<compile_context>
chip_gen: v7x
topology: tpu7x:2x2x1
jax: 0.10.0
libtpu: 0.0.40
codegen_flags: <defaults>
</compile_context>

<pallas_src>
import functools

import jax
import jax.numpy as jnp
from jax.experimental import pallas as pl
from jax.experimental.pallas import tpu as pltpu


# ----------------------------------------------------------------------------
# Fused kernel: one grid step = one batch element, full forward pass
# ----------------------------------------------------------------------------
def fused_gat_kernel(*refs, n_layers, nheads, nhid, alpha):
    (x_ref, mask_ref, g1_ref, b1_ref, w1_ref, bw1_ref, g2_ref, b2_ref) = refs[:8]
    pos = 8
    layer_refs = []
    for _ in range(n_layers):
        layer_refs.append(refs[pos:pos + 3])            # (wcat, a1_blkT, a2_blkT)
        pos += 3
    wo_ref, a1o_ref, a2o_ref = refs[pos:pos + 3]
    pos += 3
    wc_ref, bc_ref = refs[pos:pos + 2]
    pos += 2
    o_ref = refs[pos]

    f32 = jnp.float32

    # ---- patch embedding: LayerNorm(P) -> Linear(P, E) -> LayerNorm(E) ----
    x = x_ref[0]                                         # (N, P)
    N = x.shape[0]
    mu = jnp.mean(x, axis=-1, keepdims=True)
    var = jnp.mean((x - mu) ** 2, axis=-1, keepdims=True)
    xn = (x - mu) * jax.lax.rsqrt(var + 1e-5)
    xn = xn * g1_ref[...] + b1_ref[...]
    y = jnp.dot(xn, w1_ref[...], preferred_element_type=f32) + bw1_ref[...]
    mu2 = jnp.mean(y, axis=-1, keepdims=True)
    var2 = jnp.mean((y - mu2) ** 2, axis=-1, keepdims=True)
    h = (y - mu2) * jax.lax.rsqrt(var2 + 1e-5)
    h = h * g2_ref[...] + b2_ref[...]                    # (N, E)

    mask = mask_ref[...]                                 # (N, N) additive 0 / -9e15
    ones_col = jnp.full((N, 1), 1.0, dtype=f32)          # for MXU row-sums

    def one_head_attention(wh_h, f1_col, f2_row):
        """One GAT head. wh_h: (N, d), f1_col: (N, 1), f2_row: (1, N) -> (N, d)."""
        e = f1_col + f2_row                              # (N, N)
        e = jnp.where(e > 0.0, e, alpha * e)             # LeakyReLU(alpha)
        e = e + mask                                     # adjacency mask (additive)
        e = e - jnp.max(e, axis=-1, keepdims=True)
        p = jnp.exp(e)
        denom = jnp.dot(p, ones_col, preferred_element_type=f32)   # row-sum on MXU
        att = p * pl.reciprocal(denom, approx=True)                # EUP reciprocal
        return jnp.dot(att, wh_h, preferred_element_type=f32)      # (N, d)

    # ---- n_layers multi-head GAT layers (concat=True, per-head ELU) ----
    for (wcat_ref, a1t_ref, a2t_ref) in layer_refs:
        # one lane-dense matmul for all heads: (N, Din) @ (Din, H*nhid)
        wh = jnp.dot(h, wcat_ref[...], preferred_element_type=f32)
        # attention projections for ALL heads as A @ B^T matmuls (MXU, no XLU)
        f1_all = jax.lax.dot_general(wh, a1t_ref[...],
                                     (((1,), (1,)), ((), ())),
                                     preferred_element_type=f32)    # (N, H)
        f2t_all = jax.lax.dot_general(a2t_ref[...], wh,
                                      (((1,), (1,)), ((), ())),
                                      preferred_element_type=f32)   # (H, N)
        outs = []
        for hh in range(nheads):                         # static unroll (H=4)
            wh_h = wh[:, hh * nhid:(hh + 1) * nhid]
            outs.append(one_head_attention(wh_h,
                                           f1_all[:, hh:hh + 1],
                                           f2t_all[hh:hh + 1, :]))
        hcat = jnp.concatenate(outs, axis=-1)            # (N, H*nhid)
        h = jnp.where(hcat > 0.0, hcat, jnp.exp(hcat) - 1.0)  # ELU (concat=True)

    # ---- out_att: single head, concat=False (no ELU) ----
    wh_o = jnp.dot(h, wo_ref[...], preferred_element_type=f32)      # (N, nhid)
    f1_o = jax.lax.dot_general(wh_o, a1o_ref[...], (((1,), (1,)), ((), ())),
                               preferred_element_type=f32)          # (N, 1)
    f2t_o = jax.lax.dot_general(a2o_ref[...], wh_o, (((1,), (1,)), ((), ())),
                                preferred_element_type=f32)         # (1, N)
    hp = one_head_attention(wh_o, f1_o, f2t_o)                      # (N, nhid)

    # ---- readout: mean over nodes (MXU) -> Linear -> log_softmax ----
    pool = jnp.full((1, N), 1.0 / N, dtype=f32)
    xm = jnp.dot(pool, hp, preferred_element_type=f32)              # (1, nhid)
    logits = jnp.dot(xm, wc_ref[...], preferred_element_type=f32) + bc_ref[...]
    m = jnp.max(logits, axis=-1, keepdims=True)
    z = logits - m
    lse = jnp.log(jnp.sum(jnp.exp(z), axis=-1, keepdims=True))
    o_ref[0] = z - lse                                              # (1, nclass)


# ----------------------------------------------------------------------------
# Wrapper: parameter re-layout (plain JAX, done once) + one pallas_call
# ----------------------------------------------------------------------------
def gat_base_forward(x_img, adj, params, *, patch, alpha):
    B, C, H, W = x_img.shape
    hh = H // patch
    ww = W // patch
    # Rearrange 'b c (h p1) (w p2) -> b (h w) (p1 p2 c)'   (glue, plain JAX)
    p = x_img.reshape(B, C, hh, patch, ww, patch)
    p = jnp.transpose(p, (0, 2, 4, 3, 5, 1))             # b h w p1 p2 c
    patches = p.reshape(B, hh * ww, patch * patch * C)

    N = hh * ww
    P = patch * patch * C
    E = params["w1"].shape[1]
    n_layers = len(params["gat_layers"])
    nheads, _, nhid = params["gat_layers"][0][0].shape
    nclass = params["wc"].shape[1]

    # Additive adjacency mask, computed once for all layers / heads / batches.
    mask_add = jnp.where(adj > 0, 0.0, -9e15).astype(jnp.float32)

    def blkdiag_t(a):
        """(H, d) -> (H, H*d) block-diagonal-transposed: row g holds a[g] in block g."""
        Hh, d = a.shape
        return (jnp.eye(Hh, dtype=a.dtype)[:, :, None] * a[None, :, :]).reshape(Hh, Hh * d)

    inputs = [patches, mask_add,
              params["ln1_g"], params["ln1_b"], params["w1"], params["b1"],
              params["ln2_g"], params["ln2_b"]]
    in_specs = [
        pl.BlockSpec((1, N, P), lambda b: (b, 0, 0)),
        pl.BlockSpec((N, N), lambda b: (0, 0)),
        pl.BlockSpec((1, P), lambda b: (0, 0)),
        pl.BlockSpec((1, P), lambda b: (0, 0)),
        pl.BlockSpec((P, E), lambda b: (0, 0)),
        pl.BlockSpec((1, E), lambda b: (0, 0)),
        pl.BlockSpec((1, E), lambda b: (0, 0)),
        pl.BlockSpec((1, E), lambda b: (0, 0)),
    ]

    din = E
    for (W_l, A_l) in params["gat_layers"]:
        # concat per-head W along the output dim: wcat[:, h*nhid:(h+1)*nhid] = W_l[h]
        wcat = jnp.transpose(W_l, (1, 0, 2)).reshape(din, nheads * nhid)
        a1t = blkdiag_t(A_l[:, :nhid])                   # (H, H*nhid)
        a2t = blkdiag_t(A_l[:, nhid:])                   # (H, H*nhid)
        inputs += [wcat, a1t, a2t]
        in_specs += [
            pl.BlockSpec((din, nheads * nhid), lambda b: (0, 0)),
            pl.BlockSpec((nheads, nheads * nhid), lambda b: (0, 0)),
            pl.BlockSpec((nheads, nheads * nhid), lambda b: (0, 0)),
        ]
        din = nheads * nhid                              # concat=True

    W_out, A_out = params["out_att"]
    w_out = W_out[0]                                     # (din, nhid)
    a1o = A_out[:, :nhid]                                # (1, nhid)
    a2o = A_out[:, nhid:]                                # (1, nhid)
    inputs += [w_out, a1o, a2o, params["wc"], params["bc"]]
    in_specs += [
        pl.BlockSpec((din, nhid), lambda b: (0, 0)),
        pl.BlockSpec((1, nhid), lambda b: (0, 0)),
        pl.BlockSpec((1, nhid), lambda b: (0, 0)),
        pl.BlockSpec((nhid, nclass), lambda b: (0, 0)),
        pl.BlockSpec((1, nclass), lambda b: (0, 0)),
    ]

    kernel = functools.partial(fused_gat_kernel, n_layers=n_layers,
                               nheads=nheads, nhid=nhid, alpha=alpha)

    out = pl.pallas_call(
        kernel,
        out_shape=jax.ShapeDtypeStruct((B, 1, nclass), jnp.float32),
        grid_spec=pltpu.PrefetchScalarGridSpec(
            num_scalar_prefetch=0,
            grid=(B,),                                   # parallel -> both v7x TCs used
            in_specs=in_specs,
            out_specs=pl.BlockSpec((1, 1, nclass), lambda b: (b, 0, 0)),
        ),
        compiler_params=pltpu.CompilerParams(dimension_semantics=("parallel",)),
    )(*inputs)
    return out.reshape(B, nclass)


# ----------------------------------------------------------------------------
# Pure-JAX reference (for a correctness sanity check)
# ----------------------------------------------------------------------------
def reference_forward(x_img, adj, params, *, patch, alpha):
    B, C, H, W = x_img.shape
    hh, ww = H // patch, W // patch
    p = x_img.reshape(B, C, hh, patch, ww, patch)
    p = jnp.transpose(p, (0, 2, 4, 3, 5, 1))
    x = p.reshape(B, hh * ww, patch * patch * C)

    def ln(v, g, b):
        mu = jnp.mean(v, axis=-1, keepdims=True)
        var = jnp.mean((v - mu) ** 2, axis=-1, keepdims=True)
        return (v - mu) / jnp.sqrt(var + 1e-5) * g + b

    x = ln(x, params["ln1_g"][0], params["ln1_b"][0])
    x = x @ params["w1"] + params["b1"][0]
    x = ln(x, params["ln2_g"][0], params["ln2_b"][0])

    def gat_head(h, W_h, a, concat):
        wh = h @ W_h
        nh = W_h.shape[1]
        f1 = wh @ a[:nh][:, None]
        f2 = wh @ a[nh:][:, None]
        e = f1 + jnp.swapaxes(f2, -1, -2)
        e = jnp.where(e > 0, e, alpha * e)
        e = jnp.where(adj[None] > 0, e, -9e15)
        att = jax.nn.softmax(e, axis=-1)
        hp = att @ wh
        return jax.nn.elu(hp) if concat else hp

    for (W_l, A_l) in params["gat_layers"]:
        heads = [gat_head(x, W_l[i], A_l[i], True) for i in range(W_l.shape[0])]
        x = jnp.concatenate(heads, axis=-1)

    W_out, A_out = params["out_att"]
    x = gat_head(x, W_out[0], A_out[0], False)

    x = jnp.mean(x, axis=1)
    logits = x @ params["wc"] + params["bc"][0]
    return jax.nn.log_softmax(logits, axis=-1)


# ----------------------------------------------------------------------------
# Main
# ----------------------------------------------------------------------------
if __name__ == "__main__":
    # Module hyper-parameters (image/patch sizes fixed by the PyTorch module)
    IMAGE, PATCH, CHAN = 224, 28, 3
    N_PATCHES = (IMAGE // PATCH) ** 2                    # 64
    PATCH_DIM = PATCH * PATCH * CHAN                     # 2352
    EMBED_DIM, NHID, NHEADS, NCLASS = 32, 16, 4, 10
    N_LAYERS, ALPHA = 2, 0.2
    B = 2

    key = jax.random.PRNGKey(0)
    keys = jax.random.split(key, 16)

    params = {
        "ln1_g": jnp.ones((1, PATCH_DIM), jnp.float32),
        "ln1_b": jnp.zeros((1, PATCH_DIM), jnp.float32),
        "w1": 0.02 * jax.random.normal(keys[0], (PATCH_DIM, EMBED_DIM), jnp.float32),
        "b1": jnp.zeros((1, EMBED_DIM), jnp.float32),
        "ln2_g": jnp.ones((1, EMBED_DIM), jnp.float32),
        "ln2_b": jnp.zeros((1, EMBED_DIM), jnp.float32),
    }

    gat_layers = []
    din = EMBED_DIM
    for layer in range(N_LAYERS):
        Wl = 0.1 * jax.random.normal(keys[1 + 2 * layer], (NHEADS, din, NHID), jnp.float32)
        Al = 0.1 * jax.random.normal(keys[2 + 2 * layer], (NHEADS, 2 * NHID), jnp.float32)
        gat_layers.append((Wl, Al))
        din = NHEADS * NHID                              # concat=True
    params["gat_layers"] = gat_layers

    params["out_att"] = (
        0.1 * jax.random.normal(keys[10], (1, NHEADS * NHID, NHID), jnp.float32),
        0.1 * jax.random.normal(keys[11], (1, 2 * NHID), jnp.float32),
    )
    params["wc"] = 0.1 * jax.random.normal(keys[12], (NHID, NCLASS), jnp.float32)
    params["bc"] = jnp.zeros((1, NCLASS), jnp.float32)

    # Inputs
    x_img = jax.random.normal(keys[13], (B, CHAN, IMAGE, IMAGE), jnp.float32)
    adj_rand = (jax.random.uniform(keys[14], (N_PATCHES, N_PATCHES)) > 0.7).astype(jnp.float32)
    adj = jnp.maximum(adj_rand, adj_rand.T)
    adj = jnp.maximum(adj, jnp.eye(N_PATCHES, dtype=jnp.float32))   # self-loops

    out = gat_base_forward(x_img, adj, params, patch=PATCH, alpha=ALPHA)
    out = jax.block_until_ready(out)
    assert out.shape == (B, NCLASS)

    # Correctness sanity check against a pure-JAX reference (full-precision matmuls).
    with jax.default_matmul_precision("highest"):
        ref = reference_forward(x_img, adj, params, patch=PATCH, alpha=ALPHA)
    ref = jax.block_until_ready(ref)
    assert bool(jnp.allclose(out, ref, atol=5e-2, rtol=5e-2))

    print("KERNEL_OK")
</pallas_src>

<mosaic_0001>
module attributes {stable_mosaic.version = 11 : i64} {
  func.func @fused_gat_kernel(%arg0: i32, %arg1: memref<1x64x2352xf32, #tpu.memory_space<vmem>>, %arg2: memref<64x64xf32, #tpu.memory_space<vmem>>, %arg3: memref<1x2352xf32, #tpu.memory_space<vmem>>, %arg4: memref<1x2352xf32, #tpu.memory_space<vmem>>, %arg5: memref<2352x32xf32, #tpu.memory_space<vmem>>, %arg6: memref<1x32xf32, #tpu.memory_space<vmem>>, %arg7: memref<1x32xf32, #tpu.memory_space<vmem>>, %arg8: memref<1x32xf32, #tpu.memory_space<vmem>>, %arg9: memref<32x64xf32, #tpu.memory_space<vmem>>, %arg10: memref<4x64xf32, #tpu.memory_space<vmem>>, %arg11: memref<4x64xf32, #tpu.memory_space<vmem>>, %arg12: memref<64x64xf32, #tpu.memory_space<vmem>>, %arg13: memref<4x64xf32, #tpu.memory_space<vmem>>, %arg14: memref<4x64xf32, #tpu.memory_space<vmem>>, %arg15: memref<64x16xf32, #tpu.memory_space<vmem>>, %arg16: memref<1x16xf32, #tpu.memory_space<vmem>>, %arg17: memref<1x16xf32, #tpu.memory_space<vmem>>, %arg18: memref<16x10xf32, #tpu.memory_space<vmem>>, %arg19: memref<1x10xf32, #tpu.memory_space<vmem>>, %arg20: memref<1x1x10xf32, #tpu.memory_space<vmem>>) attributes {dimension_semantics = [#tpu.dimension_semantics<parallel>], iteration_bounds = array<i64: 2>, scalar_prefetch = 0 : i64, scratch_operands = 0 : i64, tpu.core_type = #tpu.core_type<tc>, window_params = [{transform_indices = @transform_0, window_bounds = array<i64: 1, 64, 2352>}, {pipeline_mode = #tpu.pipeline_mode<synchronous>, transform_indices = @transform_1, window_bounds = array<i64: 64, 64>}, {pipeline_mode = #tpu.pipeline_mode<synchronous>, transform_indices = @transform_2, window_bounds = array<i64: 1, 2352>}, {pipeline_mode = #tpu.pipeline_mode<synchronous>, transform_indices = @transform_3, window_bounds = array<i64: 1, 2352>}, {pipeline_mode = #tpu.pipeline_mode<synchronous>, transform_indices = @transform_4, window_bounds = array<i64: 2352, 32>}, {pipeline_mode = #tpu.pipeline_mode<synchronous>, transform_indices = @transform_5, window_bounds = array<i64: 1, 32>}, {pipeline_mode = #tpu.pipeline_mode<synchronous>, transform_indices = @transform_6, window_bounds = array<i64: 1, 32>}, {pipeline_mode = #tpu.pipeline_mode<synchronous>, transform_indices = @transform_7, window_bounds = array<i64: 1, 32>}, {pipeline_mode = #tpu.pipeline_mode<synchronous>, transform_indices = @transform_8, window_bounds = array<i64: 32, 64>}, {pipeline_mode = #tpu.pipeline_mode<synchronous>, transform_indices = @transform_9, window_bounds = array<i64: 4, 64>}, {pipeline_mode = #tpu.pipeline_mode<synchronous>, transform_indices = @transform_10, window_bounds = array<i64: 4, 64>}, {pipeline_mode = #tpu.pipeline_mode<synchronous>, transform_indices = @transform_11, window_bounds = array<i64: 64, 64>}, {pipeline_mode = #tpu.pipeline_mode<synchronous>, transform_indices = @transform_12, window_bounds = array<i64: 4, 64>}, {pipeline_mode = #tpu.pipeline_mode<synchronous>, transform_indices = @transform_13, window_bounds = array<i64: 4, 64>}, {pipeline_mode = #tpu.pipeline_mode<synchronous>, transform_indices = @transform_14, window_bounds = array<i64: 64, 16>}, {pipeline_mode = #tpu.pipeline_mode<synchronous>, transform_indices = @transform_15, window_bounds = array<i64: 1, 16>}, {pipeline_mode = #tpu.pipeline_mode<synchronous>, transform_indices = @transform_16, window_bounds = array<i64: 1, 16>}, {pipeline_mode = #tpu.pipeline_mode<synchronous>, transform_indices = @transform_17, window_bounds = array<i64: 16, 10>}, {pipeline_mode = #tpu.pipeline_mode<synchronous>, transform_indices = @transform_18, window_bounds = array<i64: 1, 10>}, {transform_indices = @transform_19, window_bounds = array<i64: 1, 1, 10>}]} {
    %c0 = arith.constant 0 : index
    %c0_0 = arith.constant 0 : index
    %c0_1 = arith.constant 0 : index
    %0 = vector.load %arg1[%c0, %c0_0, %c0_1] : memref<1x64x2352xf32, #tpu.memory_space<vmem>>, vector<1x64x2352xf32>
    %1 = vector.shape_cast %0 : vector<1x64x2352xf32> to vector<64x2352xf32>
    %cst = arith.constant dense<0.000000e+00> : vector<64xf32>
    %2 = vector.multi_reduction <add>, %1, %cst [1] : vector<64x2352xf32> to vector<64xf32>
    %3 = vector.shape_cast %2 : vector<64xf32> to vector<64x1xf32>
    %cst_2 = arith.constant 2.352000e+03 : f32
    %4 = vector.broadcast %cst_2 : f32 to vector<64x1xf32>
    %5 = arith.divf %3, %4 : vector<64x1xf32>
    %6 = vector.broadcast %5 : vector<64x1xf32> to vector<64x2352xf32>
    %7 = arith.subf %1, %6 : vector<64x2352xf32>
    %8 = arith.mulf %7, %7 : vector<64x2352xf32>
    %cst_3 = arith.constant dense<0.000000e+00> : vector<64xf32>
    %9 = vector.multi_reduction <add>, %8, %cst_3 [1] : vector<64x2352xf32> to vector<64xf32>
    %10 = vector.shape_cast %9 : vector<64xf32> to vector<64x1xf32>
    %cst_4 = arith.constant 2.352000e+03 : f32
    %11 = vector.broadcast %cst_4 : f32 to vector<64x1xf32>
    %12 = arith.divf %10, %11 : vector<64x1xf32>
    %13 = vector.broadcast %5 : vector<64x1xf32> to vector<64x2352xf32>
    %14 = arith.subf %1, %13 : vector<64x2352xf32>
    %cst_5 = arith.constant 9.99999974E-6 : f32
    %15 = vector.broadcast %cst_5 : f32 to vector<64x1xf32>
    %16 = arith.addf %12, %15 : vector<64x1xf32>
    %17 = math.rsqrt %16 : vector<64x1xf32>
    %18 = vector.broadcast %17 : vector<64x1xf32> to vector<64x2352xf32>
    %19 = arith.mulf %14, %18 : vector<64x2352xf32>
    %c0_6 = arith.constant 0 : index
    %c0_7 = arith.constant 0 : index
    %20 = vector.load %arg3[%c0_6, %c0_7] : memref<1x2352xf32, #tpu.memory_space<vmem>>, vector<1x2352xf32>
    %21 = vector.broadcast %20 : vector<1x2352xf32> to vector<64x2352xf32>
    %22 = arith.mulf %19, %21 : vector<64x2352xf32>
    %c0_8 = arith.constant 0 : index
    %c0_9 = arith.constant 0 : index
    %23 = vector.load %arg4[%c0_8, %c0_9] : memref<1x2352xf32, #tpu.memory_space<vmem>>, vector<1x2352xf32>
    %24 = vector.broadcast %23 : vector<1x2352xf32> to vector<64x2352xf32>
    %25 = arith.addf %22, %24 : vector<64x2352xf32>
    %c0_10 = arith.constant 0 : index
    %c0_11 = arith.constant 0 : index
    %26 = vector.load %arg5[%c0_10, %c0_11] : memref<2352x32xf32, #tpu.memory_space<vmem>>, vector<2352x32xf32>
    %cst_12 = arith.constant dense<0.000000e+00> : vector<64x32xf32>
    %27 = tpu.matmul %25, %26, %cst_12 {dimension_numbers = #tpu.dot_dimension_numbers<[1], [0], [0], [1], [0, 0, 1, 1], [], []>} : vector<64x2352xf32>, vector<2352x32xf32>, vector<64x32xf32> -> vector<64x32xf32>
    %c0_13 = arith.constant 0 : index
    %c0_14 = arith.constant 0 : index
    %28 = vector.load %arg6[%c0_13, %c0_14] : memref<1x32xf32, #tpu.memory_space<vmem>>, vector<1x32xf32>
    %29 = vector.broadcast %28 : vector<1x32xf32> to vector<64x32xf32>
    %30 = arith.addf %27, %29 : vector<64x32xf32>
    %cst_15 = arith.constant dense<0.000000e+00> : vector<64xf32>
    %31 = vector.multi_reduction <add>, %30, %cst_15 [1] : vector<64x32xf32> to vector<64xf32>
    %32 = vector.shape_cast %31 : vector<64xf32> to vector<64x1xf32>
    %cst_16 = arith.constant 3.200000e+01 : f32
    %33 = vector.broadcast %cst_16 : f32 to vector<64x1xf32>
    %34 = arith.divf %32, %33 : vector<64x1xf32>
    %35 = vector.broadcast %34 : vector<64x1xf32> to vector<64x32xf32>
    %36 = arith.subf %30, %35 : vector<64x32xf32>
    %37 = arith.mulf %36, %36 : vector<64x32xf32>
    %cst_17 = arith.constant dense<0.000000e+00> : vector<64xf32>
    %38 = vector.multi_reduction <add>, %37, %cst_17 [1] : vector<64x32xf32> to vector<64xf32>
    %39 = vector.shape_cast %38 : vector<64xf32> to vector<64x1xf32>
    %cst_18 = arith.constant 3.200000e+01 : f32
    %40 = vector.broadcast %cst_18 : f32 to vector<64x1xf32>
    %41 = arith.divf %39, %40 : vector<64x1xf32>
    %42 = vector.broadcast %34 : vector<64x1xf32> to vector<64x32xf32>
    %43 = arith.subf %30, %42 : vector<64x32xf32>
    %cst_19 = arith.constant 9.99999974E-6 : f32
    %44 = vector.broadcast %cst_19 : f32 to vector<64x1xf32>
    %45 = arith.addf %41, %44 : vector<64x1xf32>
    %46 = math.rsqrt %45 : vector<64x1xf32>
    %47 = vector.broadcast %46 : vector<64x1xf32> to vector<64x32xf32>
    %48 = arith.mulf %43, %47 : vector<64x32xf32>
    %c0_20 = arith.constant 0 : index
    %c0_21 = arith.constant 0 : index
    %49 = vector.load %arg7[%c0_20, %c0_21] : memref<1x32xf32, #tpu.memory_space<vmem>>, vector<1x32xf32>
    %50 = vector.broadcast %49 : vector<1x32xf32> to vector<64x32xf32>
    %51 = arith.mulf %48, %50 : vector<64x32xf32>
    %c0_22 = arith.constant 0 : index
    %c0_23 = arith.constant 0 : index
    %52 = vector.load %arg8[%c0_22, %c0_23] : memref<1x32xf32, #tpu.memory_space<vmem>>, vector<1x32xf32>
    %53 = vector.broadcast %52 : vector<1x32xf32> to vector<64x32xf32>
    %54 = arith.addf %51, %53 : vector<64x32xf32>
    %c0_24 = arith.constant 0 : index
    %c0_25 = arith.constant 0 : index
    %55 = vector.load %arg2[%c0_24, %c0_25] : memref<64x64xf32, #tpu.memory_space<vmem>>, vector<64x64xf32>
    %cst_26 = arith.constant 1.000000e+00 : f32
    %56 = vector.broadcast %cst_26 : f32 to vector<64x1xf32>
    %c0_27 = arith.constant 0 : index
    %c0_28 = arith.constant 0 : index
    %57 = vector.load %arg9[%c0_27, %c0_28] : memref<32x64xf32, #tpu.memory_space<vmem>>, vector<32x64xf32>
    %cst_29 = arith.constant dense<0.000000e+00> : vector<64x64xf32>
    %58 = tpu.matmul %54, %57, %cst_29 {dimension_numbers = #tpu.dot_dimension_numbers<[1], [0], [0], [1], [0, 0, 1, 1], [], []>} : vector<64x32xf32>, vector<32x64xf32>, vector<64x64xf32> -> vector<64x64xf32>
    %c0_30 = arith.constant 0 : index
    %c0_31 = arith.constant 0 : index
    %59 = vector.load %arg10[%c0_30, %c0_31] : memref<4x64xf32, #tpu.memory_space<vmem>>, vector<4x64xf32>
    %cst_32 = arith.constant dense<0.000000e+00> : vector<64x4xf32>
    %60 = tpu.matmul %58, %59, %cst_32 {dimension_numbers = #tpu.dot_dimension_numbers<[1], [1], [0], [0], [0, 0, 1, 0], [], []>} : vector<64x64xf32>, vector<4x64xf32>, vector<64x4xf32> -> vector<64x4xf32>
    %c0_33 = arith.constant 0 : index
    %c0_34 = arith.constant 0 : index
    %61 = vector.load %arg11[%c0_33, %c0_34] : memref<4x64xf32, #tpu.memory_space<vmem>>, vector<4x64xf32>
    %cst_35 = arith.constant dense<0.000000e+00> : vector<4x64xf32>
    %62 = tpu.matmul %61, %58, %cst_35 {dimension_numbers = #tpu.dot_dimension_numbers<[1], [1], [0], [0], [0, 0, 1, 0], [], []>} : vector<4x64xf32>, vector<64x64xf32>, vector<4x64xf32> -> vector<4x64xf32>
    %63 = vector.extract_strided_slice %58 {offsets = [0, 0], sizes = [64, 16], strides = [1, 1]} : vector<64x64xf32> to vector<64x16xf32>
    %64 = vector.extract_strided_slice %60 {offsets = [0, 0], sizes = [64, 1], strides = [1, 1]} : vector<64x4xf32> to vector<64x1xf32>
    %65 = vector.extract_strided_slice %62 {offsets = [0, 0], sizes = [1, 64], strides = [1, 1]} : vector<4x64xf32> to vector<1x64xf32>
    %66 = vector.broadcast %64 : vector<64x1xf32> to vector<64x64xf32>
    %67 = vector.broadcast %65 : vector<1x64xf32> to vector<64x64xf32>
    %68 = arith.addf %66, %67 : vector<64x64xf32>
    %cst_36 = arith.constant 0.000000e+00 : f32
    %69 = vector.broadcast %cst_36 : f32 to vector<64x64xf32>
    %70 = arith.cmpf ogt, %68, %69 : vector<64x64xf32>
    %cst_37 = arith.constant 2.000000e-01 : f32
    %71 = vector.broadcast %cst_37 : f32 to vector<64x64xf32>
    %72 = arith.mulf %71, %68 : vector<64x64xf32>
    %73 = arith.select %70, %68, %72 : vector<64x64xi1>, vector<64x64xf32>
    %74 = arith.addf %73, %55 : vector<64x64xf32>
    %cst_38 = arith.constant dense<0xFF800000> : vector<64xf32>
    %75 = vector.multi_reduction <maximumf>, %74, %cst_38 [1] : vector<64x64xf32> to vector<64xf32>
    %76 = vector.shape_cast %75 : vector<64xf32> to vector<64x1xf32>
    %77 = vector.broadcast %76 : vector<64x1xf32> to vector<64x64xf32>
    %78 = arith.subf %74, %77 : vector<64x64xf32>
    %79 = math.exp %78 : vector<64x64xf32>
    %cst_39 = arith.constant dense<0.000000e+00> : vector<64x1xf32>
    %80 = tpu.matmul %79, %56, %cst_39 {dimension_numbers = #tpu.dot_dimension_numbers<[1], [0], [0], [1], [0, 0, 1, 1], [], []>} : vector<64x64xf32>, vector<64x1xf32>, vector<64x1xf32> -> vector<64x1xf32>
    %81 = tpu.reciprocal %80 {approx = true} : vector<64x1xf32> -> vector<64x1xf32>
    %82 = vector.broadcast %81 : vector<64x1xf32> to vector<64x64xf32>
    %83 = arith.mulf %79, %82 : vector<64x64xf32>
    %cst_40 = arith.constant dense<0.000000e+00> : vector<64x16xf32>
    %84 = tpu.matmul %83, %63, %cst_40 {dimension_numbers = #tpu.dot_dimension_numbers<[1], [0], [0], [1], [0, 0, 1, 1], [], []>} : vector<64x64xf32>, vector<64x16xf32>, vector<64x16xf32> -> vector<64x16xf32>
    %85 = vector.extract_strided_slice %58 {offsets = [0, 16], sizes = [64, 16], strides = [1, 1]} : vector<64x64xf32> to vector<64x16xf32>
    %86 = vector.extract_strided_slice %60 {offsets = [0, 1], sizes = [64, 1], strides = [1, 1]} : vector<64x4xf32> to vector<64x1xf32>
    %87 = vector.extract_strided_slice %62 {offsets = [1, 0], sizes = [1, 64], strides = [1, 1]} : vector<4x64xf32> to vector<1x64xf32>
    %88 = vector.broadcast %86 : vector<64x1xf32> to vector<64x64xf32>
    %89 = vector.broadcast %87 : vector<1x64xf32> to vector<64x64xf32>
    %90 = arith.addf %88, %89 : vector<64x64xf32>
    %cst_41 = arith.constant 0.000000e+00 : f32
    %91 = vector.broadcast %cst_41 : f32 to vector<64x64xf32>
    %92 = arith.cmpf ogt, %90, %91 : vector<64x64xf32>
    %cst_42 = arith.constant 2.000000e-01 : f32
    %93 = vector.broadcast %cst_42 : f32 to vector<64x64xf32>
    %94 = arith.mulf %93, %90 : vector<64x64xf32>
    %95 = arith.select %92, %90, %94 : vector<64x64xi1>, vector<64x64xf32>
    %96 = arith.addf %95, %55 : vector<64x64xf32>
    %cst_43 = arith.constant dense<0xFF800000> : vector<64xf32>
    %97 = vector.multi_reduction <maximumf>, %96, %cst_43 [1] : vector<64x64xf32> to vector<64xf32>
    %98 = vector.shape_cast %97 : vector<64xf32> to vector<64x1xf32>
    %99 = vector.broadcast %98 : vector<64x1xf32> to vector<64x64xf32>
    %100 = arith.subf %96, %99 : vector<64x64xf32>
    %101 = math.exp %100 : vector<64x64xf32>
    %cst_44 = arith.constant dense<0.000000e+00> : vector<64x1xf32>
    %102 = tpu.matmul %101, %56, %cst_44 {dimension_numbers = #tpu.dot_dimension_numbers<[1], [0], [0], [1], [0, 0, 1, 1], [], []>} : vector<64x64xf32>, vector<64x1xf32>, vector<64x1xf32> -> vector<64x1xf32>
    %103 = tpu.reciprocal %102 {approx = true} : vector<64x1xf32> -> vector<64x1xf32>
    %104 = vector.broadcast %103 : vector<64x1xf32> to vector<64x64xf32>
    %105 = arith.mulf %101, %104 : vector<64x64xf32>
    %cst_45 = arith.constant dense<0.000000e+00> : vector<64x16xf32>
    %106 = tpu.matmul %105, %85, %cst_45 {dimension_numbers = #tpu.dot_dimension_numbers<[1], [0], [0], [1], [0, 0, 1, 1], [], []>} : vector<64x64xf32>, vector<64x16xf32>, vector<64x16xf32> -> vector<64x16xf32>
    %107 = vector.extract_strided_slice %58 {offsets = [0, 32], sizes = [64, 16], strides = [1, 1]} : vector<64x64xf32> to vector<64x16xf32>
    %108 = vector.extract_strided_slice %60 {offsets = [0, 2], sizes = [64, 1], strides = [1, 1]} : vector<64x4xf32> to vector<64x1xf32>
    %109 = vector.extract_strided_slice %62 {offsets = [2, 0], sizes = [1, 64], strides = [1, 1]} : vector<4x64xf32> to vector<1x64xf32>
    %110 = vector.broadcast %108 : vector<64x1xf32> to vector<64x64xf32>
    %111 = vector.broadcast %109 : vector<1x64xf32> to vector<64x64xf32>
    %112 = arith.addf %110, %111 : vector<64x64xf32>
    %cst_46 = arith.constant 0.000000e+00 : f32
    %113 = vector.broadcast %cst_46 : f32 to vector<64x64xf32>
    %114 = arith.cmpf ogt, %112, %113 : vector<64x64xf32>
    %cst_47 = arith.constant 2.000000e-01 : f32
    %115 = vector.broadcast %cst_47 : f32 to vector<64x64xf32>
    %116 = arith.mulf %115, %112 : vector<64x64xf32>
    %117 = arith.select %114, %112, %116 : vector<64x64xi1>, vector<64x64xf32>
    %118 = arith.addf %117, %55 : vector<64x64xf32>
    %cst_48 = arith.constant dense<0xFF800000> : vector<64xf32>
    %119 = vector.multi_reduction <maximumf>, %118, %cst_48 [1] : vector<64x64xf32> to vector<64xf32>
    %120 = vector.shape_cast %119 : vector<64xf32> to vector<64x1xf32>
    %121 = vector.broadcast %120 : vector<64x1xf32> to vector<64x64xf32>
    %122 = arith.subf %118, %121 : vector<64x64xf32>
    %123 = math.exp %122 : vector<64x64xf32>
    %cst_49 = arith.constant dense<0.000000e+00> : vector<64x1xf32>
    %124 = tpu.matmul %123, %56, %cst_49 {dimension_numbers = #tpu.dot_dimension_numbers<[1], [0], [0], [1], [0, 0, 1, 1], [], []>} : vector<64x64xf32>, vector<64x1xf32>, vector<64x1xf32> -> vector<64x1xf32>
    %125 = tpu.reciprocal %124 {approx = true} : vector<64x1xf32> -> vector<64x1xf32>
    %126 = vector.broadcast %125 : vector<64x1xf32> to vector<64x64xf32>
    %127 = arith.mulf %123, %126 : vector<64x64xf32>
    %cst_50 = arith.constant dense<0.000000e+00> : vector<64x16xf32>
    %128 = tpu.matmul %127, %107, %cst_50 {dimension_numbers = #tpu.dot_dimension_numbers<[1], [0], [0], [1], [0, 0, 1, 1], [], []>} : vector<64x64xf32>, vector<64x16xf32>, vector<64x16xf32> -> vector<64x16xf32>
    %129 = vector.extract_strided_slice %58 {offsets = [0, 48], sizes = [64, 16], strides = [1, 1]} : vector<64x64xf32> to vector<64x16xf32>
    %130 = vector.extract_strided_slice %60 {offsets = [0, 3], sizes = [64, 1], strides = [1, 1]} : vector<64x4xf32> to vector<64x1xf32>
    %131 = vector.extract_strided_slice %62 {offsets = [3, 0], sizes = [1, 64], strides = [1, 1]} : vector<4x64xf32> to vector<1x64xf32>
    %132 = vector.broadcast %130 : vector<64x1xf32> to vector<64x64xf32>
    %133 = vector.broadcast %131 : vector<1x64xf32> to vector<64x64xf32>
    %134 = arith.addf %132, %133 : vector<64x64xf32>
    %cst_51 = arith.constant 0.000000e+00 : f32
    %135 = vector.broadcast %cst_51 : f32 to vector<64x64xf32>
    %136 = arith.cmpf ogt, %134, %135 : vector<64x64xf32>
    %cst_52 = arith.constant 2.000000e-01 : f32
    %137 = vector.broadcast %cst_52 : f32 to vector<64x64xf32>
    %138 = arith.mulf %137, %134 : vector<64x64xf32>
    %139 = arith.select %136, %134, %138 : vector<64x64xi1>, vector<64x64xf32>
    %140 = arith.addf %139, %55 : vector<64x64xf32>
    %cst_53 = arith.constant dense<0xFF800000> : vector<64xf32>
    %141 = vector.multi_reduction <maximumf>, %140, %cst_53 [1] : vector<64x64xf32> to vector<64xf32>
    %142 = vector.shape_cast %141 : vector<64xf32> to vector<64x1xf32>
    %143 = vector.broadcast %142 : vector<64x1xf32> to vector<64x64xf32>
    %144 = arith.subf %140, %143 : vector<64x64xf32>
    %145 = math.exp %144 : vector<64x64xf32>
    %cst_54 = arith.constant dense<0.000000e+00> : vector<64x1xf32>
    %146 = tpu.matmul %145, %56, %cst_54 {dimension_numbers = #tpu.dot_dimension_numbers<[1], [0], [0], [1], [0, 0, 1, 1], [], []>} : vector<64x64xf32>, vector<64x1xf32>, vector<64x1xf32> -> vector<64x1xf32>
    %147 = tpu.reciprocal %146 {approx = true} : vector<64x1xf32> -> vector<64x1xf32>
    %148 = vector.broadcast %147 : vector<64x1xf32> to vector<64x64xf32>
    %149 = arith.mulf %145, %148 : vector<64x64xf32>
    %cst_55 = arith.constant dense<0.000000e+00> : vector<64x16xf32>
    %150 = tpu.matmul %149, %129, %cst_55 {dimension_numbers = #tpu.dot_dimension_numbers<[1], [0], [0], [1], [0, 0, 1, 1], [], []>} : vector<64x64xf32>, vector<64x16xf32>, vector<64x16xf32> -> vector<64x16xf32>
    %151 = tpu.concatenate %84, %106, %128, %150 in 1 : vector<64x16xf32>, vector<64x16xf32>, vector<64x16xf32>, vector<64x16xf32> -> vector<64x64xf32>
    %cst_56 = arith.constant 0.000000e+00 : f32
    %152 = vector.broadcast %cst_56 : f32 to vector<64x64xf32>
    %153 = arith.cmpf ogt, %151, %152 : vector<64x64xf32>
    %154 = math.exp %151 : vector<64x64xf32>
    %cst_57 = arith.constant 1.000000e+00 : f32
    %155 = vector.broadcast %cst_57 : f32 to vector<64x64xf32>
    %156 = arith.subf %154, %155 : vector<64x64xf32>
    %157 = arith.select %153, %151, %156 : vector<64x64xi1>, vector<64x64xf32>
    %c0_58 = arith.constant 0 : index
    %c0_59 = arith.constant 0 : index
    %158 = vector.load %arg12[%c0_58, %c0_59] : memref<64x64xf32, #tpu.memory_space<vmem>>, vector<64x64xf32>
    %cst_60 = arith.constant dense<0.000000e+00> : vector<64x64xf32>
    %159 = tpu.matmul %157, %158, %cst_60 {dimension_numbers = #tpu.dot_dimension_numbers<[1], [0], [0], [1], [0, 0, 1, 1], [], []>} : vector<64x64xf32>, vector<64x64xf32>, vector<64x64xf32> -> vector<64x64xf32>
    %c0_61 = arith.constant 0 : index
    %c0_62 = arith.constant 0 : index
    %160 = vector.load %arg13[%c0_61, %c0_62] : memref<4x64xf32, #tpu.memory_space<vmem>>, vector<4x64xf32>
    %cst_63 = arith.constant dense<0.000000e+00> : vector<64x4xf32>
    %161 = tpu.matmul %159, %160, %cst_63 {dimension_numbers = #tpu.dot_dimension_numbers<[1], [1], [0], [0], [0, 0, 1, 0], [], []>} : vector<64x64xf32>, vector<4x64xf32>, vector<64x4xf32> -> vector<64x4xf32>
    %c0_64 = arith.constant 0 : index
    %c0_65 = arith.constant 0 : index
    %162 = vector.load %arg14[%c0_64, %c0_65] : memref<4x64xf32, #tpu.memory_space<vmem>>, vector<4x64xf32>
    %cst_66 = arith.constant dense<0.000000e+00> : vector<4x64xf32>
    %163 = tpu.matmul %162, %159, %cst_66 {dimension_numbers = #tpu.dot_dimension_numbers<[1], [1], [0], [0], [0, 0, 1, 0], [], []>} : vector<4x64xf32>, vector<64x64xf32>, vector<4x64xf32> -> vector<4x64xf32>
    %164 = vector.extract_strided_slice %159 {offsets = [0, 0], sizes = [64, 16], strides = [1, 1]} : vector<64x64xf32> to vector<64x16xf32>
    %165 = vector.extract_strided_slice %161 {offsets = [0, 0], sizes = [64, 1], strides = [1, 1]} : vector<64x4xf32> to vector<64x1xf32>
    %166 = vector.extract_strided_slice %163 {offsets = [0, 0], sizes = [1, 64], strides = [1, 1]} : vector<4x64xf32> to vector<1x64xf32>
    %167 = vector.broadcast %165 : vector<64x1xf32> to vector<64x64xf32>
    %168 = vector.broadcast %166 : vector<1x64xf32> to vector<64x64xf32>
    %169 = arith.addf %167, %168 : vector<64x64xf32>
    %cst_67 = arith.constant 0.000000e+00 : f32
    %170 = vector.broadcast %cst_67 : f32 to vector<64x64xf32>
    %171 = arith.cmpf ogt, %169, %170 : vector<64x64xf32>
    %cst_68 = arith.constant 2.000000e-01 : f32
    %172 = vector.broadcast %cst_68 : f32 to vector<64x64xf32>
    %173 = arith.mulf %172, %169 : vector<64x64xf32>
    %174 = arith.select %171, %169, %173 : vector<64x64xi1>, vector<64x64xf32>
    %175 = arith.addf %174, %55 : vector<64x64xf32>
    %cst_69 = arith.constant dense<0xFF800000> : vector<64xf32>
    %176 = vector.multi_reduction <maximumf>, %175, %cst_69 [1] : vector<64x64xf32> to vector<64xf32>
    %177 = vector.shape_cast %176 : vector<64xf32> to vector<64x1xf32>
    %178 = vector.broadcast %177 : vector<64x1xf32> to vector<64x64xf32>
    %179 = arith.subf %175, %178 : vector<64x64xf32>
    %180 = math.exp %179 : vector<64x64xf32>
    %cst_70 = arith.constant dense<0.000000e+00> : vector<64x1xf32>
    %181 = tpu.matmul %180, %56, %cst_70 {dimension_numbers = #tpu.dot_dimension_numbers<[1], [0], [0], [1], [0, 0, 1, 1], [], []>} : vector<64x64xf32>, vector<64x1xf32>, vector<64x1xf32> -> vector<64x1xf32>
    %182 = tpu.reciprocal %181 {approx = true} : vector<64x1xf32> -> vector<64x1xf32>
    %183 = vector.broadcast %182 : vector<64x1xf32> to vector<64x64xf32>
    %184 = arith.mulf %180, %183 : vector<64x64xf32>
    %cst_71 = arith.constant dense<0.000000e+00> : vector<64x16xf32>
    %185 = tpu.matmul %184, %164, %cst_71 {dimension_numbers = #tpu.dot_dimension_numbers<[1], [0], [0], [1], [0, 0, 1, 1], [], []>} : vector<64x64xf32>, vector<64x16xf32>, vector<64x16xf32> -> vector<64x16xf32>
    %186 = vector.extract_strided_slice %159 {offsets = [0, 16], sizes = [64, 16], strides = [1, 1]} : vector<64x64xf32> to vector<64x16xf32>
    %187 = vector.extract_strided_slice %161 {offsets = [0, 1], sizes = [64, 1], strides = [1, 1]} : vector<64x4xf32> to vector<64x1xf32>
    %188 = vector.extract_strided_slice %163 {offsets = [1, 0], sizes = [1, 64], strides = [1, 1]} : vector<4x64xf32> to vector<1x64xf32>
    %189 = vector.broadcast %187 : vector<64x1xf32> to vector<64x64xf32>
    %190 = vector.broadcast %188 : vector<1x64xf32> to vector<64x64xf32>
    %191 = arith.addf %189, %190 : vector<64x64xf32>
    %cst_72 = arith.constant 0.000000e+00 : f32
    %192 = vector.broadcast %cst_72 : f32 to vector<64x64xf32>
    %193 = arith.cmpf ogt, %191, %192 : vector<64x64xf32>
    %cst_73 = arith.constant 2.000000e-01 : f32
    %194 = vector.broadcast %cst_73 : f32 to vector<64x64xf32>
    %195 = arith.mulf %194, %191 : vector<64x64xf32>
    %196 = arith.select %193, %191, %195 : vector<64x64xi1>, vector<64x64xf32>
    %197 = arith.addf %196, %55 : vector<64x64xf32>
    %cst_74 = arith.constant dense<0xFF800000> : vector<64xf32>
    %198 = vector.multi_reduction <maximumf>, %197, %cst_74 [1] : vector<64x64xf32> to vector<64xf32>
    %199 = vector.shape_cast %198 : vector<64xf32> to vector<64x1xf32>
    %200 = vector.broadcast %199 : vector<64x1xf32> to vector<64x64xf32>
    %201 = arith.subf %197, %200 : vector<64x64xf32>
    %202 = math.exp %201 : vector<64x64xf32>
    %cst_75 = arith.constant dense<0.000000e+00> : vector<64x1xf32>
    %203 = tpu.matmul %202, %56, %cst_75 {dimension_numbers = #tpu.dot_dimension_numbers<[1], [0], [0], [1], [0, 0, 1, 1], [], []>} : vector<64x64xf32>, vector<64x1xf32>, vector<64x1xf32> -> vector<64x1xf32>
    %204 = tpu.reciprocal %203 {approx = true} : vector<64x1xf32> -> vector<64x1xf32>
    %205 = vector.broadcast %204 : vector<64x1xf32> to vector<64x64xf32>
    %206 = arith.mulf %202, %205 : vector<64x64xf32>
    %cst_76 = arith.constant dense<0.000000e+00> : vector<64x16xf32>
    %207 = tpu.matmul %206, %186, %cst_76 {dimension_numbers = #tpu.dot_dimension_numbers<[1], [0], [0], [1], [0, 0, 1, 1], [], []>} : vector<64x64xf32>, vector<64x16xf32>, vector<64x16xf32> -> vector<64x16xf32>
    %208 = vector.extract_strided_slice %159 {offsets = [0, 32], sizes = [64, 16], strides = [1, 1]} : vector<64x64xf32> to vector<64x16xf32>
    %209 = vector.extract_strided_slice %161 {offsets = [0, 2], sizes = [64, 1], strides = [1, 1]} : vector<64x4xf32> to vector<64x1xf32>
    %210 = vector.extract_strided_slice %163 {offsets = [2, 0], sizes = [1, 64], strides = [1, 1]} : vector<4x64xf32> to vector<1x64xf32>
    %211 = vector.broadcast %209 : vector<64x1xf32> to vector<64x64xf32>
    %212 = vector.broadcast %210 : vector<1x64xf32> to vector<64x64xf32>
    %213 = arith.addf %211, %212 : vector<64x64xf32>
    %cst_77 = arith.constant 0.000000e+00 : f32
    %214 = vector.broadcast %cst_77 : f32 to vector<64x64xf32>
    %215 = arith.cmpf ogt, %213, %214 : vector<64x64xf32>
    %cst_78 = arith.constant 2.000000e-01 : f32
    %216 = vector.broadcast %cst_78 : f32 to vector<64x64xf32>
    %217 = arith.mulf %216, %213 : vector<64x64xf32>
    %218 = arith.select %215, %213, %217 : vector<64x64xi1>, vector<64x64xf32>
    %219 = arith.addf %218, %55 : vector<64x64xf32>
    %cst_79 = arith.constant dense<0xFF800000> : vector<64xf32>
    %220 = vector.multi_reduction <maximumf>, %219, %cst_79 [1] : vector<64x64xf32> to vector<64xf32>
    %221 = vector.shape_cast %220 : vector<64xf32> to vector<64x1xf32>
    %222 = vector.broadcast %221 : vector<64x1xf32> to vector<64x64xf32>
    %223 = arith.subf %219, %222 : vector<64x64xf32>
    %224 = math.exp %223 : vector<64x64xf32>
    %cst_80 = arith.constant dense<0.000000e+00> : vector<64x1xf32>
    %225 = tpu.matmul %224, %56, %cst_80 {dimension_numbers = #tpu.dot_dimension_numbers<[1], [0], [0], [1], [0, 0, 1, 1], [], []>} : vector<64x64xf32>, vector<64x1xf32>, vector<64x1xf32> -> vector<64x1xf32>
    %226 = tpu.reciprocal %225 {approx = true} : vector<64x1xf32> -> vector<64x1xf32>
    %227 = vector.broadcast %226 : vector<64x1xf32> to vector<64x64xf32>
    %228 = arith.mulf %224, %227 : vector<64x64xf32>
    %cst_81 = arith.constant dense<0.000000e+00> : vector<64x16xf32>
    %229 = tpu.matmul %228, %208, %cst_81 {dimension_numbers = #tpu.dot_dimension_numbers<[1], [0], [0], [1], [0, 0, 1, 1], [], []>} : vector<64x64xf32>, vector<64x16xf32>, vector<64x16xf32> -> vector<64x16xf32>
    %230 = vector.extract_strided_slice %159 {offsets = [0, 48], sizes = [64, 16], strides = [1, 1]} : vector<64x64xf32> to vector<64x16xf32>
    %231 = vector.extract_strided_slice %161 {offsets = [0, 3], sizes = [64, 1], strides = [1, 1]} : vector<64x4xf32> to vector<64x1xf32>
    %232 = vector.extract_strided_slice %163 {offsets = [3, 0], sizes = [1, 64], strides = [1, 1]} : vector<4x64xf32> to vector<1x64xf32>
    %233 = vector.broadcast %231 : vector<64x1xf32> to vector<64x64xf32>
    %234 = vector.broadcast %232 : vector<1x64xf32> to vector<64x64xf32>
    %235 = arith.addf %233, %234 : vector<64x64xf32>
    %cst_82 = arith.constant 0.000000e+00 : f32
    %236 = vector.broadcast %cst_82 : f32 to vector<64x64xf32>
    %237 = arith.cmpf ogt, %235, %236 : vector<64x64xf32>
    %cst_83 = arith.constant 2.000000e-01 : f32
    %238 = vector.broadcast %cst_83 : f32 to vector<64x64xf32>
    %239 = arith.mulf %238, %235 : vector<64x64xf32>
    %240 = arith.select %237, %235, %239 : vector<64x64xi1>, vector<64x64xf32>
    %241 = arith.addf %240, %55 : vector<64x64xf32>
    %cst_84 = arith.constant dense<0xFF800000> : vector<64xf32>
    %242 = vector.multi_reduction <maximumf>, %241, %cst_84 [1] : vector<64x64xf32> to vector<64xf32>
    %243 = vector.shape_cast %242 : vector<64xf32> to vector<64x1xf32>
    %244 = vector.broadcast %243 : vector<64x1xf32> to vector<64x64xf32>
    %245 = arith.subf %241, %244 : vector<64x64xf32>
    %246 = math.exp %245 : vector<64x64xf32>
    %cst_85 = arith.constant dense<0.000000e+00> : vector<64x1xf32>
    %247 = tpu.matmul %246, %56, %cst_85 {dimension_numbers = #tpu.dot_dimension_numbers<[1], [0], [0], [1], [0, 0, 1, 1], [], []>} : vector<64x64xf32>, vector<64x1xf32>, vector<64x1xf32> -> vector<64x1xf32>
    %248 = tpu.reciprocal %247 {approx = true} : vector<64x1xf32> -> vector<64x1xf32>
    %249 = vector.broadcast %248 : vector<64x1xf32> to vector<64x64xf32>
    %250 = arith.mulf %246, %249 : vector<64x64xf32>
    %cst_86 = arith.constant dense<0.000000e+00> : vector<64x16xf32>
    %251 = tpu.matmul %250, %230, %cst_86 {dimension_numbers = #tpu.dot_dimension_numbers<[1], [0], [0], [1], [0, 0, 1, 1], [], []>} : vector<64x64xf32>, vector<64x16xf32>, vector<64x16xf32> -> vector<64x16xf32>
    %252 = tpu.concatenate %185, %207, %229, %251 in 1 : vector<64x16xf32>, vector<64x16xf32>, vector<64x16xf32>, vector<64x16xf32> -> vector<64x64xf32>
    %cst_87 = arith.constant 0.000000e+00 : f32
    %253 = vector.broadcast %cst_87 : f32 to vector<64x64xf32>
    %254 = arith.cmpf ogt, %252, %253 : vector<64x64xf32>
    %255 = math.exp %252 : vector<64x64xf32>
    %cst_88 = arith.constant 1.000000e+00 : f32
    %256 = vector.broadcast %cst_88 : f32 to vector<64x64xf32>
    %257 = arith.subf %255, %256 : vector<64x64xf32>
    %258 = arith.select %254, %252, %257 : vector<64x64xi1>, vector<64x64xf32>
    %c0_89 = arith.constant 0 : index
    %c0_90 = arith.constant 0 : index
    %259 = vector.load %arg15[%c0_89, %c0_90] : memref<64x16xf32, #tpu.memory_space<vmem>>, vector<64x16xf32>
    %cst_91 = arith.constant dense<0.000000e+00> : vector<64x16xf32>
    %260 = tpu.matmul %258, %259, %cst_91 {dimension_numbers = #tpu.dot_dimension_numbers<[1], [0], [0], [1], [0, 0, 1, 1], [], []>} : vector<64x64xf32>, vector<64x16xf32>, vector<64x16xf32> -> vector<64x16xf32>
    %c0_92 = arith.constant 0 : index
    %c0_93 = arith.constant 0 : index
    %261 = vector.load %arg16[%c0_92, %c0_93] : memref<1x16xf32, #tpu.memory_space<vmem>>, vector<1x16xf32>
    %cst_94 = arith.constant dense<0.000000e+00> : vector<64x1xf32>
    %262 = tpu.matmul %260, %261, %cst_94 {dimension_numbers = #tpu.dot_dimension_numbers<[1], [1], [0], [0], [0, 0, 1, 0], [], []>} : vector<64x16xf32>, vector<1x16xf32>, vector<64x1xf32> -> vector<64x1xf32>
    %c0_95 = arith.constant 0 : index
    %c0_96 = arith.constant 0 : index
    %263 = vector.load %arg17[%c0_95, %c0_96] : memref<1x16xf32, #tpu.memory_space<vmem>>, vector<1x16xf32>
    %cst_97 = arith.constant dense<0.000000e+00> : vector<1x64xf32>
    %264 = tpu.matmul %263, %260, %cst_97 {dimension_numbers = #tpu.dot_dimension_numbers<[1], [1], [0], [0], [0, 0, 1, 0], [], []>} : vector<1x16xf32>, vector<64x16xf32>, vector<1x64xf32> -> vector<1x64xf32>
    %265 = vector.broadcast %262 : vector<64x1xf32> to vector<64x64xf32>
    %266 = vector.broadcast %264 : vector<1x64xf32> to vector<64x64xf32>
    %267 = arith.addf %265, %266 : vector<64x64xf32>
    %cst_98 = arith.constant 0.000000e+00 : f32
    %268 = vector.broadcast %cst_98 : f32 to vector<64x64xf32>
    %269 = arith.cmpf ogt, %267, %268 : vector<64x64xf32>
    %cst_99 = arith.constant 2.000000e-01 : f32
    %270 = vector.broadcast %cst_99 : f32 to vector<64x64xf32>
    %271 = arith.mulf %270, %267 : vector<64x64xf32>
    %272 = arith.select %269, %267, %271 : vector<64x64xi1>, vector<64x64xf32>
    %273 = arith.addf %272, %55 : vector<64x64xf32>
    %cst_100 = arith.constant dense<0xFF800000> : vector<64xf32>
    %274 = vector.multi_reduction <maximumf>, %273, %cst_100 [1] : vector<64x64xf32> to vector<64xf32>
    %275 = vector.shape_cast %274 : vector<64xf32> to vector<64x1xf32>
    %276 = vector.broadcast %275 : vector<64x1xf32> to vector<64x64xf32>
    %277 = arith.subf %273, %276 : vector<64x64xf32>
    %278 = math.exp %277 : vector<64x64xf32>
    %cst_101 = arith.constant dense<0.000000e+00> : vector<64x1xf32>
    %279 = tpu.matmul %278, %56, %cst_101 {dimension_numbers = #tpu.dot_dimension_numbers<[1], [0], [0], [1], [0, 0, 1, 1], [], []>} : vector<64x64xf32>, vector<64x1xf32>, vector<64x1xf32> -> vector<64x1xf32>
    %280 = tpu.reciprocal %279 {approx = true} : vector<64x1xf32> -> vector<64x1xf32>
    %281 = vector.broadcast %280 : vector<64x1xf32> to vector<64x64xf32>
    %282 = arith.mulf %278, %281 : vector<64x64xf32>
    %cst_102 = arith.constant dense<0.000000e+00> : vector<64x16xf32>
    %283 = tpu.matmul %282, %260, %cst_102 {dimension_numbers = #tpu.dot_dimension_numbers<[1], [0], [0], [1], [0, 0, 1, 1], [], []>} : vector<64x64xf32>, vector<64x16xf32>, vector<64x16xf32> -> vector<64x16xf32>
    %cst_103 = arith.constant 1.562500e-02 : f32
    %284 = vector.broadcast %cst_103 : f32 to vector<1x64xf32>
    %cst_104 = arith.constant dense<0.000000e+00> : vector<1x16xf32>
    %285 = tpu.matmul %284, %283, %cst_104 {dimension_numbers = #tpu.dot_dimension_numbers<[1], [0], [0], [1], [0, 0, 1, 1], [], []>} : vector<1x64xf32>, vector<64x16xf32>, vector<1x16xf32> -> vector<1x16xf32>
    %c0_105 = arith.constant 0 : index
    %c0_106 = arith.constant 0 : index
    %286 = vector.load %arg18[%c0_105, %c0_106] : memref<16x10xf32, #tpu.memory_space<vmem>>, vector<16x10xf32>
    %cst_107 = arith.constant dense<0.000000e+00> : vector<1x10xf32>
    %287 = tpu.matmul %285, %286, %cst_107 {dimension_numbers = #tpu.dot_dimension_numbers<[1], [0], [0], [1], [0, 0, 1, 1], [], []>} : vector<1x16xf32>, vector<16x10xf32>, vector<1x10xf32> -> vector<1x10xf32>
    %c0_108 = arith.constant 0 : index
    %c0_109 = arith.constant 0 : index
    %288 = vector.load %arg19[%c0_108, %c0_109] : memref<1x10xf32, #tpu.memory_space<vmem>>, vector<1x10xf32>
    %289 = arith.addf %287, %288 : vector<1x10xf32>
    %cst_110 = arith.constant dense<0xFF800000> : vector<1xf32>
    %290 = vector.multi_reduction <maximumf>, %289, %cst_110 [1] : vector<1x10xf32> to vector<1xf32>
    %291 = vector.shape_cast %290 : vector<1xf32> to vector<1x1xf32>
    %292 = vector.broadcast %291 : vector<1x1xf32> to vector<1x10xf32>
    %293 = arith.subf %289, %292 : vector<1x10xf32>
    %294 = math.exp %293 : vector<1x10xf32>
    %cst_111 = arith.constant dense<0.000000e+00> : vector<1xf32>
    %295 = vector.multi_reduction <add>, %294, %cst_111 [1] : vector<1x10xf32> to vector<1xf32>
    %296 = vector.shape_cast %295 : vector<1xf32> to vector<1x1xf32>
    %297 = math.log %296 : vector<1x1xf32>
    %298 = vector.broadcast %297 : vector<1x1xf32> to vector<1x10xf32>
    %299 = arith.subf %293, %298 : vector<1x10xf32>
    %c0_112 = arith.constant 0 : index
    %c0_113 = arith.constant 0 : index
    %c0_114 = arith.constant 0 : index
    %300 = vector.load %arg20[%c0_112, %c0_113, %c0_114] : memref<1x1x10xf32, #tpu.memory_space<vmem>>, vector<1x1x10xf32>
    %301 = vector.shape_cast %300 : vector<1x1x10xf32> to vector<1x10xf32>
    %302 = vector.shape_cast %299 : vector<1x10xf32> to vector<1x1x10xf32>
    tpu.vector_store %arg20[%c0_112, %c0_113, %c0_114], %302 {strides = array<i32>} : memref<1x1x10xf32, #tpu.memory_space<vmem>>, vector<1x1x10xf32>,
    return
  }
  func.func @transform_0(%arg0: i32) -> (i32, i32, i32) {
    %c0_i32 = arith.constant 0 : i32
    %c0_i32_0 = arith.constant 0 : i32
    %c0_i32_1 = arith.constant 0 : i32
    return %arg0, %c0_i32, %c0_i32_0 : i32, i32, i32
  }
  func.func @transform_1(%arg0: i32) -> (i32, i32) {
    %c0_i32 = arith.constant 0 : i32
    %c0_i32_0 = arith.constant 0 : i32
    %c0_i32_1 = arith.constant 0 : i32
    return %c0_i32, %c0_i32_0 : i32, i32
  }
  func.func @transform_2(%arg0: i32) -> (i32, i32) {
    %c0_i32 = arith.constant 0 : i32
    %c0_i32_0 = arith.constant 0 : i32
    %c0_i32_1 = arith.constant 0 : i32
    return %c0_i32, %c0_i32_0 : i32, i32
  }
  func.func @transform_3(%arg0: i32) -> (i32, i32) {
    %c0_i32 = arith.constant 0 : i32
    %c0_i32_0 = arith.constant 0 : i32
    %c0_i32_1 = arith.constant 0 : i32
    return %c0_i32, %c0_i32_0 : i32, i32
  }
  func.func @transform_4(%arg0: i32) -> (i32, i32) {
    %c0_i32 = arith.constant 0 : i32
    %c0_i32_0 = arith.constant 0 : i32
    %c0_i32_1 = arith.constant 0 : i32
    return %c0_i32, %c0_i32_0 : i32, i32
  }
  func.func @transform_5(%arg0: i32) -> (i32, i32) {
    %c0_i32 = arith.constant 0 : i32
    %c0_i32_0 = arith.constant 0 : i32
    %c0_i32_1 = arith.constant 0 : i32
    return %c0_i32, %c0_i32_0 : i32, i32
  }
  func.func @transform_6(%arg0: i32) -> (i32, i32) {
    %c0_i32 = arith.constant 0 : i32
    %c0_i32_0 = arith.constant 0 : i32
    %c0_i32_1 = arith.constant 0 : i32
    return %c0_i32, %c0_i32_0 : i32, i32
  }
  func.func @transform_7(%arg0: i32) -> (i32, i32) {
    %c0_i32 = arith.constant 0 : i32
    %c0_i32_0 = arith.constant 0 : i32
    %c0_i32_1 = arith.constant 0 : i32
    return %c0_i32, %c0_i32_0 : i32, i32
  }
  func.func @transform_8(%arg0: i32) -> (i32, i32) {
    %c0_i32 = arith.constant 0 : i32
    %c0_i32_0 = arith.constant 0 : i32
    %c0_i32_1 = arith.constant 0 : i32
    return %c0_i32, %c0_i32_0 : i32, i32
  }
  func.func @transform_9(%arg0: i32) -> (i32, i32) {
    %c0_i32 = arith.constant 0 : i32
    %c0_i32_0 = arith.constant 0 : i32
    %c0_i32_1 = arith.constant 0 : i32
    return %c0_i32, %c0_i32_0 : i32, i32
  }
  func.func @transform_10(%arg0: i32) -> (i32, i32) {
    %c0_i32 = arith.constant 0 : i32
    %c0_i32_0 = arith.constant 0 : i32
    %c0_i32_1 = arith.constant 0 : i32
    return %c0_i32, %c0_i32_0 : i32, i32
  }
  func.func @transform_11(%arg0: i32) -> (i32, i32) {
    %c0_i32 = arith.constant 0 : i32
    %c0_i32_0 = arith.constant 0 : i32
    %c0_i32_1 = arith.constant 0 : i32
    return %c0_i32, %c0_i32_0 : i32, i32
  }
  func.func @transform_12(%arg0: i32) -> (i32, i32) {
    %c0_i32 = arith.constant 0 : i32
    %c0_i32_0 = arith.constant 0 : i32
    %c0_i32_1 = arith.constant 0 : i32
    return %c0_i32, %c0_i32_0 : i32, i32
  }
  func.func @transform_13(%arg0: i32) -> (i32, i32) {
    %c0_i32 = arith.constant 0 : i32
    %c0_i32_0 = arith.constant 0 : i32
    %c0_i32_1 = arith.constant 0 : i32
    return %c0_i32, %c0_i32_0 : i32, i32
  }
  func.func @transform_14(%arg0: i32) -> (i32, i32) {
    %c0_i32 = arith.constant 0 : i32
    %c0_i32_0 = arith.constant 0 : i32
    %c0_i32_1 = arith.constant 0 : i32
    return %c0_i32, %c0_i32_0 : i32, i32
  }
  func.func @transform_15(%arg0: i32) -> (i32, i32) {
    %c0_i32 = arith.constant 0 : i32
    %c0_i32_0 = arith.constant 0 : i32
    %c0_i32_1 = arith.constant 0 : i32
    return %c0_i32, %c0_i32_0 : i32, i32
  }
  func.func @transform_16(%arg0: i32) -> (i32, i32) {
    %c0_i32 = arith.constant 0 : i32
    %c0_i32_0 = arith.constant 0 : i32
    %c0_i32_1 = arith.constant 0 : i32
    return %c0_i32, %c0_i32_0 : i32, i32
  }
  func.func @transform_17(%arg0: i32) -> (i32, i32) {
    %c0_i32 = arith.constant 0 : i32
    %c0_i32_0 = arith.constant 0 : i32
    %c0_i32_1 = arith.constant 0 : i32
    return %c0_i32, %c0_i32_0 : i32, i32
  }
  func.func @transform_18(%arg0: i32) -> (i32, i32) {
    %c0_i32 = arith.constant 0 : i32
    %c0_i32_0 = arith.constant 0 : i32
    %c0_i32_1 = arith.constant 0 : i32
    return %c0_i32, %c0_i32_0 : i32, i32
  }
  func.func @transform_19(%arg0: i32) -> (i32, i32, i32) {
    %c0_i32 = arith.constant 0 : i32
    %c0_i32_0 = arith.constant 0 : i32
    %c0_i32_1 = arith.constant 0 : i32
    return %arg0, %c0_i32, %c0_i32_0 : i32, i32, i32
  }
}

</mosaic_0001>

<llo_original>
// kernel: tpu_custom_call.1
$region0: #{tpu_custom_call.1}
  #allocation0 [shape = 'u32[]', space=smem, size = 0x4, offset = 0x4, fixed_abs, tag = 'smem constant byte address 0x4 - core index']
  #allocation1 [shape = 'u32[144,128]{1,0:T(1,128)}', space=vmem, size = 0x12000, scoped, tag = 'internal scratch']
  %s0 = inlined_call_operand.vmem [shape: f32[2,64,2352], index: 0, kind: input, shape index: {}]
  %s1 = inlined_call_operand.vmem [shape: f32[64,64], index: 1, kind: input, shape index: {}]
  %s2 = inlined_call_operand.vmem [shape: f32[1,2352], index: 2, kind: input, shape index: {}]
  %s3 = inlined_call_operand.vmem [shape: f32[1,2352], index: 3, kind: input, shape index: {}]
  %s4 = inlined_call_operand.vmem [shape: f32[2352,32], index: 4, kind: input, shape index: {}]
  %s5 = inlined_call_operand.vmem [shape: f32[1,32], index: 5, kind: input, shape index: {}]
  %s6 = inlined_call_operand.vmem [shape: f32[1,32], index: 6, kind: input, shape index: {}]
  %s7 = inlined_call_operand.vmem [shape: f32[1,32], index: 7, kind: input, shape index: {}]
  %s8 = inlined_call_operand.vmem [shape: f32[32,64], index: 8, kind: input, shape index: {}]
  %s9 = inlined_call_operand.vmem [shape: f32[4,64], index: 9, kind: input, shape index: {}]
  %s10 = inlined_call_operand.vmem [shape: f32[4,64], index: 10, kind: input, shape index: {}]
  %s11 = inlined_call_operand.vmem [shape: f32[64,64], index: 11, kind: input, shape index: {}]
  %s12 = inlined_call_operand.vmem [shape: f32[4,64], index: 12, kind: input, shape index: {}]
  %s13 = inlined_call_operand.vmem [shape: f32[4,64], index: 13, kind: input, shape index: {}]
  %s14 = inlined_call_operand.vmem [shape: f32[64,16], index: 14, kind: input, shape index: {}]
  %s15 = inlined_call_operand.vmem [shape: f32[1,16], index: 15, kind: input, shape index: {}]
  %s16 = inlined_call_operand.vmem [shape: f32[1,16], index: 16, kind: input, shape index: {}]
  %s17 = inlined_call_operand.vmem [shape: f32[16,10], index: 17, kind: input, shape index: {}]
  %s18 = inlined_call_operand.vmem [shape: f32[1,10], index: 18, kind: input, shape index: {}]
  %s19 = inlined_call_operand.hbm [shape: f32[2,1,10], index: 19, kind: output, shape index: {}]
  %s20 = sld [smem:[#allocation0]]
  $region109: #{tpu_custom_call.1} parent=0
    _
  %s22 = ssub.s32 1, %s20
  %s23 = scalar_select 0, %s22, %s20
  $region1: #{tpu_custom_call.1} parent=0
    #allocation2 [shape = 'u8[1024]{0}', space=vmem, size = 0x400, scoped, tag = 'output window, operand 0']
    #allocation3 [shape = 's32[2]{0}', space=sflag, size = 0x8, scoped, tag = 'scoped memory for tpu_custom_call.1']
    %24 = vsyncpa [#allocation3], 0
    %s25 = scalar_lea.sflag [#allocation3], 1
    %26 = vsyncpa %s25, 0
    loop: start=0, step=1, limit=4
    $region2: #{tpu_custom_call.1} parent=1 // loop_pre_header
      _
    $region3: #{tpu_custom_call.1} parent=1 // loop_header
      %s28 = sphi 0, %s32
      %p29 = scmp.ge.s32.totalorder %s28, 4
      %s38 = sphi 0, %s40
      %s41 = sphi 0, %s38
      %s42 = sphi 0, %s41
      %s58 = sphi 0, %s42
      %s62 = sphi 0, %s62
      %s64 = sphi 0, %s62
      %s65 = sphi 0, %s64
      %s79 = sphi 0, %s65
      %s83 = sphi 0, %s83
      %s85 = sphi 0, %s83
      %s86 = sphi 0, %s85
      %s100 = sphi 0, %s86
      %s104 = sphi 0, %s104
      %s106 = sphi 0, %s104
      %s107 = sphi 0, %s106
      %s121 = sphi 0, %s107
      %s125 = sphi 0, %s125
      %s127 = sphi 0, %s125
      %s128 = sphi 0, %s127
      %s142 = sphi 0, %s128
      %s146 = sphi 0, %s146
      %s148 = sphi 0, %s146
      %s149 = sphi 0, %s148
      %s163 = sphi 0, %s149
      %s167 = sphi 0, %s167
      %s169 = sphi 0, %s167
      %s170 = sphi 0, %s169
      %s184 = sphi 0, %s170
      %s188 = sphi 0, %s188
      %s190 = sphi 0, %s188
      %s191 = sphi 0, %s190
      %s205 = sphi 0, %s191
      %s209 = sphi 0, %s209
      %s211 = sphi 0, %s209
      %s212 = sphi 0, %s211
      %s226 = sphi 0, %s212
      %s230 = sphi 0, %s230
      %s232 = sphi 0, %s230
      %s233 = sphi 0, %s232
      %s247 = sphi 0, %s233
      %s251 = sphi 0, %s251
      %s253 = sphi 0, %s251
      %s254 = sphi 0, %s253
      %s268 = sphi 0, %s254
      %s272 = sphi 0, %s272
      %s274 = sphi 0, %s272
      %s275 = sphi 0, %s274
      %s289 = sphi 0, %s275
      %s293 = sphi 0, %s293
      %s295 = sphi 0, %s293
      %s296 = sphi 0, %s295
      %s310 = sphi 0, %s296
      %s314 = sphi 0, %s314
      %s316 = sphi 0, %s314
      %s317 = sphi 0, %s316
      %s331 = sphi 0, %s317
      %s335 = sphi 0, %s335
      %s337 = sphi 0, %s335
      %s338 = sphi 0, %s337
      %s352 = sphi 0, %s338
      %s356 = sphi 0, %s356
      %s358 = sphi 0, %s356
      %s359 = sphi 0, %s358
      %s373 = sphi 0, %s359
      %s377 = sphi 0, %s377
      %s379 = sphi 0, %s377
      %s380 = sphi 0, %s379
      %s394 = sphi 0, %s380
      %s398 = sphi 0, %s398
      %s400 = sphi 0, %s398
      %s401 = sphi 0, %s400
      %s415 = sphi 0, %s401
      %s419 = sphi 0, %s419
      %s421 = sphi 0, %s419
      %s422 = sphi 0, %s421
      %s436 = sphi 0, %s422
      %s442 = sphi 0, %s444
      %s445 = sphi 0, %s442
      %s446 = sphi 0, %s445
      %s462 = sphi 0, %s446
    $region4: #{tpu_custom_call.1} parent=1 // loop_header_branch
      %31 = sbr.rel (%p29) target = $region8
    $region5: #{tpu_custom_call.1} parent=1 // loop_body
      %s33 = ssub.s32 %s28, 1
      %s34 = ssub.s32 %s28, 2
      %s35 = sadd.s32 %s28, 1
      %s36 = ssub.s32 %s28, %s35
      %p37 = scmp.eq.s32.totalorder %s36, 0
      %s39 = sadd.s32 %s38, 1
      %s40 = scalar_select %p37, %s38, %s39
      %p43 = pneg %p37
      %p44 = scmp.eq.s32.totalorder %s28, 1
      %p45 = por %p43, %p44
      %p46 = scmp.ne.s32.totalorder %s38, %s41
      %p47 = scmp.eq.s32.totalorder %s28, 0
      %p48 = por %p46, %p47
      %p49 = scmp.ne.s32.totalorder %s38, %s41
      %p50 = scmp.eq.s32.totalorder %s33, 1
      %p51 = por %p49, %p50
      %p52 = scmp.ne.s32.totalorder %s41, %s42
      %p53 = scmp.eq.s32.totalorder %s33, 0
      %p54 = por %p52, %p53
      %p55 = scmp.ne.s32.totalorder %s41, %s42
      %p56 = scmp.eq.s32.totalorder %s34, 1
      %p57 = por %p55, %p56
      %p59 = scmp.ne.s32.totalorder %s42, %s58
      %p60 = scmp.eq.s32.totalorder %s34, 0
      %p61 = por %p59, %p60
      %s63 = sadd.s32 %s62, 1
      %p66 = scmp.eq.s32.totalorder %s28, 1
      %p67 = scmp.ne.s32.totalorder %s62, %s64
      %p68 = scmp.eq.s32.totalorder %s28, 0
      %p69 = por %p67, %p68
      %p70 = scmp.ne.s32.totalorder %s62, %s64
      %p71 = scmp.eq.s32.totalorder %s33, 1
      %p72 = por %p70, %p71
      %p73 = scmp.ne.s32.totalorder %s64, %s65
      %p74 = scmp.eq.s32.totalorder %s33, 0
      %p75 = por %p73, %p74
      %p76 = scmp.ne.s32.totalorder %s64, %s65
      %p77 = scmp.eq.s32.totalorder %s34, 1
      %p78 = por %p76, %p77
      %p80 = scmp.ne.s32.totalorder %s65, %s79
      %p81 = scmp.eq.s32.totalorder %s34, 0
      %p82 = por %p80, %p81
      %s84 = sadd.s32 %s83, 1
      %p87 = scmp.eq.s32.totalorder %s28, 1
      %p88 = scmp.ne.s32.totalorder %s83, %s85
      %p89 = scmp.eq.s32.totalorder %s28, 0
      %p90 = por %p88, %p89
      %p91 = scmp.ne.s32.totalorder %s83, %s85
      %p92 = scmp.eq.s32.totalorder %s33, 1
      %p93 = por %p91, %p92
      %p94 = scmp.ne.s32.totalorder %s85, %s86
      %p95 = scmp.eq.s32.totalorder %s33, 0
      %p96 = por %p94, %p95
      %p97 = scmp.ne.s32.totalorder %s85, %s86
      %p98 = scmp.eq.s32.totalorder %s34, 1
      %p99 = por %p97, %p98
      %p101 = scmp.ne.s32.totalorder %s86, %s100
      %p102 = scmp.eq.s32.totalorder %s34, 0
      %p103 = por %p101, %p102
      %s105 = sadd.s32 %s104, 1
      %p108 = scmp.eq.s32.totalorder %s28, 1
      %p109 = scmp.ne.s32.totalorder %s104, %s106
      %p110 = scmp.eq.s32.totalorder %s28, 0
      %p111 = por %p109, %p110
      %p112 = scmp.ne.s32.totalorder %s104, %s106
      %p113 = scmp.eq.s32.totalorder %s33, 1
      %p114 = por %p112, %p113
      %p115 = scmp.ne.s32.totalorder %s106, %s107
      %p116 = scmp.eq.s32.totalorder %s33, 0
      %p117 = por %p115, %p116
      %p118 = scmp.ne.s32.totalorder %s106, %s107
      %p119 = scmp.eq.s32.totalorder %s34, 1
      %p120 = por %p118, %p119
      %p122 = scmp.ne.s32.totalorder %s107, %s121
      %p123 = scmp.eq.s32.totalorder %s34, 0
      %p124 = por %p122, %p123
      %s126 = sadd.s32 %s125, 1
      %p129 = scmp.eq.s32.totalorder %s28, 1
      %p130 = scmp.ne.s32.totalorder %s125, %s127
      %p131 = scmp.eq.s32.totalorder %s28, 0
      %p132 = por %p130, %p131
      %p133 = scmp.ne.s32.totalorder %s125, %s127
      %p134 = scmp.eq.s32.totalorder %s33, 1
      %p135 = por %p133, %p134
      %p136 = scmp.ne.s32.totalorder %s127, %s128
      %p137 = scmp.eq.s32.totalorder %s33, 0
      %p138 = por %p136, %p137
      %p139 = scmp.ne.s32.totalorder %s127, %s128
      %p140 = scmp.eq.s32.totalorder %s34, 1
      %p141 = por %p139, %p140
      %p143 = scmp.ne.s32.totalorder %s128, %s142
      %p144 = scmp.eq.s32.totalorder %s34, 0
      %p145 = por %p143, %p144
      %s147 = sadd.s32 %s146, 1
      %p150 = scmp.eq.s32.totalorder %s28, 1
      %p151 = scmp.ne.s32.totalorder %s146, %s148
      %p152 = scmp.eq.s32.totalorder %s28, 0
      %p153 = por %p151, %p152
      %p154 = scmp.ne.s32.totalorder %s146, %s148
      %p155 = scmp.eq.s32.totalorder %s33, 1
      %p156 = por %p154, %p155
      %p157 = scmp.ne.s32.totalorder %s148, %s149
      %p158 = scmp.eq.s32.totalorder %s33, 0
      %p159 = por %p157, %p158
      %p160 = scmp.ne.s32.totalorder %s148, %s149
      %p161 = scmp.eq.s32.totalorder %s34, 1
      %p162 = por %p160, %p161
      %p164 = scmp.ne.s32.totalorder %s149, %s163
      %p165 = scmp.eq.s32.totalorder %s34, 0
      %p166 = por %p164, %p165
      %s168 = sadd.s32 %s167, 1
      %p171 = scmp.eq.s32.totalorder %s28, 1
      %p172 = scmp.ne.s32.totalorder %s167, %s169
      %p173 = scmp.eq.s32.totalorder %s28, 0
      %p174 = por %p172, %p173
      %p175 = scmp.ne.s32.totalorder %s167, %s169
      %p176 = scmp.eq.s32.totalorder %s33, 1
      %p177 = por %p175, %p176
      %p178 = scmp.ne.s32.totalorder %s169, %s170
      %p179 = scmp.eq.s32.totalorder %s33, 0
      %p180 = por %p178, %p179
      %p181 = scmp.ne.s32.totalorder %s169, %s170
      %p182 = scmp.eq.s32.totalorder %s34, 1
      %p183 = por %p181, %p182
      %p185 = scmp.ne.s32.totalorder %s170, %s184
      %p186 = scmp.eq.s32.totalorder %s34, 0
      %p187 = por %p185, %p186
      %s189 = sadd.s32 %s188, 1
      %p192 = scmp.eq.s32.totalorder %s28, 1
      %p193 = scmp.ne.s32.totalorder %s188, %s190
      %p194 = scmp.eq.s32.totalorder %s28, 0
      %p195 = por %p193, %p194
      %p196 = scmp.ne.s32.totalorder %s188, %s190
      %p197 = scmp.eq.s32.totalorder %s33, 1
      %p198 = por %p196, %p197
      %p199 = scmp.ne.s32.totalorder %s190, %s191
      %p200 = scmp.eq.s32.totalorder %s33, 0
      %p201 = por %p199, %p200
      %p202 = scmp.ne.s32.totalorder %s190, %s191
      %p203 = scmp.eq.s32.totalorder %s34, 1
      %p204 = por %p202, %p203
      %p206 = scmp.ne.s32.totalorder %s191, %s205
      %p207 = scmp.eq.s32.totalorder %s34, 0
      %p208 = por %p206, %p207
      %s210 = sadd.s32 %s209, 1
      %p213 = scmp.eq.s32.totalorder %s28, 1
      %p214 = scmp.ne.s32.totalorder %s209, %s211
      %p215 = scmp.eq.s32.totalorder %s28, 0
      %p216 = por %p214, %p215
      %p217 = scmp.ne.s32.totalorder %s209, %s211
      %p218 = scmp.eq.s32.totalorder %s33, 1
      %p219 = por %p217, %p218
      %p220 = scmp.ne.s32.totalorder %s211, %s212
      %p221 = scmp.eq.s32.totalorder %s33, 0
      %p222 = por %p220, %p221
      %p223 = scmp.ne.s32.totalorder %s211, %s212
      %p224 = scmp.eq.s32.totalorder %s34, 1
      %p225 = por %p223, %p224
      %p227 = scmp.ne.s32.totalorder %s212, %s226
      %p228 = scmp.eq.s32.totalorder %s34, 0
      %p229 = por %p227, %p228
      %s231 = sadd.s32 %s230, 1
      %p234 = scmp.eq.s32.totalorder %s28, 1
      %p235 = scmp.ne.s32.totalorder %s230, %s232
      %p236 = scmp.eq.s32.totalorder %s28, 0
      %p237 = por %p235, %p236
      %p238 = scmp.ne.s32.totalorder %s230, %s232
      %p239 = scmp.eq.s32.totalorder %s33, 1
      %p240 = por %p238, %p239
      %p241 = scmp.ne.s32.totalorder %s232, %s233
      %p242 = scmp.eq.s32.totalorder %s33, 0
      %p243 = por %p241, %p242
      %p244 = scmp.ne.s32.totalorder %s232, %s233
      %p245 = scmp.eq.s32.totalorder %s34, 1
      %p246 = por %p244, %p245
      %p248 = scmp.ne.s32.totalorder %s233, %s247
      %p249 = scmp.eq.s32.totalorder %s34, 0
      %p250 = por %p248, %p249
      %s252 = sadd.s32 %s251, 1
      %p255 = scmp.eq.s32.totalorder %s28, 1
      %p256 = scmp.ne.s32.totalorder %s251, %s253
      %p257 = scmp.eq.s32.totalorder %s28, 0
      %p258 = por %p256, %p257
      %p259 = scmp.ne.s32.totalorder %s251, %s253
      %p260 = scmp.eq.s32.totalorder %s33, 1
      %p261 = por %p259, %p260
      %p262 = scmp.ne.s32.totalorder %s253, %s254
      %p263 = scmp.eq.s32.totalorder %s33, 0
      %p264 = por %p262, %p263
      %p265 = scmp.ne.s32.totalorder %s253, %s254
      %p266 = scmp.eq.s32.totalorder %s34, 1
      %p267 = por %p265, %p266
      %p269 = scmp.ne.s32.totalorder %s254, %s268
      %p270 = scmp.eq.s32.totalorder %s34, 0
      %p271 = por %p269, %p270
      %s273 = sadd.s32 %s272, 1
      %p276 = scmp.eq.s32.totalorder %s28, 1
      %p277 = scmp.ne.s32.totalorder %s272, %s274
      %p278 = scmp.eq.s32.totalorder %s28, 0
      %p279 = por %p277, %p278
      %p280 = scmp.ne.s32.totalorder %s272, %s274
      %p281 = scmp.eq.s32.totalorder %s33, 1
      %p282 = por %p280, %p281
      %p283 = scmp.ne.s32.totalorder %s274, %s275
      %p284 = scmp.eq.s32.totalorder %s33, 0
      %p285 = por %p283, %p284
      %p286 = scmp.ne.s32.totalorder %s274, %s275
      %p287 = scmp.eq.s32.totalorder %s34, 1
      %p288 = por %p286, %p287
      %p290 = scmp.ne.s32.totalorder %s275, %s289
      %p291 = scmp.eq.s32.totalorder %s34, 0
      %p292 = por %p290, %p291
      %s294 = sadd.s32 %s293, 1
      %p297 = scmp.eq.s32.totalorder %s28, 1
      %p298 = scmp.ne.s32.totalorder %s293, %s295
      %p299 = scmp.eq.s32.totalorder %s28, 0
      %p300 = por %p298, %p299
      %p301 = scmp.ne.s32.totalorder %s293, %s295
      %p302 = scmp.eq.s32.totalorder %s33, 1
      %p303 = por %p301, %p302
      %p304 = scmp.ne.s32.totalorder %s295, %s296
      %p305 = scmp.eq.s32.totalorder %s33, 0
      %p306 = por %p304, %p305
      %p307 = scmp.ne.s32.totalorder %s295, %s296
      %p308 = scmp.eq.s32.totalorder %s34, 1
      %p309 = por %p307, %p308
      %p311 = scmp.ne.s32.totalorder %s296, %s310
      %p312 = scmp.eq.s32.totalorder %s34, 0
      %p313 = por %p311, %p312
      %s315 = sadd.s32 %s314, 1
      %p318 = scmp.eq.s32.totalorder %s28, 1
      %p319 = scmp.ne.s32.totalorder %s314, %s316
      %p320 = scmp.eq.s32.totalorder %s28, 0
      %p321 = por %p319, %p320
      %p322 = scmp.ne.s32.totalorder %s314, %s316
      %p323 = scmp.eq.s32.totalorder %s33, 1
      %p324 = por %p322, %p323
      %p325 = scmp.ne.s32.totalorder %s316, %s317
      %p326 = scmp.eq.s32.totalorder %s33, 0
      %p327 = por %p325, %p326
      %p328 = scmp.ne.s32.totalorder %s316, %s317
      %p329 = scmp.eq.s32.totalorder %s34, 1
      %p330 = por %p328, %p329
      %p332 = scmp.ne.s32.totalorder %s317, %s331
      %p333 = scmp.eq.s32.totalorder %s34, 0
      %p334 = por %p332, %p333
      %s336 = sadd.s32 %s335, 1
      %p339 = scmp.eq.s32.totalorder %s28, 1
      %p340 = scmp.ne.s32.totalorder %s335, %s337
      %p341 = scmp.eq.s32.totalorder %s28, 0
      %p342 = por %p340, %p341
      %p343 = scmp.ne.s32.totalorder %s335, %s337
      %p344 = scmp.eq.s32.totalorder %s33, 1
      %p345 = por %p343, %p344
      %p346 = scmp.ne.s32.totalorder %s337, %s338
      %p347 = scmp.eq.s32.totalorder %s33, 0
      %p348 = por %p346, %p347
      %p349 = scmp.ne.s32.totalorder %s337, %s338
      %p350 = scmp.eq.s32.totalorder %s34, 1
      %p351 = por %p349, %p350
      %p353 = scmp.ne.s32.totalorder %s338, %s352
      %p354 = scmp.eq.s32.totalorder %s34, 0
      %p355 = por %p353, %p354
      %s357 = sadd.s32 %s356, 1
      %p360 = scmp.eq.s32.totalorder %s28, 1
      %p361 = scmp.ne.s32.totalorder %s356, %s358
      %p362 = scmp.eq.s32.totalorder %s28, 0
      %p363 = por %p361, %p362
      %p364 = scmp.ne.s32.totalorder %s356, %s358
      %p365 = scmp.eq.s32.totalorder %s33, 1
      %p366 = por %p364, %p365
      %p367 = scmp.ne.s32.totalorder %s358, %s359
      %p368 = scmp.eq.s32.totalorder %s33, 0
      %p369 = por %p367, %p368
      %p370 = scmp.ne.s32.totalorder %s358, %s359
      %p371 = scmp.eq.s32.totalorder %s34, 1
      %p372 = por %p370, %p371
      %p374 = scmp.ne.s32.totalorder %s359, %s373
      %p375 = scmp.eq.s32.totalorder %s34, 0
      %p376 = por %p374, %p375
      %s378 = sadd.s32 %s377, 1
      %p381 = scmp.eq.s32.totalorder %s28, 1
      %p382 = scmp.ne.s32.totalorder %s377, %s379
      %p383 = scmp.eq.s32.totalorder %s28, 0
      %p384 = por %p382, %p383
      %p385 = scmp.ne.s32.totalorder %s377, %s379
      %p386 = scmp.eq.s32.totalorder %s33, 1
      %p387 = por %p385, %p386
      %p388 = scmp.ne.s32.totalorder %s379, %s380
      %p389 = scmp.eq.s32.totalorder %s33, 0
      %p390 = por %p388, %p389
      %p391 = scmp.ne.s32.totalorder %s379, %s380
      %p392 = scmp.eq.s32.totalorder %s34, 1
      %p393 = por %p391, %p392
      %p395 = scmp.ne.s32.totalorder %s380, %s394
      %p396 = scmp.eq.s32.totalorder %s34, 0
      %p397 = por %p395, %p396
      %s399 = sadd.s32 %s398, 1
      %p402 = scmp.eq.s32.totalorder %s28, 1
      %p403 = scmp.ne.s32.totalorder %s398, %s400
      %p404 = scmp.eq.s32.totalorder %s28, 0
      %p405 = por %p403, %p404
      %p406 = scmp.ne.s32.totalorder %s398, %s400
      %p407 = scmp.eq.s32.totalorder %s33, 1
      %p408 = por %p406, %p407
      %p409 = scmp.ne.s32.totalorder %s400, %s401
      %p410 = scmp.eq.s32.totalorder %s33, 0
      %p411 = por %p409, %p410
      %p412 = scmp.ne.s32.totalorder %s400, %s401
      %p413 = scmp.eq.s32.totalorder %s34, 1
      %p414 = por %p412, %p413
      %p416 = scmp.ne.s32.totalorder %s401, %s415
      %p417 = scmp.eq.s32.totalorder %s34, 0
      %p418 = por %p416, %p417
      %s420 = sadd.s32 %s419, 1
      %p423 = scmp.eq.s32.totalorder %s28, 1
      %p424 = scmp.ne.s32.totalorder %s419, %s421
      %p425 = scmp.eq.s32.totalorder %s28, 0
      %p426 = por %p424, %p425
      %p427 = scmp.ne.s32.totalorder %s419, %s421
      %p428 = scmp.eq.s32.totalorder %s33, 1
      %p429 = por %p427, %p428
      %p430 = scmp.ne.s32.totalorder %s421, %s422
      %p431 = scmp.eq.s32.totalorder %s33, 0
      %p432 = por %p430, %p431
      %p433 = scmp.ne.s32.totalorder %s421, %s422
      %p434 = scmp.eq.s32.totalorder %s34, 1
      %p435 = por %p433, %p434
      %p437 = scmp.ne.s32.totalorder %s422, %s436
      %p438 = scmp.eq.s32.totalorder %s34, 0
      %p439 = por %p437, %p438
      %s440 = ssub.s32 %s28, %s35
      %p441 = scmp.eq.s32.totalorder %s440, 0
      %s443 = sadd.s32 %s442, 1
      %s444 = scalar_select %p441, %s442, %s443
      %p447 = pneg %p441
      %p448 = scmp.eq.s32.totalorder %s28, 1
      %p449 = por %p447, %p448
      %p450 = scmp.ne.s32.totalorder %s442, %s445
      %p451 = scmp.eq.s32.totalorder %s28, 0
      %p452 = por %p450, %p451
      %p453 = scmp.ne.s32.totalorder %s442, %s445
      %p454 = scmp.eq.s32.totalorder %s33, 1
      %p455 = por %p453, %p454
      %p456 = scmp.ne.s32.totalorder %s445, %s446
      %p457 = scmp.eq.s32.totalorder %s33, 0
      %p458 = por %p456, %p457
      %p459 = scmp.ne.s32.totalorder %s445, %s446
      %p460 = scmp.eq.s32.totalorder %s34, 1
      %p461 = por %p459, %p460
      %p463 = scmp.ne.s32.totalorder %s446, %s462
      %p464 = scmp.eq.s32.totalorder %s34, 0
      %p465 = por %p463, %p464
      %p466 = scmp.le.s32.totalorder 1, %s28
      %p467 = scmp.lt.s32.totalorder %s28, 3
      %p468 = pnand %p466, %p467
      %p469 = pneg %p468
      // Predicated region
      $region9: #{tpu_custom_call.1} parent=5 // pred_check
        _
      $region10: #{tpu_custom_call.1} parent=5 // pred_check_branch
        %471 = sbr.rel (%p468) target = $region12
      $region11: #{tpu_custom_call.1} parent=5 // pred_region
        %s472 = ssub.s32 %s28, 1
        // Predicated region
        $region13: #{tpu_custom_call.1} parent=11 // pred_check
          %p473 = pneg %p75
        $region14: #{tpu_custom_call.1} parent=11 // pred_check_branch
          %475 = sbr.rel (%p473) target = $region16
        $region15: #{tpu_custom_call.1} parent=11 // pred_region
          _
        $region16: #{tpu_custom_call.1} parent=11 // pred_fallthru
          _
        // Predicated region
        $region17: #{tpu_custom_call.1} parent=11 // pred_check
          %p476 = pneg %p96
        $region18: #{tpu_custom_call.1} parent=11 // pred_check_branch
          %478 = sbr.rel (%p476) target = $region20
        $region19: #{tpu_custom_call.1} parent=11 // pred_region
          _
        $region20: #{tpu_custom_call.1} parent=11 // pred_fallthru
          _
        // Predicated region
        $region21: #{tpu_custom_call.1} parent=11 // pred_check
          %p479 = pneg %p117
        $region22: #{tpu_custom_call.1} parent=11 // pred_check_branch
          %481 = sbr.rel (%p479) target = $region24
        $region23: #{tpu_custom_call.1} parent=11 // pred_region
          _
        $region24: #{tpu_custom_call.1} parent=11 // pred_fallthru
          _
        // Predicated region
        $region25: #{tpu_custom_call.1} parent=11 // pred_check
          %p482 = pneg %p138
        $region26: #{tpu_custom_call.1} parent=11 // pred_check_branch
          %484 = sbr.rel (%p482) target = $region28
        $region27: #{tpu_custom_call.1} parent=11 // pred_region
          _
        $region28: #{tpu_custom_call.1} parent=11 // pred_fallthru
          _
        // Predicated region
        $region29: #{tpu_custom_call.1} parent=11 // pred_check
          %p485 = pneg %p159
        $region30: #{tpu_custom_call.1} parent=11 // pred_check_branch
          %487 = sbr.rel (%p485) target = $region32
        $region31: #{tpu_custom_call.1} parent=11 // pred_region
          _
        $region32: #{tpu_custom_call.1} parent=11 // pred_fallthru
          _
        // Predicated region
        $region33: #{tpu_custom_call.1} parent=11 // pred_check
          %p488 = pneg %p180
        $region34: #{tpu_custom_call.1} parent=11 // pred_check_branch
          %490 = sbr.rel (%p488) target = $region36
        $region35: #{tpu_custom_call.1} parent=11 // pred_region
          _
        $region36: #{tpu_custom_call.1} parent=11 // pred_fallthru
          _
        // Predicated region
        $region37: #{tpu_custom_call.1} parent=11 // pred_check
          %p491 = pneg %p201
        $region38: #{tpu_custom_call.1} parent=11 // pred_check_branch
          %493 = sbr.rel (%p491) target = $region40
        $region39: #{tpu_custom_call.1} parent=11 // pred_region
          _
        $region40: #{tpu_custom_call.1} parent=11 // pred_fallthru
          _
        // Predicated region
        $region41: #{tpu_custom_call.1} parent=11 // pred_check
          %p494 = pneg %p222
        $region42: #{tpu_custom_call.1} parent=11 // pred_check_branch
          %496 = sbr.rel (%p494) target = $region44
        $region43: #{tpu_custom_call.1} parent=11 // pred_region
          _
        $region44: #{tpu_custom_call.1} parent=11 // pred_fallthru
          _
        // Predicated region
        $region45: #{tpu_custom_call.1} parent=11 // pred_check
          %p497 = pneg %p243
        $region46: #{tpu_custom_call.1} parent=11 // pred_check_branch
          %499 = sbr.rel (%p497) target = $region48
        $region47: #{tpu_custom_call.1} parent=11 // pred_region
          _
        $region48: #{tpu_custom_call.1} parent=11 // pred_fallthru
          _
        // Predicated region
        $region49: #{tpu_custom_call.1} parent=11 // pred_check
          %p500 = pneg %p264
        $region50: #{tpu_custom_call.1} parent=11 // pred_check_branch
          %502 = sbr.rel (%p500) target = $region52
        $region51: #{tpu_custom_call.1} parent=11 // pred_region
          _
        $region52: #{tpu_custom_call.1} parent=11 // pred_fallthru
          _
        // Predicated region
        $region53: #{tpu_custom_call.1} parent=11 // pred_check
          %p503 = pneg %p285
        $region54: #{tpu_custom_call.1} parent=11 // pred_check_branch
          %505 = sbr.rel (%p503) target = $region56
        $region55: #{tpu_custom_call.1} parent=11 // pred_region
          _
        $region56: #{tpu_custom_call.1} parent=11 // pred_fallthru
          _
        // Predicated region
        $region57: #{tpu_custom_call.1} parent=11 // pred_check
          %p506 = pneg %p306
        $region58: #{tpu_custom_call.1} parent=11 // pred_check_branch
          %508 = sbr.rel (%p506) target = $region60
        $region59: #{tpu_custom_call.1} parent=11 // pred_region
          _
        $region60: #{tpu_custom_call.1} parent=11 // pred_fallthru
          _
        // Predicated region
        $region61: #{tpu_custom_call.1} parent=11 // pred_check
          %p509 = pneg %p327
        $region62: #{tpu_custom_call.1} parent=11 // pred_check_branch
          %511 = sbr.rel (%p509) target = $region64
        $region63: #{tpu_custom_call.1} parent=11 // pred_region
          _
        $region64: #{tpu_custom_call.1} parent=11 // pred_fallthru
          _
        // Predicated region
        $region65: #{tpu_custom_call.1} parent=11 // pred_check
          %p512 = pneg %p348
        $region66: #{tpu_custom_call.1} parent=11 // pred_check_branch
          %514 = sbr.rel (%p512) target = $region68
        $region67: #{tpu_custom_call.1} parent=11 // pred_region
          _
        $region68: #{tpu_custom_call.1} parent=11 // pred_fallthru
          _
        // Predicated region
        $region69: #{tpu_custom_call.1} parent=11 // pred_check
          %p515 = pneg %p369
        $region70: #{tpu_custom_call.1} parent=11 // pred_check_branch
          %517 = sbr.rel (%p515) target = $region72
        $region71: #{tpu_custom_call.1} parent=11 // pred_region
          _
        $region72: #{tpu_custom_call.1} parent=11 // pred_fallthru
          _
        // Predicated region
        $region73: #{tpu_custom_call.1} parent=11 // pred_check
          %p518 = pneg %p390
        $region74: #{tpu_custom_call.1} parent=11 // pred_check_branch
          %520 = sbr.rel (%p518) target = $region76
        $region75: #{tpu_custom_call.1} parent=11 // pred_region
          _
        $region76: #{tpu_custom_call.1} parent=11 // pred_fallthru
          _
        // Predicated region
        $region77: #{tpu_custom_call.1} parent=11 // pred_check
          %p521 = pneg %p411
        $region78: #{tpu_custom_call.1} parent=11 // pred_check_branch
          %523 = sbr.rel (%p521) target = $region80
        $region79: #{tpu_custom_call.1} parent=11 // pred_region
          _
        $region80: #{tpu_custom_call.1} parent=11 // pred_fallthru
          _
        // Predicated region
        $region81: #{tpu_custom_call.1} parent=11 // pred_check
          %p524 = pneg %p432
        $region82: #{tpu_custom_call.1} parent=11 // pred_check_branch
          %526 = sbr.rel (%p524) target = $region84
        $region83: #{tpu_custom_call.1} parent=11 // pred_region
          _
        $region84: #{tpu_custom_call.1} parent=11 // pred_fallthru
          _
      $region12: #{tpu_custom_call.1} parent=5 // pred_fallthru
        _
      %p527 = scmp.lt.s32.totalorder %s28, 2
      // Predicated region
      $region85: #{tpu_custom_call.1} parent=5 // pred_check
        %p528 = pneg %p527
      $region86: #{tpu_custom_call.1} parent=5 // pred_check_branch
        %530 = sbr.rel (%p528) target = $region88
      $region87: #{tpu_custom_call.1} parent=5 // pred_region
        // Predicated region
        $region89: #{tpu_custom_call.1} parent=87 // pred_check
          %p531 = pneg %p48
        $region90: #{tpu_custom_call.1} parent=87 // pred_check_branch
          %533 = sbr.rel (%p531) target = $region92
        $region91: #{tpu_custom_call.1} parent=87 // pred_region
          %p534 = scmp.lt.s32.totalorder %s28, 1
          %s535 = scalar_select %p534, %s28, 1
          %s536 = smul.addr %s535, 152
          %s537 = smul.addr %s536, 8
          %s538 = scalar_lea.vmem %s0, %s537
        $region92: #{tpu_custom_call.1} parent=87 // pred_fallthru
          _
      $region88: #{tpu_custom_call.1} parent=5 // pred_fallthru
        _
      %p539 = scmp.le.s32.totalorder 1, %s28
      %p540 = scmp.lt.s32.totalorder %s28, 3
      %p541 = pnand %p539, %p540
      %p542 = pneg %p541
      // Predicated region
      $region93: #{tpu_custom_call.1} parent=5 // pred_check
        _
      $region94: #{tpu_custom_call.1} parent=5 // pred_check_branch
        %544 = sbr.rel (%p541) target = $region96
      $region95: #{tpu_custom_call.1} parent=5 // pred_region
        %s545 = ssub.s32 %s28, 1
        %p546 = scmp.lt.s32.totalorder %s33, 1
        %s547 = scalar_select %p546, %s33, 1
        %s548 = smul.addr %s547, 152
        %s549 = smul.addr %s548, 8
        %s550 = scalar_lea.vmem %s0, %s549
        %p551 = pneg %p54
        %p552 = pneg %p51
        %p553 = pneg %p75
        %p554 = pneg %p72
        %p555 = pneg %p96
        %p556 = pneg %p93
        %p557 = pneg %p117
        %p558 = pneg %p114
        %p559 = pneg %p138
        %p560 = pneg %p135
        %p561 = pneg %p159
        %p562 = pneg %p156
        %p563 = pneg %p180
        %p564 = pneg %p177
        %p565 = pneg %p201
        %p566 = pneg %p198
        %p567 = pneg %p222
        %p568 = pneg %p219
        %p569 = pneg %p243
        %p570 = pneg %p240
        %p571 = pneg %p264
        %p572 = pneg %p261
        %p573 = pneg %p285
        %p574 = pneg %p282
        %p575 = pneg %p306
        %p576 = pneg %p303
        %p577 = pneg %p327
        %p578 = pneg %p324
        %p579 = pneg %p348
        %p580 = pneg %p345
        %p581 = pneg %p369
        %p582 = pneg %p366
        %p583 = pneg %p390
        %p584 = pneg %p387
        %p585 = pneg %p411
        %p586 = pneg %p408
        %p587 = pneg %p432
        %p588 = pneg %p429
        %p589 = pneg %p458
        %p590 = pneg %p455
        %s591 = sand.u32 %s445, 1
        %s592 = scalar_lea.sflag [#allocation3], %s591
        %s593 = sand.u32 %s445, 1
        %s594 = scalar_lea.vmem [#allocation2], %s593
        %p595 = scmp.lt.s32.totalorder %s33, 1
        %s596 = scalar_select %p595, %s33, 1
        %s597 = smul.addr %s596, 152
        %s598 = smul.addr %s597, 8
        %s599 = scalar_lea.vmem %s0, %s598
        %v600 = vld [vmem:[%s599] sm:$0xff]
        %v601 = vld [vmem:[%s599 + $0x8] sm:$0xff]
        %v602 = vld [vmem:[%s599 + $0x10] sm:$0xff]
        %v603 = vld [vmem:[%s599 + $0x18] sm:$0xff]
        %v604 = vld [vmem:[%s599 + $0x20] sm:$0xff]
        %v605 = vld [vmem:[%s599 + $0x28] sm:$0xff]
        %v606 = vld [vmem:[%s599 + $0x30] sm:$0xff]
        %v607 = vld [vmem:[%s599 + $0x38] sm:$0xff]
        %v608 = vld [vmem:[%s599 + $0x40] sm:$0xff]
        %v609 = vld [vmem:[%s599 + $0x48] sm:$0xff]
        %v610 = vld [vmem:[%s599 + $0x50] sm:$0xff]
        %v611 = vld [vmem:[%s599 + $0x58] sm:$0xff]
        %v612 = vld [vmem:[%s599 + $0x60] sm:$0xff]
        %v613 = vld [vmem:[%s599 + $0x68] sm:$0xff]
        %v614 = vld [vmem:[%s599 + $0x70] sm:$0xff]
        %v615 = vld [vmem:[%s599 + $0x78] sm:$0xff]
        %v616 = vld [vmem:[%s599 + $0x80] sm:$0xff]
        %v617 = vld [vmem:[%s599 + $0x88] sm:$0xff]
        %v618 = vld [vmem:[%s599 + $0x90] sm:$0xff]
        %v619 = vld [vmem:[%s599 + $0x98] sm:$0xff]
        %v620 = vld [vmem:[%s599 + $0xa0] sm:$0xff]
        %v621 = vld [vmem:[%s599 + $0xa8] sm:$0xff]
        %v622 = vld [vmem:[%s599 + $0xb0] sm:$0xff]
        %v623 = vld [vmem:[%s599 + $0xb8] sm:$0xff]
        %v624 = vld [vmem:[%s599 + $0xc0] sm:$0xff]
        %v625 = vld [vmem:[%s599 + $0xc8] sm:$0xff]
        %v626 = vld [vmem:[%s599 + $0xd0] sm:$0xff]
        %v627 = vld [vmem:[%s599 + $0xd8] sm:$0xff]
        %v628 = vld [vmem:[%s599 + $0xe0] sm:$0xff]
        %v629 = vld [vmem:[%s599 + $0xe8] sm:$0xff]
        %v630 = vld [vmem:[%s599 + $0xf0] sm:$0xff]
        %v631 = vld [vmem:[%s599 + $0xf8] sm:$0xff]
        %v632 = vld [vmem:[%s599 + $0x100] sm:$0xff]
        %v633 = vld [vmem:[%s599 + $0x108] sm:$0xff]
        %v634 = vld [vmem:[%s599 + $0x110] sm:$0xff]
        %v635 = vld [vmem:[%s599 + $0x118] sm:$0xff]
        %v636 = vld [vmem:[%s599 + $0x120] sm:$0xff]
        %v637 = vld [vmem:[%s599 + $0x128] sm:$0xff]
        %v638 = vld [vmem:[%s599 + $0x130] sm:$0xff]
        %v639 = vld [vmem:[%s599 + $0x138] sm:$0xff]
        %v640 = vld [vmem:[%s599 + $0x140] sm:$0xff]
        %v641 = vld [vmem:[%s599 + $0x148] sm:$0xff]
        %v642 = vld [vmem:[%s599 + $0x150] sm:$0xff]
        %v643 = vld [vmem:[%s599 + $0x158] sm:$0xff]
        %v644 = vld [vmem:[%s599 + $0x160] sm:$0xff]
        %v645 = vld [vmem:[%s599 + $0x168] sm:$0xff]
        %v646 = vld [vmem:[%s599 + $0x170] sm:$0xff]
        %v647 = vld [vmem:[%s599 + $0x178] sm:$0xff]
        %v648 = vld [vmem:[%s599 + $0x180] sm:$0xff]
        %v649 = vld [vmem:[%s599 + $0x188] sm:$0xff]
        %v650 = vld [vmem:[%s599 + $0x190] sm:$0xff]
        %v651 = vld [vmem:[%s599 + $0x198] sm:$0xff]
        %v652 = vld [vmem:[%s599 + $0x1a0] sm:$0xff]
        %v653 = vld [vmem:[%s599 + $0x1a8] sm:$0xff]
        %v654 = vld [vmem:[%s599 + $0x1b0] sm:$0xff]
        %v655 = vld [vmem:[%s599 + $0x1b8] sm:$0xff]
        %v656 = vld [vmem:[%s599 + $0x1c0] sm:$0xff]
        %v657 = vld [vmem:[%s599 + $0x1c8] sm:$0xff]
        %v658 = vld [vmem:[%s599 + $0x1d0] sm:$0xff]
        %v659 = vld [vmem:[%s599 + $0x1d8] sm:$0xff]
        %v660 = vld [vmem:[%s599 + $0x1e0] sm:$0xff]
        %v661 = vld [vmem:[%s599 + $0x1e8] sm:$0xff]
        %v662 = vld [vmem:[%s599 + $0x1f0] sm:$0xff]
        %v663 = vld [vmem:[%s599 + $0x1f8] sm:$0xff]
        %v664 = vld [vmem:[%s599 + $0x200] sm:$0xff]
        %v665 = vld [vmem:[%s599 + $0x208] sm:$0xff]
        %v666 = vld [vmem:[%s599 + $0x210] sm:$0xff]
        %v667 = vld [vmem:[%s599 + $0x218] sm:$0xff]
        %v668 = vld [vmem:[%s599 + $0x220] sm:$0xff]
        %v669 = vld [vmem:[%s599 + $0x228] sm:$0xff]
        %v670 = vld [vmem:[%s599 + $0x230] sm:$0xff]
        %v671 = vld [vmem:[%s599 + $0x238] sm:$0xff]
        %v672 = vld [vmem:[%s599 + $0x240] sm:$0xff]
        %v673 = vld [vmem:[%s599 + $0x248] sm:$0xff]
        %v674 = vld [vmem:[%s599 + $0x250] sm:$0xff]
        %v675 = vld [vmem:[%s599 + $0x258] sm:$0xff]
        %v676 = vld [vmem:[%s599 + $0x260] sm:$0xff]
        %v677 = vld [vmem:[%s599 + $0x268] sm:$0xff]
        %v678 = vld [vmem:[%s599 + $0x270] sm:$0xff]
        %v679 = vld [vmem:[%s599 + $0x278] sm:$0xff]
        %v680 = vld [vmem:[%s599 + $0x280] sm:$0xff]
        %v681 = vld [vmem:[%s599 + $0x288] sm:$0xff]
        %v682 = vld [vmem:[%s599 + $0x290] sm:$0xff]
        %v683 = vld [vmem:[%s599 + $0x298] sm:$0xff]
        %v684 = vld [vmem:[%s599 + $0x2a0] sm:$0xff]
        %v685 = vld [vmem:[%s599 + $0x2a8] sm:$0xff]
        %v686 = vld [vmem:[%s599 + $0x2b0] sm:$0xff]
        %v687 = vld [vmem:[%s599 + $0x2b8] sm:$0xff]
        %v688 = vld [vmem:[%s599 + $0x2c0] sm:$0xff]
        %v689 = vld [vmem:[%s599 + $0x2c8] sm:$0xff]
        %v690 = vld [vmem:[%s599 + $0x2d0] sm:$0xff]
        %v691 = vld [vmem:[%s599 + $0x2d8] sm:$0xff]
        %v692 = vld [vmem:[%s599 + $0x2e0] sm:$0xff]
        %v693 = vld [vmem:[%s599 + $0x2e8] sm:$0xff]
        %v694 = vld [vmem:[%s599 + $0x2f0] sm:$0xff]
        %v695 = vld [vmem:[%s599 + $0x2f8] sm:$0xff]
        %v696 = vld [vmem:[%s599 + $0x300] sm:$0xff]
        %v697 = vld [vmem:[%s599 + $0x308] sm:$0xff]
        %v698 = vld [vmem:[%s599 + $0x310] sm:$0xff]
        %v699 = vld [vmem:[%s599 + $0x318] sm:$0xff]
        %v700 = vld [vmem:[%s599 + $0x320] sm:$0xff]
        %v701 = vld [vmem:[%s599 + $0x328] sm:$0xff]
        %v702 = vld [vmem:[%s599 + $0x330] sm:$0xff]
        %v703 = vld [vmem:[%s599 + $0x338] sm:$0xff]
        %v704 = vld [vmem:[%s599 + $0x340] sm:$0xff]
        %v705 = vld [vmem:[%s599 + $0x348] sm:$0xff]
        %v706 = vld [vmem:[%s599 + $0x350] sm:$0xff]
        %v707 = vld [vmem:[%s599 + $0x358] sm:$0xff]
        %v708 = vld [vmem:[%s599 + $0x360] sm:$0xff]
        %v709 = vld [vmem:[%s599 + $0x368] sm:$0xff]
        %v710 = vld [vmem:[%s599 + $0x370] sm:$0xff]
        %v711 = vld [vmem:[%s599 + $0x378] sm:$0xff]
        %v712 = vld [vmem:[%s599 + $0x380] sm:$0xff]
        %v713 = vld [vmem:[%s599 + $0x388] sm:$0xff]
        %v714 = vld [vmem:[%s599 + $0x390] sm:$0xff]
        %v715 = vld [vmem:[%s599 + $0x398] sm:$0xff]
        %v716 = vld [vmem:[%s599 + $0x3a0] sm:$0xff]
        %v717 = vld [vmem:[%s599 + $0x3a8] sm:$0xff]
        %v718 = vld [vmem:[%s599 + $0x3b0] sm:$0xff]
        %v719 = vld [vmem:[%s599 + $0x3b8] sm:$0xff]
        %v720 = vld [vmem:[%s599 + $0x3c0] sm:$0xff]
        %v721 = vld [vmem:[%s599 + $0x3c8] sm:$0xff]
        %v722 = vld [vmem:[%s599 + $0x3d0] sm:$0xff]
        %v723 = vld [vmem:[%s599 + $0x3d8] sm:$0xff]
        %v724 = vld [vmem:[%s599 + $0x3e0] sm:$0xff]
        %v725 = vld [vmem:[%s599 + $0x3e8] sm:$0xff]
        %v726 = vld [vmem:[%s599 + $0x3f0] sm:$0xff]
        %v727 = vld [vmem:[%s599 + $0x3f8] sm:$0xff]
        %v728 = vld [vmem:[%s599 + $0x400] sm:$0xff]
        %v729 = vld [vmem:[%s599 + $0x408] sm:$0xff]
        %v730 = vld [vmem:[%s599 + $0x410] sm:$0xff]
        %v731 = vld [vmem:[%s599 + $0x418] sm:$0xff]
        %v732 = vld [vmem:[%s599 + $0x420] sm:$0xff]
        %v733 = vld [vmem:[%s599 + $0x428] sm:$0xff]
        %v734 = vld [vmem:[%s599 + $0x430] sm:$0xff]
        %v735 = vld [vmem:[%s599 + $0x438] sm:$0xff]
        %v736 = vld [vmem:[%s599 + $0x440] sm:$0xff]
        %v737 = vld [vmem:[%s599 + $0x448] sm:$0xff]
        %v738 = vld [vmem:[%s599 + $0x450] sm:$0xff]
        %v739 = vld [vmem:[%s599 + $0x458] sm:$0xff]
        %v740 = vld [vmem:[%s599 + $0x460] sm:$0xff]
        %v741 = vld [vmem:[%s599 + $0x468] sm:$0xff]
        %v742 = vld [vmem:[%s599 + $0x470] sm:$0xff]
        %v743 = vld [vmem:[%s599 + $0x478] sm:$0xff]
        %v744 = vld [vmem:[%s599 + $0x480] sm:$0xff]
        %v745 = vld [vmem:[%s599 + $0x488] sm:$0xff]
        %v746 = vld [vmem:[%s599 + $0x490] sm:$0xff]
        %v747 = vld [vmem:[%s599 + $0x498] sm:$0xff]
        %v748 = vld [vmem:[%s599 + $0x4a0] sm:$0xff]
        %v749 = vld [vmem:[%s599 + $0x4a8] sm:$0xff]
        %v750 = vld [vmem:[%s599 + $0x4b0] sm:$0xff]
        %v751 = vld [vmem:[%s599 + $0x4b8] sm:$0xff]
        %v752 = vadd.f32 %v600, %v601
        %v753 = vadd.f32 %v752, %v602
        %v754 = vadd.f32 %v753, %v603
        %v755 = vadd.f32 %v754, %v604
        %v756 = vadd.f32 %v755, %v605
        %v757 = vadd.f32 %v756, %v606
        %v758 = vadd.f32 %v757, %v607
        %v759 = vadd.f32 %v758, %v608
        %v760 = vadd.f32 %v759, %v609
        %v761 = vadd.f32 %v760, %v610
        %v762 = vadd.f32 %v761, %v611
        %v763 = vadd.f32 %v762, %v612
        %v764 = vadd.f32 %v763, %v613
        %v765 = vadd.f32 %v764, %v614
        %v766 = vadd.f32 %v765, %v615
        %v767 = vadd.f32 %v766, %v616
        %v768 = vadd.f32 %v767, %v617
        %vm769 = vcmask 392192
        %v770 = vsel %vm769, %v618, 0.0
        %v771 = vadd.f32 %v768, %v770
        %772 = vadd.xlane.f32.xlu0 %v771
        %v773 = vpop.xlane.xlu0 %772
        %v774 = vadd.f32 %v619, %v620
        %v775 = vadd.f32 %v774, %v621
        %v776 = vadd.f32 %v775, %v622
        %v777 = vadd.f32 %v776, %v623
        %v778 = vadd.f32 %v777, %v624
        %v779 = vadd.f32 %v778, %v625
        %v780 = vadd.f32 %v779, %v626
        %v781 = vadd.f32 %v780, %v627
        %v782 = vadd.f32 %v781, %v628
        %v783 = vadd.f32 %v782, %v629
        %v784 = vadd.f32 %v783, %v630
        %v785 = vadd.f32 %v784, %v631
        %v786 = vadd.f32 %v785, %v632
        %v787 = vadd.f32 %v786, %v633
        %v788 = vadd.f32 %v787, %v634
        %v789 = vadd.f32 %v788, %v635
        %v790 = vadd.f32 %v789, %v636
        %v791 = vsel %vm769, %v637, 0.0
        %v792 = vadd.f32 %v790, %v791
        %793 = vadd.xlane.f32.xlu0 %v792
        %v794 = vpop.xlane.xlu0 %793
        %v795 = vadd.f32 %v638, %v639
        %v796 = vadd.f32 %v795, %v640
        %v797 = vadd.f32 %v796, %v641
        %v798 = vadd.f32 %v797, %v642
        %v799 = vadd.f32 %v798, %v643
        %v800 = vadd.f32 %v799, %v644
        %v801 = vadd.f32 %v800, %v645
        %v802 = vadd.f32 %v801, %v646
        %v803 = vadd.f32 %v802, %v647
        %v804 = vadd.f32 %v803, %v648
        %v805 = vadd.f32 %v804, %v649
        %v806 = vadd.f32 %v805, %v650
        %v807 = vadd.f32 %v806, %v651
        %v808 = vadd.f32 %v807, %v652
        %v809 = vadd.f32 %v808, %v653
        %v810 = vadd.f32 %v809, %v654
        %v811 = vadd.f32 %v810, %v655
        %v812 = vsel %vm769, %v656, 0.0
        %v813 = vadd.f32 %v811, %v812
        %814 = vadd.xlane.f32.xlu0 %v813
        %v815 = vpop.xlane.xlu0 %814
        %v816 = vadd.f32 %v657, %v658
        %v817 = vadd.f32 %v816, %v659
        %v818 = vadd.f32 %v817, %v660
        %v819 = vadd.f32 %v818, %v661
        %v820 = vadd.f32 %v819, %v662
        %v821 = vadd.f32 %v820, %v663
        %v822 = vadd.f32 %v821, %v664
        %v823 = vadd.f32 %v822, %v665
        %v824 = vadd.f32 %v823, %v666
        %v825 = vadd.f32 %v824, %v667
        %v826 = vadd.f32 %v825, %v668
        %v827 = vadd.f32 %v826, %v669
        %v828 = vadd.f32 %v827, %v670
        %v829 = vadd.f32 %v828, %v671
        %v830 = vadd.f32 %v829, %v672
        %v831 = vadd.f32 %v830, %v673
        %v832 = vadd.f32 %v831, %v674
        %v833 = vsel %vm769, %v675, 0.0
        %v834 = vadd.f32 %v832, %v833
        %835 = vadd.xlane.f32.xlu0 %v834
        %v836 = vpop.xlane.xlu0 %835
        %v837 = vadd.f32 %v676, %v677
        %v838 = vadd.f32 %v837, %v678
        %v839 = vadd.f32 %v838, %v679
        %v840 = vadd.f32 %v839, %v680
        %v841 = vadd.f32 %v840, %v681
        %v842 = vadd.f32 %v841, %v682
        %v843 = vadd.f32 %v842, %v683
        %v844 = vadd.f32 %v843, %v684
        %v845 = vadd.f32 %v844, %v685
        %v846 = vadd.f32 %v845, %v686
        %v847 = vadd.f32 %v846, %v687
        %v848 = vadd.f32 %v847, %v688
        %v849 = vadd.f32 %v848, %v689
        %v850 = vadd.f32 %v849, %v690
        %v851 = vadd.f32 %v850, %v691
        %v852 = vadd.f32 %v851, %v692
        %v853 = vadd.f32 %v852, %v693
        %v854 = vsel %vm769, %v694, 0.0
        %v855 = vadd.f32 %v853, %v854
        %856 = vadd.xlane.f32.xlu0 %v855
        %v857 = vpop.xlane.xlu0 %856
        %v858 = vadd.f32 %v695, %v696
        %v859 = vadd.f32 %v858, %v697
        %v860 = vadd.f32 %v859, %v698
        %v861 = vadd.f32 %v860, %v699
        %v862 = vadd.f32 %v861, %v700
        %v863 = vadd.f32 %v862, %v701
        %v864 = vadd.f32 %v863, %v702
        %v865 = vadd.f32 %v864, %v703
        %v866 = vadd.f32 %v865, %v704
        %v867 = vadd.f32 %v866, %v705
        %v868 = vadd.f32 %v867, %v706
        %v869 = vadd.f32 %v868, %v707
        %v870 = vadd.f32 %v869, %v708
        %v871 = vadd.f32 %v870, %v709
        %v872 = vadd.f32 %v871, %v710
        %v873 = vadd.f32 %v872, %v711
        %v874 = vadd.f32 %v873, %v712
        %v875 = vsel %vm769, %v713, 0.0
        %v876 = vadd.f32 %v874, %v875
        %877 = vadd.xlane.f32.xlu0 %v876
        %v878 = vpop.xlane.xlu0 %877
        %v879 = vadd.f32 %v714, %v715
        %v880 = vadd.f32 %v879, %v716
        %v881 = vadd.f32 %v880, %v717
        %v882 = vadd.f32 %v881, %v718
        %v883 = vadd.f32 %v882, %v719
        %v884 = vadd.f32 %v883, %v720
        %v885 = vadd.f32 %v884, %v721
        %v886 = vadd.f32 %v885, %v722
        %v887 = vadd.f32 %v886, %v723
        %v888 = vadd.f32 %v887, %v724
        %v889 = vadd.f32 %v888, %v725
        %v890 = vadd.f32 %v889, %v726
        %v891 = vadd.f32 %v890, %v727
        %v892 = vadd.f32 %v891, %v728
        %v893 = vadd.f32 %v892, %v729
        %v894 = vadd.f32 %v893, %v730
        %v895 = vadd.f32 %v894, %v731
        %v896 = vsel %vm769, %v732, 0.0
        %v897 = vadd.f32 %v895, %v896
        %898 = vadd.xlane.f32.xlu0 %v897
        %v899 = vpop.xlane.xlu0 %898
        %v900 = vadd.f32 %v733, %v734
        %v901 = vadd.f32 %v900, %v735
        %v902 = vadd.f32 %v901, %v736
        %v903 = vadd.f32 %v902, %v737
        %v904 = vadd.f32 %v903, %v738
        %v905 = vadd.f32 %v904, %v739
        %v906 = vadd.f32 %v905, %v740
        %v907 = vadd.f32 %v906, %v741
        %v908 = vadd.f32 %v907, %v742
        %v909 = vadd.f32 %v908, %v743
        %v910 = vadd.f32 %v909, %v744
        %v911 = vadd.f32 %v910, %v745
        %v912 = vadd.f32 %v911, %v746
        %v913 = vadd.f32 %v912, %v747
        %v914 = vadd.f32 %v913, %v748
        %v915 = vadd.f32 %v914, %v749
        %v916 = vadd.f32 %v915, %v750
        %v917 = vsel %vm769, %v751, 0.0
        %v918 = vadd.f32 %v916, %v917
        %919 = vadd.xlane.f32.xlu0 %v918
        %v920 = vpop.xlane.xlu0 %919
        %v921 = vrcp.pop 2352.0
        %v922 = vmul.f32 %v773, %v921
        %v923 = vmul.f32 %v794, %v921
        %v924 = vmul.f32 %v815, %v921
        %v925 = vmul.f32 %v836, %v921
        %v926 = vmul.f32 %v857, %v921
        %v927 = vmul.f32 %v878, %v921
        %v928 = vmul.f32 %v899, %v921
        %v929 = vmul.f32 %v920, %v921
        %v930 = vsub.f32 %v600, %v922
        %v931 = vsub.f32 %v601, %v922
        %v932 = vsub.f32 %v602, %v922
        %v933 = vsub.f32 %v603, %v922
        %v934 = vsub.f32 %v604, %v922
        %v935 = vsub.f32 %v605, %v922
        %v936 = vsub.f32 %v606, %v922
        %v937 = vsub.f32 %v607, %v922
        %v938 = vsub.f32 %v608, %v922
        %v939 = vsub.f32 %v609, %v922
        %v940 = vsub.f32 %v610, %v922
        %v941 = vsub.f32 %v611, %v922
        %v942 = vsub.f32 %v612, %v922
        %v943 = vsub.f32 %v613, %v922
        %v944 = vsub.f32 %v614, %v922
        %v945 = vsub.f32 %v615, %v922
        %v946 = vsub.f32 %v616, %v922
        %v947 = vsub.f32 %v617, %v922
        %v948 = vsub.f32 %v618, %v922
        %v949 = vsub.f32 %v619, %v923
        %v950 = vsub.f32 %v620, %v923
        %v951 = vsub.f32 %v621, %v923
        %v952 = vsub.f32 %v622, %v923
        %v953 = vsub.f32 %v623, %v923
        %v954 = vsub.f32 %v624, %v923
        %v955 = vsub.f32 %v625, %v923
        %v956 = vsub.f32 %v626, %v923
        %v957 = vsub.f32 %v627, %v923
        %v958 = vsub.f32 %v628, %v923
        %v959 = vsub.f32 %v629, %v923
        %v960 = vsub.f32 %v630, %v923
        %v961 = vsub.f32 %v631, %v923
        %v962 = vsub.f32 %v632, %v923
        %v963 = vsub.f32 %v633, %v923
        %v964 = vsub.f32 %v634, %v923
        %v965 = vsub.f32 %v635, %v923
        %v966 = vsub.f32 %v636, %v923
        %v967 = vsub.f32 %v637, %v923
        %v968 = vsub.f32 %v638, %v924
        %v969 = vsub.f32 %v639, %v924
        %v970 = vsub.f32 %v640, %v924
        %v971 = vsub.f32 %v641, %v924
        %v972 = vsub.f32 %v642, %v924
        %v973 = vsub.f32 %v643, %v924
        %v974 = vsub.f32 %v644, %v924
        %v975 = vsub.f32 %v645, %v924
        %v976 = vsub.f32 %v646, %v924
        %v977 = vsub.f32 %v647, %v924
        %v978 = vsub.f32 %v648, %v924
        %v979 = vsub.f32 %v649, %v924
        %v980 = vsub.f32 %v650, %v924
        %v981 = vsub.f32 %v651, %v924
        %v982 = vsub.f32 %v652, %v924
        %v983 = vsub.f32 %v653, %v924
        %v984 = vsub.f32 %v654, %v924
        %v985 = vsub.f32 %v655, %v924
        %v986 = vsub.f32 %v656, %v924
        %v987 = vsub.f32 %v657, %v925
        %v988 = vsub.f32 %v658, %v925
        %v989 = vsub.f32 %v659, %v925
        %v990 = vsub.f32 %v660, %v925
        %v991 = vsub.f32 %v661, %v925
        %v992 = vsub.f32 %v662, %v925
        %v993 = vsub.f32 %v663, %v925
        %v994 = vsub.f32 %v664, %v925
        %v995 = vsub.f32 %v665, %v925
        %v996 = vsub.f32 %v666, %v925
        %v997 = vsub.f32 %v667, %v925
        %v998 = vsub.f32 %v668, %v925
        %v999 = vsub.f32 %v669, %v925
        %v1000 = vsub.f32 %v670, %v925
        %v1001 = vsub.f32 %v671, %v925
        %v1002 = vsub.f32 %v672, %v925
        %v1003 = vsub.f32 %v673, %v925
        %v1004 = vsub.f32 %v674, %v925
        %v1005 = vsub.f32 %v675, %v925
        %v1006 = vsub.f32 %v676, %v926
        %v1007 = vsub.f32 %v677, %v926
        %v1008 = vsub.f32 %v678, %v926
        %v1009 = vsub.f32 %v679, %v926
        %v1010 = vsub.f32 %v680, %v926
        %v1011 = vsub.f32 %v681, %v926
        %v1012 = vsub.f32 %v682, %v926
        %v1013 = vsub.f32 %v683, %v926
        %v1014 = vsub.f32 %v684, %v926
        %v1015 = vsub.f32 %v685, %v926
        %v1016 = vsub.f32 %v686, %v926
        %v1017 = vsub.f32 %v687, %v926
        %v1018 = vsub.f32 %v688, %v926
        %v1019 = vsub.f32 %v689, %v926
        %v1020 = vsub.f32 %v690, %v926
        %v1021 = vsub.f32 %v691, %v926
        %v1022 = vsub.f32 %v692, %v926
        %v1023 = vsub.f32 %v693, %v926
        %v1024 = vsub.f32 %v694, %v926
        %v1025 = vsub.f32 %v695, %v927
        %v1026 = vsub.f32 %v696, %v927
        %v1027 = vsub.f32 %v697, %v927
        %v1028 = vsub.f32 %v698, %v927
        %v1029 = vsub.f32 %v699, %v927
        %v1030 = vsub.f32 %v700, %v927
        %v1031 = vsub.f32 %v701, %v927
        %v1032 = vsub.f32 %v702, %v927
        %v1033 = vsub.f32 %v703, %v927
        %v1034 = vsub.f32 %v704, %v927
        %v1035 = vsub.f32 %v705, %v927
        %v1036 = vsub.f32 %v706, %v927
        %v1037 = vsub.f32 %v707, %v927
        %v1038 = vsub.f32 %v708, %v927
        %v1039 = vsub.f32 %v709, %v927
        %v1040 = vsub.f32 %v710, %v927
        %v1041 = vsub.f32 %v711, %v927
        %v1042 = vsub.f32 %v712, %v927
        %v1043 = vsub.f32 %v713, %v927
        %v1044 = vsub.f32 %v714, %v928
        %v1045 = vsub.f32 %v715, %v928
        %v1046 = vsub.f32 %v716, %v928
        %v1047 = vsub.f32 %v717, %v928
        %v1048 = vsub.f32 %v718, %v928
        %v1049 = vsub.f32 %v719, %v928
        %v1050 = vsub.f32 %v720, %v928
        %v1051 = vsub.f32 %v721, %v928
        %v1052 = vsub.f32 %v722, %v928
        %v1053 = vsub.f32 %v723, %v928
        %v1054 = vsub.f32 %v724, %v928
        %v1055 = vsub.f32 %v725, %v928
        %v1056 = vsub.f32 %v726, %v928
        %v1057 = vsub.f32 %v727, %v928
        %v1058 = vsub.f32 %v728, %v928
        %v1059 = vsub.f32 %v729, %v928
        %v1060 = vsub.f32 %v730, %v928
        %v1061 = vsub.f32 %v731, %v928
        %v1062 = vsub.f32 %v732, %v928
        %v1063 = vsub.f32 %v733, %v929
        %v1064 = vsub.f32 %v734, %v929
        %v1065 = vsub.f32 %v735, %v929
        %v1066 = vsub.f32 %v736, %v929
        %v1067 = vsub.f32 %v737, %v929
        %v1068 = vsub.f32 %v738, %v929
        %v1069 = vsub.f32 %v739, %v929
        %v1070 = vsub.f32 %v740, %v929
        %v1071 = vsub.f32 %v741, %v929
        %v1072 = vsub.f32 %v742, %v929
        %v1073 = vsub.f32 %v743, %v929
        %v1074 = vsub.f32 %v744, %v929
        %v1075 = vsub.f32 %v745, %v929
        %v1076 = vsub.f32 %v746, %v929
        %v1077 = vsub.f32 %v747, %v929
        %v1078 = vsub.f32 %v748, %v929
        %v1079 = vsub.f32 %v749, %v929
        %v1080 = vsub.f32 %v750, %v929
        %v1081 = vsub.f32 %v751, %v929
        %v1082 = vmul.f32 %v930, %v930
        %v1083 = vmul.f32 %v931, %v931
        %v1084 = vmul.f32 %v932, %v932
        %v1085 = vmul.f32 %v933, %v933
        %v1086 = vmul.f32 %v934, %v934
        %v1087 = vmul.f32 %v935, %v935
        %v1088 = vmul.f32 %v936, %v936
        %v1089 = vmul.f32 %v937, %v937
        %v1090 = vmul.f32 %v938, %v938
        %v1091 = vmul.f32 %v939, %v939
        %v1092 = vmul.f32 %v940, %v940
        %v1093 = vmul.f32 %v941, %v941
        %v1094 = vmul.f32 %v942, %v942
        %v1095 = vmul.f32 %v943, %v943
        %v1096 = vmul.f32 %v944, %v944
        %v1097 = vmul.f32 %v945, %v945
        %v1098 = vmul.f32 %v946, %v946
        %v1099 = vmul.f32 %v947, %v947
        %v1100 = vmul.f32 %v948, %v948
        %v1101 = vmul.f32 %v949, %v949
        %v1102 = vmul.f32 %v950, %v950
        %v1103 = vmul.f32 %v951, %v951
        %v1104 = vmul.f32 %v952, %v952
        %v1105 = vmul.f32 %v953, %v953
        %v1106 = vmul.f32 %v954, %v954
        %v1107 = vmul.f32 %v955, %v955
        %v1108 = vmul.f32 %v956, %v956
        %v1109 = vmul.f32 %v957, %v957
        %v1110 = vmul.f32 %v958, %v958
        %v1111 = vmul.f32 %v959, %v959
        %v1112 = vmul.f32 %v960, %v960
        %v1113 = vmul.f32 %v961, %v961
        %v1114 = vmul.f32 %v962, %v962
        %v1115 = vmul.f32 %v963, %v963
        %v1116 = vmul.f32 %v964, %v964
        %v1117 = vmul.f32 %v965, %v965
        %v1118 = vmul.f32 %v966, %v966
        %v1119 = vmul.f32 %v967, %v967
        %v1120 = vmul.f32 %v968, %v968
        %v1121 = vmul.f32 %v969, %v969
        %v1122 = vmul.f32 %v970, %v970
        %v1123 = vmul.f32 %v971, %v971
        %v1124 = vmul.f32 %v972, %v972
        %v1125 = vmul.f32 %v973, %v973
        %v1126 = vmul.f32 %v974, %v974
        %v1127 = vmul.f32 %v975, %v975
        %v1128 = vmul.f32 %v976, %v976
        %v1129 = vmul.f32 %v977, %v977
        %v1130 = vmul.f32 %v978, %v978
        %v1131 = vmul.f32 %v979, %v979
        %v1132 = vmul.f32 %v980, %v980
        %v1133 = vmul.f32 %v981, %v981
        %v1134 = vmul.f32 %v982, %v982
        %v1135 = vmul.f32 %v983, %v983
        %v1136 = vmul.f32 %v984, %v984
        %v1137 = vmul.f32 %v985, %v985
        %v1138 = vmul.f32 %v986, %v986
        %v1139 = vmul.f32 %v987, %v987
        %v1140 = vmul.f32 %v988, %v988
        %v1141 = vmul.f32 %v989, %v989
        %v1142 = vmul.f32 %v990, %v990
        %v1143 = vmul.f32 %v991, %v991
        %v1144 = vmul.f32 %v992, %v992
        %v1145 = vmul.f32 %v993, %v993
        %v1146 = vmul.f32 %v994, %v994
        %v1147 = vmul.f32 %v995, %v995
        %v1148 = vmul.f32 %v996, %v996
        %v1149 = vmul.f32 %v997, %v997
        %v1150 = vmul.f32 %v998, %v998
        %v1151 = vmul.f32 %v999, %v999
        %v1152 = vmul.f32 %v1000, %v1000
        %v1153 = vmul.f32 %v1001, %v1001
        %v1154 = vmul.f32 %v1002, %v1002
        %v1155 = vmul.f32 %v1003, %v1003
        %v1156 = vmul.f32 %v1004, %v1004
        %v1157 = vmul.f32 %v1005, %v1005
        %v1158 = vmul.f32 %v1006, %v1006
        %v1159 = vmul.f32 %v1007, %v1007
        %v1160 = vmul.f32 %v1008, %v1008
        %v1161 = vmul.f32 %v1009, %v1009
        %v1162 = vmul.f32 %v1010, %v1010
        %v1163 = vmul.f32 %v1011, %v1011
        %v1164 = vmul.f32 %v1012, %v1012
        %v1165 = vmul.f32 %v1013, %v1013
        %v1166 = vmul.f32 %v1014, %v1014
        %v1167 = vmul.f32 %v1015, %v1015
        %v1168 = vmul.f32 %v1016, %v1016
        %v1169 = vmul.f32 %v1017, %v1017
        %v1170 = vmul.f32 %v1018, %v1018
        %v1171 = vmul.f32 %v1019, %v1019
        %v1172 = vmul.f32 %v1020, %v1020
        %v1173 = vmul.f32 %v1021, %v1021
        %v1174 = vmul.f32 %v1022, %v1022
        %v1175 = vmul.f32 %v1023, %v1023
        %v1176 = vmul.f32 %v1024, %v1024
        %v1177 = vmul.f32 %v1025, %v1025
        %v1178 = vmul.f32 %v1026, %v1026
        %v1179 = vmul.f32 %v1027, %v1027
        %v1180 = vmul.f32 %v1028, %v1028
        %v1181 = vmul.f32 %v1029, %v1029
        %v1182 = vmul.f32 %v1030, %v1030
        %v1183 = vmul.f32 %v1031, %v1031
        %v1184 = vmul.f32 %v1032, %v1032
        %v1185 = vmul.f32 %v1033, %v1033
        %v1186 = vmul.f32 %v1034, %v1034
        %v1187 = vmul.f32 %v1035, %v1035
        %v1188 = vmul.f32 %v1036, %v1036
        %v1189 = vmul.f32 %v1037, %v1037
        %v1190 = vmul.f32 %v1038, %v1038
        %v1191 = vmul.f32 %v1039, %v1039
        %v1192 = vmul.f32 %v1040, %v1040
        %v1193 = vmul.f32 %v1041, %v1041
        %v1194 = vmul.f32 %v1042, %v1042
        %v1195 = vmul.f32 %v1043, %v1043
        %v1196 = vmul.f32 %v1044, %v1044
        %v1197 = vmul.f32 %v1045, %v1045
        %v1198 = vmul.f32 %v1046, %v1046
        %v1199 = vmul.f32 %v1047, %v1047
        %v1200 = vmul.f32 %v1048, %v1048
        %v1201 = vmul.f32 %v1049, %v1049
        %v1202 = vmul.f32 %v1050, %v1050
        %v1203 = vmul.f32 %v1051, %v1051
        %v1204 = vmul.f32 %v1052, %v1052
        %v1205 = vmul.f32 %v1053, %v1053
        %v1206 = vmul.f32 %v1054, %v1054
        %v1207 = vmul.f32 %v1055, %v1055
        %v1208 = vmul.f32 %v1056, %v1056
        %v1209 = vmul.f32 %v1057, %v1057
        %v1210 = vmul.f32 %v1058, %v1058
        %v1211 = vmul.f32 %v1059, %v1059
        %v1212 = vmul.f32 %v1060, %v1060
        %v1213 = vmul.f32 %v1061, %v1061
        %v1214 = vmul.f32 %v1062, %v1062
        %v1215 = vmul.f32 %v1063, %v1063
        %v1216 = vmul.f32 %v1064, %v1064
        %v1217 = vmul.f32 %v1065, %v1065
        %v1218 = vmul.f32 %v1066, %v1066
        %v1219 = vmul.f32 %v1067, %v1067
        %v1220 = vmul.f32 %v1068, %v1068
        %v1221 = vmul.f32 %v1069, %v1069
        %v1222 = vmul.f32 %v1070, %v1070
        %v1223 = vmul.f32 %v1071, %v1071
        %v1224 = vmul.f32 %v1072, %v1072
        %v1225 = vmul.f32 %v1073, %v1073
        %v1226 = vmul.f32 %v1074, %v1074
        %v1227 = vmul.f32 %v1075, %v1075
        %v1228 = vmul.f32 %v1076, %v1076
        %v1229 = vmul.f32 %v1077, %v1077
        %v1230 = vmul.f32 %v1078, %v1078
        %v1231 = vmul.f32 %v1079, %v1079
        %v1232 = vmul.f32 %v1080, %v1080
        %v1233 = vmul.f32 %v1081, %v1081
        %v1234 = vadd.f32 %v1082, %v1083
        %v1235 = vadd.f32 %v1234, %v1084
        %v1236 = vadd.f32 %v1235, %v1085
        %v1237 = vadd.f32 %v1236, %v1086
        %v1238 = vadd.f32 %v1237, %v1087
        %v1239 = vadd.f32 %v1238, %v1088
        %v1240 = vadd.f32 %v1239, %v1089
        %v1241 = vadd.f32 %v1240, %v1090
        %v1242 = vadd.f32 %v1241, %v1091
        %v1243 = vadd.f32 %v1242, %v1092
        %v1244 = vadd.f32 %v1243, %v1093
        %v1245 = vadd.f32 %v1244, %v1094
        %v1246 = vadd.f32 %v1245, %v1095
        %v1247 = vadd.f32 %v1246, %v1096
        %v1248 = vadd.f32 %v1247, %v1097
        %v1249 = vadd.f32 %v1248, %v1098
        %v1250 = vadd.f32 %v1249, %v1099
        %v1251 = vsel %vm769, %v1100, 0.0
        %v1252 = vadd.f32 %v1250, %v1251
        %1253 = vadd.xlane.f32.xlu0 %v1252
        %v1254 = vpop.xlane.xlu0 %1253
        %v1255 = vadd.f32 %v1101, %v1102
        %v1256 = vadd.f32 %v1255, %v1103
        %v1257 = vadd.f32 %v1256, %v1104
        %v1258 = vadd.f32 %v1257, %v1105
        %v1259 = vadd.f32 %v1258, %v1106
        %v1260 = vadd.f32 %v1259, %v1107
        %v1261 = vadd.f32 %v1260, %v1108
        %v1262 = vadd.f32 %v1261, %v1109
        %v1263 = vadd.f32 %v1262, %v1110
        %v1264 = vadd.f32 %v1263, %v1111
        %v1265 = vadd.f32 %v1264, %v1112
        %v1266 = vadd.f32 %v1265, %v1113
        %v1267 = vadd.f32 %v1266, %v1114
        %v1268 = vadd.f32 %v1267, %v1115
        %v1269 = vadd.f32 %v1268, %v1116
        %v1270 = vadd.f32 %v1269, %v1117
        %v1271 = vadd.f32 %v1270, %v1118
        %v1272 = vsel %vm769, %v1119, 0.0
        %v1273 = vadd.f32 %v1271, %v1272
        %1274 = vadd.xlane.f32.xlu0 %v1273
        %v1275 = vpop.xlane.xlu0 %1274
        %v1276 = vadd.f32 %v1120, %v1121
        %v1277 = vadd.f32 %v1276, %v1122
        %v1278 = vadd.f32 %v1277, %v1123
        %v1279 = vadd.f32 %v1278, %v1124
        %v1280 = vadd.f32 %v1279, %v1125
        %v1281 = vadd.f32 %v1280, %v1126
        %v1282 = vadd.f32 %v1281, %v1127
        %v1283 = vadd.f32 %v1282, %v1128
        %v1284 = vadd.f32 %v1283, %v1129
        %v1285 = vadd.f32 %v1284, %v1130
        %v1286 = vadd.f32 %v1285, %v1131
        %v1287 = vadd.f32 %v1286, %v1132
        %v1288 = vadd.f32 %v1287, %v1133
        %v1289 = vadd.f32 %v1288, %v1134
        %v1290 = vadd.f32 %v1289, %v1135
        %v1291 = vadd.f32 %v1290, %v1136
        %v1292 = vadd.f32 %v1291, %v1137
        %v1293 = vsel %vm769, %v1138, 0.0
        %v1294 = vadd.f32 %v1292, %v1293
        %1295 = vadd.xlane.f32.xlu0 %v1294
        %v1296 = vpop.xlane.xlu0 %1295
        %v1297 = vadd.f32 %v1139, %v1140
        %v1298 = vadd.f32 %v1297, %v1141
        %v1299 = vadd.f32 %v1298, %v1142
        %v1300 = vadd.f32 %v1299, %v1143
        %v1301 = vadd.f32 %v1300, %v1144
        %v1302 = vadd.f32 %v1301, %v1145
        %v1303 = vadd.f32 %v1302, %v1146
        %v1304 = vadd.f32 %v1303, %v1147
        %v1305 = vadd.f32 %v1304, %v1148
        %v1306 = vadd.f32 %v1305, %v1149
        %v1307 = vadd.f32 %v1306, %v1150
        %v1308 = vadd.f32 %v1307, %v1151
        %v1309 = vadd.f32 %v1308, %v1152
        %v1310 = vadd.f32 %v1309, %v1153
        %v1311 = vadd.f32 %v1310, %v1154
        %v1312 = vadd.f32 %v1311, %v1155
        %v1313 = vadd.f32 %v1312, %v1156
        %v1314 = vsel %vm769, %v1157, 0.0
        %v1315 = vadd.f32 %v1313, %v1314
        %1316 = vadd.xlane.f32.xlu0 %v1315
        %v1317 = vpop.xlane.xlu0 %1316
        %v1318 = vadd.f32 %v1158, %v1159
        %v1319 = vadd.f32 %v1318, %v1160
        %v1320 = vadd.f32 %v1319, %v1161
        %v1321 = vadd.f32 %v1320, %v1162
        %v1322 = vadd.f32 %v1321, %v1163
        %v1323 = vadd.f32 %v1322, %v1164
        %v1324 = vadd.f32 %v1323, %v1165
        %v1325 = vadd.f32 %v1324, %v1166
        %v1326 = vadd.f32 %v1325, %v1167
        %v1327 = vadd.f32 %v1326, %v1168
        %v1328 = vadd.f32 %v1327, %v1169
        %v1329 = vadd.f32 %v1328, %v1170
        %v1330 = vadd.f32 %v1329, %v1171
        %v1331 = vadd.f32 %v1330, %v1172
        %v1332 = vadd.f32 %v1331, %v1173
        %v1333 = vadd.f32 %v1332, %v1174
        %v1334 = vadd.f32 %v1333, %v1175
        %v1335 = vsel %vm769, %v1176, 0.0
        %v1336 = vadd.f32 %v1334, %v1335
        %1337 = vadd.xlane.f32.xlu0 %v1336
        %v1338 = vpop.xlane.xlu0 %1337
        %v1339 = vadd.f32 %v1177, %v1178
        %v1340 = vadd.f32 %v1339, %v1179
        %v1341 = vadd.f32 %v1340, %v1180
        %v1342 = vadd.f32 %v1341, %v1181
        %v1343 = vadd.f32 %v1342, %v1182
        %v1344 = vadd.f32 %v1343, %v1183
        %v1345 = vadd.f32 %v1344, %v1184
        %v1346 = vadd.f32 %v1345, %v1185
        %v1347 = vadd.f32 %v1346, %v1186
        %v1348 = vadd.f32 %v1347, %v1187
        %v1349 = vadd.f32 %v1348, %v1188
        %v1350 = vadd.f32 %v1349, %v1189
        %v1351 = vadd.f32 %v1350, %v1190
        %v1352 = vadd.f32 %v1351, %v1191
        %v1353 = vadd.f32 %v1352, %v1192
        %v1354 = vadd.f32 %v1353, %v1193
        %v1355 = vadd.f32 %v1354, %v1194
        %v1356 = vsel %vm769, %v1195, 0.0
        %v1357 = vadd.f32 %v1355, %v1356
        %1358 = vadd.xlane.f32.xlu0 %v1357
        %v1359 = vpop.xlane.xlu0 %1358
        %v1360 = vadd.f32 %v1196, %v1197
        %v1361 = vadd.f32 %v1360, %v1198
        %v1362 = vadd.f32 %v1361, %v1199
        %v1363 = vadd.f32 %v1362, %v1200
        %v1364 = vadd.f32 %v1363, %v1201
        %v1365 = vadd.f32 %v1364, %v1202
        %v1366 = vadd.f32 %v1365, %v1203
        %v1367 = vadd.f32 %v1366, %v1204
        %v1368 = vadd.f32 %v1367, %v1205
        %v1369 = vadd.f32 %v1368, %v1206
        %v1370 = vadd.f32 %v1369, %v1207
        %v1371 = vadd.f32 %v1370, %v1208
        %v1372 = vadd.f32 %v1371, %v1209
        %v1373 = vadd.f32 %v1372, %v1210
        %v1374 = vadd.f32 %v1373, %v1211
        %v1375 = vadd.f32 %v1374, %v1212
        %v1376 = vadd.f32 %v1375, %v1213
        %v1377 = vsel %vm769, %v1214, 0.0
        %v1378 = vadd.f32 %v1376, %v1377
        %1379 = vadd.xlane.f32.xlu0 %v1378
        %v1380 = vpop.xlane.xlu0 %1379
        %v1381 = vadd.f32 %v1215, %v1216
        %v1382 = vadd.f32 %v1381, %v1217
        %v1383 = vadd.f32 %v1382, %v1218
        %v1384 = vadd.f32 %v1383, %v1219
        %v1385 = vadd.f32 %v1384, %v1220
        %v1386 = vadd.f32 %v1385, %v1221
        %v1387 = vadd.f32 %v1386, %v1222
        %v1388 = vadd.f32 %v1387, %v1223
        %v1389 = vadd.f32 %v1388, %v1224
        %v1390 = vadd.f32 %v1389, %v1225
        %v1391 = vadd.f32 %v1390, %v1226
        %v1392 = vadd.f32 %v1391, %v1227
        %v1393 = vadd.f32 %v1392, %v1228
        %v1394 = vadd.f32 %v1393, %v1229
        %v1395 = vadd.f32 %v1394, %v1230
        %v1396 = vadd.f32 %v1395, %v1231
        %v1397 = vadd.f32 %v1396, %v1232
        %v1398 = vsel %vm769, %v1233, 0.0
        %v1399 = vadd.f32 %v1397, %v1398
        %1400 = vadd.xlane.f32.xlu0 %v1399
        %v1401 = vpop.xlane.xlu0 %1400
        %v1402 = vmul.f32 %v1254, %v921
        %v1403 = vmul.f32 %v1275, %v921
        %v1404 = vmul.f32 %v1296, %v921
        %v1405 = vmul.f32 %v1317, %v921
        %v1406 = vmul.f32 %v1338, %v921
        %v1407 = vmul.f32 %v1359, %v921
        %v1408 = vmul.f32 %v1380, %v921
        %v1409 = vmul.f32 %v1401, %v921
        %v1410 = vadd.f32 %v1402, 1e-05
        %v1411 = vadd.f32 %v1403, 1e-05
        %v1412 = vadd.f32 %v1404, 1e-05
        %v1413 = vadd.f32 %v1405, 1e-05
        %v1414 = vadd.f32 %v1406, 1e-05
        %v1415 = vadd.f32 %v1407, 1e-05
        %v1416 = vadd.f32 %v1408, 1e-05
        %v1417 = vadd.f32 %v1409, 1e-05
        %v1418 = vrsqrt.pop %v1410
        %v1419 = vrsqrt.pop %v1411
        %v1420 = vrsqrt.pop %v1412
        %v1421 = vrsqrt.pop %v1413
        %v1422 = vrsqrt.pop %v1414
        %v1423 = vrsqrt.pop %v1415
        %v1424 = vrsqrt.pop %v1416
        %v1425 = vrsqrt.pop %v1417
        %v1426 = vmul.f32 %v930, %v1418
        %v1427 = vmul.f32 %v931, %v1418
        %v1428 = vmul.f32 %v932, %v1418
        %v1429 = vmul.f32 %v933, %v1418
        %v1430 = vmul.f32 %v934, %v1418
        %v1431 = vmul.f32 %v935, %v1418
        %v1432 = vmul.f32 %v936, %v1418
        %v1433 = vmul.f32 %v937, %v1418
        %v1434 = vmul.f32 %v938, %v1418
        %v1435 = vmul.f32 %v939, %v1418
        %v1436 = vmul.f32 %v940, %v1418
        %v1437 = vmul.f32 %v941, %v1418
        %v1438 = vmul.f32 %v942, %v1418
        %v1439 = vmul.f32 %v943, %v1418
        %v1440 = vmul.f32 %v944, %v1418
        %v1441 = vmul.f32 %v945, %v1418
        %v1442 = vmul.f32 %v946, %v1418
        %v1443 = vmul.f32 %v947, %v1418
        %v1444 = vmul.f32 %v948, %v1418
        %v1445 = vmul.f32 %v949, %v1419
        %v1446 = vmul.f32 %v950, %v1419
        %v1447 = vmul.f32 %v951, %v1419
        %v1448 = vmul.f32 %v952, %v1419
        %v1449 = vmul.f32 %v953, %v1419
        %v1450 = vmul.f32 %v954, %v1419
        %v1451 = vmul.f32 %v955, %v1419
        %v1452 = vmul.f32 %v956, %v1419
        %v1453 = vmul.f32 %v957, %v1419
        %v1454 = vmul.f32 %v958, %v1419
        %v1455 = vmul.f32 %v959, %v1419
        %v1456 = vmul.f32 %v960, %v1419
        %v1457 = vmul.f32 %v961, %v1419
        %v1458 = vmul.f32 %v962, %v1419
        %v1459 = vmul.f32 %v963, %v1419
        %v1460 = vmul.f32 %v964, %v1419
        %v1461 = vmul.f32 %v965, %v1419
        %v1462 = vmul.f32 %v966, %v1419
        %v1463 = vmul.f32 %v967, %v1419
        %v1464 = vmul.f32 %v968, %v1420
        %v1465 = vmul.f32 %v969, %v1420
        %v1466 = vmul.f32 %v970, %v1420
        %v1467 = vmul.f32 %v971, %v1420
        %v1468 = vmul.f32 %v972, %v1420
        %v1469 = vmul.f32 %v973, %v1420
        %v1470 = vmul.f32 %v974, %v1420
        %v1471 = vmul.f32 %v975, %v1420
        %v1472 = vmul.f32 %v976, %v1420
        %v1473 = vmul.f32 %v977, %v1420
        %v1474 = vmul.f32 %v978, %v1420
        %v1475 = vmul.f32 %v979, %v1420
        %v1476 = vmul.f32 %v980, %v1420
        %v1477 = vmul.f32 %v981, %v1420
        %v1478 = vmul.f32 %v982, %v1420
        %v1479 = vmul.f32 %v983, %v1420
        %v1480 = vmul.f32 %v984, %v1420
        %v1481 = vmul.f32 %v985, %v1420
        %v1482 = vmul.f32 %v986, %v1420
        %v1483 = vmul.f32 %v987, %v1421
        %v1484 = vmul.f32 %v988, %v1421
        %v1485 = vmul.f32 %v989, %v1421
        %v1486 = vmul.f32 %v990, %v1421
        %v1487 = vmul.f32 %v991, %v1421
        %v1488 = vmul.f32 %v992, %v1421
        %v1489 = vmul.f32 %v993, %v1421
        %v1490 = vmul.f32 %v994, %v1421
        %v1491 = vmul.f32 %v995, %v1421
        %v1492 = vmul.f32 %v996, %v1421
        %v1493 = vmul.f32 %v997, %v1421
        %v1494 = vmul.f32 %v998, %v1421
        %v1495 = vmul.f32 %v999, %v1421
        %v1496 = vmul.f32 %v1000, %v1421
        %v1497 = vmul.f32 %v1001, %v1421
        %v1498 = vmul.f32 %v1002, %v1421
        %v1499 = vmul.f32 %v1003, %v1421
        %v1500 = vmul.f32 %v1004, %v1421
        %v1501 = vmul.f32 %v1005, %v1421
        %v1502 = vmul.f32 %v1006, %v1422
        %v1503 = vmul.f32 %v1007, %v1422
        %v1504 = vmul.f32 %v1008, %v1422
        %v1505 = vmul.f32 %v1009, %v1422
        %v1506 = vmul.f32 %v1010, %v1422
        %v1507 = vmul.f32 %v1011, %v1422
        %v1508 = vmul.f32 %v1012, %v1422
        %v1509 = vmul.f32 %v1013, %v1422
        %v1510 = vmul.f32 %v1014, %v1422
        %v1511 = vmul.f32 %v1015, %v1422
        %v1512 = vmul.f32 %v1016, %v1422
        %v1513 = vmul.f32 %v1017, %v1422
        %v1514 = vmul.f32 %v1018, %v1422
        %v1515 = vmul.f32 %v1019, %v1422
        %v1516 = vmul.f32 %v1020, %v1422
        %v1517 = vmul.f32 %v1021, %v1422
        %v1518 = vmul.f32 %v1022, %v1422
        %v1519 = vmul.f32 %v1023, %v1422
        %v1520 = vmul.f32 %v1024, %v1422
        %v1521 = vmul.f32 %v1025, %v1423
        %v1522 = vmul.f32 %v1026, %v1423
        %v1523 = vmul.f32 %v1027, %v1423
        %v1524 = vmul.f32 %v1028, %v1423
        %v1525 = vmul.f32 %v1029, %v1423
        %v1526 = vmul.f32 %v1030, %v1423
        %v1527 = vmul.f32 %v1031, %v1423
        %v1528 = vmul.f32 %v1032, %v1423
        %v1529 = vmul.f32 %v1033, %v1423
        %v1530 = vmul.f32 %v1034, %v1423
        %v1531 = vmul.f32 %v1035, %v1423
        %v1532 = vmul.f32 %v1036, %v1423
        %v1533 = vmul.f32 %v1037, %v1423
        %v1534 = vmul.f32 %v1038, %v1423
        %v1535 = vmul.f32 %v1039, %v1423
        %v1536 = vmul.f32 %v1040, %v1423
        %v1537 = vmul.f32 %v1041, %v1423
        %v1538 = vmul.f32 %v1042, %v1423
        %v1539 = vmul.f32 %v1043, %v1423
        %v1540 = vmul.f32 %v1044, %v1424
        %v1541 = vmul.f32 %v1045, %v1424
        %v1542 = vmul.f32 %v1046, %v1424
        %v1543 = vmul.f32 %v1047, %v1424
        %v1544 = vmul.f32 %v1048, %v1424
        %v1545 = vmul.f32 %v1049, %v1424
        %v1546 = vmul.f32 %v1050, %v1424
        %v1547 = vmul.f32 %v1051, %v1424
        %v1548 = vmul.f32 %v1052, %v1424
        %v1549 = vmul.f32 %v1053, %v1424
        %v1550 = vmul.f32 %v1054, %v1424
        %v1551 = vmul.f32 %v1055, %v1424
        %v1552 = vmul.f32 %v1056, %v1424
        %v1553 = vmul.f32 %v1057, %v1424
        %v1554 = vmul.f32 %v1058, %v1424
        %v1555 = vmul.f32 %v1059, %v1424
        %v1556 = vmul.f32 %v1060, %v1424
        %v1557 = vmul.f32 %v1061, %v1424
        %v1558 = vmul.f32 %v1062, %v1424
        %v1559 = vmul.f32 %v1063, %v1425
        %v1560 = vmul.f32 %v1064, %v1425
        %v1561 = vmul.f32 %v1065, %v1425
        %v1562 = vmul.f32 %v1066, %v1425
        %v1563 = vmul.f32 %v1067, %v1425
        %v1564 = vmul.f32 %v1068, %v1425
        %v1565 = vmul.f32 %v1069, %v1425
        %v1566 = vmul.f32 %v1070, %v1425
        %v1567 = vmul.f32 %v1071, %v1425
        %v1568 = vmul.f32 %v1072, %v1425
        %v1569 = vmul.f32 %v1073, %v1425
        %v1570 = vmul.f32 %v1074, %v1425
        %v1571 = vmul.f32 %v1075, %v1425
        %v1572 = vmul.f32 %v1076, %v1425
        %v1573 = vmul.f32 %v1077, %v1425
        %v1574 = vmul.f32 %v1078, %v1425
        %v1575 = vmul.f32 %v1079, %v1425
        %v1576 = vmul.f32 %v1080, %v1425
        %v1577 = vmul.f32 %v1081, %v1425
        %v1578 = vld [vmem:[%s2] sm:$0xff]
        %v1579 = vld [vmem:[%s2 + $0x8] sm:$0xff]
        %v1580 = vld [vmem:[%s2 + $0x10] sm:$0x7]
        %v1584 = vlaneseq
        %v1585 = vshrl.u32 %v1584, 7
        %v1586 = vsub.s32 0, %v1585
        %v1587 = vrot.slane %v1578, %v1586
        %v1588 = vlaneseq
        %v1589 = vshrl.u32 %v1588, 7
        %v1590 = vsub.s32 1, %v1589
        %v1591 = vrot.slane %v1578, %v1590
        %v1592 = vlaneseq
        %v1593 = vshrl.u32 %v1592, 7
        %v1594 = vsub.s32 2, %v1593
        %v1595 = vrot.slane %v1578, %v1594
        %v1596 = vlaneseq
        %v1597 = vshrl.u32 %v1596, 7
        %v1598 = vsub.s32 3, %v1597
        %v1599 = vrot.slane %v1578, %v1598
        %v1600 = vlaneseq
        %v1601 = vshrl.u32 %v1600, 7
        %v1602 = vsub.s32 4, %v1601
        %v1603 = vrot.slane %v1578, %v1602
        %v1604 = vlaneseq
        %v1605 = vshrl.u32 %v1604, 7
        %v1606 = vsub.s32 5, %v1605
        %v1607 = vrot.slane %v1578, %v1606
        %v1608 = vlaneseq
        %v1609 = vshrl.u32 %v1608, 7
        %v1610 = vsub.s32 6, %v1609
        %v1611 = vrot.slane %v1578, %v1610
        %v1612 = vlaneseq
        %v1613 = vshrl.u32 %v1612, 7
        %v1614 = vsub.s32 7, %v1613
        %v1615 = vrot.slane %v1578, %v1614
        %v1616 = vlaneseq
        %v1617 = vshrl.u32 %v1616, 7
        %v1618 = vsub.s32 0, %v1617
        %v1619 = vrot.slane %v1579, %v1618
        %v1620 = vlaneseq
        %v1621 = vshrl.u32 %v1620, 7
        %v1622 = vsub.s32 1, %v1621
        %v1623 = vrot.slane %v1579, %v1622
        %v1624 = vlaneseq
        %v1625 = vshrl.u32 %v1624, 7
        %v1626 = vsub.s32 2, %v1625
        %v1627 = vrot.slane %v1579, %v1626
        %v1628 = vlaneseq
        %v1629 = vshrl.u32 %v1628, 7
        %v1630 = vsub.s32 3, %v1629
        %v1631 = vrot.slane %v1579, %v1630
        %v1632 = vlaneseq
        %v1633 = vshrl.u32 %v1632, 7
        %v1634 = vsub.s32 4, %v1633
        %v1635 = vrot.slane %v1579, %v1634
        %v1636 = vlaneseq
        %v1637 = vshrl.u32 %v1636, 7
        %v1638 = vsub.s32 5, %v1637
        %v1639 = vrot.slane %v1579, %v1638
        %v1640 = vlaneseq
        %v1641 = vshrl.u32 %v1640, 7
        %v1642 = vsub.s32 6, %v1641
        %v1643 = vrot.slane %v1579, %v1642
        %v1644 = vlaneseq
        %v1645 = vshrl.u32 %v1644, 7
        %v1646 = vsub.s32 7, %v1645
        %v1647 = vrot.slane %v1579, %v1646
        %v1648 = vlaneseq
        %v1649 = vshrl.u32 %v1648, 7
        %v1650 = vsub.s32 0, %v1649
        %v1651 = vrot.slane %v1580, %v1650
        %v1652 = vlaneseq
        %v1653 = vshrl.u32 %v1652, 7
        %v1654 = vsub.s32 1, %v1653
        %v1655 = vrot.slane %v1580, %v1654
        %v1656 = vlaneseq
        %v1657 = vshrl.u32 %v1656, 7
        %v1658 = vsub.s32 2, %v1657
        %v1659 = vrot.slane %v1580, %v1658
        %v1679 = vmul.f32 %v1426, %v1587
        %v1680 = vmul.f32 %v1427, %v1591
        %v1681 = vmul.f32 %v1428, %v1595
        %v1682 = vmul.f32 %v1429, %v1599
        %v1683 = vmul.f32 %v1430, %v1603
        %v1684 = vmul.f32 %v1431, %v1607
        %v1685 = vmul.f32 %v1432, %v1611
        %v1686 = vmul.f32 %v1433, %v1615
        %v1687 = vmul.f32 %v1434, %v1619
        %v1688 = vmul.f32 %v1435, %v1623
        %v1689 = vmul.f32 %v1436, %v1627
        %v1690 = vmul.f32 %v1437, %v1631
        %v1691 = vmul.f32 %v1438, %v1635
        %v1692 = vmul.f32 %v1439, %v1639
        %v1693 = vmul.f32 %v1440, %v1643
        %v1694 = vmul.f32 %v1441, %v1647
        %v1695 = vmul.f32 %v1442, %v1651
        %v1696 = vmul.f32 %v1443, %v1655
        %v1697 = vmul.f32 %v1444, %v1659
        %v1698 = vmul.f32 %v1445, %v1587
        %v1699 = vmul.f32 %v1446, %v1591
        %v1700 = vmul.f32 %v1447, %v1595
        %v1701 = vmul.f32 %v1448, %v1599
        %v1702 = vmul.f32 %v1449, %v1603
        %v1703 = vmul.f32 %v1450, %v1607
        %v1704 = vmul.f32 %v1451, %v1611
        %v1705 = vmul.f32 %v1452, %v1615
        %v1706 = vmul.f32 %v1453, %v1619
        %v1707 = vmul.f32 %v1454, %v1623
        %v1708 = vmul.f32 %v1455, %v1627
        %v1709 = vmul.f32 %v1456, %v1631
        %v1710 = vmul.f32 %v1457, %v1635
        %v1711 = vmul.f32 %v1458, %v1639
        %v1712 = vmul.f32 %v1459, %v1643
        %v1713 = vmul.f32 %v1460, %v1647
        %v1714 = vmul.f32 %v1461, %v1651
        %v1715 = vmul.f32 %v1462, %v1655
        %v1716 = vmul.f32 %v1463, %v1659
        %v1717 = vmul.f32 %v1464, %v1587
        %v1718 = vmul.f32 %v1465, %v1591
        %v1719 = vmul.f32 %v1466, %v1595
        %v1720 = vmul.f32 %v1467, %v1599
        %v1721 = vmul.f32 %v1468, %v1603
        %v1722 = vmul.f32 %v1469, %v1607
        %v1723 = vmul.f32 %v1470, %v1611
        %v1724 = vmul.f32 %v1471, %v1615
        %v1725 = vmul.f32 %v1472, %v1619
        %v1726 = vmul.f32 %v1473, %v1623
        %v1727 = vmul.f32 %v1474, %v1627
        %v1728 = vmul.f32 %v1475, %v1631
        %v1729 = vmul.f32 %v1476, %v1635
        %v1730 = vmul.f32 %v1477, %v1639
        %v1731 = vmul.f32 %v1478, %v1643
        %v1732 = vmul.f32 %v1479, %v1647
        %v1733 = vmul.f32 %v1480, %v1651
        %v1734 = vmul.f32 %v1481, %v1655
        %v1735 = vmul.f32 %v1482, %v1659
        %v1736 = vmul.f32 %v1483, %v1587
        %v1737 = vmul.f32 %v1484, %v1591
        %v1738 = vmul.f32 %v1485, %v1595
        %v1739 = vmul.f32 %v1486, %v1599
        %v1740 = vmul.f32 %v1487, %v1603
        %v1741 = vmul.f32 %v1488, %v1607
        %v1742 = vmul.f32 %v1489, %v1611
        %v1743 = vmul.f32 %v1490, %v1615
        %v1744 = vmul.f32 %v1491, %v1619
        %v1745 = vmul.f32 %v1492, %v1623
        %v1746 = vmul.f32 %v1493, %v1627
        %v1747 = vmul.f32 %v1494, %v1631
        %v1748 = vmul.f32 %v1495, %v1635
        %v1749 = vmul.f32 %v1496, %v1639
        %v1750 = vmul.f32 %v1497, %v1643
        %v1751 = vmul.f32 %v1498, %v1647
        %v1752 = vmul.f32 %v1499, %v1651
        %v1753 = vmul.f32 %v1500, %v1655
        %v1754 = vmul.f32 %v1501, %v1659
        %v1755 = vmul.f32 %v1502, %v1587
        %v1756 = vmul.f32 %v1503, %v1591
        %v1757 = vmul.f32 %v1504, %v1595
        %v1758 = vmul.f32 %v1505, %v1599
        %v1759 = vmul.f32 %v1506, %v1603
        %v1760 = vmul.f32 %v1507, %v1607
        %v1761 = vmul.f32 %v1508, %v1611
        %v1762 = vmul.f32 %v1509, %v1615
        %v1763 = vmul.f32 %v1510, %v1619
        %v1764 = vmul.f32 %v1511, %v1623
        %v1765 = vmul.f32 %v1512, %v1627
        %v1766 = vmul.f32 %v1513, %v1631
        %v1767 = vmul.f32 %v1514, %v1635
        %v1768 = vmul.f32 %v1515, %v1639
        %v1769 = vmul.f32 %v1516, %v1643
        %v1770 = vmul.f32 %v1517, %v1647
        %v1771 = vmul.f32 %v1518, %v1651
        %v1772 = vmul.f32 %v1519, %v1655
        %v1773 = vmul.f32 %v1520, %v1659
        %v1774 = vmul.f32 %v1521, %v1587
        %v1775 = vmul.f32 %v1522, %v1591
        %v1776 = vmul.f32 %v1523, %v1595
        %v1777 = vmul.f32 %v1524, %v1599
        %v1778 = vmul.f32 %v1525, %v1603
        %v1779 = vmul.f32 %v1526, %v1607
        %v1780 = vmul.f32 %v1527, %v1611
        %v1781 = vmul.f32 %v1528, %v1615
        %v1782 = vmul.f32 %v1529, %v1619
        %v1783 = vmul.f32 %v1530, %v1623
        %v1784 = vmul.f32 %v1531, %v1627
        %v1785 = vmul.f32 %v1532, %v1631
        %v1786 = vmul.f32 %v1533, %v1635
        %v1787 = vmul.f32 %v1534, %v1639
        %v1788 = vmul.f32 %v1535, %v1643
        %v1789 = vmul.f32 %v1536, %v1647
        %v1790 = vmul.f32 %v1537, %v1651
        %v1791 = vmul.f32 %v1538, %v1655
        %v1792 = vmul.f32 %v1539, %v1659
        %v1793 = vmul.f32 %v1540, %v1587
        %v1794 = vmul.f32 %v1541, %v1591
        %v1795 = vmul.f32 %v1542, %v1595
        %v1796 = vmul.f32 %v1543, %v1599
        %v1797 = vmul.f32 %v1544, %v1603
        %v1798 = vmul.f32 %v1545, %v1607
        %v1799 = vmul.f32 %v1546, %v1611
        %v1800 = vmul.f32 %v1547, %v1615
        %v1801 = vmul.f32 %v1548, %v1619
        %v1802 = vmul.f32 %v1549, %v1623
        %v1803 = vmul.f32 %v1550, %v1627
        %v1804 = vmul.f32 %v1551, %v1631
        %v1805 = vmul.f32 %v1552, %v1635
        %v1806 = vmul.f32 %v1553, %v1639
        %v1807 = vmul.f32 %v1554, %v1643
        %v1808 = vmul.f32 %v1555, %v1647
        %v1809 = vmul.f32 %v1556, %v1651
        %v1810 = vmul.f32 %v1557, %v1655
        %v1811 = vmul.f32 %v1558, %v1659
        %v1812 = vmul.f32 %v1559, %v1587
        %v1813 = vmul.f32 %v1560, %v1591
        %v1814 = vmul.f32 %v1561, %v1595
        %v1815 = vmul.f32 %v1562, %v1599
        %v1816 = vmul.f32 %v1563, %v1603
        %v1817 = vmul.f32 %v1564, %v1607
        %v1818 = vmul.f32 %v1565, %v1611
        %v1819 = vmul.f32 %v1566, %v1615
        %v1820 = vmul.f32 %v1567, %v1619
        %v1821 = vmul.f32 %v1568, %v1623
        %v1822 = vmul.f32 %v1569, %v1627
        %v1823 = vmul.f32 %v1570, %v1631
        %v1824 = vmul.f32 %v1571, %v1635
        %v1825 = vmul.f32 %v1572, %v1639
        %v1826 = vmul.f32 %v1573, %v1643
        %v1827 = vmul.f32 %v1574, %v1647
        %v1828 = vmul.f32 %v1575, %v1651
        %v1829 = vmul.f32 %v1576, %v1655
        %v1830 = vmul.f32 %v1577, %v1659
        %v1831 = vld [vmem:[%s3] sm:$0xff]
        %v1832 = vld [vmem:[%s3 + $0x8] sm:$0xff]
        %v1833 = vld [vmem:[%s3 + $0x10] sm:$0x7]
        %v1837 = vlaneseq
        %v1838 = vshrl.u32 %v1837, 7
        %v1839 = vsub.s32 0, %v1838
        %v1840 = vrot.slane %v1831, %v1839
        %v1841 = vlaneseq
        %v1842 = vshrl.u32 %v1841, 7
        %v1843 = vsub.s32 1, %v1842
        %v1844 = vrot.slane %v1831, %v1843
        %v1845 = vlaneseq
        %v1846 = vshrl.u32 %v1845, 7
        %v1847 = vsub.s32 2, %v1846
        %v1848 = vrot.slane %v1831, %v1847
        %v1849 = vlaneseq
        %v1850 = vshrl.u32 %v1849, 7
        %v1851 = vsub.s32 3, %v1850
        %v1852 = vrot.slane %v1831, %v1851
        %v1853 = vlaneseq
        %v1854 = vshrl.u32 %v1853, 7
        %v1855 = vsub.s32 4, %v1854
        %v1856 = vrot.slane %v1831, %v1855
        %v1857 = vlaneseq
        %v1858 = vshrl.u32 %v1857, 7
        %v1859 = vsub.s32 5, %v1858
        %v1860 = vrot.slane %v1831, %v1859
        %v1861 = vlaneseq
        %v1862 = vshrl.u32 %v1861, 7
        %v1863 = vsub.s32 6, %v1862
        %v1864 = vrot.slane %v1831, %v1863
        %v1865 = vlaneseq
        %v1866 = vshrl.u32 %v1865, 7
        %v1867 = vsub.s32 7, %v1866
        %v1868 = vrot.slane %v1831, %v1867
        %v1869 = vlaneseq
        %v1870 = vshrl.u32 %v1869, 7
        %v1871 = vsub.s32 0, %v1870
        %v1872 = vrot.slane %v1832, %v1871
        %v1873 = vlaneseq
        %v1874 = vshrl.u32 %v1873, 7
        %v1875 = vsub.s32 1, %v1874
        %v1876 = vrot.slane %v1832, %v1875
        %v1877 = vlaneseq
        %v1878 = vshrl.u32 %v1877, 7
        %v1879 = vsub.s32 2, %v1878
        %v1880 = vrot.slane %v1832, %v1879
        %v1881 = vlaneseq
        %v1882 = vshrl.u32 %v1881, 7
        %v1883 = vsub.s32 3, %v1882
        %v1884 = vrot.slane %v1832, %v1883
        %v1885 = vlaneseq
        %v1886 = vshrl.u32 %v1885, 7
        %v1887 = vsub.s32 4, %v1886
        %v1888 = vrot.slane %v1832, %v1887
        %v1889 = vlaneseq
        %v1890 = vshrl.u32 %v1889, 7
        %v1891 = vsub.s32 5, %v1890
        %v1892 = vrot.slane %v1832, %v1891
        %v1893 = vlaneseq
        %v1894 = vshrl.u32 %v1893, 7
        %v1895 = vsub.s32 6, %v1894
        %v1896 = vrot.slane %v1832, %v1895
        %v1897 = vlaneseq
        %v1898 = vshrl.u32 %v1897, 7
        %v1899 = vsub.s32 7, %v1898
        %v1900 = vrot.slane %v1832, %v1899
        %v1901 = vlaneseq
        %v1902 = vshrl.u32 %v1901, 7
        %v1903 = vsub.s32 0, %v1902
        %v1904 = vrot.slane %v1833, %v1903
        %v1905 = vlaneseq
        %v1906 = vshrl.u32 %v1905, 7
        %v1907 = vsub.s32 1, %v1906
        %v1908 = vrot.slane %v1833, %v1907
        %v1909 = vlaneseq
        %v1910 = vshrl.u32 %v1909, 7
        %v1911 = vsub.s32 2, %v1910
        %v1912 = vrot.slane %v1833, %v1911
        %v1932 = vadd.f32 %v1679, %v1840
        %v1933 = vadd.f32 %v1680, %v1844
        %v1934 = vadd.f32 %v1681, %v1848
        %v1935 = vadd.f32 %v1682, %v1852
        %v1936 = vadd.f32 %v1683, %v1856
        %v1937 = vadd.f32 %v1684, %v1860
        %v1938 = vadd.f32 %v1685, %v1864
        %v1939 = vadd.f32 %v1686, %v1868
        %v1940 = vadd.f32 %v1687, %v1872
        %v1941 = vadd.f32 %v1688, %v1876
        %v1942 = vadd.f32 %v1689, %v1880
        %v1943 = vadd.f32 %v1690, %v1884
        %v1944 = vadd.f32 %v1691, %v1888
        %v1945 = vadd.f32 %v1692, %v1892
        %v1946 = vadd.f32 %v1693, %v1896
        %v1947 = vadd.f32 %v1694, %v1900
        %v1948 = vadd.f32 %v1695, %v1904
        %v1949 = vadd.f32 %v1696, %v1908
        %v1950 = vadd.f32 %v1697, %v1912
        %v1951 = vadd.f32 %v1698, %v1840
        %v1952 = vadd.f32 %v1699, %v1844
        %v1953 = vadd.f32 %v1700, %v1848
        %v1954 = vadd.f32 %v1701, %v1852
        %v1955 = vadd.f32 %v1702, %v1856
        %v1956 = vadd.f32 %v1703, %v1860
        %v1957 = vadd.f32 %v1704, %v1864
        %v1958 = vadd.f32 %v1705, %v1868
        %v1959 = vadd.f32 %v1706, %v1872
        %v1960 = vadd.f32 %v1707, %v1876
        %v1961 = vadd.f32 %v1708, %v1880
        %v1962 = vadd.f32 %v1709, %v1884
        %v1963 = vadd.f32 %v1710, %v1888
        %v1964 = vadd.f32 %v1711, %v1892
        %v1965 = vadd.f32 %v1712, %v1896
        %v1966 = vadd.f32 %v1713, %v1900
        %v1967 = vadd.f32 %v1714, %v1904
        %v1968 = vadd.f32 %v1715, %v1908
        %v1969 = vadd.f32 %v1716, %v1912
        %v1970 = vadd.f32 %v1717, %v1840
        %v1971 = vadd.f32 %v1718, %v1844
        %v1972 = vadd.f32 %v1719, %v1848
        %v1973 = vadd.f32 %v1720, %v1852
        %v1974 = vadd.f32 %v1721, %v1856
        %v1975 = vadd.f32 %v1722, %v1860
        %v1976 = vadd.f32 %v1723, %v1864
        %v1977 = vadd.f32 %v1724, %v1868
        %v1978 = vadd.f32 %v1725, %v1872
        %v1979 = vadd.f32 %v1726, %v1876
        %v1980 = vadd.f32 %v1727, %v1880
        %v1981 = vadd.f32 %v1728, %v1884
        %v1982 = vadd.f32 %v1729, %v1888
        %v1983 = vadd.f32 %v1730, %v1892
        %v1984 = vadd.f32 %v1731, %v1896
        %v1985 = vadd.f32 %v1732, %v1900
        %v1986 = vadd.f32 %v1733, %v1904
        %v1987 = vadd.f32 %v1734, %v1908
        %v1988 = vadd.f32 %v1735, %v1912
        %v1989 = vadd.f32 %v1736, %v1840
        %v1990 = vadd.f32 %v1737, %v1844
        %v1991 = vadd.f32 %v1738, %v1848
        %v1992 = vadd.f32 %v1739, %v1852
        %v1993 = vadd.f32 %v1740, %v1856
        %v1994 = vadd.f32 %v1741, %v1860
        %v1995 = vadd.f32 %v1742, %v1864
        %v1996 = vadd.f32 %v1743, %v1868
        %v1997 = vadd.f32 %v1744, %v1872
        %v1998 = vadd.f32 %v1745, %v1876
        %v1999 = vadd.f32 %v1746, %v1880
        %v2000 = vadd.f32 %v1747, %v1884
        %v2001 = vadd.f32 %v1748, %v1888
        %v2002 = vadd.f32 %v1749, %v1892
        %v2003 = vadd.f32 %v1750, %v1896
        %v2004 = vadd.f32 %v1751, %v1900
        %v2005 = vadd.f32 %v1752, %v1904
        %v2006 = vadd.f32 %v1753, %v1908
        %v2007 = vadd.f32 %v1754, %v1912
        %v2008 = vadd.f32 %v1755, %v1840
        %v2009 = vadd.f32 %v1756, %v1844
        %v2010 = vadd.f32 %v1757, %v1848
        %v2011 = vadd.f32 %v1758, %v1852
        %v2012 = vadd.f32 %v1759, %v1856
        %v2013 = vadd.f32 %v1760, %v1860
        %v2014 = vadd.f32 %v1761, %v1864
        %v2015 = vadd.f32 %v1762, %v1868
        %v2016 = vadd.f32 %v1763, %v1872
        %v2017 = vadd.f32 %v1764, %v1876
        %v2018 = vadd.f32 %v1765, %v1880
        %v2019 = vadd.f32 %v1766, %v1884
        %v2020 = vadd.f32 %v1767, %v1888
        %v2021 = vadd.f32 %v1768, %v1892
        %v2022 = vadd.f32 %v1769, %v1896
        %v2023 = vadd.f32 %v1770, %v1900
        %v2024 = vadd.f32 %v1771, %v1904
        %v2025 = vadd.f32 %v1772, %v1908
        %v2026 = vadd.f32 %v1773, %v1912
        %v2027 = vadd.f32 %v1774, %v1840
        %v2028 = vadd.f32 %v1775, %v1844
        %v2029 = vadd.f32 %v1776, %v1848
        %v2030 = vadd.f32 %v1777, %v1852
        %v2031 = vadd.f32 %v1778, %v1856
        %v2032 = vadd.f32 %v1779, %v1860
        %v2033 = vadd.f32 %v1780, %v1864
        %v2034 = vadd.f32 %v1781, %v1868
        %v2035 = vadd.f32 %v1782, %v1872
        %v2036 = vadd.f32 %v1783, %v1876
        %v2037 = vadd.f32 %v1784, %v1880
        %v2038 = vadd.f32 %v1785, %v1884
        %v2039 = vadd.f32 %v1786, %v1888
        %v2040 = vadd.f32 %v1787, %v1892
        %v2041 = vadd.f32 %v1788, %v1896
        %v2042 = vadd.f32 %v1789, %v1900
        %v2043 = vadd.f32 %v1790, %v1904
        %v2044 = vadd.f32 %v1791, %v1908
        %v2045 = vadd.f32 %v1792, %v1912
        %v2046 = vadd.f32 %v1793, %v1840
        %v2047 = vadd.f32 %v1794, %v1844
        %v2048 = vadd.f32 %v1795, %v1848
        %v2049 = vadd.f32 %v1796, %v1852
        %v2050 = vadd.f32 %v1797, %v1856
        %v2051 = vadd.f32 %v1798, %v1860
        %v2052 = vadd.f32 %v1799, %v1864
        %v2053 = vadd.f32 %v1800, %v1868
        %v2054 = vadd.f32 %v1801, %v1872
        %v2055 = vadd.f32 %v1802, %v1876
        %v2056 = vadd.f32 %v1803, %v1880
        %v2057 = vadd.f32 %v1804, %v1884
        %v2058 = vadd.f32 %v1805, %v1888
        %v2059 = vadd.f32 %v1806, %v1892
        %v2060 = vadd.f32 %v1807, %v1896
        %v2061 = vadd.f32 %v1808, %v1900
        %v2062 = vadd.f32 %v1809, %v1904
        %v2063 = vadd.f32 %v1810, %v1908
        %v2064 = vadd.f32 %v1811, %v1912
        %v2065 = vadd.f32 %v1812, %v1840
        %v2066 = vadd.f32 %v1813, %v1844
        %v2067 = vadd.f32 %v1814, %v1848
        %v2068 = vadd.f32 %v1815, %v1852
        %v2069 = vadd.f32 %v1816, %v1856
        %v2070 = vadd.f32 %v1817, %v1860
        %v2071 = vadd.f32 %v1818, %v1864
        %v2072 = vadd.f32 %v1819, %v1868
        %v2073 = vadd.f32 %v1820, %v1872
        %v2074 = vadd.f32 %v1821, %v1876
        %v2075 = vadd.f32 %v1822, %v1880
        %v2076 = vadd.f32 %v1823, %v1884
        %v2077 = vadd.f32 %v1824, %v1888
        %v2078 = vadd.f32 %v1825, %v1892
        %v2079 = vadd.f32 %v1826, %v1896
        %v2080 = vadd.f32 %v1827, %v1900
        %v2081 = vadd.f32 %v1828, %v1904
        %v2082 = vadd.f32 %v1829, %v1908
        %v2083 = vadd.f32 %v1830, %v1912
        %v2084 = vld [vmem:[%s4] sm:$0xff]
        %v2085 = vld [vmem:[%s4 + $0x8] sm:$0xff]
        %v2086 = vld [vmem:[%s4 + $0x10] sm:$0xff]
        %v2087 = vld [vmem:[%s4 + $0x18] sm:$0xff]
        %v2088 = vld [vmem:[%s4 + $0x20] sm:$0xff]
        %v2089 = vld [vmem:[%s4 + $0x28] sm:$0xff]
        %v2090 = vld [vmem:[%s4 + $0x30] sm:$0xff]
        %v2091 = vld [vmem:[%s4 + $0x38] sm:$0xff]
        %v2092 = vld [vmem:[%s4 + $0x40] sm:$0xff]
        %v2093 = vld [vmem:[%s4 + $0x48] sm:$0xff]
        %v2094 = vld [vmem:[%s4 + $0x50] sm:$0xff]
        %v2095 = vld [vmem:[%s4 + $0x58] sm:$0xff]
        %v2096 = vld [vmem:[%s4 + $0x60] sm:$0xff]
        %v2097 = vld [vmem:[%s4 + $0x68] sm:$0xff]
        %v2098 = vld [vmem:[%s4 + $0x70] sm:$0xff]
        %v2099 = vld [vmem:[%s4 + $0x78] sm:$0xff]
        %v2100 = vld [vmem:[%s4 + $0x80] sm:$0xff]
        %v2101 = vld [vmem:[%s4 + $0x88] sm:$0xff]
        %v2102 = vld [vmem:[%s4 + $0x90] sm:$0xff]
        %v2103 = vld [vmem:[%s4 + $0x98] sm:$0xff]
        %v2104 = vld [vmem:[%s4 + $0xa0] sm:$0xff]
        %v2105 = vld [vmem:[%s4 + $0xa8] sm:$0xff]
        %v2106 = vld [vmem:[%s4 + $0xb0] sm:$0xff]
        %v2107 = vld [vmem:[%s4 + $0xb8] sm:$0xff]
        %v2108 = vld [vmem:[%s4 + $0xc0] sm:$0xff]
        %v2109 = vld [vmem:[%s4 + $0xc8] sm:$0xff]
        %v2110 = vld [vmem:[%s4 + $0xd0] sm:$0xff]
        %v2111 = vld [vmem:[%s4 + $0xd8] sm:$0xff]
        %v2112 = vld [vmem:[%s4 + $0xe0] sm:$0xff]
        %v2113 = vld [vmem:[%s4 + $0xe8] sm:$0xff]
        %v2114 = vld [vmem:[%s4 + $0xf0] sm:$0xff]
        %v2115 = vld [vmem:[%s4 + $0xf8] sm:$0xff]
        %v2116 = vld [vmem:[%s4 + $0x100] sm:$0xff]
        %v2117 = vld [vmem:[%s4 + $0x108] sm:$0xff]
        %v2118 = vld [vmem:[%s4 + $0x110] sm:$0xff]
        %v2119 = vld [vmem:[%s4 + $0x118] sm:$0xff]
        %v2120 = vld [vmem:[%s4 + $0x120] sm:$0xff]
        %v2121 = vld [vmem:[%s4 + $0x128] sm:$0xff]
        %v2122 = vld [vmem:[%s4 + $0x130] sm:$0xff]
        %v2123 = vld [vmem:[%s4 + $0x138] sm:$0xff]
        %v2124 = vld [vmem:[%s4 + $0x140] sm:$0xff]
        %v2125 = vld [vmem:[%s4 + $0x148] sm:$0xff]
        %v2126 = vld [vmem:[%s4 + $0x150] sm:$0xff]
        %v2127 = vld [vmem:[%s4 + $0x158] sm:$0xff]
        %v2128 = vld [vmem:[%s4 + $0x160] sm:$0xff]
        %v2129 = vld [vmem:[%s4 + $0x168] sm:$0xff]
        %v2130 = vld [vmem:[%s4 + $0x170] sm:$0xff]
        %v2131 = vld [vmem:[%s4 + $0x178] sm:$0xff]
        %v2132 = vld [vmem:[%s4 + $0x180] sm:$0xff]
        %v2133 = vld [vmem:[%s4 + $0x188] sm:$0xff]
        %v2134 = vld [vmem:[%s4 + $0x190] sm:$0xff]
        %v2135 = vld [vmem:[%s4 + $0x198] sm:$0xff]
        %v2136 = vld [vmem:[%s4 + $0x1a0] sm:$0xff]
        %v2137 = vld [vmem:[%s4 + $0x1a8] sm:$0xff]
        %v2138 = vld [vmem:[%s4 + $0x1b0] sm:$0xff]
        %v2139 = vld [vmem:[%s4 + $0x1b8] sm:$0xff]
        %v2140 = vld [vmem:[%s4 + $0x1c0] sm:$0xff]
        %v2141 = vld [vmem:[%s4 + $0x1c8] sm:$0xff]
        %v2142 = vld [vmem:[%s4 + $0x1d0] sm:$0xff]
        %v2143 = vld [vmem:[%s4 + $0x1d8] sm:$0xff]
        %v2144 = vld [vmem:[%s4 + $0x1e0] sm:$0xff]
        %v2145 = vld [vmem:[%s4 + $0x1e8] sm:$0xff]
        %v2146 = vld [vmem:[%s4 + $0x1f0] sm:$0xff]
        %v2147 = vld [vmem:[%s4 + $0x1f8] sm:$0xff]
        %v2148 = vld [vmem:[%s4 + $0x200] sm:$0xff]
        %v2149 = vld [vmem:[%s4 + $0x208] sm:$0xff]
        %v2150 = vld [vmem:[%s4 + $0x210] sm:$0xff]
        %v2151 = vld [vmem:[%s4 + $0x218] sm:$0xff]
        %v2152 = vld [vmem:[%s4 + $0x220] sm:$0xff]
        %v2153 = vld [vmem:[%s4 + $0x228] sm:$0xff]
        %v2154 = vld [vmem:[%s4 + $0x230] sm:$0xff]
        %v2155 = vld [vmem:[%s4 + $0x238] sm:$0xff]
        %v2156 = vld [vmem:[%s4 + $0x240] sm:$0xff]
        %v2157 = vld [vmem:[%s4 + $0x248] sm:$0xff]
        %v2158 = vld [vmem:[%s4 + $0x250] sm:$0xff]
        %v2159 = vld [vmem:[%s4 + $0x258] sm:$0xff]
        %v2160 = vld [vmem:[%s4 + $0x260] sm:$0xff]
        %v2161 = vld [vmem:[%s4 + $0x268] sm:$0xff]
        %v2162 = vld [vmem:[%s4 + $0x270] sm:$0xff]
        %v2163 = vld [vmem:[%s4 + $0x278] sm:$0xff]
        %v2164 = vld [vmem:[%s4 + $0x280] sm:$0xff]
        %v2165 = vld [vmem:[%s4 + $0x288] sm:$0xff]
        %v2166 = vld [vmem:[%s4 + $0x290] sm:$0xff]
        %v2167 = vld [vmem:[%s4 + $0x298] sm:$0xff]
        %v2168 = vld [vmem:[%s4 + $0x2a0] sm:$0xff]
        %v2169 = vld [vmem:[%s4 + $0x2a8] sm:$0xff]
        %v2170 = vld [vmem:[%s4 + $0x2b0] sm:$0xff]
        %v2171 = vld [vmem:[%s4 + $0x2b8] sm:$0xff]
        %v2172 = vld [vmem:[%s4 + $0x2c0] sm:$0xff]
        %v2173 = vld [vmem:[%s4 + $0x2c8] sm:$0xff]
        %v2174 = vld [vmem:[%s4 + $0x2d0] sm:$0xff]
        %v2175 = vld [vmem:[%s4 + $0x2d8] sm:$0xff]
        %v2176 = vld [vmem:[%s4 + $0x2e0] sm:$0xff]
        %v2177 = vld [vmem:[%s4 + $0x2e8] sm:$0xff]
        %v2178 = vld [vmem:[%s4 + $0x2f0] sm:$0xff]
        %v2179 = vld [vmem:[%s4 + $0x2f8] sm:$0xff]
        %v2180 = vld [vmem:[%s4 + $0x300] sm:$0xff]
        %v2181 = vld [vmem:[%s4 + $0x308] sm:$0xff]
        %v2182 = vld [vmem:[%s4 + $0x310] sm:$0xff]
        %v2183 = vld [vmem:[%s4 + $0x318] sm:$0xff]
        %v2184 = vld [vmem:[%s4 + $0x320] sm:$0xff]
        %v2185 = vld [vmem:[%s4 + $0x328] sm:$0xff]
        %v2186 = vld [vmem:[%s4 + $0x330] sm:$0xff]
        %v2187 = vld [vmem:[%s4 + $0x338] sm:$0xff]
        %v2188 = vld [vmem:[%s4 + $0x340] sm:$0xff]
        %v2189 = vld [vmem:[%s4 + $0x348] sm:$0xff]
        %v2190 = vld [vmem:[%s4 + $0x350] sm:$0xff]
        %v2191 = vld [vmem:[%s4 + $0x358] sm:$0xff]
        %v2192 = vld [vmem:[%s4 + $0x360] sm:$0xff]
        %v2193 = vld [vmem:[%s4 + $0x368] sm:$0xff]
        %v2194 = vld [vmem:[%s4 + $0x370] sm:$0xff]
        %v2195 = vld [vmem:[%s4 + $0x378] sm:$0xff]
        %v2196 = vld [vmem:[%s4 + $0x380] sm:$0xff]
        %v2197 = vld [vmem:[%s4 + $0x388] sm:$0xff]
        %v2198 = vld [vmem:[%s4 + $0x390] sm:$0xff]
        %v2199 = vld [vmem:[%s4 + $0x398] sm:$0xff]
        %v2200 = vld [vmem:[%s4 + $0x3a0] sm:$0xff]
        %v2201 = vld [vmem:[%s4 + $0x3a8] sm:$0xff]
        %v2202 = vld [vmem:[%s4 + $0x3b0] sm:$0xff]
        %v2203 = vld [vmem:[%s4 + $0x3b8] sm:$0xff]
        %v2204 = vld [vmem:[%s4 + $0x3c0] sm:$0xff]
        %v2205 = vld [vmem:[%s4 + $0x3c8] sm:$0xff]
        %v2206 = vld [vmem:[%s4 + $0x3d0] sm:$0xff]
        %v2207 = vld [vmem:[%s4 + $0x3d8] sm:$0xff]
        %v2208 = vld [vmem:[%s4 + $0x3e0] sm:$0xff]
        %v2209 = vld [vmem:[%s4 + $0x3e8] sm:$0xff]
        %v2210 = vld [vmem:[%s4 + $0x3f0] sm:$0xff]
        %v2211 = vld [vmem:[%s4 + $0x3f8] sm:$0xff]
        %v2212 = vld [vmem:[%s4 + $0x400] sm:$0xff]
        %v2213 = vld [vmem:[%s4 + $0x408] sm:$0xff]
        %v2214 = vld [vmem:[%s4 + $0x410] sm:$0xff]
        %v2215 = vld [vmem:[%s4 + $0x418] sm:$0xff]
        %v2216 = vld [vmem:[%s4 + $0x420] sm:$0xff]
        %v2217 = vld [vmem:[%s4 + $0x428] sm:$0xff]
        %v2218 = vld [vmem:[%s4 + $0x430] sm:$0xff]
        %v2219 = vld [vmem:[%s4 + $0x438] sm:$0xff]
        %v2220 = vld [vmem:[%s4 + $0x440] sm:$0xff]
        %v2221 = vld [vmem:[%s4 + $0x448] sm:$0xff]
        %v2222 = vld [vmem:[%s4 + $0x450] sm:$0xff]
        %v2223 = vld [vmem:[%s4 + $0x458] sm:$0xff]
        %v2224 = vld [vmem:[%s4 + $0x460] sm:$0xff]
        %v2225 = vld [vmem:[%s4 + $0x468] sm:$0xff]
        %v2226 = vld [vmem:[%s4 + $0x470] sm:$0xff]
        %v2227 = vld [vmem:[%s4 + $0x478] sm:$0xff]
        %v2228 = vld [vmem:[%s4 + $0x480] sm:$0xff]
        %v2229 = vld [vmem:[%s4 + $0x488] sm:$0xff]
        %v2230 = vld [vmem:[%s4 + $0x490] sm:$0xff]
        %v2231 = vld [vmem:[%s4 + $0x498] sm:$0xff]
        %v2232 = vld [vmem:[%s4 + $0x4a0] sm:$0xff]
        %v2233 = vld [vmem:[%s4 + $0x4a8] sm:$0xff]
        %v2234 = vld [vmem:[%s4 + $0x4b0] sm:$0xff]
        %v2235 = vld [vmem:[%s4 + $0x4b8] sm:$0xff]
        %v2236 = vld [vmem:[%s4 + $0x4c0] sm:$0xff]
        %v2237 = vld [vmem:[%s4 + $0x4c8] sm:$0xff]
        %v2238 = vld [vmem:[%s4 + $0x4d0] sm:$0xff]
        %v2239 = vld [vmem:[%s4 + $0x4d8] sm:$0xff]
        %v2240 = vld [vmem:[%s4 + $0x4e0] sm:$0xff]
        %v2241 = vld [vmem:[%s4 + $0x4e8] sm:$0xff]
        %v2242 = vld [vmem:[%s4 + $0x4f0] sm:$0xff]
        %v2243 = vld [vmem:[%s4 + $0x4f8] sm:$0xff]
        %v2244 = vld [vmem:[%s4 + $0x500] sm:$0xff]
        %v2245 = vld [vmem:[%s4 + $0x508] sm:$0xff]
        %v2246 = vld [vmem:[%s4 + $0x510] sm:$0xff]
        %v2247 = vld [vmem:[%s4 + $0x518] sm:$0xff]
        %v2248 = vld [vmem:[%s4 + $0x520] sm:$0xff]
        %v2249 = vld [vmem:[%s4 + $0x528] sm:$0xff]
        %v2250 = vld [vmem:[%s4 + $0x530] sm:$0xff]
        %v2251 = vld [vmem:[%s4 + $0x538] sm:$0xff]
        %v2252 = vld [vmem:[%s4 + $0x540] sm:$0xff]
        %v2253 = vld [vmem:[%s4 + $0x548] sm:$0xff]
        %v2254 = vld [vmem:[%s4 + $0x550] sm:$0xff]
        %v2255 = vld [vmem:[%s4 + $0x558] sm:$0xff]
        %v2256 = vld [vmem:[%s4 + $0x560] sm:$0xff]
        %v2257 = vld [vmem:[%s4 + $0x568] sm:$0xff]
        %v2258 = vld [vmem:[%s4 + $0x570] sm:$0xff]
        %v2259 = vld [vmem:[%s4 + $0x578] sm:$0xff]
        %v2260 = vld [vmem:[%s4 + $0x580] sm:$0xff]
        %v2261 = vld [vmem:[%s4 + $0x588] sm:$0xff]
        %v2262 = vld [vmem:[%s4 + $0x590] sm:$0xff]
        %v2263 = vld [vmem:[%s4 + $0x598] sm:$0xff]
        %v2264 = vld [vmem:[%s4 + $0x5a0] sm:$0xff]
        %v2265 = vld [vmem:[%s4 + $0x5a8] sm:$0xff]
        %v2266 = vld [vmem:[%s4 + $0x5b0] sm:$0xff]
        %v2267 = vld [vmem:[%s4 + $0x5b8] sm:$0xff]
        %v2268 = vld [vmem:[%s4 + $0x5c0] sm:$0xff]
        %v2269 = vld [vmem:[%s4 + $0x5c8] sm:$0xff]
        %v2270 = vld [vmem:[%s4 + $0x5d0] sm:$0xff]
        %v2271 = vld [vmem:[%s4 + $0x5d8] sm:$0xff]
        %v2272 = vld [vmem:[%s4 + $0x5e0] sm:$0xff]
        %v2273 = vld [vmem:[%s4 + $0x5e8] sm:$0xff]
        %v2274 = vld [vmem:[%s4 + $0x5f0] sm:$0xff]
        %v2275 = vld [vmem:[%s4 + $0x5f8] sm:$0xff]
        %v2276 = vld [vmem:[%s4 + $0x600] sm:$0xff]
        %v2277 = vld [vmem:[%s4 + $0x608] sm:$0xff]
        %v2278 = vld [vmem:[%s4 + $0x610] sm:$0xff]
        %v2279 = vld [vmem:[%s4 + $0x618] sm:$0xff]
        %v2280 = vld [vmem:[%s4 + $0x620] sm:$0xff]
        %v2281 = vld [vmem:[%s4 + $0x628] sm:$0xff]
        %v2282 = vld [vmem:[%s4 + $0x630] sm:$0xff]
        %v2283 = vld [vmem:[%s4 + $0x638] sm:$0xff]
        %v2284 = vld [vmem:[%s4 + $0x640] sm:$0xff]
        %v2285 = vld [vmem:[%s4 + $0x648] sm:$0xff]
        %v2286 = vld [vmem:[%s4 + $0x650] sm:$0xff]
        %v2287 = vld [vmem:[%s4 + $0x658] sm:$0xff]
        %v2288 = vld [vmem:[%s4 + $0x660] sm:$0xff]
        %v2289 = vld [vmem:[%s4 + $0x668] sm:$0xff]
        %v2290 = vld [vmem:[%s4 + $0x670] sm:$0xff]
        %v2291 = vld [vmem:[%s4 + $0x678] sm:$0xff]
        %v2292 = vld [vmem:[%s4 + $0x680] sm:$0xff]
        %v2293 = vld [vmem:[%s4 + $0x688] sm:$0xff]
        %v2294 = vld [vmem:[%s4 + $0x690] sm:$0xff]
        %v2295 = vld [vmem:[%s4 + $0x698] sm:$0xff]
        %v2296 = vld [vmem:[%s4 + $0x6a0] sm:$0xff]
        %v2297 = vld [vmem:[%s4 + $0x6a8] sm:$0xff]
        %v2298 = vld [vmem:[%s4 + $0x6b0] sm:$0xff]
        %v2299 = vld [vmem:[%s4 + $0x6b8] sm:$0xff]
        %v2300 = vld [vmem:[%s4 + $0x6c0] sm:$0xff]
        %v2301 = vld [vmem:[%s4 + $0x6c8] sm:$0xff]
        %v2302 = vld [vmem:[%s4 + $0x6d0] sm:$0xff]
        %v2303 = vld [vmem:[%s4 + $0x6d8] sm:$0xff]
        %v2304 = vld [vmem:[%s4 + $0x6e0] sm:$0xff]
        %v2305 = vld [vmem:[%s4 + $0x6e8] sm:$0xff]
        %v2306 = vld [vmem:[%s4 + $0x6f0] sm:$0xff]
        %v2307 = vld [vmem:[%s4 + $0x6f8] sm:$0xff]
        %v2308 = vld [vmem:[%s4 + $0x700] sm:$0xff]
        %v2309 = vld [vmem:[%s4 + $0x708] sm:$0xff]
        %v2310 = vld [vmem:[%s4 + $0x710] sm:$0xff]
        %v2311 = vld [vmem:[%s4 + $0x718] sm:$0xff]
        %v2312 = vld [vmem:[%s4 + $0x720] sm:$0xff]
        %v2313 = vld [vmem:[%s4 + $0x728] sm:$0xff]
        %v2314 = vld [vmem:[%s4 + $0x730] sm:$0xff]
        %v2315 = vld [vmem:[%s4 + $0x738] sm:$0xff]
        %v2316 = vld [vmem:[%s4 + $0x740] sm:$0xff]
        %v2317 = vld [vmem:[%s4 + $0x748] sm:$0xff]
        %v2318 = vld [vmem:[%s4 + $0x750] sm:$0xff]
        %v2319 = vld [vmem:[%s4 + $0x758] sm:$0xff]
        %v2320 = vld [vmem:[%s4 + $0x760] sm:$0xff]
        %v2321 = vld [vmem:[%s4 + $0x768] sm:$0xff]
        %v2322 = vld [vmem:[%s4 + $0x770] sm:$0xff]
        %v2323 = vld [vmem:[%s4 + $0x778] sm:$0xff]
        %v2324 = vld [vmem:[%s4 + $0x780] sm:$0xff]
        %v2325 = vld [vmem:[%s4 + $0x788] sm:$0xff]
        %v2326 = vld [vmem:[%s4 + $0x790] sm:$0xff]
        %v2327 = vld [vmem:[%s4 + $0x798] sm:$0xff]
        %v2328 = vld [vmem:[%s4 + $0x7a0] sm:$0xff]
        %v2329 = vld [vmem:[%s4 + $0x7a8] sm:$0xff]
        %v2330 = vld [vmem:[%s4 + $0x7b0] sm:$0xff]
        %v2331 = vld [vmem:[%s4 + $0x7b8] sm:$0xff]
        %v2332 = vld [vmem:[%s4 + $0x7c0] sm:$0xff]
        %v2333 = vld [vmem:[%s4 + $0x7c8] sm:$0xff]
        %v2334 = vld [vmem:[%s4 + $0x7d0] sm:$0xff]
        %v2335 = vld [vmem:[%s4 + $0x7d8] sm:$0xff]
        %v2336 = vld [vmem:[%s4 + $0x7e0] sm:$0xff]
        %v2337 = vld [vmem:[%s4 + $0x7e8] sm:$0xff]
        %v2338 = vld [vmem:[%s4 + $0x7f0] sm:$0xff]
        %v2339 = vld [vmem:[%s4 + $0x7f8] sm:$0xff]
        %v2340 = vld [vmem:[%s4 + $0x800] sm:$0xff]
        %v2341 = vld [vmem:[%s4 + $0x808] sm:$0xff]
        %v2342 = vld [vmem:[%s4 + $0x810] sm:$0xff]
        %v2343 = vld [vmem:[%s4 + $0x818] sm:$0xff]
        %v2344 = vld [vmem:[%s4 + $0x820] sm:$0xff]
        %v2345 = vld [vmem:[%s4 + $0x828] sm:$0xff]
        %v2346 = vld [vmem:[%s4 + $0x830] sm:$0xff]
        %v2347 = vld [vmem:[%s4 + $0x838] sm:$0xff]
        %v2348 = vld [vmem:[%s4 + $0x840] sm:$0xff]
        %v2349 = vld [vmem:[%s4 + $0x848] sm:$0xff]
        %v2350 = vld [vmem:[%s4 + $0x850] sm:$0xff]
        %v2351 = vld [vmem:[%s4 + $0x858] sm:$0xff]
        %v2352 = vld [vmem:[%s4 + $0x860] sm:$0xff]
        %v2353 = vld [vmem:[%s4 + $0x868] sm:$0xff]
        %v2354 = vld [vmem:[%s4 + $0x870] sm:$0xff]
        %v2355 = vld [vmem:[%s4 + $0x878] sm:$0xff]
        %v2356 = vld [vmem:[%s4 + $0x880] sm:$0xff]
        %v2357 = vld [vmem:[%s4 + $0x888] sm:$0xff]
        %v2358 = vld [vmem:[%s4 + $0x890] sm:$0xff]
        %v2359 = vld [vmem:[%s4 + $0x898] sm:$0xff]
        %v2360 = vld [vmem:[%s4 + $0x8a0] sm:$0xff]
        %v2361 = vld [vmem:[%s4 + $0x8a8] sm:$0xff]
        %v2362 = vld [vmem:[%s4 + $0x8b0] sm:$0xff]
        %v2363 = vld [vmem:[%s4 + $0x8b8] sm:$0xff]
        %v2364 = vld [vmem:[%s4 + $0x8c0] sm:$0xff]
        %v2365 = vld [vmem:[%s4 + $0x8c8] sm:$0xff]
        %v2366 = vld [vmem:[%s4 + $0x8d0] sm:$0xff]
        %v2367 = vld [vmem:[%s4 + $0x8d8] sm:$0xff]
        %v2368 = vld [vmem:[%s4 + $0x8e0] sm:$0xff]
        %v2369 = vld [vmem:[%s4 + $0x8e8] sm:$0xff]
        %v2370 = vld [vmem:[%s4 + $0x8f0] sm:$0xff]
        %v2371 = vld [vmem:[%s4 + $0x8f8] sm:$0xff]
        %v2372 = vld [vmem:[%s4 + $0x900] sm:$0xff]
        %v2373 = vld [vmem:[%s4 + $0x908] sm:$0xff]
        %v2374 = vld [vmem:[%s4 + $0x910] sm:$0xff]
        %v2375 = vld [vmem:[%s4 + $0x918] sm:$0xff]
        %v2376 = vld [vmem:[%s4 + $0x920] sm:$0xff]
        %v2377 = vld [vmem:[%s4 + $0x928] sm:$0xff]
        %v2378 = vld [vmem:[%s5] sm:$0x1]
        %v2380 = vlaneseq
        %v2381 = vshrl.u32 %v2380, 7
        %v2382 = vsub.s32 0, %v2381
        %v2383 = vrot.slane %v2378, %v2382
        %v2386 = vsel %vm769, %v1950, 0
        %v2389 = vsel %vm769, %v1969, 0
        %v2392 = vsel %vm769, %v1988, 0
        %v2395 = vsel %vm769, %v2007, 0
        %v2398 = vsel %vm769, %v2026, 0
        %v2401 = vsel %vm769, %v2045, 0
        %v2404 = vsel %vm769, %v2064, 0
        %v2407 = vsel %vm769, %v2083, 0
        %2409 = vmatprep.subr.mxu0 0.0
        %2410 = vmatpush1.msra.mxu0 %v2084
        %2411 = vmatprep.subr.mxu0 0.0
        %2412 = vmatpush1.msra.mxu0 %v2085
        %2413 = vmatprep.subr.mxu0 0.0
        %2414 = vmatpush1.msra.mxu0 %v2086
        %2415 = vmatprep.subr.mxu0 0.0
        %2416 = vmatpush1.msra.mxu0 %v2087
        %2417 = vmatprep.subr.mxu0 0.0
        %2418 = vmatpush1.msra.mxu0 %v2088
        %2419 = vmatprep.subr.mxu0 0.0
        %2420 = vmatpush1.msra.mxu0 %v2089
        %2421 = vmatprep.subr.mxu0 0.0
        %2422 = vmatpush1.msra.mxu0 %v2090
        %2423 = vmatprep.subr.mxu0 0.0
        %2424 = vmatpush1.msra.mxu0 %v2091
        %2425 = vmatprep.subr.mxu0 0.0
        %2426 = vmatpush1.msra.mxu0 %v2092
        %2427 = vmatprep.subr.mxu0 0.0
        %2428 = vmatpush1.msra.mxu0 %v2093
        %2429 = vmatprep.subr.mxu0 0.0
        %2430 = vmatpush1.msra.mxu0 %v2094
        %2431 = vmatprep.subr.mxu0 0.0
        %2432 = vmatpush1.msra.mxu0 %v2095
        %2433 = vmatprep.subr.mxu0 0.0
        %2434 = vmatpush1.msra.mxu0 %v2096
        %2435 = vmatprep.subr.mxu0 0.0
        %2436 = vmatpush1.msra.mxu0 %v2097
        %2437 = vmatprep.subr.mxu0 0.0
        %2438 = vmatpush1.msra.mxu0 %v2098
        %2439 = vmatprep.subr.mxu0 0.0
        %2440 = vmatpush1.msra.mxu0 %v2099
        %2441 = vmatprep.subr.mxu0 0.0
        %2442 = vmatpush1.msra.mxu0 %v2100
        %2443 = vmatprep.subr.mxu0 0.0
        %2444 = vmatpush1.msra.mxu0 %v2101
        %2445 = vmatprep.subr.mxu0 0.0
        %2446 = vmatpush1.msra.mxu0 %v2102
        %2447 = vmatprep.subr.mxu0 0.0
        %2448 = vmatpush1.msra.mxu0 %v2103
        %2449 = vmatprep.subr.mxu0 0.0
        %2450 = vmatpush1.msra.mxu0 %v2104
        %2451 = vmatprep.subr.mxu0 0.0
        %2452 = vmatpush1.msra.mxu0 %v2105
        %2453 = vmatprep.subr.mxu0 0.0
        %2454 = vmatpush1.msra.mxu0 %v2106
        %2455 = vmatprep.subr.mxu0 0.0
        %2456 = vmatpush1.msra.mxu0 %v2107
        %2457 = vmatprep.subr.mxu0 0.0
        %2458 = vmatpush1.msra.mxu0 %v2108
        %2459 = vmatprep.subr.mxu0 0.0
        %2460 = vmatpush1.msra.mxu0 %v2109
        %2461 = vmatprep.subr.mxu0 0.0
        %2462 = vmatpush1.msra.mxu0 %v2110
        %2463 = vmatprep.subr.mxu0 0.0
        %2464 = vmatpush1.msra.mxu0 %v2111
        %2465 = vmatprep.subr.mxu0 0.0
        %2466 = vmatpush1.msra.mxu0 %v2112
        %2467 = vmatprep.subr.mxu0 0.0
        %2468 = vmatpush1.msra.mxu0 %v2113
        %2469 = vmatprep.subr.mxu0 0.0
        %2470 = vmatpush1.msra.mxu0 %v2114
        %2471 = vmatprep.subr.mxu0 0.0
        %2472 = vmatpush1.msra.mxu0 %v2115
        %2473 = vmatprep.mubr.f32.mxu0 %v1933
        %2474 = vmatmul.mubr.f32.gmra.mrb[0].mxu0 %v1932
        %v2475 = vpop.f32.mrb[0].mxu0
        %v2476 = vadd.f32 %v2383, %v2475
        %v2477 = vpop.f32.mrb[0].mxu0
        %2478 = vmatprep.mubr.f32.mxu0 %v1952
        %2479 = vmatmul.mubr.f32.gmra.mrb[0].mxu0 %v1951
        %v2480 = vpop.f32.mrb[0].mxu0
        %v2481 = vadd.f32 %v2383, %v2480
        %v2482 = vpop.f32.mrb[0].mxu0
        %2483 = vmatprep.mubr.f32.mxu0 %v1971
        %2484 = vmatmul.mubr.f32.gmra.mrb[0].mxu0 %v1970
        %v2485 = vpop.f32.mrb[0].mxu0
        %v2486 = vadd.f32 %v2383, %v2485
        %v2487 = vpop.f32.mrb[0].mxu0
        %2488 = vmatprep.mubr.f32.mxu0 %v1990
        %2489 = vmatmul.mubr.f32.gmra.mrb[0].mxu0 %v1989
        %v2490 = vpop.f32.mrb[0].mxu0
        %v2491 = vadd.f32 %v2383, %v2490
        %v2492 = vpop.f32.mrb[0].mxu0
        %2493 = vmatprep.mubr.f32.mxu0 %v2009
        %2494 = vmatmul.mubr.f32.gmra.mrb[0].mxu0 %v2008
        %v2495 = vpop.f32.mrb[0].mxu0
        %v2496 = vadd.f32 %v2383, %v2495
        %v2497 = vpop.f32.mrb[0].mxu0
        %2498 = vmatprep.mubr.f32.mxu0 %v2028
        %2499 = vmatmul.mubr.f32.gmra.mrb[0].mxu0 %v2027
        %v2500 = vpop.f32.mrb[0].mxu0
        %v2501 = vadd.f32 %v2383, %v2500
        %v2502 = vpop.f32.mrb[0].mxu0
        %2503 = vmatprep.mubr.f32.mxu0 %v2047
        %2504 = vmatmul.mubr.f32.gmra.mrb[0].mxu0 %v2046
        %v2505 = vpop.f32.mrb[0].mxu0
        %v2506 = vadd.f32 %v2383, %v2505
        %v2507 = vpop.f32.mrb[0].mxu0
        %2508 = vmatprep.mubr.f32.mxu0 %v2066
        %2509 = vmatmul.mubr.f32.gmra.mrb[0].mxu0 %v2065
        %v2510 = vpop.f32.mrb[0].mxu0
        %v2511 = vadd.f32 %v2383, %v2510
        %v2512 = vpop.f32.mrb[0].mxu0
        %2513 = vdwg.mxu0
        %2514 = vmatprep.subr.mxu0 0.0
        %2515 = vmatpush1.msra.mxu0 %v2116
        %2516 = vmatprep.subr.mxu0 0.0
        %2517 = vmatpush1.msra.mxu0 %v2117
        %2518 = vmatprep.subr.mxu0 0.0
        %2519 = vmatpush1.msra.mxu0 %v2118
        %2520 = vmatprep.subr.mxu0 0.0
        %2521 = vmatpush1.msra.mxu0 %v2119
        %2522 = vmatprep.subr.mxu0 0.0
        %2523 = vmatpush1.msra.mxu0 %v2120
        %2524 = vmatprep.subr.mxu0 0.0
        %2525 = vmatpush1.msra.mxu0 %v2121
        %2526 = vmatprep.subr.mxu0 0.0
        %2527 = vmatpush1.msra.mxu0 %v2122
        %2528 = vmatprep.subr.mxu0 0.0
        %2529 = vmatpush1.msra.mxu0 %v2123
        %2530 = vmatprep.subr.mxu0 0.0
        %2531 = vmatpush1.msra.mxu0 %v2124
        %2532 = vmatprep.subr.mxu0 0.0
        %2533 = vmatpush1.msra.mxu0 %v2125
        %2534 = vmatprep.subr.mxu0 0.0
        %2535 = vmatpush1.msra.mxu0 %v2126
        %2536 = vmatprep.subr.mxu0 0.0
        %2537 = vmatpush1.msra.mxu0 %v2127
        %2538 = vmatprep.subr.mxu0 0.0
        %2539 = vmatpush1.msra.mxu0 %v2128
        %2540 = vmatprep.subr.mxu0 0.0
        %2541 = vmatpush1.msra.mxu0 %v2129
        %2542 = vmatprep.subr.mxu0 0.0
        %2543 = vmatpush1.msra.mxu0 %v2130
        %2544 = vmatprep.subr.mxu0 0.0
        %2545 = vmatpush1.msra.mxu0 %v2131
        %2546 = vmatprep.subr.mxu0 0.0
        %2547 = vmatpush1.msra.mxu0 %v2132
        %2548 = vmatprep.subr.mxu0 0.0
        %2549 = vmatpush1.msra.mxu0 %v2133
        %2550 = vmatprep.subr.mxu0 0.0
        %2551 = vmatpush1.msra.mxu0 %v2134
        %2552 = vmatprep.subr.mxu0 0.0
        %2553 = vmatpush1.msra.mxu0 %v2135
        %2554 = vmatprep.subr.mxu0 0.0
        %2555 = vmatpush1.msra.mxu0 %v2136
        %2556 = vmatprep.subr.mxu0 0.0
        %2557 = vmatpush1.msra.mxu0 %v2137
        %2558 = vmatprep.subr.mxu0 0.0
        %2559 = vmatpush1.msra.mxu0 %v2138
        %2560 = vmatprep.subr.mxu0 0.0
        %2561 = vmatpush1.msra.mxu0 %v2139
        %2562 = vmatprep.subr.mxu0 0.0
        %2563 = vmatpush1.msra.mxu0 %v2140
        %2564 = vmatprep.subr.mxu0 0.0
        %2565 = vmatpush1.msra.mxu0 %v2141
        %2566 = vmatprep.subr.mxu0 0.0
        %2567 = vmatpush1.msra.mxu0 %v2142
        %2568 = vmatprep.subr.mxu0 0.0
        %2569 = vmatpush1.msra.mxu0 %v2143
        %2570 = vmatprep.subr.mxu0 0.0
        %2571 = vmatpush1.msra.mxu0 %v2144
        %2572 = vmatprep.subr.mxu0 0.0
        %2573 = vmatpush1.msra.mxu0 %v2145
        %2574 = vmatprep.subr.mxu0 0.0
        %2575 = vmatpush1.msra.mxu0 %v2146
        %2576 = vmatprep.subr.mxu0 0.0
        %2577 = vmatpush1.msra.mxu0 %v2147
        %2578 = vmatprep.mubr.f32.mxu0 %v1935
        %2579 = vmatmul.mubr.f32.gmra.mrb[0].mxu0 %v1934
        %v2580 = vpop.f32.mrb[0].mxu0
        %v2581 = vadd.f32 %v2476, %v2580
        %v2582 = vpop.f32.mrb[0].mxu0
        %2583 = vmatprep.mubr.f32.mxu0 %v1954
        %2584 = vmatmul.mubr.f32.gmra.mrb[0].mxu0 %v1953
        %v2585 = vpop.f32.mrb[0].mxu0
        %v2586 = vadd.f32 %v2481, %v2585
        %v2587 = vpop.f32.mrb[0].mxu0
        %2588 = vmatprep.mubr.f32.mxu0 %v1973
        %2589 = vmatmul.mubr.f32.gmra.mrb[0].mxu0 %v1972
        %v2590 = vpop.f32.mrb[0].mxu0
        %v2591 = vadd.f32 %v2486, %v2590
        %v2592 = vpop.f32.mrb[0].mxu0
        %2593 = vmatprep.mubr.f32.mxu0 %v1992
        %2594 = vmatmul.mubr.f32.gmra.mrb[0].mxu0 %v1991
        %v2595 = vpop.f32.mrb[0].mxu0
        %v2596 = vadd.f32 %v2491, %v2595
        %v2597 = vpop.f32.mrb[0].mxu0
        %2598 = vmatprep.mubr.f32.mxu0 %v2011
        %2599 = vmatmul.mubr.f32.gmra.mrb[0].mxu0 %v2010
        %v2600 = vpop.f32.mrb[0].mxu0
        %v2601 = vadd.f32 %v2496, %v2600
        %v2602 = vpop.f32.mrb[0].mxu0
        %2603 = vmatprep.mubr.f32.mxu0 %v2030
        %2604 = vmatmul.mubr.f32.gmra.mrb[0].mxu0 %v2029
        %v2605 = vpop.f32.mrb[0].mxu0
        %v2606 = vadd.f32 %v2501, %v2605
        %v2607 = vpop.f32.mrb[0].mxu0
        %2608 = vmatprep.mubr.f32.mxu0 %v2049
        %2609 = vmatmul.mubr.f32.gmra.mrb[0].mxu0 %v2048
        %v2610 = vpop.f32.mrb[0].mxu0
        %v2611 = vadd.f32 %v2506, %v2610
        %v2612 = vpop.f32.mrb[0].mxu0
        %2613 = vmatprep.mubr.f32.mxu0 %v2068
        %2614 = vmatmul.mubr.f32.gmra.mrb[0].mxu0 %v2067
        %v2615 = vpop.f32.mrb[0].mxu0
        %v2616 = vadd.f32 %v2511, %v2615
        %v2617 = vpop.f32.mrb[0].mxu0
        %2618 = vdwg.mxu0
        %2619 = vmatprep.subr.mxu0 0.0
        %2620 = vmatpush1.msra.mxu0 %v2148
        %2621 = vmatprep.subr.mxu0 0.0
        %2622 = vmatpush1.msra.mxu0 %v2149
        %2623 = vmatprep.subr.mxu0 0.0
        %2624 = vmatpush1.msra.mxu0 %v2150
        %2625 = vmatprep.subr.mxu0 0.0
        %2626 = vmatpush1.msra.mxu0 %v2151
        %2627 = vmatprep.subr.mxu0 0.0
        %2628 = vmatpush1.msra.mxu0 %v2152
        %2629 = vmatprep.subr.mxu0 0.0
        %2630 = vmatpush1.msra.mxu0 %v2153
        %2631 = vmatprep.subr.mxu0 0.0
        %2632 = vmatpush1.msra.mxu0 %v2154
        %2633 = vmatprep.subr.mxu0 0.0
        %2634 = vmatpush1.msra.mxu0 %v2155
        %2635 = vmatprep.subr.mxu0 0.0
        %2636 = vmatpush1.msra.mxu0 %v2156
        %2637 = vmatprep.subr.mxu0 0.0
        %2638 = vmatpush1.msra.mxu0 %v2157
        %2639 = vmatprep.subr.mxu0 0.0
        %2640 = vmatpush1.msra.mxu0 %v2158
        %2641 = vmatprep.subr.mxu0 0.0
        %2642 = vmatpush1.msra.mxu0 %v2159
        %2643 = vmatprep.subr.mxu0 0.0
        %2644 = vmatpush1.msra.mxu0 %v2160
        %2645 = vmatprep.subr.mxu0 0.0
        %2646 = vmatpush1.msra.mxu0 %v2161
        %2647 = vmatprep.subr.mxu0 0.0
        %2648 = vmatpush1.msra.mxu0 %v2162
        %2649 = vmatprep.subr.mxu0 0.0
        %2650 = vmatpush1.msra.mxu0 %v2163
        %2651 = vmatprep.subr.mxu0 0.0
        %2652 = vmatpush1.msra.mxu0 %v2164
        %2653 = vmatprep.subr.mxu0 0.0
        %2654 = vmatpush1.msra.mxu0 %v2165
        %2655 = vmatprep.subr.mxu0 0.0
        %2656 = vmatpush1.msra.mxu0 %v2166
        %2657 = vmatprep.subr.mxu0 0.0
        %2658 = vmatpush1.msra.mxu0 %v2167
        %2659 = vmatprep.subr.mxu0 0.0
        %2660 = vmatpush1.msra.mxu0 %v2168
        %2661 = vmatprep.subr.mxu0 0.0
        %2662 = vmatpush1.msra.mxu0 %v2169
        %2663 = vmatprep.subr.mxu0 0.0
        %2664 = vmatpush1.msra.mxu0 %v2170
        %2665 = vmatprep.subr.mxu0 0.0
        %2666 = vmatpush1.msra.mxu0 %v2171
        %2667 = vmatprep.subr.mxu0 0.0
        %2668 = vmatpush1.msra.mxu0 %v2172
        %2669 = vmatprep.subr.mxu0 0.0
        %2670 = vmatpush1.msra.mxu0 %v2173
        %2671 = vmatprep.subr.mxu0 0.0
        %2672 = vmatpush1.msra.mxu0 %v2174
        %2673 = vmatprep.subr.mxu0 0.0
        %2674 = vmatpush1.msra.mxu0 %v2175
        %2675 = vmatprep.subr.mxu0 0.0
        %2676 = vmatpush1.msra.mxu0 %v2176
        %2677 = vmatprep.subr.mxu0 0.0
        %2678 = vmatpush1.msra.mxu0 %v2177
        %2679 = vmatprep.subr.mxu0 0.0
        %2680 = vmatpush1.msra.mxu0 %v2178
        %2681 = vmatprep.subr.mxu0 0.0
        %2682 = vmatpush1.msra.mxu0 %v2179
        %2683 = vmatprep.mubr.f32.mxu0 %v1937
        %2684 = vmatmul.mubr.f32.gmra.mrb[0].mxu0 %v1936
        %v2685 = vpop.f32.mrb[0].mxu0
        %v2686 = vadd.f32 %v2581, %v2685
        %v2687 = vpop.f32.mrb[0].mxu0
        %2688 = vmatprep.mubr.f32.mxu0 %v1956
        %2689 = vmatmul.mubr.f32.gmra.mrb[0].mxu0 %v1955
        %v2690 = vpop.f32.mrb[0].mxu0
        %v2691 = vadd.f32 %v2586, %v2690
        %v2692 = vpop.f32.mrb[0].mxu0
        %2693 = vmatprep.mubr.f32.mxu0 %v1975
        %2694 = vmatmul.mubr.f32.gmra.mrb[0].mxu0 %v1974
        %v2695 = vpop.f32.mrb[0].mxu0
        %v2696 = vadd.f32 %v2591, %v2695
        %v2697 = vpop.f32.mrb[0].mxu0
        %2698 = vmatprep.mubr.f32.mxu0 %v1994
        %2699 = vmatmul.mubr.f32.gmra.mrb[0].mxu0 %v1993
        %v2700 = vpop.f32.mrb[0].mxu0
        %v2701 = vadd.f32 %v2596, %v2700
        %v2702 = vpop.f32.mrb[0].mxu0
        %2703 = vmatprep.mubr.f32.mxu0 %v2013
        %2704 = vmatmul.mubr.f32.gmra.mrb[0].mxu0 %v2012
        %v2705 = vpop.f32.mrb[0].mxu0
        %v2706 = vadd.f32 %v2601, %v2705
        %v2707 = vpop.f32.mrb[0].mxu0
        %2708 = vmatprep.mubr.f32.mxu0 %v2032
        %2709 = vmatmul.mubr.f32.gmra.mrb[0].mxu0 %v2031
        %v2710 = vpop.f32.mrb[0].mxu0
        %v2711 = vadd.f32 %v2606, %v2710
        %v2712 = vpop.f32.mrb[0].mxu0
        %2713 = vmatprep.mubr.f32.mxu0 %v2051
        %2714 = vmatmul.mubr.f32.gmra.mrb[0].mxu0 %v2050
        %v2715 = vpop.f32.mrb[0].mxu0
        %v2716 = vadd.f32 %v2611, %v2715
        %v2717 = vpop.f32.mrb[0].mxu0
        %2718 = vmatprep.mubr.f32.mxu0 %v2070
        %2719 = vmatmul.mubr.f32.gmra.mrb[0].mxu0 %v2069
        %v2720 = vpop.f32.mrb[0].mxu0
        %v2721 = vadd.f32 %v2616, %v2720
        %v2722 = vpop.f32.mrb[0].mxu0
        %2723 = vdwg.mxu0
        %2724 = vmatprep.subr.mxu0 0.0
        %2725 = vmatpush1.msra.mxu0 %v2180
        %2726 = vmatprep.subr.mxu0 0.0
        %2727 = vmatpush1.msra.mxu0 %v2181
        %2728 = vmatprep.subr.mxu0 0.0
        %2729 = vmatpush1.msra.mxu0 %v2182
        %2730 = vmatprep.subr.mxu0 0.0
        %2731 = vmatpush1.msra.mxu0 %v2183
        %2732 = vmatprep.subr.mxu0 0.0
        %2733 = vmatpush1.msra.mxu0 %v2184
        %2734 = vmatprep.subr.mxu0 0.0
        %2735 = vmatpush1.msra.mxu0 %v2185
        %2736 = vmatprep.subr.mxu0 0.0
        %2737 = vmatpush1.msra.mxu0 %v2186
        %2738 = vmatprep.subr.mxu0 0.0
        %2739 = vmatpush1.msra.mxu0 %v2187
        %2740 = vmatprep.subr.mxu0 0.0
        %2741 = vmatpush1.msra.mxu0 %v2188
        %2742 = vmatprep.subr.mxu0 0.0
        %2743 = vmatpush1.msra.mxu0 %v2189
        %2744 = vmatprep.subr.mxu0 0.0
        %2745 = vmatpush1.msra.mxu0 %v2190
        %2746 = vmatprep.subr.mxu0 0.0
        %2747 = vmatpush1.msra.mxu0 %v2191
        %2748 = vmatprep.subr.mxu0 0.0
        %2749 = vmatpush1.msra.mxu0 %v2192
        %2750 = vmatprep.subr.mxu0 0.0
        %2751 = vmatpush1.msra.mxu0 %v2193
        %2752 = vmatprep.subr.mxu0 0.0
        %2753 = vmatpush1.msra.mxu0 %v2194
        %2754 = vmatprep.subr.mxu0 0.0
        %2755 = vmatpush1.msra.mxu0 %v2195
        %2756 = vmatprep.subr.mxu0 0.0
        %2757 = vmatpush1.msra.mxu0 %v2196
        %2758 = vmatprep.subr.mxu0 0.0
        %2759 = vmatpush1.msra.mxu0 %v2197
        %2760 = vmatprep.subr.mxu0 0.0
        %2761 = vmatpush1.msra.mxu0 %v2198
        %2762 = vmatprep.subr.mxu0 0.0
        %2763 = vmatpush1.msra.mxu0 %v2199
        %2764 = vmatprep.subr.mxu0 0.0
        %2765 = vmatpush1.msra.mxu0 %v2200
        %2766 = vmatprep.subr.mxu0 0.0
        %2767 = vmatpush1.msra.mxu0 %v2201
        %2768 = vmatprep.subr.mxu0 0.0
        %2769 = vmatpush1.msra.mxu0 %v2202
        %2770 = vmatprep.subr.mxu0 0.0
        %2771 = vmatpush1.msra.mxu0 %v2203
        %2772 = vmatprep.subr.mxu0 0.0
        %2773 = vmatpush1.msra.mxu0 %v2204
        %2774 = vmatprep.subr.mxu0 0.0
        %2775 = vmatpush1.msra.mxu0 %v2205
        %2776 = vmatprep.subr.mxu0 0.0
        %2777 = vmatpush1.msra.mxu0 %v2206
        %2778 = vmatprep.subr.mxu0 0.0
        %2779 = vmatpush1.msra.mxu0 %v2207
        %2780 = vmatprep.subr.mxu0 0.0
        %2781 = vmatpush1.msra.mxu0 %v2208
        %2782 = vmatprep.subr.mxu0 0.0
        %2783 = vmatpush1.msra.mxu0 %v2209
        %2784 = vmatprep.subr.mxu0 0.0
        %2785 = vmatpush1.msra.mxu0 %v2210
        %2786 = vmatprep.subr.mxu0 0.0
        %2787 = vmatpush1.msra.mxu0 %v2211
        %2788 = vmatprep.mubr.f32.mxu0 %v1939
        %2789 = vmatmul.mubr.f32.gmra.mrb[0].mxu0 %v1938
        %v2790 = vpop.f32.mrb[0].mxu0
        %v2791 = vadd.f32 %v2686, %v2790
        %v2792 = vpop.f32.mrb[0].mxu0
        %2793 = vmatprep.mubr.f32.mxu0 %v1958
        %2794 = vmatmul.mubr.f32.gmra.mrb[0].mxu0 %v1957
        %v2795 = vpop.f32.mrb[0].mxu0
        %v2796 = vadd.f32 %v2691, %v2795
        %v2797 = vpop.f32.mrb[0].mxu0
        %2798 = vmatprep.mubr.f32.mxu0 %v1977
        %2799 = vmatmul.mubr.f32.gmra.mrb[0].mxu0 %v1976
        %v2800 = vpop.f32.mrb[0].mxu0
        %v2801 = vadd.f32 %v2696, %v2800
        %v2802 = vpop.f32.mrb[0].mxu0
        %2803 = vmatprep.mubr.f32.mxu0 %v1996
        %2804 = vmatmul.mubr.f32.gmra.mrb[0].mxu0 %v1995
        %v2805 = vpop.f32.mrb[0].mxu0
        %v2806 = vadd.f32 %v2701, %v2805
        %v2807 = vpop.f32.mrb[0].mxu0
        %2808 = vmatprep.mubr.f32.mxu0 %v2015
        %2809 = vmatmul.mubr.f32.gmra.mrb[0].mxu0 %v2014
        %v2810 = vpop.f32.mrb[0].mxu0
        %v2811 = vadd.f32 %v2706, %v2810
        %v2812 = vpop.f32.mrb[0].mxu0
        %2813 = vmatprep.mubr.f32.mxu0 %v2034
        %2814 = vmatmul.mubr.f32.gmra.mrb[0].mxu0 %v2033
        %v2815 = vpop.f32.mrb[0].mxu0
        %v2816 = vadd.f32 %v2711, %v2815
        %v2817 = vpop.f32.mrb[0].mxu0
        %2818 = vmatprep.mubr.f32.mxu0 %v2053
        %2819 = vmatmul.mubr.f32.gmra.mrb[0].mxu0 %v2052
        %v2820 = vpop.f32.mrb[0].mxu0
        %v2821 = vadd.f32 %v2716, %v2820
        %v2822 = vpop.f32.mrb[0].mxu0
        %2823 = vmatprep.mubr.f32.mxu0 %v2072
        %2824 = vmatmul.mubr.f32.gmra.mrb[0].mxu0 %v2071
        %v2825 = vpop.f32.mrb[0].mxu0
        %v2826 = vadd.f32 %v2721, %v2825
        %v2827 = vpop.f32.mrb[0].mxu0
        %2828 = vdwg.mxu0
        %2829 = vmatprep.subr.mxu0 0.0
        %2830 = vmatpush1.msra.mxu0 %v2212
        %2831 = vmatprep.subr.mxu0 0.0
        %2832 = vmatpush1.msra.mxu0 %v2213
        %2833 = vmatprep.subr.mxu0 0.0
        %2834 = vmatpush1.msra.mxu0 %v2214
        %2835 = vmatprep.subr.mxu0 0.0
        %2836 = vmatpush1.msra.mxu0 %v2215
        %2837 = vmatprep.subr.mxu0 0.0
        %2838 = vmatpush1.msra.mxu0 %v2216
        %2839 = vmatprep.subr.mxu0 0.0
        %2840 = vmatpush1.msra.mxu0 %v2217
        %2841 = vmatprep.subr.mxu0 0.0
        %2842 = vmatpush1.msra.mxu0 %v2218
        %2843 = vmatprep.subr.mxu0 0.0
        %2844 = vmatpush1.msra.mxu0 %v2219
        %2845 = vmatprep.subr.mxu0 0.0
        %2846 = vmatpush1.msra.mxu0 %v2220
        %2847 = vmatprep.subr.mxu0 0.0
        %2848 = vmatpush1.msra.mxu0 %v2221
        %2849 = vmatprep.subr.mxu0 0.0
        %2850 = vmatpush1.msra.mxu0 %v2222
        %2851 = vmatprep.subr.mxu0 0.0
        %2852 = vmatpush1.msra.mxu0 %v2223
        %2853 = vmatprep.subr.mxu0 0.0
        %2854 = vmatpush1.msra.mxu0 %v2224
        %2855 = vmatprep.subr.mxu0 0.0
        %2856 = vmatpush1.msra.mxu0 %v2225
        %2857 = vmatprep.subr.mxu0 0.0
        %2858 = vmatpush1.msra.mxu0 %v2226
        %2859 = vmatprep.subr.mxu0 0.0
        %2860 = vmatpush1.msra.mxu0 %v2227
        %2861 = vmatprep.subr.mxu0 0.0
        %2862 = vmatpush1.msra.mxu0 %v2228
        %2863 = vmatprep.subr.mxu0 0.0
        %2864 = vmatpush1.msra.mxu0 %v2229
        %2865 = vmatprep.subr.mxu0 0.0
        %2866 = vmatpush1.msra.mxu0 %v2230
        %2867 = vmatprep.subr.mxu0 0.0
        %2868 = vmatpush1.msra.mxu0 %v2231
        %2869 = vmatprep.subr.mxu0 0.0
        %2870 = vmatpush1.msra.mxu0 %v2232
        %2871 = vmatprep.subr.mxu0 0.0
        %2872 = vmatpush1.msra.mxu0 %v2233
        %2873 = vmatprep.subr.mxu0 0.0
        %2874 = vmatpush1.msra.mxu0 %v2234
        %2875 = vmatprep.subr.mxu0 0.0
        %2876 = vmatpush1.msra.mxu0 %v2235
        %2877 = vmatprep.subr.mxu0 0.0
        %2878 = vmatpush1.msra.mxu0 %v2236
        %2879 = vmatprep.subr.mxu0 0.0
        %2880 = vmatpush1.msra.mxu0 %v2237
        %2881 = vmatprep.subr.mxu0 0.0
        %2882 = vmatpush1.msra.mxu0 %v2238
        %2883 = vmatprep.subr.mxu0 0.0
        %2884 = vmatpush1.msra.mxu0 %v2239
        %2885 = vmatprep.subr.mxu0 0.0
        %2886 = vmatpush1.msra.mxu0 %v2240
        %2887 = vmatprep.subr.mxu0 0.0
        %2888 = vmatpush1.msra.mxu0 %v2241
        %2889 = vmatprep.subr.mxu0 0.0
        %2890 = vmatpush1.msra.mxu0 %v2242
        %2891 = vmatprep.subr.mxu0 0.0
        %2892 = vmatpush1.msra.mxu0 %v2243
        %2893 = vmatprep.mubr.f32.mxu0 %v1941
        %2894 = vmatmul.mubr.f32.gmra.mrb[0].mxu0 %v1940
        %v2895 = vpop.f32.mrb[0].mxu0
        %v2896 = vadd.f32 %v2791, %v2895
        %v2897 = vpop.f32.mrb[0].mxu0
        %2898 = vmatprep.mubr.f32.mxu0 %v1960
        %2899 = vmatmul.mubr.f32.gmra.mrb[0].mxu0 %v1959
        %v2900 = vpop.f32.mrb[0].mxu0
        %v2901 = vadd.f32 %v2796, %v2900
        %v2902 = vpop.f32.mrb[0].mxu0
        %2903 = vmatprep.mubr.f32.mxu0 %v1979
        %2904 = vmatmul.mubr.f32.gmra.mrb[0].mxu0 %v1978
        %v2905 = vpop.f32.mrb[0].mxu0
        %v2906 = vadd.f32 %v2801, %v2905
        %v2907 = vpop.f32.mrb[0].mxu0
        %2908 = vmatprep.mubr.f32.mxu0 %v1998
        %2909 = vmatmul.mubr.f32.gmra.mrb[0].mxu0 %v1997
        %v2910 = vpop.f32.mrb[0].mxu0
        %v2911 = vadd.f32 %v2806, %v2910
        %v2912 = vpop.f32.mrb[0].mxu0
        %2913 = vmatprep.mubr.f32.mxu0 %v2017
        %2914 = vmatmul.mubr.f32.gmra.mrb[0].mxu0 %v2016
        %v2915 = vpop.f32.mrb[0].mxu0
        %v2916 = vadd.f32 %v2811, %v2915
        %v2917 = vpop.f32.mrb[0].mxu0
        %2918 = vmatprep.mubr.f32.mxu0 %v2036
        %2919 = vmatmul.mubr.f32.gmra.mrb[0].mxu0 %v2035
        %v2920 = vpop.f32.mrb[0].mxu0
        %v2921 = vadd.f32 %v2816, %v2920
        %v2922 = vpop.f32.mrb[0].mxu0
        %2923 = vmatprep.mubr.f32.mxu0 %v2055
        %2924 = vmatmul.mubr.f32.gmra.mrb[0].mxu0 %v2054
        %v2925 = vpop.f32.mrb[0].mxu0
        %v2926 = vadd.f32 %v2821, %v2925
        %v2927 = vpop.f32.mrb[0].mxu0
        %2928 = vmatprep.mubr.f32.mxu0 %v2074
        %2929 = vmatmul.mubr.f32.gmra.mrb[0].mxu0 %v2073
        %v2930 = vpop.f32.mrb[0].mxu0
        %v2931 = vadd.f32 %v2826, %v2930
        %v2932 = vpop.f32.mrb[0].mxu0
        %2933 = vdwg.mxu0
        %2934 = vmatprep.subr.mxu0 0.0
        %2935 = vmatpush1.msra.mxu0 %v2244
        %2936 = vmatprep.subr.mxu0 0.0
        %2937 = vmatpush1.msra.mxu0 %v2245
        %2938 = vmatprep.subr.mxu0 0.0
        %2939 = vmatpush1.msra.mxu0 %v2246
        %2940 = vmatprep.subr.mxu0 0.0
        %2941 = vmatpush1.msra.mxu0 %v2247
        %2942 = vmatprep.subr.mxu0 0.0
        %2943 = vmatpush1.msra.mxu0 %v2248
        %2944 = vmatprep.subr.mxu0 0.0
        %2945 = vmatpush1.msra.mxu0 %v2249
        %2946 = vmatprep.subr.mxu0 0.0
        %2947 = vmatpush1.msra.mxu0 %v2250
        %2948 = vmatprep.subr.mxu0 0.0
        %2949 = vmatpush1.msra.mxu0 %v2251
        %2950 = vmatprep.subr.mxu0 0.0
        %2951 = vmatpush1.msra.mxu0 %v2252
        %2952 = vmatprep.subr.mxu0 0.0
        %2953 = vmatpush1.msra.mxu0 %v2253
        %2954 = vmatprep.subr.mxu0 0.0
        %2955 = vmatpush1.msra.mxu0 %v2254
        %2956 = vmatprep.subr.mxu0 0.0
        %2957 = vmatpush1.msra.mxu0 %v2255
        %2958 = vmatprep.subr.mxu0 0.0
        %2959 = vmatpush1.msra.mxu0 %v2256
        %2960 = vmatprep.subr.mxu0 0.0
        %2961 = vmatpush1.msra.mxu0 %v2257
        %2962 = vmatprep.subr.mxu0 0.0
        %2963 = vmatpush1.msra.mxu0 %v2258
        %2964 = vmatprep.subr.mxu0 0.0
        %2965 = vmatpush1.msra.mxu0 %v2259
        %2966 = vmatprep.subr.mxu0 0.0
        %2967 = vmatpush1.msra.mxu0 %v2260
        %2968 = vmatprep.subr.mxu0 0.0
        %2969 = vmatpush1.msra.mxu0 %v2261
        %2970 = vmatprep.subr.mxu0 0.0
        %2971 = vmatpush1.msra.mxu0 %v2262
        %2972 = vmatprep.subr.mxu0 0.0
        %2973 = vmatpush1.msra.mxu0 %v2263
        %2974 = vmatprep.subr.mxu0 0.0
        %2975 = vmatpush1.msra.mxu0 %v2264
        %2976 = vmatprep.subr.mxu0 0.0
        %2977 = vmatpush1.msra.mxu0 %v2265
        %2978 = vmatprep.subr.mxu0 0.0
        %2979 = vmatpush1.msra.mxu0 %v2266
        %2980 = vmatprep.subr.mxu0 0.0
        %2981 = vmatpush1.msra.mxu0 %v2267
        %2982 = vmatprep.subr.mxu0 0.0
        %2983 = vmatpush1.msra.mxu0 %v2268
        %2984 = vmatprep.subr.mxu0 0.0
        %2985 = vmatpush1.msra.mxu0 %v2269
        %2986 = vmatprep.subr.mxu0 0.0
        %2987 = vmatpush1.msra.mxu0 %v2270
        %2988 = vmatprep.subr.mxu0 0.0
        %2989 = vmatpush1.msra.mxu0 %v2271
        %2990 = vmatprep.subr.mxu0 0.0
        %2991 = vmatpush1.msra.mxu0 %v2272
        %2992 = vmatprep.subr.mxu0 0.0
        %2993 = vmatpush1.msra.mxu0 %v2273
        %2994 = vmatprep.subr.mxu0 0.0
        %2995 = vmatpush1.msra.mxu0 %v2274
        %2996 = vmatprep.subr.mxu0 0.0
        %2997 = vmatpush1.msra.mxu0 %v2275
        %2998 = vmatprep.mubr.f32.mxu0 %v1943
        %2999 = vmatmul.mubr.f32.gmra.mrb[0].mxu0 %v1942
        %v3000 = vpop.f32.mrb[0].mxu0
        %v3001 = vadd.f32 %v2896, %v3000
        %v3002 = vpop.f32.mrb[0].mxu0
        %3003 = vmatprep.mubr.f32.mxu0 %v1962
        %3004 = vmatmul.mubr.f32.gmra.mrb[0].mxu0 %v1961
        %v3005 = vpop.f32.mrb[0].mxu0
        %v3006 = vadd.f32 %v2901, %v3005
        %v3007 = vpop.f32.mrb[0].mxu0
        %3008 = vmatprep.mubr.f32.mxu0 %v1981
        %3009 = vmatmul.mubr.f32.gmra.mrb[0].mxu0 %v1980
        %v3010 = vpop.f32.mrb[0].mxu0
        %v3011 = vadd.f32 %v2906, %v3010
        %v3012 = vpop.f32.mrb[0].mxu0
        %3013 = vmatprep.mubr.f32.mxu0 %v2000
        %3014 = vmatmul.mubr.f32.gmra.mrb[0].mxu0 %v1999
        %v3015 = vpop.f32.mrb[0].mxu0
        %v3016 = vadd.f32 %v2911, %v3015
        %v3017 = vpop.f32.mrb[0].mxu0
        %3018 = vmatprep.mubr.f32.mxu0 %v2019
        %3019 = vmatmul.mubr.f32.gmra.mrb[0].mxu0 %v2018
        %v3020 = vpop.f32.mrb[0].mxu0
        %v3021 = vadd.f32 %v2916, %v3020
        %v3022 = vpop.f32.mrb[0].mxu0
        %3023 = vmatprep.mubr.f32.mxu0 %v2038
        %3024 = vmatmul.mubr.f32.gmra.mrb[0].mxu0 %v2037
        %v3025 = vpop.f32.mrb[0].mxu0
        %v3026 = vadd.f32 %v2921, %v3025
        %v3027 = vpop.f32.mrb[0].mxu0
        %3028 = vmatprep.mubr.f32.mxu0 %v2057
        %3029 = vmatmul.mubr.f32.gmra.mrb[0].mxu0 %v2056
        %v3030 = vpop.f32.mrb[0].mxu0
        %v3031 = vadd.f32 %v2926, %v3030
        %v3032 = vpop.f32.mrb[0].mxu0
        %3033 = vmatprep.mubr.f32.mxu0 %v2076
        %3034 = vmatmul.mubr.f32.gmra.mrb[0].mxu0 %v2075
        %v3035 = vpop.f32.mrb[0].mxu0
        %v3036 = vadd.f32 %v2931, %v3035
        %v3037 = vpop.f32.mrb[0].mxu0
        %3038 = vdwg.mxu0
        %3039 = vmatprep.subr.mxu0 0.0
        %3040 = vmatpush1.msra.mxu0 %v2276
        %3041 = vmatprep.subr.mxu0 0.0
        %3042 = vmatpush1.msra.mxu0 %v2277
        %3043 = vmatprep.subr.mxu0 0.0
        %3044 = vmatpush1.msra.mxu0 %v2278
        %3045 = vmatprep.subr.mxu0 0.0
        %3046 = vmatpush1.msra.mxu0 %v2279
        %3047 = vmatprep.subr.mxu0 0.0
        %3048 = vmatpush1.msra.mxu0 %v2280
        %3049 = vmatprep.subr.mxu0 0.0
        %3050 = vmatpush1.msra.mxu0 %v2281
        %3051 = vmatprep.subr.mxu0 0.0
        %3052 = vmatpush1.msra.mxu0 %v2282
        %3053 = vmatprep.subr.mxu0 0.0
        %3054 = vmatpush1.msra.mxu0 %v2283
        %3055 = vmatprep.subr.mxu0 0.0
        %3056 = vmatpush1.msra.mxu0 %v2284
        %3057 = vmatprep.subr.mxu0 0.0
        %3058 = vmatpush1.msra.mxu0 %v2285
        %3059 = vmatprep.subr.mxu0 0.0
        %3060 = vmatpush1.msra.mxu0 %v2286
        %3061 = vmatprep.subr.mxu0 0.0
        %3062 = vmatpush1.msra.mxu0 %v2287
        %3063 = vmatprep.subr.mxu0 0.0
        %3064 = vmatpush1.msra.mxu0 %v2288
        %3065 = vmatprep.subr.mxu0 0.0
        %3066 = vmatpush1.msra.mxu0 %v2289
        %3067 = vmatprep.subr.mxu0 0.0
        %3068 = vmatpush1.msra.mxu0 %v2290
        %3069 = vmatprep.subr.mxu0 0.0
        %3070 = vmatpush1.msra.mxu0 %v2291
        %3071 = vmatprep.subr.mxu0 0.0
        %3072 = vmatpush1.msra.mxu0 %v2292
        %3073 = vmatprep.subr.mxu0 0.0
        %3074 = vmatpush1.msra.mxu0 %v2293
        %3075 = vmatprep.subr.mxu0 0.0
        %3076 = vmatpush1.msra.mxu0 %v2294
        %3077 = vmatprep.subr.mxu0 0.0
        %3078 = vmatpush1.msra.mxu0 %v2295
        %3079 = vmatprep.subr.mxu0 0.0
        %3080 = vmatpush1.msra.mxu0 %v2296
        %3081 = vmatprep.subr.mxu0 0.0
        %3082 = vmatpush1.msra.mxu0 %v2297
        %3083 = vmatprep.subr.mxu0 0.0
        %3084 = vmatpush1.msra.mxu0 %v2298
        %3085 = vmatprep.subr.mxu0 0.0
        %3086 = vmatpush1.msra.mxu0 %v2299
        %3087 = vmatprep.subr.mxu0 0.0
        %3088 = vmatpush1.msra.mxu0 %v2300
        %3089 = vmatprep.subr.mxu0 0.0
        %3090 = vmatpush1.msra.mxu0 %v2301
        %3091 = vmatprep.subr.mxu0 0.0
        %3092 = vmatpush1.msra.mxu0 %v2302
        %3093 = vmatprep.subr.mxu0 0.0
        %3094 = vmatpush1.msra.mxu0 %v2303
        %3095 = vmatprep.subr.mxu0 0.0
        %3096 = vmatpush1.msra.mxu0 %v2304
        %3097 = vmatprep.subr.mxu0 0.0
        %3098 = vmatpush1.msra.mxu0 %v2305
        %3099 = vmatprep.subr.mxu0 0.0
        %3100 = vmatpush1.msra.mxu0 %v2306
        %3101 = vmatprep.subr.mxu0 0.0
        %3102 = vmatpush1.msra.mxu0 %v2307
        %3103 = vmatprep.mubr.f32.mxu0 %v1945
        %3104 = vmatmul.mubr.f32.gmra.mrb[0].mxu0 %v1944
        %v3105 = vpop.f32.mrb[0].mxu0
        %v3106 = vadd.f32 %v3001, %v3105
        %v3107 = vpop.f32.mrb[0].mxu0
        %3108 = vmatprep.mubr.f32.mxu0 %v1964
        %3109 = vmatmul.mubr.f32.gmra.mrb[0].mxu0 %v1963
        %v3110 = vpop.f32.mrb[0].mxu0
        %v3111 = vadd.f32 %v3006, %v3110
        %v3112 = vpop.f32.mrb[0].mxu0
        %3113 = vmatprep.mubr.f32.mxu0 %v1983
        %3114 = vmatmul.mubr.f32.gmra.mrb[0].mxu0 %v1982
        %v3115 = vpop.f32.mrb[0].mxu0
        %v3116 = vadd.f32 %v3011, %v3115
        %v3117 = vpop.f32.mrb[0].mxu0
        %3118 = vmatprep.mubr.f32.mxu0 %v2002
        %3119 = vmatmul.mubr.f32.gmra.mrb[0].mxu0 %v2001
        %v3120 = vpop.f32.mrb[0].mxu0
        %v3121 = vadd.f32 %v3016, %v3120
        %v3122 = vpop.f32.mrb[0].mxu0
        %3123 = vmatprep.mubr.f32.mxu0 %v2021
        %3124 = vmatmul.mubr.f32.gmra.mrb[0].mxu0 %v2020
        %v3125 = vpop.f32.mrb[0].mxu0
        %v3126 = vadd.f32 %v3021, %v3125
        %v3127 = vpop.f32.mrb[0].mxu0
        %3128 = vmatprep.mubr.f32.mxu0 %v2040
        %3129 = vmatmul.mubr.f32.gmra.mrb[0].mxu0 %v2039
        %v3130 = vpop.f32.mrb[0].mxu0
        %v3131 = vadd.f32 %v3026, %v3130
        %v3132 = vpop.f32.mrb[0].mxu0
        %3133 = vmatprep.mubr.f32.mxu0 %v2059
        %3134 = vmatmul.mubr.f32.gmra.mrb[0].mxu0 %v2058
        %v3135 = vpop.f32.mrb[0].mxu0
        %v3136 = vadd.f32 %v3031, %v3135
        %v3137 = vpop.f32.mrb[0].mxu0
        %3138 = vmatprep.mubr.f32.mxu0 %v2078
        %3139 = vmatmul.mubr.f32.gmra.mrb[0].mxu0 %v2077
        %v3140 = vpop.f32.mrb[0].mxu0
        %v3141 = vadd.f32 %v3036, %v3140
        %v3142 = vpop.f32.mrb[0].mxu0
        %3143 = vdwg.mxu0
        %3144 = vmatprep.subr.mxu0 0.0
        %3145 = vmatpush1.msra.mxu0 %v2308
        %3146 = vmatprep.subr.mxu0 0.0
        %3147 = vmatpush1.msra.mxu0 %v2309
        %3148 = vmatprep.subr.mxu0 0.0
        %3149 = vmatpush1.msra.mxu0 %v2310
        %3150 = vmatprep.subr.mxu0 0.0
        %3151 = vmatpush1.msra.mxu0 %v2311
        %3152 = vmatprep.subr.mxu0 0.0
        %3153 = vmatpush1.msra.mxu0 %v2312
        %3154 = vmatprep.subr.mxu0 0.0
        %3155 = vmatpush1.msra.mxu0 %v2313
        %3156 = vmatprep.subr.mxu0 0.0
        %3157 = vmatpush1.msra.mxu0 %v2314
        %3158 = vmatprep.subr.mxu0 0.0
        %3159 = vmatpush1.msra.mxu0 %v2315
        %3160 = vmatprep.subr.mxu0 0.0
        %3161 = vmatpush1.msra.mxu0 %v2316
        %3162 = vmatprep.subr.mxu0 0.0
        %3163 = vmatpush1.msra.mxu0 %v2317
        %3164 = vmatprep.subr.mxu0 0.0
        %3165 = vmatpush1.msra.mxu0 %v2318
        %3166 = vmatprep.subr.mxu0 0.0
        %3167 = vmatpush1.msra.mxu0 %v2319
        %3168 = vmatprep.subr.mxu0 0.0
        %3169 = vmatpush1.msra.mxu0 %v2320
        %3170 = vmatprep.subr.mxu0 0.0
        %3171 = vmatpush1.msra.mxu0 %v2321
        %3172 = vmatprep.subr.mxu0 0.0
        %3173 = vmatpush1.msra.mxu0 %v2322
        %3174 = vmatprep.subr.mxu0 0.0
        %3175 = vmatpush1.msra.mxu0 %v2323
        %3176 = vmatprep.subr.mxu0 0.0
        %3177 = vmatpush1.msra.mxu0 %v2324
        %3178 = vmatprep.subr.mxu0 0.0
        %3179 = vmatpush1.msra.mxu0 %v2325
        %3180 = vmatprep.subr.mxu0 0.0
        %3181 = vmatpush1.msra.mxu0 %v2326
        %3182 = vmatprep.subr.mxu0 0.0
        %3183 = vmatpush1.msra.mxu0 %v2327
        %3184 = vmatprep.subr.mxu0 0.0
        %3185 = vmatpush1.msra.mxu0 %v2328
        %3186 = vmatprep.subr.mxu0 0.0
        %3187 = vmatpush1.msra.mxu0 %v2329
        %3188 = vmatprep.subr.mxu0 0.0
        %3189 = vmatpush1.msra.mxu0 %v2330
        %3190 = vmatprep.subr.mxu0 0.0
        %3191 = vmatpush1.msra.mxu0 %v2331
        %3192 = vmatprep.subr.mxu0 0.0
        %3193 = vmatpush1.msra.mxu0 %v2332
        %3194 = vmatprep.subr.mxu0 0.0
        %3195 = vmatpush1.msra.mxu0 %v2333
        %3196 = vmatprep.subr.mxu0 0.0
        %3197 = vmatpush1.msra.mxu0 %v2334
        %3198 = vmatprep.subr.mxu0 0.0
        %3199 = vmatpush1.msra.mxu0 %v2335
        %3200 = vmatprep.subr.mxu0 0.0
        %3201 = vmatpush1.msra.mxu0 %v2336
        %3202 = vmatprep.subr.mxu0 0.0
        %3203 = vmatpush1.msra.mxu0 %v2337
        %3204 = vmatprep.subr.mxu0 0.0
        %3205 = vmatpush1.msra.mxu0 %v2338
        %3206 = vmatprep.subr.mxu0 0.0
        %3207 = vmatpush1.msra.mxu0 %v2339
        %3208 = vmatprep.mubr.f32.mxu0 %v1947
        %3209 = vmatmul.mubr.f32.gmra.mrb[0].mxu0 %v1946
        %v3210 = vpop.f32.mrb[0].mxu0
        %v3211 = vadd.f32 %v3106, %v3210
        %v3212 = vpop.f32.mrb[0].mxu0
        %3213 = vmatprep.mubr.f32.mxu0 %v1966
        %3214 = vmatmul.mubr.f32.gmra.mrb[0].mxu0 %v1965
        %v3215 = vpop.f32.mrb[0].mxu0
        %v3216 = vadd.f32 %v3111, %v3215
        %v3217 = vpop.f32.mrb[0].mxu0
        %3218 = vmatprep.mubr.f32.mxu0 %v1985
        %3219 = vmatmul.mubr.f32.gmra.mrb[0].mxu0 %v1984
        %v3220 = vpop.f32.mrb[0].mxu0
        %v3221 = vadd.f32 %v3116, %v3220
        %v3222 = vpop.f32.mrb[0].mxu0
        %3223 = vmatprep.mubr.f32.mxu0 %v2004
        %3224 = vmatmul.mubr.f32.gmra.mrb[0].mxu0 %v2003
        %v3225 = vpop.f32.mrb[0].mxu0
        %v3226 = vadd.f32 %v3121, %v3225
        %v3227 = vpop.f32.mrb[0].mxu0
        %3228 = vmatprep.mubr.f32.mxu0 %v2023
        %3229 = vmatmul.mubr.f32.gmra.mrb[0].mxu0 %v2022
        %v3230 = vpop.f32.mrb[0].mxu0
        %v3231 = vadd.f32 %v3126, %v3230
        %v3232 = vpop.f32.mrb[0].mxu0
        %3233 = vmatprep.mubr.f32.mxu0 %v2042
        %3234 = vmatmul.mubr.f32.gmra.mrb[0].mxu0 %v2041
        %v3235 = vpop.f32.mrb[0].mxu0
        %v3236 = vadd.f32 %v3131, %v3235
        %v3237 = vpop.f32.mrb[0].mxu0
        %3238 = vmatprep.mubr.f32.mxu0 %v2061
        %3239 = vmatmul.mubr.f32.gmra.mrb[0].mxu0 %v2060
        %v3240 = vpop.f32.mrb[0].mxu0
        %v3241 = vadd.f32 %v3136, %v3240
        %v3242 = vpop.f32.mrb[0].mxu0
        %3243 = vmatprep.mubr.f32.mxu0 %v2080
        %3244 = vmatmul.mubr.f32.gmra.mrb[0].mxu0 %v2079
        %v3245 = vpop.f32.mrb[0].mxu0
        %v3246 = vadd.f32 %v3141, %v3245
        %v3247 = vpop.f32.mrb[0].mxu0
        %3248 = vdwg.mxu0
        %3249 = vmatprep.subr.mxu0 0.0
        %3250 = vmatpush1.msra.mxu0 %v2340
        %3251 = vmatprep.subr.mxu0 0.0
        %3252 = vmatpush1.msra.mxu0 %v2341
        %3253 = vmatprep.subr.mxu0 0.0
        %3254 = vmatpush1.msra.mxu0 %v2342
        %3255 = vmatprep.subr.mxu0 0.0
        %3256 = vmatpush1.msra.mxu0 %v2343
        %3257 = vmatprep.subr.mxu0 0.0
        %3258 = vmatpush1.msra.mxu0 %v2344
        %3259 = vmatprep.subr.mxu0 0.0
        %3260 = vmatpush1.msra.mxu0 %v2345
        %3261 = vmatprep.subr.mxu0 0.0
        %3262 = vmatpush1.msra.mxu0 %v2346
        %3263 = vmatprep.subr.mxu0 0.0
        %3264 = vmatpush1.msra.mxu0 %v2347
        %3265 = vmatprep.subr.mxu0 0.0
        %3266 = vmatpush1.msra.mxu0 %v2348
        %3267 = vmatprep.subr.mxu0 0.0
        %3268 = vmatpush1.msra.mxu0 %v2349
        %3269 = vmatprep.subr.mxu0 0.0
        %3270 = vmatpush1.msra.mxu0 %v2350
        %3271 = vmatprep.subr.mxu0 0.0
        %3272 = vmatpush1.msra.mxu0 %v2351
        %3273 = vmatprep.subr.mxu0 0.0
        %3274 = vmatpush1.msra.mxu0 %v2352
        %3275 = vmatprep.subr.mxu0 0.0
        %3276 = vmatpush1.msra.mxu0 %v2353
        %3277 = vmatprep.subr.mxu0 0.0
        %3278 = vmatpush1.msra.mxu0 %v2354
        %3279 = vmatprep.subr.mxu0 0.0
        %3280 = vmatpush1.msra.mxu0 %v2355
        %3281 = vmatprep.subr.mxu0 0.0
        %3282 = vmatpush1.msra.mxu0 %v2356
        %3283 = vmatprep.subr.mxu0 0.0
        %3284 = vmatpush1.msra.mxu0 %v2357
        %3285 = vmatprep.subr.mxu0 0.0
        %3286 = vmatpush1.msra.mxu0 %v2358
        %3287 = vmatprep.subr.mxu0 0.0
        %3288 = vmatpush1.msra.mxu0 %v2359
        %3289 = vmatprep.subr.mxu0 0.0
        %3290 = vmatpush1.msra.mxu0 %v2360
        %3291 = vmatprep.subr.mxu0 0.0
        %3292 = vmatpush1.msra.mxu0 %v2361
        %3293 = vmatprep.subr.mxu0 0.0
        %3294 = vmatpush1.msra.mxu0 %v2362
        %3295 = vmatprep.subr.mxu0 0.0
        %3296 = vmatpush1.msra.mxu0 %v2363
        %3297 = vmatprep.subr.mxu0 0.0
        %3298 = vmatpush1.msra.mxu0 %v2364
        %3299 = vmatprep.subr.mxu0 0.0
        %3300 = vmatpush1.msra.mxu0 %v2365
        %3301 = vmatprep.subr.mxu0 0.0
        %3302 = vmatpush1.msra.mxu0 %v2366
        %3303 = vmatprep.subr.mxu0 0.0
        %3304 = vmatpush1.msra.mxu0 %v2367
        %3305 = vmatprep.subr.mxu0 0.0
        %3306 = vmatpush1.msra.mxu0 %v2368
        %3307 = vmatprep.subr.mxu0 0.0
        %3308 = vmatpush1.msra.mxu0 %v2369
        %3309 = vmatprep.subr.mxu0 0.0
        %3310 = vmatpush1.msra.mxu0 %v2370
        %3311 = vmatprep.subr.mxu0 0.0
        %3312 = vmatpush1.msra.mxu0 %v2371
        %3313 = vmatprep.mubr.f32.mxu0 %v1949
        %3314 = vmatmul.mubr.f32.gmra.mrb[0].mxu0 %v1948
        %v3315 = vpop.f32.mrb[0].mxu0
        %v3316 = vadd.f32 %v3211, %v3315
        %v3317 = vpop.f32.mrb[0].mxu0
        %3318 = vmatprep.mubr.f32.mxu0 %v1968
        %3319 = vmatmul.mubr.f32.gmra.mrb[0].mxu0 %v1967
        %v3320 = vpop.f32.mrb[0].mxu0
        %v3321 = vadd.f32 %v3216, %v3320
        %v3322 = vpop.f32.mrb[0].mxu0
        %3323 = vmatprep.mubr.f32.mxu0 %v1987
        %3324 = vmatmul.mubr.f32.gmra.mrb[0].mxu0 %v1986
        %v3325 = vpop.f32.mrb[0].mxu0
        %v3326 = vadd.f32 %v3221, %v3325
        %v3327 = vpop.f32.mrb[0].mxu0
        %3328 = vmatprep.mubr.f32.mxu0 %v2006
        %3329 = vmatmul.mubr.f32.gmra.mrb[0].mxu0 %v2005
        %v3330 = vpop.f32.mrb[0].mxu0
        %v3331 = vadd.f32 %v3226, %v3330
        %v3332 = vpop.f32.mrb[0].mxu0
        %3333 = vmatprep.mubr.f32.mxu0 %v2025
        %3334 = vmatmul.mubr.f32.gmra.mrb[0].mxu0 %v2024
        %v3335 = vpop.f32.mrb[0].mxu0
        %v3336 = vadd.f32 %v3231, %v3335
        %v3337 = vpop.f32.mrb[0].mxu0
        %3338 = vmatprep.mubr.f32.mxu0 %v2044
        %3339 = vmatmul.mubr.f32.gmra.mrb[0].mxu0 %v2043
        %v3340 = vpop.f32.mrb[0].mxu0
        %v3341 = vadd.f32 %v3236, %v3340
        %v3342 = vpop.f32.mrb[0].mxu0
        %3343 = vmatprep.mubr.f32.mxu0 %v2063
        %3344 = vmatmul.mubr.f32.gmra.mrb[0].mxu0 %v2062
        %v3345 = vpop.f32.mrb[0].mxu0
        %v3346 = vadd.f32 %v3241, %v3345
        %v3347 = vpop.f32.mrb[0].mxu0
        %3348 = vmatprep.mubr.f32.mxu0 %v2082
        %3349 = vmatmul.mubr.f32.gmra.mrb[0].mxu0 %v2081
        %v3350 = vpop.f32.mrb[0].mxu0
        %v3351 = vadd.f32 %v3246, %v3350
        %v3352 = vpop.f32.mrb[0].mxu0
        %3353 = vdwg.mxu0
        %3354 = vmatprep.subr.mxu0 0.0
        %3355 = vmatpush1.msra.mxu0 %v2372
        %3356 = vmatprep.subr.mxu0 0.0
        %3357 = vmatpush1.msra.mxu0 %v2373
        %3358 = vmatprep.subr.mxu0 0.0
        %3359 = vmatpush1.msra.mxu0 %v2374
        %3360 = vmatprep.subr.mxu0 0.0
        %3361 = vmatpush1.msra.mxu0 %v2375
        %3362 = vmatprep.subr.mxu0 0.0
        %3363 = vmatpush1.msra.mxu0 %v2376
        %3364 = vmatprep.subr.mxu0 0.0
        %3365 = vmatpush1.msra.mxu0 %v2377
        %3366 = vmatprep.subr.mxu0 0.0
        %3367 = vmatpush1.msra.mxu0 0.0
        %3368 = vmatprep.subr.mxu0 0.0
        %3369 = vmatpush1.msra.mxu0 0.0
        %3370 = vmatprep.subr.mxu0 0.0
        %3371 = vmatpush1.msra.mxu0 0.0
        %3372 = vmatprep.subr.mxu0 0.0
        %3373 = vmatpush1.msra.mxu0 0.0
        %3374 = vmatprep.subr.mxu0 0.0
        %3375 = vmatpush1.msra.mxu0 0.0
        %3376 = vmatprep.subr.mxu0 0.0
        %3377 = vmatpush1.msra.mxu0 0.0
        %3378 = vmatprep.subr.mxu0 0.0
        %3379 = vmatpush1.msra.mxu0 0.0
        %3380 = vmatprep.subr.mxu0 0.0
        %3381 = vmatpush1.msra.mxu0 0.0
        %3382 = vmatprep.subr.mxu0 0.0
        %3383 = vmatpush1.msra.mxu0 0.0
        %3384 = vmatprep.subr.mxu0 0.0
        %3385 = vmatpush1.msra.mxu0 0.0
        %3386 = vmatprep.subr.mxu0 0.0
        %3387 = vmatpush1.msra.mxu0 0.0
        %3388 = vmatprep.subr.mxu0 0.0
        %3389 = vmatpush1.msra.mxu0 0.0
        %3390 = vmatprep.subr.mxu0 0.0
        %3391 = vmatpush1.msra.mxu0 0.0
        %3392 = vmatprep.subr.mxu0 0.0
        %3393 = vmatpush1.msra.mxu0 0.0
        %3394 = vmatprep.subr.mxu0 0.0
        %3395 = vmatpush1.msra.mxu0 0.0
        %3396 = vmatprep.subr.mxu0 0.0
        %3397 = vmatpush1.msra.mxu0 0.0
        %3398 = vmatprep.subr.mxu0 0.0
        %3399 = vmatpush1.msra.mxu0 0.0
        %3400 = vmatprep.subr.mxu0 0.0
        %3401 = vmatpush1.msra.mxu0 0.0
        %3402 = vmatprep.subr.mxu0 0.0
        %3403 = vmatpush1.msra.mxu0 0.0
        %3404 = vmatprep.subr.mxu0 0.0
        %3405 = vmatpush1.msra.mxu0 0.0
        %3406 = vmatprep.subr.mxu0 0.0
        %3407 = vmatpush1.msra.mxu0 0.0
        %3408 = vmatprep.subr.mxu0 0.0
        %3409 = vmatpush1.msra.mxu0 0.0
        %3410 = vmatprep.subr.mxu0 0.0
        %3411 = vmatpush1.msra.mxu0 0.0
        %3412 = vmatprep.subr.mxu0 0.0
        %3413 = vmatpush1.msra.mxu0 0.0
        %3414 = vmatprep.subr.mxu0 0.0
        %3415 = vmatpush1.msra.mxu0 0.0
        %3416 = vmatprep.subr.mxu0 0.0
        %3417 = vmatpush1.msra.mxu0 0.0
        %3418 = vmatprep.mubr.f32.mxu0 0.0
        %3419 = vmatmul.mubr.f32.gmra.mrb[0].mxu0 %v2386
        %v3420 = vpop.f32.mrb[0].mxu0
        %v3421 = vadd.f32 %v3316, %v3420
        %v3422 = vpop.f32.mrb[0].mxu0
        %3423 = vmatprep.mubr.f32.mxu0 0.0
        %3424 = vmatmul.mubr.f32.gmra.mrb[0].mxu0 %v2389
        %v3425 = vpop.f32.mrb[0].mxu0
        %v3426 = vadd.f32 %v3321, %v3425
        %v3427 = vpop.f32.mrb[0].mxu0
        %3428 = vmatprep.mubr.f32.mxu0 0.0
        %3429 = vmatmul.mubr.f32.gmra.mrb[0].mxu0 %v2392
        %v3430 = vpop.f32.mrb[0].mxu0
        %v3431 = vadd.f32 %v3326, %v3430
        %v3432 = vpop.f32.mrb[0].mxu0
        %3433 = vmatprep.mubr.f32.mxu0 0.0
        %3434 = vmatmul.mubr.f32.gmra.mrb[0].mxu0 %v2395
        %v3435 = vpop.f32.mrb[0].mxu0
        %v3436 = vadd.f32 %v3331, %v3435
        %v3437 = vpop.f32.mrb[0].mxu0
        %3438 = vmatprep.mubr.f32.mxu0 0.0
        %3439 = vmatmul.mubr.f32.gmra.mrb[0].mxu0 %v2398
        %v3440 = vpop.f32.mrb[0].mxu0
        %v3441 = vadd.f32 %v3336, %v3440
        %v3442 = vpop.f32.mrb[0].mxu0
        %3443 = vmatprep.mubr.f32.mxu0 0.0
        %3444 = vmatmul.mubr.f32.gmra.mrb[0].mxu0 %v2401
        %v3445 = vpop.f32.mrb[0].mxu0
        %v3446 = vadd.f32 %v3341, %v3445
        %v3447 = vpop.f32.mrb[0].mxu0
        %3448 = vmatprep.mubr.f32.mxu0 0.0
        %3449 = vmatmul.mubr.f32.gmra.mrb[0].mxu0 %v2404
        %v3450 = vpop.f32.mrb[0].mxu0
        %v3451 = vadd.f32 %v3346, %v3450
        %v3452 = vpop.f32.mrb[0].mxu0
        %3453 = vmatprep.mubr.f32.mxu0 0.0
        %3454 = vmatmul.mubr.f32.gmra.mrb[0].mxu0 %v2407
        %v3455 = vpop.f32.mrb[0].mxu0
        %v3456 = vadd.f32 %v3351, %v3455
        %v3457 = vpop.f32.mrb[0].mxu0
        %3458 = vdwg.mxu0
        %vm3459 = vcmask 261120
        %v3460 = vsel %vm3459, %v3421, 0.0
        %3461 = vadd.xlane.f32.xlu0 %v3460
        %v3462 = vpop.xlane.xlu0 %3461
        %v3463 = vsel %vm3459, %v3426, 0.0
        %3464 = vadd.xlane.f32.xlu0 %v3463
        %v3465 = vpop.xlane.xlu0 %3464
        %v3466 = vsel %vm3459, %v3431, 0.0
        %3467 = vadd.xlane.f32.xlu0 %v3466
        %v3468 = vpop.xlane.xlu0 %3467
        %v3469 = vsel %vm3459, %v3436, 0.0
        %3470 = vadd.xlane.f32.xlu0 %v3469
        %v3471 = vpop.xlane.xlu0 %3470
        %v3472 = vsel %vm3459, %v3441, 0.0
        %3473 = vadd.xlane.f32.xlu0 %v3472
        %v3474 = vpop.xlane.xlu0 %3473
        %v3475 = vsel %vm3459, %v3446, 0.0
        %3476 = vadd.xlane.f32.xlu0 %v3475
        %v3477 = vpop.xlane.xlu0 %3476
        %v3478 = vsel %vm3459, %v3451, 0.0
        %3479 = vadd.xlane.f32.xlu0 %v3478
        %v3480 = vpop.xlane.xlu0 %3479
        %v3481 = vsel %vm3459, %v3456, 0.0
        %3482 = vadd.xlane.f32.xlu0 %v3481
        %v3483 = vpop.xlane.xlu0 %3482
        %v3484 = vrcp.pop 32.0
        %v3485 = vmul.f32 %v3462, %v3484
        %v3486 = vmul.f32 %v3465, %v3484
        %v3487 = vmul.f32 %v3468, %v3484
        %v3488 = vmul.f32 %v3471, %v3484
        %v3489 = vmul.f32 %v3474, %v3484
        %v3490 = vmul.f32 %v3477, %v3484
        %v3491 = vmul.f32 %v3480, %v3484
        %v3492 = vmul.f32 %v3483, %v3484
        %v3493 = vsub.f32 %v3421, %v3485
        %v3494 = vsub.f32 %v3426, %v3486
        %v3495 = vsub.f32 %v3431, %v3487
        %v3496 = vsub.f32 %v3436, %v3488
        %v3497 = vsub.f32 %v3441, %v3489
        %v3498 = vsub.f32 %v3446, %v3490
        %v3499 = vsub.f32 %v3451, %v3491
        %v3500 = vsub.f32 %v3456, %v3492
        %v3501 = vmul.f32 %v3493, %v3493
        %v3502 = vmul.f32 %v3494, %v3494
        %v3503 = vmul.f32 %v3495, %v3495
        %v3504 = vmul.f32 %v3496, %v3496
        %v3505 = vmul.f32 %v3497, %v3497
        %v3506 = vmul.f32 %v3498, %v3498
        %v3507 = vmul.f32 %v3499, %v3499
        %v3508 = vmul.f32 %v3500, %v3500
        %v3509 = vsel %vm3459, %v3501, 0.0
        %3510 = vadd.xlane.f32.xlu0 %v3509
        %v3511 = vpop.xlane.xlu0 %3510
        %v3512 = vsel %vm3459, %v3502, 0.0
        %3513 = vadd.xlane.f32.xlu0 %v3512
        %v3514 = vpop.xlane.xlu0 %3513
        %v3515 = vsel %vm3459, %v3503, 0.0
        %3516 = vadd.xlane.f32.xlu0 %v3515
        %v3517 = vpop.xlane.xlu0 %3516
        %v3518 = vsel %vm3459, %v3504, 0.0
        %3519 = vadd.xlane.f32.xlu0 %v3518
        %v3520 = vpop.xlane.xlu0 %3519
        %v3521 = vsel %vm3459, %v3505, 0.0
        %3522 = vadd.xlane.f32.xlu0 %v3521
        %v3523 = vpop.xlane.xlu0 %3522
        %v3524 = vsel %vm3459, %v3506, 0.0
        %3525 = vadd.xlane.f32.xlu0 %v3524
        %v3526 = vpop.xlane.xlu0 %3525
        %v3527 = vsel %vm3459, %v3507, 0.0
        %3528 = vadd.xlane.f32.xlu0 %v3527
        %v3529 = vpop.xlane.xlu0 %3528
        %v3530 = vsel %vm3459, %v3508, 0.0
        %3531 = vadd.xlane.f32.xlu0 %v3530
        %v3532 = vpop.xlane.xlu0 %3531
        %v3533 = vmul.f32 %v3511, %v3484
        %v3534 = vmul.f32 %v3514, %v3484
        %v3535 = vmul.f32 %v3517, %v3484
        %v3536 = vmul.f32 %v3520, %v3484
        %v3537 = vmul.f32 %v3523, %v3484
        %v3538 = vmul.f32 %v3526, %v3484
        %v3539 = vmul.f32 %v3529, %v3484
        %v3540 = vmul.f32 %v3532, %v3484
        %v3541 = vadd.f32 %v3533, 1e-05
        %v3542 = vadd.f32 %v3534, 1e-05
        %v3543 = vadd.f32 %v3535, 1e-05
        %v3544 = vadd.f32 %v3536, 1e-05
        %v3545 = vadd.f32 %v3537, 1e-05
        %v3546 = vadd.f32 %v3538, 1e-05
        %v3547 = vadd.f32 %v3539, 1e-05
        %v3548 = vadd.f32 %v3540, 1e-05
        %v3549 = vrsqrt.pop %v3541
        %v3550 = vrsqrt.pop %v3542
        %v3551 = vrsqrt.pop %v3543
        %v3552 = vrsqrt.pop %v3544
        %v3553 = vrsqrt.pop %v3545
        %v3554 = vrsqrt.pop %v3546
        %v3555 = vrsqrt.pop %v3547
        %v3556 = vrsqrt.pop %v3548
        %v3557 = vmul.f32 %v3493, %v3549
        %v3558 = vmul.f32 %v3494, %v3550
        %v3559 = vmul.f32 %v3495, %v3551
        %v3560 = vmul.f32 %v3496, %v3552
        %v3561 = vmul.f32 %v3497, %v3553
        %v3562 = vmul.f32 %v3498, %v3554
        %v3563 = vmul.f32 %v3499, %v3555
        %v3564 = vmul.f32 %v3500, %v3556
        %v3565 = vld [vmem:[%s6] sm:$0x1]
        %v3567 = vlaneseq
        %v3568 = vshrl.u32 %v3567, 7
        %v3569 = vsub.s32 0, %v3568
        %v3570 = vrot.slane %v3565, %v3569
        %v3572 = vmul.f32 %v3557, %v3570
        %v3573 = vmul.f32 %v3558, %v3570
        %v3574 = vmul.f32 %v3559, %v3570
        %v3575 = vmul.f32 %v3560, %v3570
        %v3576 = vmul.f32 %v3561, %v3570
        %v3577 = vmul.f32 %v3562, %v3570
        %v3578 = vmul.f32 %v3563, %v3570
        %v3579 = vmul.f32 %v3564, %v3570
        %v3580 = vld [vmem:[%s7] sm:$0x1]
        %v3582 = vlaneseq
        %v3583 = vshrl.u32 %v3582, 7
        %v3584 = vsub.s32 0, %v3583
        %v3585 = vrot.slane %v3580, %v3584
        %v3587 = vadd.f32 %v3572, %v3585
        %v3588 = vadd.f32 %v3573, %v3585
        %v3589 = vadd.f32 %v3574, %v3585
        %v3590 = vadd.f32 %v3575, %v3585
        %v3591 = vadd.f32 %v3576, %v3585
        %v3592 = vadd.f32 %v3577, %v3585
        %v3593 = vadd.f32 %v3578, %v3585
        %v3594 = vadd.f32 %v3579, %v3585
        %v3595 = vld [vmem:[%s1] sm:$0xff]
        %v3596 = vld [vmem:[%s1 + $0x8] sm:$0xff]
        %v3597 = vld [vmem:[%s1 + $0x10] sm:$0xff]
        %v3598 = vld [vmem:[%s1 + $0x18] sm:$0xff]
        %v3599 = vld [vmem:[%s1 + $0x20] sm:$0xff]
        %v3600 = vld [vmem:[%s1 + $0x28] sm:$0xff]
        %v3601 = vld [vmem:[%s1 + $0x30] sm:$0xff]
        %v3602 = vld [vmem:[%s1 + $0x38] sm:$0xff]
        %v3603 = vld [vmem:[%s8] sm:$0xff]
        %v3604 = vld [vmem:[%s8 + $0x8] sm:$0xff]
        %v3605 = vld [vmem:[%s8 + $0x10] sm:$0xff]
        %v3606 = vld [vmem:[%s8 + $0x18] sm:$0xff]
        %v3608 = vsel %vm3459, %v3587, 0
        %v3611 = vsel %vm3459, %v3588, 0
        %v3614 = vsel %vm3459, %v3589, 0
        %v3617 = vsel %vm3459, %v3590, 0
        %v3620 = vsel %vm3459, %v3591, 0
        %v3623 = vsel %vm3459, %v3592, 0
        %v3626 = vsel %vm3459, %v3593, 0
        %v3629 = vsel %vm3459, %v3594, 0
        %3631 = vmatprep.subr.mxu0 0.0
        %3632 = vmatpush1.msra.mxu0 %v3603
        %3633 = vmatprep.subr.mxu0 0.0
        %3634 = vmatpush1.msra.mxu0 %v3604
        %3635 = vmatprep.subr.mxu0 0.0
        %3636 = vmatpush1.msra.mxu0 %v3605
        %3637 = vmatprep.subr.mxu0 0.0
        %3638 = vmatpush1.msra.mxu0 %v3606
        %3639 = vmatprep.subr.mxu0 0.0
        %3640 = vmatpush1.msra.mxu0 0.0
        %3641 = vmatprep.subr.mxu0 0.0
        %3642 = vmatpush1.msra.mxu0 0.0
        %3643 = vmatprep.subr.mxu0 0.0
        %3644 = vmatpush1.msra.mxu0 0.0
        %3645 = vmatprep.subr.mxu0 0.0
        %3646 = vmatpush1.msra.mxu0 0.0
        %3647 = vmatprep.subr.mxu0 0.0
        %3648 = vmatpush1.msra.mxu0 0.0
        %3649 = vmatprep.subr.mxu0 0.0
        %3650 = vmatpush1.msra.mxu0 0.0
        %3651 = vmatprep.subr.mxu0 0.0
        %3652 = vmatpush1.msra.mxu0 0.0
        %3653 = vmatprep.subr.mxu0 0.0
        %3654 = vmatpush1.msra.mxu0 0.0
        %3655 = vmatprep.subr.mxu0 0.0
        %3656 = vmatpush1.msra.mxu0 0.0
        %3657 = vmatprep.subr.mxu0 0.0
        %3658 = vmatpush1.msra.mxu0 0.0
        %3659 = vmatprep.subr.mxu0 0.0
        %3660 = vmatpush1.msra.mxu0 0.0
        %3661 = vmatprep.subr.mxu0 0.0
        %3662 = vmatpush1.msra.mxu0 0.0
        %3663 = vmatprep.subr.mxu0 0.0
        %3664 = vmatpush1.msra.mxu0 0.0
        %3665 = vmatprep.subr.mxu0 0.0
        %3666 = vmatpush1.msra.mxu0 0.0
        %3667 = vmatprep.subr.mxu0 0.0
        %3668 = vmatpush1.msra.mxu0 0.0
        %3669 = vmatprep.subr.mxu0 0.0
        %3670 = vmatpush1.msra.mxu0 0.0
        %3671 = vmatprep.subr.mxu0 0.0
        %3672 = vmatpush1.msra.mxu0 0.0
        %3673 = vmatprep.subr.mxu0 0.0
        %3674 = vmatpush1.msra.mxu0 0.0
        %3675 = vmatprep.subr.mxu0 0.0
        %3676 = vmatpush1.msra.mxu0 0.0
        %3677 = vmatprep.subr.mxu0 0.0
        %3678 = vmatpush1.msra.mxu0 0.0
        %3679 = vmatprep.subr.mxu0 0.0
        %3680 = vmatpush1.msra.mxu0 0.0
        %3681 = vmatprep.subr.mxu0 0.0
        %3682 = vmatpush1.msra.mxu0 0.0
        %3683 = vmatprep.subr.mxu0 0.0
        %3684 = vmatpush1.msra.mxu0 0.0
        %3685 = vmatprep.subr.mxu0 0.0
        %3686 = vmatpush1.msra.mxu0 0.0
        %3687 = vmatprep.subr.mxu0 0.0
        %3688 = vmatpush1.msra.mxu0 0.0
        %3689 = vmatprep.subr.mxu0 0.0
        %3690 = vmatpush1.msra.mxu0 0.0
        %3691 = vmatprep.subr.mxu0 0.0
        %3692 = vmatpush1.msra.mxu0 0.0
        %3693 = vmatprep.subr.mxu0 0.0
        %3694 = vmatpush1.msra.mxu0 0.0
        %3695 = vmatprep.mubr.f32.mxu0 0.0
        %3696 = vmatmul.mubr.f32.gmra.mrb[0].mxu0 %v3608
        %v3697 = vpop.f32.mrb[0].mxu0
        %v3698 = vadd.f32 0.0, %v3697
        %v3699 = vpop.f32.mrb[0].mxu0
        %3700 = vmatprep.mubr.f32.mxu0 0.0
        %3701 = vmatmul.mubr.f32.gmra.mrb[0].mxu0 %v3611
        %v3702 = vpop.f32.mrb[0].mxu0
        %v3703 = vadd.f32 0.0, %v3702
        %v3704 = vpop.f32.mrb[0].mxu0
        %3705 = vmatprep.mubr.f32.mxu0 0.0
        %3706 = vmatmul.mubr.f32.gmra.mrb[0].mxu0 %v3614
        %v3707 = vpop.f32.mrb[0].mxu0
        %v3708 = vadd.f32 0.0, %v3707
        %v3709 = vpop.f32.mrb[0].mxu0
        %3710 = vmatprep.mubr.f32.mxu0 0.0
        %3711 = vmatmul.mubr.f32.gmra.mrb[0].mxu0 %v3617
        %v3712 = vpop.f32.mrb[0].mxu0
        %v3713 = vadd.f32 0.0, %v3712
        %v3714 = vpop.f32.mrb[0].mxu0
        %3715 = vmatprep.mubr.f32.mxu0 0.0
        %3716 = vmatmul.mubr.f32.gmra.mrb[0].mxu0 %v3620
        %v3717 = vpop.f32.mrb[0].mxu0
        %v3718 = vadd.f32 0.0, %v3717
        %v3719 = vpop.f32.mrb[0].mxu0
        %3720 = vmatprep.mubr.f32.mxu0 0.0
        %3721 = vmatmul.mubr.f32.gmra.mrb[0].mxu0 %v3623
        %v3722 = vpop.f32.mrb[0].mxu0
        %v3723 = vadd.f32 0.0, %v3722
        %v3724 = vpop.f32.mrb[0].mxu0
        %3725 = vmatprep.mubr.f32.mxu0 0.0
        %3726 = vmatmul.mubr.f32.gmra.mrb[0].mxu0 %v3626
        %v3727 = vpop.f32.mrb[0].mxu0
        %v3728 = vadd.f32 0.0, %v3727
        %v3729 = vpop.f32.mrb[0].mxu0
        %3730 = vmatprep.mubr.f32.mxu0 0.0
        %3731 = vmatmul.mubr.f32.gmra.mrb[0].mxu0 %v3629
        %v3732 = vpop.f32.mrb[0].mxu0
        %v3733 = vadd.f32 0.0, %v3732
        %v3734 = vpop.f32.mrb[0].mxu0
        %3735 = vdwg.mxu0
        %v3736 = vld [vmem:[%s9] sm:$0xf]
        %vm3737 = vcmask 523264
        %v3739 = vsel %vm3737, %v3698, 0
        %v3742 = vsel %vm3737, %v3703, 0
        %v3745 = vsel %vm3737, %v3708, 0
        %v3748 = vsel %vm3737, %v3713, 0
        %v3751 = vsel %vm3737, %v3718, 0
        %v3754 = vsel %vm3737, %v3723, 0
        %v3757 = vsel %vm3737, %v3728, 0
        %v3760 = vsel %vm3737, %v3733, 0
        %v3763 = vsel %vm3737, %v3736, 0
        %3765 = vmatprep.subr.mxu0 0.0
        %3766 = vmatpush1.xpose.msra.mxu0 %v3763
        %3767 = vmatprep.subr.mxu0 0.0
        %3768 = vmatpush1.xpose.msra.mxu0 0.0
        %3769 = vmatprep.subr.mxu0 0.0
        %3770 = vmatpush1.xpose.msra.mxu0 0.0
        %3771 = vmatprep.subr.mxu0 0.0
        %3772 = vmatpush1.xpose.msra.mxu0 0.0
        %3773 = vmatprep.subr.mxu0 0.0
        %3774 = vmatpush1.xpose.msra.mxu0 0.0
        %3775 = vmatprep.subr.mxu0 0.0
        %3776 = vmatpush1.xpose.msra.mxu0 0.0
        %3777 = vmatprep.subr.mxu0 0.0
        %3778 = vmatpush1.xpose.msra.mxu0 0.0
        %3779 = vmatprep.subr.mxu0 0.0
        %3780 = vmatpush1.xpose.msra.mxu0 0.0
        %3781 = vmatprep.subr.mxu0 0.0
        %3782 = vmatpush1.xpose.msra.mxu0 0.0
        %3783 = vmatprep.subr.mxu0 0.0
        %3784 = vmatpush1.xpose.msra.mxu0 0.0
        %3785 = vmatprep.subr.mxu0 0.0
        %3786 = vmatpush1.xpose.msra.mxu0 0.0
        %3787 = vmatprep.subr.mxu0 0.0
        %3788 = vmatpush1.xpose.msra.mxu0 0.0
        %3789 = vmatprep.subr.mxu0 0.0
        %3790 = vmatpush1.xpose.msra.mxu0 0.0
        %3791 = vmatprep.subr.mxu0 0.0
        %3792 = vmatpush1.xpose.msra.mxu0 0.0
        %3793 = vmatprep.subr.mxu0 0.0
        %3794 = vmatpush1.xpose.msra.mxu0 0.0
        %3795 = vmatprep.subr.mxu0 0.0
        %3796 = vmatpush1.xpose.msra.mxu0 0.0
        %3797 = vmatprep.subr.mxu0 0.0
        %3798 = vmatpush1.xpose.msra.mxu0 0.0
        %3799 = vmatprep.subr.mxu0 0.0
        %3800 = vmatpush1.xpose.msra.mxu0 0.0
        %3801 = vmatprep.subr.mxu0 0.0
        %3802 = vmatpush1.xpose.msra.mxu0 0.0
        %3803 = vmatprep.subr.mxu0 0.0
        %3804 = vmatpush1.xpose.msra.mxu0 0.0
        %3805 = vmatprep.subr.mxu0 0.0
        %3806 = vmatpush1.xpose.msra.mxu0 0.0
        %3807 = vmatprep.subr.mxu0 0.0
        %3808 = vmatpush1.xpose.msra.mxu0 0.0
        %3809 = vmatprep.subr.mxu0 0.0
        %3810 = vmatpush1.xpose.msra.mxu0 0.0
        %3811 = vmatprep.subr.mxu0 0.0
        %3812 = vmatpush1.xpose.msra.mxu0 0.0
        %3813 = vmatprep.subr.mxu0 0.0
        %3814 = vmatpush1.xpose.msra.mxu0 0.0
        %3815 = vmatprep.subr.mxu0 0.0
        %3816 = vmatpush1.xpose.msra.mxu0 0.0
        %3817 = vmatprep.subr.mxu0 0.0
        %3818 = vmatpush1.xpose.msra.mxu0 0.0
        %3819 = vmatprep.subr.mxu0 0.0
        %3820 = vmatpush1.xpose.msra.mxu0 0.0
        %3821 = vmatprep.subr.mxu0 0.0
        %3822 = vmatpush1.xpose.msra.mxu0 0.0
        %3823 = vmatprep.subr.mxu0 0.0
        %3824 = vmatpush1.xpose.msra.mxu0 0.0
        %3825 = vmatprep.subr.mxu0 0.0
        %3826 = vmatpush1.xpose.msra.mxu0 0.0
        %3827 = vmatprep.subr.mxu0 0.0
        %3828 = vmatpush1.xpose.msra.mxu0 0.0
        %3829 = vmatprep.mubr.f32.mxu0 0.0
        %3830 = vmatmul.mubr.f32.gmra.mrb[0].mxu0 %v3739
        %v3831 = vpop.f32.mrb[0].mxu0
        %v3832 = vadd.f32 0.0, %v3831
        %v3833 = vpop.f32.mrb[0].mxu0
        %3834 = vmatprep.mubr.f32.mxu0 0.0
        %3835 = vmatmul.mubr.f32.gmra.mrb[0].mxu0 %v3742
        %v3836 = vpop.f32.mrb[0].mxu0
        %v3837 = vadd.f32 0.0, %v3836
        %v3838 = vpop.f32.mrb[0].mxu0
        %3839 = vmatprep.mubr.f32.mxu0 0.0
        %3840 = vmatmul.mubr.f32.gmra.mrb[0].mxu0 %v3745
        %v3841 = vpop.f32.mrb[0].mxu0
        %v3842 = vadd.f32 0.0, %v3841
        %v3843 = vpop.f32.mrb[0].mxu0
        %3844 = vmatprep.mubr.f32.mxu0 0.0
        %3845 = vmatmul.mubr.f32.gmra.mrb[0].mxu0 %v3748
        %v3846 = vpop.f32.mrb[0].mxu0
        %v3847 = vadd.f32 0.0, %v3846
        %v3848 = vpop.f32.mrb[0].mxu0
        %3849 = vmatprep.mubr.f32.mxu0 0.0
        %3850 = vmatmul.mubr.f32.gmra.mrb[0].mxu0 %v3751
        %v3851 = vpop.f32.mrb[0].mxu0
        %v3852 = vadd.f32 0.0, %v3851
        %v3853 = vpop.f32.mrb[0].mxu0
        %3854 = vmatprep.mubr.f32.mxu0 0.0
        %3855 = vmatmul.mubr.f32.gmra.mrb[0].mxu0 %v3754
        %v3856 = vpop.f32.mrb[0].mxu0
        %v3857 = vadd.f32 0.0, %v3856
        %v3858 = vpop.f32.mrb[0].mxu0
        %3859 = vmatprep.mubr.f32.mxu0 0.0
        %3860 = vmatmul.mubr.f32.gmra.mrb[0].mxu0 %v3757
        %v3861 = vpop.f32.mrb[0].mxu0
        %v3862 = vadd.f32 0.0, %v3861
        %v3863 = vpop.f32.mrb[0].mxu0
        %3864 = vmatprep.mubr.f32.mxu0 0.0
        %3865 = vmatmul.mubr.f32.gmra.mrb[0].mxu0 %v3760
        %v3866 = vpop.f32.mrb[0].mxu0
        %v3867 = vadd.f32 0.0, %v3866
        %v3868 = vpop.f32.mrb[0].mxu0
        %3869 = vdwg.mxu0
        %v3870 = vld [vmem:[%s10] sm:$0xf]
        %v3872 = vsel %vm3737, %v3870, 0
        %3874 = vmatprep.subr.mxu0 0.0
        %3875 = vmatpush1.xpose.msra.mxu0 %v3739
        %3876 = vmatprep.subr.mxu0 0.0
        %3877 = vmatpush1.xpose.msra.mxu0 %v3742
        %3878 = vmatprep.subr.mxu0 0.0
        %3879 = vmatpush1.xpose.msra.mxu0 %v3745
        %3880 = vmatprep.subr.mxu0 0.0
        %3881 = vmatpush1.xpose.msra.mxu0 %v3748
        %3882 = vmatprep.subr.mxu0 0.0
        %3883 = vmatpush1.xpose.msra.mxu0 %v3751
        %3884 = vmatprep.subr.mxu0 0.0
        %3885 = vmatpush1.xpose.msra.mxu0 %v3754
        %3886 = vmatprep.subr.mxu0 0.0
        %3887 = vmatpush1.xpose.msra.mxu0 %v3757
        %3888 = vmatprep.subr.mxu0 0.0
        %3889 = vmatpush1.xpose.msra.mxu0 %v3760
        %3890 = vmatprep.subr.mxu0 0.0
        %3891 = vmatpush1.xpose.msra.mxu0 0.0
        %3892 = vmatprep.subr.mxu0 0.0
        %3893 = vmatpush1.xpose.msra.mxu0 0.0
        %3894 = vmatprep.subr.mxu0 0.0
        %3895 = vmatpush1.xpose.msra.mxu0 0.0
        %3896 = vmatprep.subr.mxu0 0.0
        %3897 = vmatpush1.xpose.msra.mxu0 0.0
        %3898 = vmatprep.subr.mxu0 0.0
        %3899 = vmatpush1.xpose.msra.mxu0 0.0
        %3900 = vmatprep.subr.mxu0 0.0
        %3901 = vmatpush1.xpose.msra.mxu0 0.0
        %3902 = vmatprep.subr.mxu0 0.0
        %3903 = vmatpush1.xpose.msra.mxu0 0.0
        %3904 = vmatprep.subr.mxu0 0.0
        %3905 = vmatpush1.xpose.msra.mxu0 0.0
        %3906 = vmatprep.subr.mxu0 0.0
        %3907 = vmatpush1.xpose.msra.mxu0 0.0
        %3908 = vmatprep.subr.mxu0 0.0
        %3909 = vmatpush1.xpose.msra.mxu0 0.0
        %3910 = vmatprep.subr.mxu0 0.0
        %3911 = vmatpush1.xpose.msra.mxu0 0.0
        %3912 = vmatprep.subr.mxu0 0.0
        %3913 = vmatpush1.xpose.msra.mxu0 0.0
        %3914 = vmatprep.subr.mxu0 0.0
        %3915 = vmatpush1.xpose.msra.mxu0 0.0
        %3916 = vmatprep.subr.mxu0 0.0
        %3917 = vmatpush1.xpose.msra.mxu0 0.0
        %3918 = vmatprep.subr.mxu0 0.0
        %3919 = vmatpush1.xpose.msra.mxu0 0.0
        %3920 = vmatprep.subr.mxu0 0.0
        %3921 = vmatpush1.xpose.msra.mxu0 0.0
        %3922 = vmatprep.subr.mxu0 0.0
        %3923 = vmatpush1.xpose.msra.mxu0 0.0
        %3924 = vmatprep.subr.mxu0 0.0
        %3925 = vmatpush1.xpose.msra.mxu0 0.0
        %3926 = vmatprep.subr.mxu0 0.0
        %3927 = vmatpush1.xpose.msra.mxu0 0.0
        %3928 = vmatprep.subr.mxu0 0.0
        %3929 = vmatpush1.xpose.msra.mxu0 0.0
        %3930 = vmatprep.subr.mxu0 0.0
        %3931 = vmatpush1.xpose.msra.mxu0 0.0
        %3932 = vmatprep.subr.mxu0 0.0
        %3933 = vmatpush1.xpose.msra.mxu0 0.0
        %3934 = vmatprep.subr.mxu0 0.0
        %3935 = vmatpush1.xpose.msra.mxu0 0.0
        %3936 = vmatprep.subr.mxu0 0.0
        %3937 = vmatpush1.xpose.msra.mxu0 0.0
        %3938 = vmatprep.mubr.f32.mxu0 0.0
        %3939 = vmatmul.mubr.f32.gmra.mrb[0].mxu0 %v3872
        %v3940 = vpop.f32.mrb[0].mxu0
        %v3941 = vadd.f32 0.0, %v3940
        %v3942 = vpop.f32.mrb[0].mxu0
        %3943 = vdwg.mxu0
        %3945 = vset.pattern.permute.xlu0 0
        %3946 = vperm.xlu0 %3945, %v3832
        %v3947 = vpop.permute.xlu0 %3946
        %3950 = vset.pattern.permute.xlu0 0
        %3951 = vperm.xlu0 %3950, %v3837
        %v3952 = vpop.permute.xlu0 %3951
        %3955 = vset.pattern.permute.xlu0 0
        %3956 = vperm.xlu0 %3955, %v3842
        %v3957 = vpop.permute.xlu0 %3956
        %3960 = vset.pattern.permute.xlu0 0
        %3961 = vperm.xlu0 %3960, %v3847
        %v3962 = vpop.permute.xlu0 %3961
        %3965 = vset.pattern.permute.xlu0 0
        %3966 = vperm.xlu0 %3965, %v3852
        %v3967 = vpop.permute.xlu0 %3966
        %3970 = vset.pattern.permute.xlu0 0
        %3971 = vperm.xlu0 %3970, %v3857
        %v3972 = vpop.permute.xlu0 %3971
        %3975 = vset.pattern.permute.xlu0 0
        %3976 = vperm.xlu0 %3975, %v3862
        %v3977 = vpop.permute.xlu0 %3976
        %3980 = vset.pattern.permute.xlu0 0
        %3981 = vperm.xlu0 %3980, %v3867
        %v3982 = vpop.permute.xlu0 %3981
        %v3984 = vlaneseq
        %v3985 = vshrl.u32 %v3984, 7
        %v3986 = vsub.s32 0, %v3985
        %v3987 = vrot.slane %v3941, %v3986
        %v3988 = vadd.f32 %v3947, %v3987
        %v3989 = vadd.f32 %v3952, %v3987
        %v3990 = vadd.f32 %v3957, %v3987
        %v3991 = vadd.f32 %v3962, %v3987
        %v3992 = vadd.f32 %v3967, %v3987
        %v3993 = vadd.f32 %v3972, %v3987
        %v3994 = vadd.f32 %v3977, %v3987
        %v3995 = vadd.f32 %v3982, %v3987
        %vm3996 = vcmp.gt.f32.partialorder %v3988, 0.0
        %vm3997 = vcmp.gt.f32.partialorder %v3989, 0.0
        %vm3998 = vcmp.gt.f32.partialorder %v3990, 0.0
        %vm3999 = vcmp.gt.f32.partialorder %v3991, 0.0
        %vm4000 = vcmp.gt.f32.partialorder %v3992, 0.0
        %vm4001 = vcmp.gt.f32.partialorder %v3993, 0.0
        %vm4002 = vcmp.gt.f32.partialorder %v3994, 0.0
        %vm4003 = vcmp.gt.f32.partialorder %v3995, 0.0
        %v4004 = vmul.f32 %v3988, 0.2
        %v4005 = vmul.f32 %v3989, 0.2
        %v4006 = vmul.f32 %v3990, 0.2
        %v4007 = vmul.f32 %v3991, 0.2
        %v4008 = vmul.f32 %v3992, 0.2
        %v4009 = vmul.f32 %v3993, 0.2
        %v4010 = vmul.f32 %v3994, 0.2
        %v4011 = vmul.f32 %v3995, 0.2
        %v4012 = vsel %vm3996, %v3988, %v4004
        %v4013 = vsel %vm3997, %v3989, %v4005
        %v4014 = vsel %vm3998, %v3990, %v4006
        %v4015 = vsel %vm3999, %v3991, %v4007
        %v4016 = vsel %vm4000, %v3992, %v4008
        %v4017 = vsel %vm4001, %v3993, %v4009
        %v4018 = vsel %vm4002, %v3994, %v4010
        %v4019 = vsel %vm4003, %v3995, %v4011
        %v4020 = vadd.f32 %v4012, %v3595
        %v4021 = vadd.f32 %v4013, %v3596
        %v4022 = vadd.f32 %v4014, %v3597
        %v4023 = vadd.f32 %v4015, %v3598
        %v4024 = vadd.f32 %v4016, %v3599
        %v4025 = vadd.f32 %v4017, %v3600
        %v4026 = vadd.f32 %v4018, %v3601
        %v4027 = vadd.f32 %v4019, %v3602
        %v4028 = vsel %vm3737, %v4020, -inf
        %4029 = vmax.xlane.f32.xlu0 %v4028
        %v4030 = vpop.xlane.xlu0 %4029
        %v4031 = vsel %vm3737, %v4021, -inf
        %4032 = vmax.xlane.f32.xlu0 %v4031
        %v4033 = vpop.xlane.xlu0 %4032
        %v4034 = vsel %vm3737, %v4022, -inf
        %4035 = vmax.xlane.f32.xlu0 %v4034
        %v4036 = vpop.xlane.xlu0 %4035
        %v4037 = vsel %vm3737, %v4023, -inf
        %4038 = vmax.xlane.f32.xlu0 %v4037
        %v4039 = vpop.xlane.xlu0 %4038
        %v4040 = vsel %vm3737, %v4024, -inf
        %4041 = vmax.xlane.f32.xlu0 %v4040
        %v4042 = vpop.xlane.xlu0 %4041
        %v4043 = vsel %vm3737, %v4025, -inf
        %4044 = vmax.xlane.f32.xlu0 %v4043
        %v4045 = vpop.xlane.xlu0 %4044
        %v4046 = vsel %vm3737, %v4026, -inf
        %4047 = vmax.xlane.f32.xlu0 %v4046
        %v4048 = vpop.xlane.xlu0 %4047
        %v4049 = vsel %vm3737, %v4027, -inf
        %4050 = vmax.xlane.f32.xlu0 %v4049
        %v4051 = vpop.xlane.xlu0 %4050
        %v4052 = vsub.f32 %v4020, %v4030
        %v4053 = vsub.f32 %v4021, %v4033
        %v4054 = vsub.f32 %v4022, %v4036
        %v4055 = vsub.f32 %v4023, %v4039
        %v4056 = vsub.f32 %v4024, %v4042
        %v4057 = vsub.f32 %v4025, %v4045
        %v4058 = vsub.f32 %v4026, %v4048
        %v4059 = vsub.f32 %v4027, %v4051
        %v4060 = vmul.f32 %v4052, 1.442695
        %v4061 = vpow.pop %v4060
        %v4062 = vmul.f32 %v4053, 1.442695
        %v4063 = vpow.pop %v4062
        %v4064 = vmul.f32 %v4054, 1.442695
        %v4065 = vpow.pop %v4064
        %v4066 = vmul.f32 %v4055, 1.442695
        %v4067 = vpow.pop %v4066
        %v4068 = vmul.f32 %v4056, 1.442695
        %v4069 = vpow.pop %v4068
        %v4070 = vmul.f32 %v4057, 1.442695
        %v4071 = vpow.pop %v4070
        %v4072 = vmul.f32 %v4058, 1.442695
        %v4073 = vpow.pop %v4072
        %v4074 = vmul.f32 %v4059, 1.442695
        %v4075 = vpow.pop %v4074
        %v4077 = vsel %vm3737, %v4061, 0
        %v4080 = vsel %vm3737, %v4063, 0
        %v4083 = vsel %vm3737, %v4065, 0
        %v4086 = vsel %vm3737, %v4067, 0
        %v4089 = vsel %vm3737, %v4069, 0
        %v4092 = vsel %vm3737, %v4071, 0
        %v4095 = vsel %vm3737, %v4073, 0
        %v4098 = vsel %vm3737, %v4075, 0
        %4100 = vmatprep.subr.mxu0 0.0
        %4101 = vmatpush1.msra.mxu0 1.0
        %4102 = vmatprep.subr.mxu0 0.0
        %4103 = vmatpush1.msra.mxu0 1.0
        %4104 = vmatprep.subr.mxu0 0.0
        %4105 = vmatpush1.msra.mxu0 1.0
        %4106 = vmatprep.subr.mxu0 0.0
        %4107 = vmatpush1.msra.mxu0 1.0
        %4108 = vmatprep.subr.mxu0 0.0
        %4109 = vmatpush1.msra.mxu0 1.0
        %4110 = vmatprep.subr.mxu0 0.0
        %4111 = vmatpush1.msra.mxu0 1.0
        %4112 = vmatprep.subr.mxu0 0.0
        %4113 = vmatpush1.msra.mxu0 1.0
        %4114 = vmatprep.subr.mxu0 0.0
        %4115 = vmatpush1.msra.mxu0 1.0
        %4116 = vmatprep.subr.mxu0 0.0
        %4117 = vmatpush1.msra.mxu0 0.0
        %4118 = vmatprep.subr.mxu0 0.0
        %4119 = vmatpush1.msra.mxu0 0.0
        %4120 = vmatprep.subr.mxu0 0.0
        %4121 = vmatpush1.msra.mxu0 0.0
        %4122 = vmatprep.subr.mxu0 0.0
        %4123 = vmatpush1.msra.mxu0 0.0
        %4124 = vmatprep.subr.mxu0 0.0
        %4125 = vmatpush1.msra.mxu0 0.0
        %4126 = vmatprep.subr.mxu0 0.0
        %4127 = vmatpush1.msra.mxu0 0.0
        %4128 = vmatprep.subr.mxu0 0.0
        %4129 = vmatpush1.msra.mxu0 0.0
        %4130 = vmatprep.subr.mxu0 0.0
        %4131 = vmatpush1.msra.mxu0 0.0
        %4132 = vmatprep.subr.mxu0 0.0
        %4133 = vmatpush1.msra.mxu0 0.0
        %4134 = vmatprep.subr.mxu0 0.0
        %4135 = vmatpush1.msra.mxu0 0.0
        %4136 = vmatprep.subr.mxu0 0.0
        %4137 = vmatpush1.msra.mxu0 0.0
        %4138 = vmatprep.subr.mxu0 0.0
        %4139 = vmatpush1.msra.mxu0 0.0
        %4140 = vmatprep.subr.mxu0 0.0
        %4141 = vmatpush1.msra.mxu0 0.0
        %4142 = vmatprep.subr.mxu0 0.0
        %4143 = vmatpush1.msra.mxu0 0.0
        %4144 = vmatprep.subr.mxu0 0.0
        %4145 = vmatpush1.msra.mxu0 0.0
        %4146 = vmatprep.subr.mxu0 0.0
        %4147 = vmatpush1.msra.mxu0 0.0
        %4148 = vmatprep.subr.mxu0 0.0
        %4149 = vmatpush1.msra.mxu0 0.0
        %4150 = vmatprep.subr.mxu0 0.0
        %4151 = vmatpush1.msra.mxu0 0.0
        %4152 = vmatprep.subr.mxu0 0.0
        %4153 = vmatpush1.msra.mxu0 0.0
        %4154 = vmatprep.subr.mxu0 0.0
        %4155 = vmatpush1.msra.mxu0 0.0
        %4156 = vmatprep.subr.mxu0 0.0
        %4157 = vmatpush1.msra.mxu0 0.0
        %4158 = vmatprep.subr.mxu0 0.0
        %4159 = vmatpush1.msra.mxu0 0.0
        %4160 = vmatprep.subr.mxu0 0.0
        %4161 = vmatpush1.msra.mxu0 0.0
        %4162 = vmatprep.subr.mxu0 0.0
        %4163 = vmatpush1.msra.mxu0 0.0
        %4164 = vmatprep.mubr.f32.mxu0 0.0
        %4165 = vmatmul.mubr.f32.gmra.mrb[0].mxu0 %v4077
        %v4166 = vpop.f32.mrb[0].mxu0
        %v4167 = vadd.f32 0.0, %v4166
        %v4168 = vpop.f32.mrb[0].mxu0
        %4169 = vmatprep.mubr.f32.mxu0 0.0
        %4170 = vmatmul.mubr.f32.gmra.mrb[0].mxu0 %v4080
        %v4171 = vpop.f32.mrb[0].mxu0
        %v4172 = vadd.f32 0.0, %v4171
        %v4173 = vpop.f32.mrb[0].mxu0
        %4174 = vmatprep.mubr.f32.mxu0 0.0
        %4175 = vmatmul.mubr.f32.gmra.mrb[0].mxu0 %v4083
        %v4176 = vpop.f32.mrb[0].mxu0
        %v4177 = vadd.f32 0.0, %v4176
        %v4178 = vpop.f32.mrb[0].mxu0
        %4179 = vmatprep.mubr.f32.mxu0 0.0
        %4180 = vmatmul.mubr.f32.gmra.mrb[0].mxu0 %v4086
        %v4181 = vpop.f32.mrb[0].mxu0
        %v4182 = vadd.f32 0.0, %v4181
        %v4183 = vpop.f32.mrb[0].mxu0
        %4184 = vmatprep.mubr.f32.mxu0 0.0
        %4185 = vmatmul.mubr.f32.gmra.mrb[0].mxu0 %v4089
        %v4186 = vpop.f32.mrb[0].mxu0
        %v4187 = vadd.f32 0.0, %v4186
        %v4188 = vpop.f32.mrb[0].mxu0
        %4189 = vmatprep.mubr.f32.mxu0 0.0
        %4190 = vmatmul.mubr.f32.gmra.mrb[0].mxu0 %v4092
        %v4191 = vpop.f32.mrb[0].mxu0
        %v4192 = vadd.f32 0.0, %v4191
        %v4193 = vpop.f32.mrb[0].mxu0
        %4194 = vmatprep.mubr.f32.mxu0 0.0
        %4195 = vmatmul.mubr.f32.gmra.mrb[0].mxu0 %v4095
        %v4196 = vpop.f32.mrb[0].mxu0
        %v4197 = vadd.f32 0.0, %v4196
        %v4198 = vpop.f32.mrb[0].mxu0
        %4199 = vmatprep.mubr.f32.mxu0 0.0
        %4200 = vmatmul.mubr.f32.gmra.mrb[0].mxu0 %v4098
        %v4201 = vpop.f32.mrb[0].mxu0
        %v4202 = vadd.f32 0.0, %v4201
        %v4203 = vpop.f32.mrb[0].mxu0
        %4204 = vdwg.mxu0
        %v4205 = vrcp.pop %v4167
        %v4206 = vrcp.pop %v4172
        %v4207 = vrcp.pop %v4177
        %v4208 = vrcp.pop %v4182
        %v4209 = vrcp.pop %v4187
        %v4210 = vrcp.pop %v4192
        %v4211 = vrcp.pop %v4197
        %v4212 = vrcp.pop %v4202
        %4214 = vset.pattern.permute.xlu0 0
        %4215 = vperm.xlu0 %4214, %v4205
        %v4216 = vpop.permute.xlu0 %4215
        %4219 = vset.pattern.permute.xlu0 0
        %4220 = vperm.xlu0 %4219, %v4206
        %v4221 = vpop.permute.xlu0 %4220
        %4224 = vset.pattern.permute.xlu0 0
        %4225 = vperm.xlu0 %4224, %v4207
        %v4226 = vpop.permute.xlu0 %4225
        %4229 = vset.pattern.permute.xlu0 0
        %4230 = vperm.xlu0 %4229, %v4208
        %v4231 = vpop.permute.xlu0 %4230
        %4234 = vset.pattern.permute.xlu0 0
        %4235 = vperm.xlu0 %4234, %v4209
        %v4236 = vpop.permute.xlu0 %4235
        %4239 = vset.pattern.permute.xlu0 0
        %4240 = vperm.xlu0 %4239, %v4210
        %v4241 = vpop.permute.xlu0 %4240
        %4244 = vset.pattern.permute.xlu0 0
        %4245 = vperm.xlu0 %4244, %v4211
        %v4246 = vpop.permute.xlu0 %4245
        %4249 = vset.pattern.permute.xlu0 0
        %4250 = vperm.xlu0 %4249, %v4212
        %v4251 = vpop.permute.xlu0 %4250
        %v4253 = vmul.f32 %v4061, %v4216
        %v4254 = vmul.f32 %v4063, %v4221
        %v4255 = vmul.f32 %v4065, %v4226
        %v4256 = vmul.f32 %v4067, %v4231
        %v4257 = vmul.f32 %v4069, %v4236
        %v4258 = vmul.f32 %v4071, %v4241
        %v4259 = vmul.f32 %v4073, %v4246
        %v4260 = vmul.f32 %v4075, %v4251
        %v4262 = vsel %vm3737, %v4253, 0
        %v4265 = vsel %vm3737, %v4254, 0
        %v4268 = vsel %vm3737, %v4255, 0
        %v4271 = vsel %vm3737, %v4256, 0
        %v4274 = vsel %vm3737, %v4257, 0
        %v4277 = vsel %vm3737, %v4258, 0
        %v4280 = vsel %vm3737, %v4259, 0
        %v4283 = vsel %vm3737, %v4260, 0
        %4285 = vmatprep.subr.mxu0 0.0
        %4286 = vmatpush1.msra.mxu0 %v3698
        %4287 = vmatprep.subr.mxu0 0.0
        %4288 = vmatpush1.msra.mxu0 %v3703
        %4289 = vmatprep.subr.mxu0 0.0
        %4290 = vmatpush1.msra.mxu0 %v3708
        %4291 = vmatprep.subr.mxu0 0.0
        %4292 = vmatpush1.msra.mxu0 %v3713
        %4293 = vmatprep.subr.mxu0 0.0
        %4294 = vmatpush1.msra.mxu0 %v3718
        %4295 = vmatprep.subr.mxu0 0.0
        %4296 = vmatpush1.msra.mxu0 %v3723
        %4297 = vmatprep.subr.mxu0 0.0
        %4298 = vmatpush1.msra.mxu0 %v3728
        %4299 = vmatprep.subr.mxu0 0.0
        %4300 = vmatpush1.msra.mxu0 %v3733
        %4301 = vmatprep.subr.mxu0 0.0
        %4302 = vmatpush1.msra.mxu0 0.0
        %4303 = vmatprep.subr.mxu0 0.0
        %4304 = vmatpush1.msra.mxu0 0.0
        %4305 = vmatprep.subr.mxu0 0.0
        %4306 = vmatpush1.msra.mxu0 0.0
        %4307 = vmatprep.subr.mxu0 0.0
        %4308 = vmatpush1.msra.mxu0 0.0
        %4309 = vmatprep.subr.mxu0 0.0
        %4310 = vmatpush1.msra.mxu0 0.0
        %4311 = vmatprep.subr.mxu0 0.0
        %4312 = vmatpush1.msra.mxu0 0.0
        %4313 = vmatprep.subr.mxu0 0.0
        %4314 = vmatpush1.msra.mxu0 0.0
        %4315 = vmatprep.subr.mxu0 0.0
        %4316 = vmatpush1.msra.mxu0 0.0
        %4317 = vmatprep.subr.mxu0 0.0
        %4318 = vmatpush1.msra.mxu0 0.0
        %4319 = vmatprep.subr.mxu0 0.0
        %4320 = vmatpush1.msra.mxu0 0.0
        %4321 = vmatprep.subr.mxu0 0.0
        %4322 = vmatpush1.msra.mxu0 0.0
        %4323 = vmatprep.subr.mxu0 0.0
        %4324 = vmatpush1.msra.mxu0 0.0
        %4325 = vmatprep.subr.mxu0 0.0
        %4326 = vmatpush1.msra.mxu0 0.0
        %4327 = vmatprep.subr.mxu0 0.0
        %4328 = vmatpush1.msra.mxu0 0.0
        %4329 = vmatprep.subr.mxu0 0.0
        %4330 = vmatpush1.msra.mxu0 0.0
        %4331 = vmatprep.subr.mxu0 0.0
        %4332 = vmatpush1.msra.mxu0 0.0
        %4333 = vmatprep.subr.mxu0 0.0
        %4334 = vmatpush1.msra.mxu0 0.0
        %4335 = vmatprep.subr.mxu0 0.0
        %4336 = vmatpush1.msra.mxu0 0.0
        %4337 = vmatprep.subr.mxu0 0.0
        %4338 = vmatpush1.msra.mxu0 0.0
        %4339 = vmatprep.subr.mxu0 0.0
        %4340 = vmatpush1.msra.mxu0 0.0
        %4341 = vmatprep.subr.mxu0 0.0
        %4342 = vmatpush1.msra.mxu0 0.0
        %4343 = vmatprep.subr.mxu0 0.0
        %4344 = vmatpush1.msra.mxu0 0.0
        %4345 = vmatprep.subr.mxu0 0.0
        %4346 = vmatpush1.msra.mxu0 0.0
        %4347 = vmatprep.subr.mxu0 0.0
        %4348 = vmatpush1.msra.mxu0 0.0
        %4349 = vmatprep.mubr.f32.mxu0 0.0
        %4350 = vmatmul.mubr.f32.gmra.mrb[0].mxu0 %v4262
        %v4351 = vpop.f32.mrb[0].mxu0
        %v4352 = vadd.f32 0.0, %v4351
        %v4353 = vpop.f32.mrb[0].mxu0
        %4354 = vmatprep.mubr.f32.mxu0 0.0
        %4355 = vmatmul.mubr.f32.gmra.mrb[0].mxu0 %v4265
        %v4356 = vpop.f32.mrb[0].mxu0
        %v4357 = vadd.f32 0.0, %v4356
        %v4358 = vpop.f32.mrb[0].mxu0
        %4359 = vmatprep.mubr.f32.mxu0 0.0
        %4360 = vmatmul.mubr.f32.gmra.mrb[0].mxu0 %v4268
        %v4361 = vpop.f32.mrb[0].mxu0
        %v4362 = vadd.f32 0.0, %v4361
        %v4363 = vpop.f32.mrb[0].mxu0
        %4364 = vmatprep.mubr.f32.mxu0 0.0
        %4365 = vmatmul.mubr.f32.gmra.mrb[0].mxu0 %v4271
        %v4366 = vpop.f32.mrb[0].mxu0
        %v4367 = vadd.f32 0.0, %v4366
        %v4368 = vpop.f32.mrb[0].mxu0
        %4369 = vmatprep.mubr.f32.mxu0 0.0
        %4370 = vmatmul.mubr.f32.gmra.mrb[0].mxu0 %v4274
        %v4371 = vpop.f32.mrb[0].mxu0
        %v4372 = vadd.f32 0.0, %v4371
        %v4373 = vpop.f32.mrb[0].mxu0
        %4374 = vmatprep.mubr.f32.mxu0 0.0
        %4375 = vmatmul.mubr.f32.gmra.mrb[0].mxu0 %v4277
        %v4376 = vpop.f32.mrb[0].mxu0
        %v4377 = vadd.f32 0.0, %v4376
        %v4378 = vpop.f32.mrb[0].mxu0
        %4379 = vmatprep.mubr.f32.mxu0 0.0
        %4380 = vmatmul.mubr.f32.gmra.mrb[0].mxu0 %v4280
        %v4381 = vpop.f32.mrb[0].mxu0
        %v4382 = vadd.f32 0.0, %v4381
        %v4383 = vpop.f32.mrb[0].mxu0
        %4384 = vmatprep.mubr.f32.mxu0 0.0
        %4385 = vmatmul.mubr.f32.gmra.mrb[0].mxu0 %v4283
        %v4386 = vpop.f32.mrb[0].mxu0
        %v4387 = vadd.f32 0.0, %v4386
        %v4388 = vpop.f32.mrb[0].mxu0
        %4389 = vdwg.mxu0
        %4390 = vset.pattern.permute.xlu0 1
        %4391 = vperm.xlu0 %4390, %v3832
        %v4392 = vpop.permute.xlu0 %4391
        %4394 = vset.pattern.permute.xlu0 1
        %4395 = vperm.xlu0 %4394, %v3837
        %v4396 = vpop.permute.xlu0 %4395
        %4398 = vset.pattern.permute.xlu0 1
        %4399 = vperm.xlu0 %4398, %v3842
        %v4400 = vpop.permute.xlu0 %4399
        %4402 = vset.pattern.permute.xlu0 1
        %4403 = vperm.xlu0 %4402, %v3847
        %v4404 = vpop.permute.xlu0 %4403
        %4406 = vset.pattern.permute.xlu0 1
        %4407 = vperm.xlu0 %4406, %v3852
        %v4408 = vpop.permute.xlu0 %4407
        %4410 = vset.pattern.permute.xlu0 1
        %4411 = vperm.xlu0 %4410, %v3857
        %v4412 = vpop.permute.xlu0 %4411
        %4414 = vset.pattern.permute.xlu0 1
        %4415 = vperm.xlu0 %4414, %v3862
        %v4416 = vpop.permute.xlu0 %4415
        %4418 = vset.pattern.permute.xlu0 1
        %4419 = vperm.xlu0 %4418, %v3867
        %v4420 = vpop.permute.xlu0 %4419
        %v4422 = vlaneseq
        %v4423 = vshrl.u32 %v4422, 7
        %v4424 = vsub.s32 1, %v4423
        %v4425 = vrot.slane %v3941, %v4424
        %v4426 = vadd.f32 %v4392, %v4425
        %v4427 = vadd.f32 %v4396, %v4425
        %v4428 = vadd.f32 %v4400, %v4425
        %v4429 = vadd.f32 %v4404, %v4425
        %v4430 = vadd.f32 %v4408, %v4425
        %v4431 = vadd.f32 %v4412, %v4425
        %v4432 = vadd.f32 %v4416, %v4425
        %v4433 = vadd.f32 %v4420, %v4425
        %vm4434 = vcmp.gt.f32.partialorder %v4426, 0.0
        %vm4435 = vcmp.gt.f32.partialorder %v4427, 0.0
        %vm4436 = vcmp.gt.f32.partialorder %v4428, 0.0
        %vm4437 = vcmp.gt.f32.partialorder %v4429, 0.0
        %vm4438 = vcmp.gt.f32.partialorder %v4430, 0.0
        %vm4439 = vcmp.gt.f32.partialorder %v4431, 0.0
        %vm4440 = vcmp.gt.f32.partialorder %v4432, 0.0
        %vm4441 = vcmp.gt.f32.partialorder %v4433, 0.0
        %v4442 = vmul.f32 %v4426, 0.2
        %v4443 = vmul.f32 %v4427, 0.2
        %v4444 = vmul.f32 %v4428, 0.2
        %v4445 = vmul.f32 %v4429, 0.2
        %v4446 = vmul.f32 %v4430, 0.2
        %v4447 = vmul.f32 %v4431, 0.2
        %v4448 = vmul.f32 %v4432, 0.2
        %v4449 = vmul.f32 %v4433, 0.2
        %v4450 = vsel %vm4434, %v4426, %v4442
        %v4451 = vsel %vm4435, %v4427, %v4443
        %v4452 = vsel %vm4436, %v4428, %v4444
        %v4453 = vsel %vm4437, %v4429, %v4445
        %v4454 = vsel %vm4438, %v4430, %v4446
        %v4455 = vsel %vm4439, %v4431, %v4447
        %v4456 = vsel %vm4440, %v4432, %v4448
        %v4457 = vsel %vm4441, %v4433, %v4449
        %v4458 = vadd.f32 %v4450, %v3595
        %v4459 = vadd.f32 %v4451, %v3596
        %v4460 = vadd.f32 %v4452, %v3597
        %v4461 = vadd.f32 %v4453, %v3598
        %v4462 = vadd.f32 %v4454, %v3599
        %v4463 = vadd.f32 %v4455, %v3600
        %v4464 = vadd.f32 %v4456, %v3601
        %v4465 = vadd.f32 %v4457, %v3602
        %v4466 = vsel %vm3737, %v4458, -inf
        %4467 = vmax.xlane.f32.xlu0 %v4466
        %v4468 = vpop.xlane.xlu0 %4467
        %v4469 = vsel %vm3737, %v4459, -inf
        %4470 = vmax.xlane.f32.xlu0 %v4469
        %v4471 = vpop.xlane.xlu0 %4470
        %v4472 = vsel %vm3737, %v4460, -inf
        %4473 = vmax.xlane.f32.xlu0 %v4472
        %v4474 = vpop.xlane.xlu0 %4473
        %v4475 = vsel %vm3737, %v4461, -inf
        %4476 = vmax.xlane.f32.xlu0 %v4475
        %v4477 = vpop.xlane.xlu0 %4476
        %v4478 = vsel %vm3737, %v4462, -inf
        %4479 = vmax.xlane.f32.xlu0 %v4478
        %v4480 = vpop.xlane.xlu0 %4479
        %v4481 = vsel %vm3737, %v4463, -inf
        %4482 = vmax.xlane.f32.xlu0 %v4481
        %v4483 = vpop.xlane.xlu0 %4482
        %v4484 = vsel %vm3737, %v4464, -inf
        %4485 = vmax.xlane.f32.xlu0 %v4484
        %v4486 = vpop.xlane.xlu0 %4485
        %v4487 = vsel %vm3737, %v4465, -inf
        %4488 = vmax.xlane.f32.xlu0 %v4487
        %v4489 = vpop.xlane.xlu0 %4488
        %v4490 = vsub.f32 %v4458, %v4468
        %v4491 = vsub.f32 %v4459, %v4471
        %v4492 = vsub.f32 %v4460, %v4474
        %v4493 = vsub.f32 %v4461, %v4477
        %v4494 = vsub.f32 %v4462, %v4480
        %v4495 = vsub.f32 %v4463, %v4483
        %v4496 = vsub.f32 %v4464, %v4486
        %v4497 = vsub.f32 %v4465, %v4489
        %v4498 = vmul.f32 %v4490, 1.442695
        %v4499 = vpow.pop %v4498
        %v4500 = vmul.f32 %v4491, 1.442695
        %v4501 = vpow.pop %v4500
        %v4502 = vmul.f32 %v4492, 1.442695
        %v4503 = vpow.pop %v4502
        %v4504 = vmul.f32 %v4493, 1.442695
        %v4505 = vpow.pop %v4504
        %v4506 = vmul.f32 %v4494, 1.442695
        %v4507 = vpow.pop %v4506
        %v4508 = vmul.f32 %v4495, 1.442695
        %v4509 = vpow.pop %v4508
        %v4510 = vmul.f32 %v4496, 1.442695
        %v4511 = vpow.pop %v4510
        %v4512 = vmul.f32 %v4497, 1.442695
        %v4513 = vpow.pop %v4512
        %v4515 = vsel %vm3737, %v4499, 0
        %v4518 = vsel %vm3737, %v4501, 0
        %v4521 = vsel %vm3737, %v4503, 0
        %v4524 = vsel %vm3737, %v4505, 0
        %v4527 = vsel %vm3737, %v4507, 0
        %v4530 = vsel %vm3737, %v4509, 0
        %v4533 = vsel %vm3737, %v4511, 0
        %v4536 = vsel %vm3737, %v4513, 0
        %4538 = vmatprep.subr.mxu0 0.0
        %4539 = vmatpush1.msra.mxu0 1.0
        %4540 = vmatprep.subr.mxu0 0.0
        %4541 = vmatpush1.msra.mxu0 1.0
        %4542 = vmatprep.subr.mxu0 0.0
        %4543 = vmatpush1.msra.mxu0 1.0
        %4544 = vmatprep.subr.mxu0 0.0
        %4545 = vmatpush1.msra.mxu0 1.0
        %4546 = vmatprep.subr.mxu0 0.0
        %4547 = vmatpush1.msra.mxu0 1.0
        %4548 = vmatprep.subr.mxu0 0.0
        %4549 = vmatpush1.msra.mxu0 1.0
        %4550 = vmatprep.subr.mxu0 0.0
        %4551 = vmatpush1.msra.mxu0 1.0
        %4552 = vmatprep.subr.mxu0 0.0
        %4553 = vmatpush1.msra.mxu0 1.0
        %4554 = vmatprep.subr.mxu0 0.0
        %4555 = vmatpush1.msra.mxu0 0.0
        %4556 = vmatprep.subr.mxu0 0.0
        %4557 = vmatpush1.msra.mxu0 0.0
        %4558 = vmatprep.subr.mxu0 0.0
        %4559 = vmatpush1.msra.mxu0 0.0
        %4560 = vmatprep.subr.mxu0 0.0
        %4561 = vmatpush1.msra.mxu0 0.0
        %4562 = vmatprep.subr.mxu0 0.0
        %4563 = vmatpush1.msra.mxu0 0.0
        %4564 = vmatprep.subr.mxu0 0.0
        %4565 = vmatpush1.msra.mxu0 0.0
        %4566 = vmatprep.subr.mxu0 0.0
        %4567 = vmatpush1.msra.mxu0 0.0
        %4568 = vmatprep.subr.mxu0 0.0
        %4569 = vmatpush1.msra.mxu0 0.0
        %4570 = vmatprep.subr.mxu0 0.0
        %4571 = vmatpush1.msra.mxu0 0.0
        %4572 = vmatprep.subr.mxu0 0.0
        %4573 = vmatpush1.msra.mxu0 0.0
        %4574 = vmatprep.subr.mxu0 0.0
        %4575 = vmatpush1.msra.mxu0 0.0
        %4576 = vmatprep.subr.mxu0 0.0
        %4577 = vmatpush1.msra.mxu0 0.0
        %4578 = vmatprep.subr.mxu0 0.0
        %4579 = vmatpush1.msra.mxu0 0.0
        %4580 = vmatprep.subr.mxu0 0.0
        %4581 = vmatpush1.msra.mxu0 0.0
        %4582 = vmatprep.subr.mxu0 0.0
        %4583 = vmatpush1.msra.mxu0 0.0
        %4584 = vmatprep.subr.mxu0 0.0
        %4585 = vmatpush1.msra.mxu0 0.0
        %4586 = vmatprep.subr.mxu0 0.0
        %4587 = vmatpush1.msra.mxu0 0.0
        %4588 = vmatprep.subr.mxu0 0.0
        %4589 = vmatpush1.msra.mxu0 0.0
        %4590 = vmatprep.subr.mxu0 0.0
        %4591 = vmatpush1.msra.mxu0 0.0
        %4592 = vmatprep.subr.mxu0 0.0
        %4593 = vmatpush1.msra.mxu0 0.0
        %4594 = vmatprep.subr.mxu0 0.0
        %4595 = vmatpush1.msra.mxu0 0.0
        %4596 = vmatprep.subr.mxu0 0.0
        %4597 = vmatpush1.msra.mxu0 0.0
        %4598 = vmatprep.subr.mxu0 0.0
        %4599 = vmatpush1.msra.mxu0 0.0
        %4600 = vmatprep.subr.mxu0 0.0
        %4601 = vmatpush1.msra.mxu0 0.0
        %4602 = vmatprep.mubr.f32.mxu0 0.0
        %4603 = vmatmul.mubr.f32.gmra.mrb[0].mxu0 %v4515
        %v4604 = vpop.f32.mrb[0].mxu0
        %v4605 = vadd.f32 0.0, %v4604
        %v4606 = vpop.f32.mrb[0].mxu0
        %4607 = vmatprep.mubr.f32.mxu0 0.0
        %4608 = vmatmul.mubr.f32.gmra.mrb[0].mxu0 %v4518
        %v4609 = vpop.f32.mrb[0].mxu0
        %v4610 = vadd.f32 0.0, %v4609
        %v4611 = vpop.f32.mrb[0].mxu0
        %4612 = vmatprep.mubr.f32.mxu0 0.0
        %4613 = vmatmul.mubr.f32.gmra.mrb[0].mxu0 %v4521
        %v4614 = vpop.f32.mrb[0].mxu0
        %v4615 = vadd.f32 0.0, %v4614
        %v4616 = vpop.f32.mrb[0].mxu0
        %4617 = vmatprep.mubr.f32.mxu0 0.0
        %4618 = vmatmul.mubr.f32.gmra.mrb[0].mxu0 %v4524
        %v4619 = vpop.f32.mrb[0].mxu0
        %v4620 = vadd.f32 0.0, %v4619
        %v4621 = vpop.f32.mrb[0].mxu0
        %4622 = vmatprep.mubr.f32.mxu0 0.0
        %4623 = vmatmul.mubr.f32.gmra.mrb[0].mxu0 %v4527
        %v4624 = vpop.f32.mrb[0].mxu0
        %v4625 = vadd.f32 0.0, %v4624
        %v4626 = vpop.f32.mrb[0].mxu0
        %4627 = vmatprep.mubr.f32.mxu0 0.0
        %4628 = vmatmul.mubr.f32.gmra.mrb[0].mxu0 %v4530
        %v4629 = vpop.f32.mrb[0].mxu0
        %v4630 = vadd.f32 0.0, %v4629
        %v4631 = vpop.f32.mrb[0].mxu0
        %4632 = vmatprep.mubr.f32.mxu0 0.0
        %4633 = vmatmul.mubr.f32.gmra.mrb[0].mxu0 %v4533
        %v4634 = vpop.f32.mrb[0].mxu0
        %v4635 = vadd.f32 0.0, %v4634
        %v4636 = vpop.f32.mrb[0].mxu0
        %4637 = vmatprep.mubr.f32.mxu0 0.0
        %4638 = vmatmul.mubr.f32.gmra.mrb[0].mxu0 %v4536
        %v4639 = vpop.f32.mrb[0].mxu0
        %v4640 = vadd.f32 0.0, %v4639
        %v4641 = vpop.f32.mrb[0].mxu0
        %4642 = vdwg.mxu0
        %v4643 = vrcp.pop %v4605
        %v4644 = vrcp.pop %v4610
        %v4645 = vrcp.pop %v4615
        %v4646 = vrcp.pop %v4620
        %v4647 = vrcp.pop %v4625
        %v4648 = vrcp.pop %v4630
        %v4649 = vrcp.pop %v4635
        %v4650 = vrcp.pop %v4640
        %4652 = vset.pattern.permute.xlu0 0
        %4653 = vperm.xlu0 %4652, %v4643
        %v4654 = vpop.permute.xlu0 %4653
        %4657 = vset.pattern.permute.xlu0 0
        %4658 = vperm.xlu0 %4657, %v4644
        %v4659 = vpop.permute.xlu0 %4658
        %4662 = vset.pattern.permute.xlu0 0
        %4663 = vperm.xlu0 %4662, %v4645
        %v4664 = vpop.permute.xlu0 %4663
        %4667 = vset.pattern.permute.xlu0 0
        %4668 = vperm.xlu0 %4667, %v4646
        %v4669 = vpop.permute.xlu0 %4668
        %4672 = vset.pattern.permute.xlu0 0
        %4673 = vperm.xlu0 %4672, %v4647
        %v4674 = vpop.permute.xlu0 %4673
        %4677 = vset.pattern.permute.xlu0 0
        %4678 = vperm.xlu0 %4677, %v4648
        %v4679 = vpop.permute.xlu0 %4678
        %4682 = vset.pattern.permute.xlu0 0
        %4683 = vperm.xlu0 %4682, %v4649
        %v4684 = vpop.permute.xlu0 %4683
        %4687 = vset.pattern.permute.xlu0 0
        %4688 = vperm.xlu0 %4687, %v4650
        %v4689 = vpop.permute.xlu0 %4688
        %v4691 = vmul.f32 %v4499, %v4654
        %v4692 = vmul.f32 %v4501, %v4659
        %v4693 = vmul.f32 %v4503, %v4664
        %v4694 = vmul.f32 %v4505, %v4669
        %v4695 = vmul.f32 %v4507, %v4674
        %v4696 = vmul.f32 %v4509, %v4679
        %v4697 = vmul.f32 %v4511, %v4684
        %v4698 = vmul.f32 %v4513, %v4689
        %4699 = vrot.lane.b32.xlu0 %v3698, 112
        %v4700 = vpop.permute.xlu0 %4699
        %4701 = vrot.lane.b32.xlu0 %v3703, 112
        %v4702 = vpop.permute.xlu0 %4701
        %4703 = vrot.lane.b32.xlu0 %v3708, 112
        %v4704 = vpop.permute.xlu0 %4703
        %4705 = vrot.lane.b32.xlu0 %v3713, 112
        %v4706 = vpop.permute.xlu0 %4705
        %4707 = vrot.lane.b32.xlu0 %v3718, 112
        %v4708 = vpop.permute.xlu0 %4707
        %4709 = vrot.lane.b32.xlu0 %v3723, 112
        %v4710 = vpop.permute.xlu0 %4709
        %4711 = vrot.lane.b32.xlu0 %v3728, 112
        %v4712 = vpop.permute.xlu0 %4711
        %4713 = vrot.lane.b32.xlu0 %v3733, 112
        %v4714 = vpop.permute.xlu0 %4713
        %v4724 = vsel %vm3737, %v4691, 0
        %v4727 = vsel %vm3737, %v4692, 0
        %v4730 = vsel %vm3737, %v4693, 0
        %v4733 = vsel %vm3737, %v4694, 0
        %v4736 = vsel %vm3737, %v4695, 0
        %v4739 = vsel %vm3737, %v4696, 0
        %v4742 = vsel %vm3737, %v4697, 0
        %v4745 = vsel %vm3737, %v4698, 0
        %4747 = vmatprep.subr.mxu0 0.0
        %4748 = vmatpush1.msra.mxu0 %v4700
        %4749 = vmatprep.subr.mxu0 0.0
        %4750 = vmatpush1.msra.mxu0 %v4702
        %4751 = vmatprep.subr.mxu0 0.0
        %4752 = vmatpush1.msra.mxu0 %v4704
        %4753 = vmatprep.subr.mxu0 0.0
        %4754 = vmatpush1.msra.mxu0 %v4706
        %4755 = vmatprep.subr.mxu0 0.0
        %4756 = vmatpush1.msra.mxu0 %v4708
        %4757 = vmatprep.subr.mxu0 0.0
        %4758 = vmatpush1.msra.mxu0 %v4710
        %4759 = vmatprep.subr.mxu0 0.0
        %4760 = vmatpush1.msra.mxu0 %v4712
        %4761 = vmatprep.subr.mxu0 0.0
        %4762 = vmatpush1.msra.mxu0 %v4714
        %4763 = vmatprep.subr.mxu0 0.0
        %4764 = vmatpush1.msra.mxu0 0.0
        %4765 = vmatprep.subr.mxu0 0.0
        %4766 = vmatpush1.msra.mxu0 0.0
        %4767 = vmatprep.subr.mxu0 0.0
        %4768 = vmatpush1.msra.mxu0 0.0
        %4769 = vmatprep.subr.mxu0 0.0
        %4770 = vmatpush1.msra.mxu0 0.0
        %4771 = vmatprep.subr.mxu0 0.0
        %4772 = vmatpush1.msra.mxu0 0.0
        %4773 = vmatprep.subr.mxu0 0.0
        %4774 = vmatpush1.msra.mxu0 0.0
        %4775 = vmatprep.subr.mxu0 0.0
        %4776 = vmatpush1.msra.mxu0 0.0
        %4777 = vmatprep.subr.mxu0 0.0
        %4778 = vmatpush1.msra.mxu0 0.0
        %4779 = vmatprep.subr.mxu0 0.0
        %4780 = vmatpush1.msra.mxu0 0.0
        %4781 = vmatprep.subr.mxu0 0.0
        %4782 = vmatpush1.msra.mxu0 0.0
        %4783 = vmatprep.subr.mxu0 0.0
        %4784 = vmatpush1.msra.mxu0 0.0
        %4785 = vmatprep.subr.mxu0 0.0
        %4786 = vmatpush1.msra.mxu0 0.0
        %4787 = vmatprep.subr.mxu0 0.0
        %4788 = vmatpush1.msra.mxu0 0.0
        %4789 = vmatprep.subr.mxu0 0.0
        %4790 = vmatpush1.msra.mxu0 0.0
        %4791 = vmatprep.subr.mxu0 0.0
        %4792 = vmatpush1.msra.mxu0 0.0
        %4793 = vmatprep.subr.mxu0 0.0
        %4794 = vmatpush1.msra.mxu0 0.0
        %4795 = vmatprep.subr.mxu0 0.0
        %4796 = vmatpush1.msra.mxu0 0.0
        %4797 = vmatprep.subr.mxu0 0.0
        %4798 = vmatpush1.msra.mxu0 0.0
        %4799 = vmatprep.subr.mxu0 0.0
        %4800 = vmatpush1.msra.mxu0 0.0
        %4801 = vmatprep.subr.mxu0 0.0
        %4802 = vmatpush1.msra.mxu0 0.0
        %4803 = vmatprep.subr.mxu0 0.0
        %4804 = vmatpush1.msra.mxu0 0.0
        %4805 = vmatprep.subr.mxu0 0.0
        %4806 = vmatpush1.msra.mxu0 0.0
        %4807 = vmatprep.subr.mxu0 0.0
        %4808 = vmatpush1.msra.mxu0 0.0
        %4809 = vmatprep.subr.mxu0 0.0
        %4810 = vmatpush1.msra.mxu0 0.0
        %4811 = vmatprep.mubr.f32.mxu0 0.0
        %4812 = vmatmul.mubr.f32.gmra.mrb[0].mxu0 %v4724
        %v4813 = vpop.f32.mrb[0].mxu0
        %v4814 = vadd.f32 0.0, %v4813
        %v4815 = vpop.f32.mrb[0].mxu0
        %4816 = vmatprep.mubr.f32.mxu0 0.0
        %4817 = vmatmul.mubr.f32.gmra.mrb[0].mxu0 %v4727
        %v4818 = vpop.f32.mrb[0].mxu0
        %v4819 = vadd.f32 0.0, %v4818
        %v4820 = vpop.f32.mrb[0].mxu0
        %4821 = vmatprep.mubr.f32.mxu0 0.0
        %4822 = vmatmul.mubr.f32.gmra.mrb[0].mxu0 %v4730
        %v4823 = vpop.f32.mrb[0].mxu0
        %v4824 = vadd.f32 0.0, %v4823
        %v4825 = vpop.f32.mrb[0].mxu0
        %4826 = vmatprep.mubr.f32.mxu0 0.0
        %4827 = vmatmul.mubr.f32.gmra.mrb[0].mxu0 %v4733
        %v4828 = vpop.f32.mrb[0].mxu0
        %v4829 = vadd.f32 0.0, %v4828
        %v4830 = vpop.f32.mrb[0].mxu0
        %4831 = vmatprep.mubr.f32.mxu0 0.0
        %4832 = vmatmul.mubr.f32.gmra.mrb[0].mxu0 %v4736
        %v4833 = vpop.f32.mrb[0].mxu0
        %v4834 = vadd.f32 0.0, %v4833
        %v4835 = vpop.f32.mrb[0].mxu0
        %4836 = vmatprep.mubr.f32.mxu0 0.0
        %4837 = vmatmul.mubr.f32.gmra.mrb[0].mxu0 %v4739
        %v4838 = vpop.f32.mrb[0].mxu0
        %v4839 = vadd.f32 0.0, %v4838
        %v4840 = vpop.f32.mrb[0].mxu0
        %4841 = vmatprep.mubr.f32.mxu0 0.0
        %4842 = vmatmul.mubr.f32.gmra.mrb[0].mxu0 %v4742
        %v4843 = vpop.f32.mrb[0].mxu0
        %v4844 = vadd.f32 0.0, %v4843
        %v4845 = vpop.f32.mrb[0].mxu0
        %4846 = vmatprep.mubr.f32.mxu0 0.0
        %4847 = vmatmul.mubr.f32.gmra.mrb[0].mxu0 %v4745
        %v4848 = vpop.f32.mrb[0].mxu0
        %v4849 = vadd.f32 0.0, %v4848
        %v4850 = vpop.f32.mrb[0].mxu0
        %4851 = vdwg.mxu0
        %4852 = vset.pattern.permute.xlu0 2
        %4853 = vperm.xlu0 %4852, %v3832
        %v4854 = vpop.permute.xlu0 %4853
        %4856 = vset.pattern.permute.xlu0 2
        %4857 = vperm.xlu0 %4856, %v3837
        %v4858 = vpop.permute.xlu0 %4857
        %4860 = vset.pattern.permute.xlu0 2
        %4861 = vperm.xlu0 %4860, %v3842
        %v4862 = vpop.permute.xlu0 %4861
        %4864 = vset.pattern.permute.xlu0 2
        %4865 = vperm.xlu0 %4864, %v3847
        %v4866 = vpop.permute.xlu0 %4865
        %4868 = vset.pattern.permute.xlu0 2
        %4869 = vperm.xlu0 %4868, %v3852
        %v4870 = vpop.permute.xlu0 %4869
        %4872 = vset.pattern.permute.xlu0 2
        %4873 = vperm.xlu0 %4872, %v3857
        %v4874 = vpop.permute.xlu0 %4873
        %4876 = vset.pattern.permute.xlu0 2
        %4877 = vperm.xlu0 %4876, %v3862
        %v4878 = vpop.permute.xlu0 %4877
        %4880 = vset.pattern.permute.xlu0 2
        %4881 = vperm.xlu0 %4880, %v3867
        %v4882 = vpop.permute.xlu0 %4881
        %v4884 = vlaneseq
        %v4885 = vshrl.u32 %v4884, 7
        %v4886 = vsub.s32 2, %v4885
        %v4887 = vrot.slane %v3941, %v4886
        %v4888 = vadd.f32 %v4854, %v4887
        %v4889 = vadd.f32 %v4858, %v4887
        %v4890 = vadd.f32 %v4862, %v4887
        %v4891 = vadd.f32 %v4866, %v4887
        %v4892 = vadd.f32 %v4870, %v4887
        %v4893 = vadd.f32 %v4874, %v4887
        %v4894 = vadd.f32 %v4878, %v4887
        %v4895 = vadd.f32 %v4882, %v4887
        %vm4896 = vcmp.gt.f32.partialorder %v4888, 0.0
        %vm4897 = vcmp.gt.f32.partialorder %v4889, 0.0
        %vm4898 = vcmp.gt.f32.partialorder %v4890, 0.0
        %vm4899 = vcmp.gt.f32.partialorder %v4891, 0.0
        %vm4900 = vcmp.gt.f32.partialorder %v4892, 0.0
        %vm4901 = vcmp.gt.f32.partialorder %v4893, 0.0
        %vm4902 = vcmp.gt.f32.partialorder %v4894, 0.0
        %vm4903 = vcmp.gt.f32.partialorder %v4895, 0.0
        %v4904 = vmul.f32 %v4888, 0.2
        %v4905 = vmul.f32 %v4889, 0.2
        %v4906 = vmul.f32 %v4890, 0.2
        %v4907 = vmul.f32 %v4891, 0.2
        %v4908 = vmul.f32 %v4892, 0.2
        %v4909 = vmul.f32 %v4893, 0.2
        %v4910 = vmul.f32 %v4894, 0.2
        %v4911 = vmul.f32 %v4895, 0.2
        %v4912 = vsel %vm4896, %v4888, %v4904
        %v4913 = vsel %vm4897, %v4889, %v4905
        %v4914 = vsel %vm4898, %v4890, %v4906
        %v4915 = vsel %vm4899, %v4891, %v4907
        %v4916 = vsel %vm4900, %v4892, %v4908
        %v4917 = vsel %vm4901, %v4893, %v4909
        %v4918 = vsel %vm4902, %v4894, %v4910
        %v4919 = vsel %vm4903, %v4895, %v4911
        %v4920 = vadd.f32 %v4912, %v3595
        %v4921 = vadd.f32 %v4913, %v3596
        %v4922 = vadd.f32 %v4914, %v3597
        %v4923 = vadd.f32 %v4915, %v3598
        %v4924 = vadd.f32 %v4916, %v3599
        %v4925 = vadd.f32 %v4917, %v3600
        %v4926 = vadd.f32 %v4918, %v3601
        %v4927 = vadd.f32 %v4919, %v3602
        %v4928 = vsel %vm3737, %v4920, -inf
        %4929 = vmax.xlane.f32.xlu0 %v4928
        %v4930 = vpop.xlane.xlu0 %4929
        %v4931 = vsel %vm3737, %v4921, -inf
        %4932 = vmax.xlane.f32.xlu0 %v4931
        %v4933 = vpop.xlane.xlu0 %4932
        %v4934 = vsel %vm3737, %v4922, -inf
        %4935 = vmax.xlane.f32.xlu0 %v4934
        %v4936 = vpop.xlane.xlu0 %4935
        %v4937 = vsel %vm3737, %v4923, -inf
        %4938 = vmax.xlane.f32.xlu0 %v4937
        %v4939 = vpop.xlane.xlu0 %4938
        %v4940 = vsel %vm3737, %v4924, -inf
        %4941 = vmax.xlane.f32.xlu0 %v4940
        %v4942 = vpop.xlane.xlu0 %4941
        %v4943 = vsel %vm3737, %v4925, -inf
        %4944 = vmax.xlane.f32.xlu0 %v4943
        %v4945 = vpop.xlane.xlu0 %4944
        %v4946 = vsel %vm3737, %v4926, -inf
        %4947 = vmax.xlane.f32.xlu0 %v4946
        %v4948 = vpop.xlane.xlu0 %4947
        %v4949 = vsel %vm3737, %v4927, -inf
        %4950 = vmax.xlane.f32.xlu0 %v4949
        %v4951 = vpop.xlane.xlu0 %4950
        %v4952 = vsub.f32 %v4920, %v4930
        %v4953 = vsub.f32 %v4921, %v4933
        %v4954 = vsub.f32 %v4922, %v4936
        %v4955 = vsub.f32 %v4923, %v4939
        %v4956 = vsub.f32 %v4924, %v4942
        %v4957 = vsub.f32 %v4925, %v4945
        %v4958 = vsub.f32 %v4926, %v4948
        %v4959 = vsub.f32 %v4927, %v4951
        %v4960 = vmul.f32 %v4952, 1.442695
        %v4961 = vpow.pop %v4960
        %v4962 = vmul.f32 %v4953, 1.442695
        %v4963 = vpow.pop %v4962
        %v4964 = vmul.f32 %v4954, 1.442695
        %v4965 = vpow.pop %v4964
        %v4966 = vmul.f32 %v4955, 1.442695
        %v4967 = vpow.pop %v4966
        %v4968 = vmul.f32 %v4956, 1.442695
        %v4969 = vpow.pop %v4968
        %v4970 = vmul.f32 %v4957, 1.442695
        %v4971 = vpow.pop %v4970
        %v4972 = vmul.f32 %v4958, 1.442695
        %v4973 = vpow.pop %v4972
        %v4974 = vmul.f32 %v4959, 1.442695
        %v4975 = vpow.pop %v4974
        %v4977 = vsel %vm3737, %v4961, 0
        %v4980 = vsel %vm3737, %v4963, 0
        %v4983 = vsel %vm3737, %v4965, 0
        %v4986 = vsel %vm3737, %v4967, 0
        %v4989 = vsel %vm3737, %v4969, 0
        %v4992 = vsel %vm3737, %v4971, 0
        %v4995 = vsel %vm3737, %v4973, 0
        %v4998 = vsel %vm3737, %v4975, 0
        %5000 = vmatprep.subr.mxu0 0.0
        %5001 = vmatpush1.msra.mxu0 1.0
        %5002 = vmatprep.subr.mxu0 0.0
        %5003 = vmatpush1.msra.mxu0 1.0
        %5004 = vmatprep.subr.mxu0 0.0
        %5005 = vmatpush1.msra.mxu0 1.0
        %5006 = vmatprep.subr.mxu0 0.0
        %5007 = vmatpush1.msra.mxu0 1.0
        %5008 = vmatprep.subr.mxu0 0.0
        %5009 = vmatpush1.msra.mxu0 1.0
        %5010 = vmatprep.subr.mxu0 0.0
        %5011 = vmatpush1.msra.mxu0 1.0
        %5012 = vmatprep.subr.mxu0 0.0
        %5013 = vmatpush1.msra.mxu0 1.0
        %5014 = vmatprep.subr.mxu0 0.0
        %5015 = vmatpush1.msra.mxu0 1.0
        %5016 = vmatprep.subr.mxu0 0.0
        %5017 = vmatpush1.msra.mxu0 0.0
        %5018 = vmatprep.subr.mxu0 0.0
        %5019 = vmatpush1.msra.mxu0 0.0
        %5020 = vmatprep.subr.mxu0 0.0
        %5021 = vmatpush1.msra.mxu0 0.0
        %5022 = vmatprep.subr.mxu0 0.0
        %5023 = vmatpush1.msra.mxu0 0.0
        %5024 = vmatprep.subr.mxu0 0.0
        %5025 = vmatpush1.msra.mxu0 0.0
        %5026 = vmatprep.subr.mxu0 0.0
        %5027 = vmatpush1.msra.mxu0 0.0
        %5028 = vmatprep.subr.mxu0 0.0
        %5029 = vmatpush1.msra.mxu0 0.0
        %5030 = vmatprep.subr.mxu0 0.0
        %5031 = vmatpush1.msra.mxu0 0.0
        %5032 = vmatprep.subr.mxu0 0.0
        %5033 = vmatpush1.msra.mxu0 0.0
        %5034 = vmatprep.subr.mxu0 0.0
        %5035 = vmatpush1.msra.mxu0 0.0
        %5036 = vmatprep.subr.mxu0 0.0
        %5037 = vmatpush1.msra.mxu0 0.0
        %5038 = vmatprep.subr.mxu0 0.0
        %5039 = vmatpush1.msra.mxu0 0.0
        %5040 = vmatprep.subr.mxu0 0.0
        %5041 = vmatpush1.msra.mxu0 0.0
        %5042 = vmatprep.subr.mxu0 0.0
        %5043 = vmatpush1.msra.mxu0 0.0
        %5044 = vmatprep.subr.mxu0 0.0
        %5045 = vmatpush1.msra.mxu0 0.0
        %5046 = vmatprep.subr.mxu0 0.0
        %5047 = vmatpush1.msra.mxu0 0.0
        %5048 = vmatprep.subr.mxu0 0.0
        %5049 = vmatpush1.msra.mxu0 0.0
        %5050 = vmatprep.subr.mxu0 0.0
        %5051 = vmatpush1.msra.mxu0 0.0
        %5052 = vmatprep.subr.mxu0 0.0
        %5053 = vmatpush1.msra.mxu0 0.0
        %5054 = vmatprep.subr.mxu0 0.0
        %5055 = vmatpush1.msra.mxu0 0.0
        %5056 = vmatprep.subr.mxu0 0.0
        %5057 = vmatpush1.msra.mxu0 0.0
        %5058 = vmatprep.subr.mxu0 0.0
        %5059 = vmatpush1.msra.mxu0 0.0
        %5060 = vmatprep.subr.mxu0 0.0
        %5061 = vmatpush1.msra.mxu0 0.0
        %5062 = vmatprep.subr.mxu0 0.0
        %5063 = vmatpush1.msra.mxu0 0.0
        %5064 = vmatprep.mubr.f32.mxu0 0.0
        %5065 = vmatmul.mubr.f32.gmra.mrb[0].mxu0 %v4977
        %v5066 = vpop.f32.mrb[0].mxu0
        %v5067 = vadd.f32 0.0, %v5066
        %v5068 = vpop.f32.mrb[0].mxu0
        %5069 = vmatprep.mubr.f32.mxu0 0.0
        %5070 = vmatmul.mubr.f32.gmra.mrb[0].mxu0 %v4980
        %v5071 = vpop.f32.mrb[0].mxu0
        %v5072 = vadd.f32 0.0, %v5071
        %v5073 = vpop.f32.mrb[0].mxu0
        %5074 = vmatprep.mubr.f32.mxu0 0.0
        %5075 = vmatmul.mubr.f32.gmra.mrb[0].mxu0 %v4983
        %v5076 = vpop.f32.mrb[0].mxu0
        %v5077 = vadd.f32 0.0, %v5076
        %v5078 = vpop.f32.mrb[0].mxu0
        %5079 = vmatprep.mubr.f32.mxu0 0.0
        %5080 = vmatmul.mubr.f32.gmra.mrb[0].mxu0 %v4986
        %v5081 = vpop.f32.mrb[0].mxu0
        %v5082 = vadd.f32 0.0, %v5081
        %v5083 = vpop.f32.mrb[0].mxu0
        %5084 = vmatprep.mubr.f32.mxu0 0.0
        %5085 = vmatmul.mubr.f32.gmra.mrb[0].mxu0 %v4989
        %v5086 = vpop.f32.mrb[0].mxu0
        %v5087 = vadd.f32 0.0, %v5086
        %v5088 = vpop.f32.mrb[0].mxu0
        %5089 = vmatprep.mubr.f32.mxu0 0.0
        %5090 = vmatmul.mubr.f32.gmra.mrb[0].mxu0 %v4992
        %v5091 = vpop.f32.mrb[0].mxu0
        %v5092 = vadd.f32 0.0, %v5091
        %v5093 = vpop.f32.mrb[0].mxu0
        %5094 = vmatprep.mubr.f32.mxu0 0.0
        %5095 = vmatmul.mubr.f32.gmra.mrb[0].mxu0 %v4995
        %v5096 = vpop.f32.mrb[0].mxu0
        %v5097 = vadd.f32 0.0, %v5096
        %v5098 = vpop.f32.mrb[0].mxu0
        %5099 = vmatprep.mubr.f32.mxu0 0.0
        %5100 = vmatmul.mubr.f32.gmra.mrb[0].mxu0 %v4998
        %v5101 = vpop.f32.mrb[0].mxu0
        %v5102 = vadd.f32 0.0, %v5101
        %v5103 = vpop.f32.mrb[0].mxu0
        %5104 = vdwg.mxu0
        %v5105 = vrcp.pop %v5067
        %v5106 = vrcp.pop %v5072
        %v5107 = vrcp.pop %v5077
        %v5108 = vrcp.pop %v5082
        %v5109 = vrcp.pop %v5087
        %v5110 = vrcp.pop %v5092
        %v5111 = vrcp.pop %v5097
        %v5112 = vrcp.pop %v5102
        %5114 = vset.pattern.permute.xlu0 0
        %5115 = vperm.xlu0 %5114, %v5105
        %v5116 = vpop.permute.xlu0 %5115
        %5119 = vset.pattern.permute.xlu0 0
        %5120 = vperm.xlu0 %5119, %v5106
        %v5121 = vpop.permute.xlu0 %5120
        %5124 = vset.pattern.permute.xlu0 0
        %5125 = vperm.xlu0 %5124, %v5107
        %v5126 = vpop.permute.xlu0 %5125
        %5129 = vset.pattern.permute.xlu0 0
        %5130 = vperm.xlu0 %5129, %v5108
        %v5131 = vpop.permute.xlu0 %5130
        %5134 = vset.pattern.permute.xlu0 0
        %5135 = vperm.xlu0 %5134, %v5109
        %v5136 = vpop.permute.xlu0 %5135
        %5139 = vset.pattern.permute.xlu0 0
        %5140 = vperm.xlu0 %5139, %v5110
        %v5141 = vpop.permute.xlu0 %5140
        %5144 = vset.pattern.permute.xlu0 0
        %5145 = vperm.xlu0 %5144, %v5111
        %v5146 = vpop.permute.xlu0 %5145
        %5149 = vset.pattern.permute.xlu0 0
        %5150 = vperm.xlu0 %5149, %v5112
        %v5151 = vpop.permute.xlu0 %5150
        %v5153 = vmul.f32 %v4961, %v5116
        %v5154 = vmul.f32 %v4963, %v5121
        %v5155 = vmul.f32 %v4965, %v5126
        %v5156 = vmul.f32 %v4967, %v5131
        %v5157 = vmul.f32 %v4969, %v5136
        %v5158 = vmul.f32 %v4971, %v5141
        %v5159 = vmul.f32 %v4973, %v5146
        %v5160 = vmul.f32 %v4975, %v5151
        %5161 = vrot.lane.b32.xlu0 %v3698, 96
        %v5162 = vpop.permute.xlu0 %5161
        %5163 = vrot.lane.b32.xlu0 %v3703, 96
        %v5164 = vpop.permute.xlu0 %5163
        %5165 = vrot.lane.b32.xlu0 %v3708, 96
        %v5166 = vpop.permute.xlu0 %5165
        %5167 = vrot.lane.b32.xlu0 %v3713, 96
        %v5168 = vpop.permute.xlu0 %5167
        %5169 = vrot.lane.b32.xlu0 %v3718, 96
        %v5170 = vpop.permute.xlu0 %5169
        %5171 = vrot.lane.b32.xlu0 %v3723, 96
        %v5172 = vpop.permute.xlu0 %5171
        %5173 = vrot.lane.b32.xlu0 %v3728, 96
        %v5174 = vpop.permute.xlu0 %5173
        %5175 = vrot.lane.b32.xlu0 %v3733, 96
        %v5176 = vpop.permute.xlu0 %5175
        %v5186 = vsel %vm3737, %v5153, 0
        %v5189 = vsel %vm3737, %v5154, 0
        %v5192 = vsel %vm3737, %v5155, 0
        %v5195 = vsel %vm3737, %v5156, 0
        %v5198 = vsel %vm3737, %v5157, 0
        %v5201 = vsel %vm3737, %v5158, 0
        %v5204 = vsel %vm3737, %v5159, 0
        %v5207 = vsel %vm3737, %v5160, 0
        %5209 = vmatprep.subr.mxu0 0.0
        %5210 = vmatpush1.msra.mxu0 %v5162
        %5211 = vmatprep.subr.mxu0 0.0
        %5212 = vmatpush1.msra.mxu0 %v5164
        %5213 = vmatprep.subr.mxu0 0.0
        %5214 = vmatpush1.msra.mxu0 %v5166
        %5215 = vmatprep.subr.mxu0 0.0
        %5216 = vmatpush1.msra.mxu0 %v5168
        %5217 = vmatprep.subr.mxu0 0.0
        %5218 = vmatpush1.msra.mxu0 %v5170
        %5219 = vmatprep.subr.mxu0 0.0
        %5220 = vmatpush1.msra.mxu0 %v5172
        %5221 = vmatprep.subr.mxu0 0.0
        %5222 = vmatpush1.msra.mxu0 %v5174
        %5223 = vmatprep.subr.mxu0 0.0
        %5224 = vmatpush1.msra.mxu0 %v5176
        %5225 = vmatprep.subr.mxu0 0.0
        %5226 = vmatpush1.msra.mxu0 0.0
        %5227 = vmatprep.subr.mxu0 0.0
        %5228 = vmatpush1.msra.mxu0 0.0
        %5229 = vmatprep.subr.mxu0 0.0
        %5230 = vmatpush1.msra.mxu0 0.0
        %5231 = vmatprep.subr.mxu0 0.0
        %5232 = vmatpush1.msra.mxu0 0.0
        %5233 = vmatprep.subr.mxu0 0.0
        %5234 = vmatpush1.msra.mxu0 0.0
        %5235 = vmatprep.subr.mxu0 0.0
        %5236 = vmatpush1.msra.mxu0 0.0
        %5237 = vmatprep.subr.mxu0 0.0
        %5238 = vmatpush1.msra.mxu0 0.0
        %5239 = vmatprep.subr.mxu0 0.0
        %5240 = vmatpush1.msra.mxu0 0.0
        %5241 = vmatprep.subr.mxu0 0.0
        %5242 = vmatpush1.msra.mxu0 0.0
        %5243 = vmatprep.subr.mxu0 0.0
        %5244 = vmatpush1.msra.mxu0 0.0
        %5245 = vmatprep.subr.mxu0 0.0
        %5246 = vmatpush1.msra.mxu0 0.0
        %5247 = vmatprep.subr.mxu0 0.0
        %5248 = vmatpush1.msra.mxu0 0.0
        %5249 = vmatprep.subr.mxu0 0.0
        %5250 = vmatpush1.msra.mxu0 0.0
        %5251 = vmatprep.subr.mxu0 0.0
        %5252 = vmatpush1.msra.mxu0 0.0
        %5253 = vmatprep.subr.mxu0 0.0
        %5254 = vmatpush1.msra.mxu0 0.0
        %5255 = vmatprep.subr.mxu0 0.0
        %5256 = vmatpush1.msra.mxu0 0.0
        %5257 = vmatprep.subr.mxu0 0.0
        %5258 = vmatpush1.msra.mxu0 0.0
        %5259 = vmatprep.subr.mxu0 0.0
        %5260 = vmatpush1.msra.mxu0 0.0
        %5261 = vmatprep.subr.mxu0 0.0
        %5262 = vmatpush1.msra.mxu0 0.0
        %5263 = vmatprep.subr.mxu0 0.0
        %5264 = vmatpush1.msra.mxu0 0.0
        %5265 = vmatprep.subr.mxu0 0.0
        %5266 = vmatpush1.msra.mxu0 0.0
        %5267 = vmatprep.subr.mxu0 0.0
        %5268 = vmatpush1.msra.mxu0 0.0
        %5269 = vmatprep.subr.mxu0 0.0
        %5270 = vmatpush1.msra.mxu0 0.0
        %5271 = vmatprep.subr.mxu0 0.0
        %5272 = vmatpush1.msra.mxu0 0.0
        %5273 = vmatprep.mubr.f32.mxu0 0.0
        %5274 = vmatmul.mubr.f32.gmra.mrb[0].mxu0 %v5186
        %v5275 = vpop.f32.mrb[0].mxu0
        %v5276 = vadd.f32 0.0, %v5275
        %v5277 = vpop.f32.mrb[0].mxu0
        %5278 = vmatprep.mubr.f32.mxu0 0.0
        %5279 = vmatmul.mubr.f32.gmra.mrb[0].mxu0 %v5189
        %v5280 = vpop.f32.mrb[0].mxu0
        %v5281 = vadd.f32 0.0, %v5280
        %v5282 = vpop.f32.mrb[0].mxu0
        %5283 = vmatprep.mubr.f32.mxu0 0.0
        %5284 = vmatmul.mubr.f32.gmra.mrb[0].mxu0 %v5192
        %v5285 = vpop.f32.mrb[0].mxu0
        %v5286 = vadd.f32 0.0, %v5285
        %v5287 = vpop.f32.mrb[0].mxu0
        %5288 = vmatprep.mubr.f32.mxu0 0.0
        %5289 = vmatmul.mubr.f32.gmra.mrb[0].mxu0 %v5195
        %v5290 = vpop.f32.mrb[0].mxu0
        %v5291 = vadd.f32 0.0, %v5290
        %v5292 = vpop.f32.mrb[0].mxu0
        %5293 = vmatprep.mubr.f32.mxu0 0.0
        %5294 = vmatmul.mubr.f32.gmra.mrb[0].mxu0 %v5198
        %v5295 = vpop.f32.mrb[0].mxu0
        %v5296 = vadd.f32 0.0, %v5295
        %v5297 = vpop.f32.mrb[0].mxu0
        %5298 = vmatprep.mubr.f32.mxu0 0.0
        %5299 = vmatmul.mubr.f32.gmra.mrb[0].mxu0 %v5201
        %v5300 = vpop.f32.mrb[0].mxu0
        %v5301 = vadd.f32 0.0, %v5300
        %v5302 = vpop.f32.mrb[0].mxu0
        %5303 = vmatprep.mubr.f32.mxu0 0.0
        %5304 = vmatmul.mubr.f32.gmra.mrb[0].mxu0 %v5204
        %v5305 = vpop.f32.mrb[0].mxu0
        %v5306 = vadd.f32 0.0, %v5305
        %v5307 = vpop.f32.mrb[0].mxu0
        %5308 = vmatprep.mubr.f32.mxu0 0.0
        %5309 = vmatmul.mubr.f32.gmra.mrb[0].mxu0 %v5207
        %v5310 = vpop.f32.mrb[0].mxu0
        %v5311 = vadd.f32 0.0, %v5310
        %v5312 = vpop.f32.mrb[0].mxu0
        %5313 = vdwg.mxu0
        %5314 = vset.pattern.permute.xlu0 3
        %5315 = vperm.xlu0 %5314, %v3832
        %v5316 = vpop.permute.xlu0 %5315
        %5318 = vset.pattern.permute.xlu0 3
        %5319 = vperm.xlu0 %5318, %v3837
        %v5320 = vpop.permute.xlu0 %5319
        %5322 = vset.pattern.permute.xlu0 3
        %5323 = vperm.xlu0 %5322, %v3842
        %v5324 = vpop.permute.xlu0 %5323
        %5326 = vset.pattern.permute.xlu0 3
        %5327 = vperm.xlu0 %5326, %v3847
        %v5328 = vpop.permute.xlu0 %5327
        %5330 = vset.pattern.permute.xlu0 3
        %5331 = vperm.xlu0 %5330, %v3852
        %v5332 = vpop.permute.xlu0 %5331
        %5334 = vset.pattern.permute.xlu0 3
        %5335 = vperm.xlu0 %5334, %v3857
        %v5336 = vpop.permute.xlu0 %5335
        %5338 = vset.pattern.permute.xlu0 3
        %5339 = vperm.xlu0 %5338, %v3862
        %v5340 = vpop.permute.xlu0 %5339
        %5342 = vset.pattern.permute.xlu0 3
        %5343 = vperm.xlu0 %5342, %v3867
        %v5344 = vpop.permute.xlu0 %5343
        %v5346 = vlaneseq
        %v5347 = vshrl.u32 %v5346, 7
        %v5348 = vsub.s32 3, %v5347
        %v5349 = vrot.slane %v3941, %v5348
        %v5350 = vadd.f32 %v5316, %v5349
        %v5351 = vadd.f32 %v5320, %v5349
        %v5352 = vadd.f32 %v5324, %v5349
        %v5353 = vadd.f32 %v5328, %v5349
        %v5354 = vadd.f32 %v5332, %v5349
        %v5355 = vadd.f32 %v5336, %v5349
        %v5356 = vadd.f32 %v5340, %v5349
        %v5357 = vadd.f32 %v5344, %v5349
        %vm5358 = vcmp.gt.f32.partialorder %v5350, 0.0
        %vm5359 = vcmp.gt.f32.partialorder %v5351, 0.0
        %vm5360 = vcmp.gt.f32.partialorder %v5352, 0.0
        %vm5361 = vcmp.gt.f32.partialorder %v5353, 0.0
        %vm5362 = vcmp.gt.f32.partialorder %v5354, 0.0
        %vm5363 = vcmp.gt.f32.partialorder %v5355, 0.0
        %vm5364 = vcmp.gt.f32.partialorder %v5356, 0.0
        %vm5365 = vcmp.gt.f32.partialorder %v5357, 0.0
        %v5366 = vmul.f32 %v5350, 0.2
        %v5367 = vmul.f32 %v5351, 0.2
        %v5368 = vmul.f32 %v5352, 0.2
        %v5369 = vmul.f32 %v5353, 0.2
        %v5370 = vmul.f32 %v5354, 0.2
        %v5371 = vmul.f32 %v5355, 0.2
        %v5372 = vmul.f32 %v5356, 0.2
        %v5373 = vmul.f32 %v5357, 0.2
        %v5374 = vsel %vm5358, %v5350, %v5366
        %v5375 = vsel %vm5359, %v5351, %v5367
        %v5376 = vsel %vm5360, %v5352, %v5368
        %v5377 = vsel %vm5361, %v5353, %v5369
        %v5378 = vsel %vm5362, %v5354, %v5370
        %v5379 = vsel %vm5363, %v5355, %v5371
        %v5380 = vsel %vm5364, %v5356, %v5372
        %v5381 = vsel %vm5365, %v5357, %v5373
        %v5382 = vadd.f32 %v5374, %v3595
        %v5383 = vadd.f32 %v5375, %v3596
        %v5384 = vadd.f32 %v5376, %v3597
        %v5385 = vadd.f32 %v5377, %v3598
        %v5386 = vadd.f32 %v5378, %v3599
        %v5387 = vadd.f32 %v5379, %v3600
        %v5388 = vadd.f32 %v5380, %v3601
        %v5389 = vadd.f32 %v5381, %v3602
        %v5390 = vsel %vm3737, %v5382, -inf
        %5391 = vmax.xlane.f32.xlu0 %v5390
        %v5392 = vpop.xlane.xlu0 %5391
        %v5393 = vsel %vm3737, %v5383, -inf
        %5394 = vmax.xlane.f32.xlu0 %v5393
        %v5395 = vpop.xlane.xlu0 %5394
        %v5396 = vsel %vm3737, %v5384, -inf
        %5397 = vmax.xlane.f32.xlu0 %v5396
        %v5398 = vpop.xlane.xlu0 %5397
        %v5399 = vsel %vm3737, %v5385, -inf
        %5400 = vmax.xlane.f32.xlu0 %v5399
        %v5401 = vpop.xlane.xlu0 %5400
        %v5402 = vsel %vm3737, %v5386, -inf
        %5403 = vmax.xlane.f32.xlu0 %v5402
        %v5404 = vpop.xlane.xlu0 %5403
        %v5405 = vsel %vm3737, %v5387, -inf
        %5406 = vmax.xlane.f32.xlu0 %v5405
        %v5407 = vpop.xlane.xlu0 %5406
        %v5408 = vsel %vm3737, %v5388, -inf
        %5409 = vmax.xlane.f32.xlu0 %v5408
        %v5410 = vpop.xlane.xlu0 %5409
        %v5411 = vsel %vm3737, %v5389, -inf
        %5412 = vmax.xlane.f32.xlu0 %v5411
        %v5413 = vpop.xlane.xlu0 %5412
        %v5414 = vsub.f32 %v5382, %v5392
        %v5415 = vsub.f32 %v5383, %v5395
        %v5416 = vsub.f32 %v5384, %v5398
        %v5417 = vsub.f32 %v5385, %v5401
        %v5418 = vsub.f32 %v5386, %v5404
        %v5419 = vsub.f32 %v5387, %v5407
        %v5420 = vsub.f32 %v5388, %v5410
        %v5421 = vsub.f32 %v5389, %v5413
        %v5422 = vmul.f32 %v5414, 1.442695
        %v5423 = vpow.pop %v5422
        %v5424 = vmul.f32 %v5415, 1.442695
        %v5425 = vpow.pop %v5424
        %v5426 = vmul.f32 %v5416, 1.442695
        %v5427 = vpow.pop %v5426
        %v5428 = vmul.f32 %v5417, 1.442695
        %v5429 = vpow.pop %v5428
        %v5430 = vmul.f32 %v5418, 1.442695
        %v5431 = vpow.pop %v5430
        %v5432 = vmul.f32 %v5419, 1.442695
        %v5433 = vpow.pop %v5432
        %v5434 = vmul.f32 %v5420, 1.442695
        %v5435 = vpow.pop %v5434
        %v5436 = vmul.f32 %v5421, 1.442695
        %v5437 = vpow.pop %v5436
        %v5439 = vsel %vm3737, %v5423, 0
        %v5442 = vsel %vm3737, %v5425, 0
        %v5445 = vsel %vm3737, %v5427, 0
        %v5448 = vsel %vm3737, %v5429, 0
        %v5451 = vsel %vm3737, %v5431, 0
        %v5454 = vsel %vm3737, %v5433, 0
        %v5457 = vsel %vm3737, %v5435, 0
        %v5460 = vsel %vm3737, %v5437, 0
        %5462 = vmatprep.subr.mxu0 0.0
        %5463 = vmatpush1.msra.mxu0 1.0
        %5464 = vmatprep.subr.mxu0 0.0
        %5465 = vmatpush1.msra.mxu0 1.0
        %5466 = vmatprep.subr.mxu0 0.0
        %5467 = vmatpush1.msra.mxu0 1.0
        %5468 = vmatprep.subr.mxu0 0.0
        %5469 = vmatpush1.msra.mxu0 1.0
        %5470 = vmatprep.subr.mxu0 0.0
        %5471 = vmatpush1.msra.mxu0 1.0
        %5472 = vmatprep.subr.mxu0 0.0
        %5473 = vmatpush1.msra.mxu0 1.0
        %5474 = vmatprep.subr.mxu0 0.0
        %5475 = vmatpush1.msra.mxu0 1.0
        %5476 = vmatprep.subr.mxu0 0.0
        %5477 = vmatpush1.msra.mxu0 1.0
        %5478 = vmatprep.subr.mxu0 0.0
        %5479 = vmatpush1.msra.mxu0 0.0
        %5480 = vmatprep.subr.mxu0 0.0
        %5481 = vmatpush1.msra.mxu0 0.0
        %5482 = vmatprep.subr.mxu0 0.0
        %5483 = vmatpush1.msra.mxu0 0.0
        %5484 = vmatprep.subr.mxu0 0.0
        %5485 = vmatpush1.msra.mxu0 0.0
        %5486 = vmatprep.subr.mxu0 0.0
        %5487 = vmatpush1.msra.mxu0 0.0
        %5488 = vmatprep.subr.mxu0 0.0
        %5489 = vmatpush1.msra.mxu0 0.0
        %5490 = vmatprep.subr.mxu0 0.0
        %5491 = vmatpush1.msra.mxu0 0.0
        %5492 = vmatprep.subr.mxu0 0.0
        %5493 = vmatpush1.msra.mxu0 0.0
        %5494 = vmatprep.subr.mxu0 0.0
        %5495 = vmatpush1.msra.mxu0 0.0
        %5496 = vmatprep.subr.mxu0 0.0
        %5497 = vmatpush1.msra.mxu0 0.0
        %5498 = vmatprep.subr.mxu0 0.0
        %5499 = vmatpush1.msra.mxu0 0.0
        %5500 = vmatprep.subr.mxu0 0.0
        %5501 = vmatpush1.msra.mxu0 0.0
        %5502 = vmatprep.subr.mxu0 0.0
        %5503 = vmatpush1.msra.mxu0 0.0
        %5504 = vmatprep.subr.mxu0 0.0
        %5505 = vmatpush1.msra.mxu0 0.0
        %5506 = vmatprep.subr.mxu0 0.0
        %5507 = vmatpush1.msra.mxu0 0.0
        %5508 = vmatprep.subr.mxu0 0.0
        %5509 = vmatpush1.msra.mxu0 0.0
        %5510 = vmatprep.subr.mxu0 0.0
        %5511 = vmatpush1.msra.mxu0 0.0
        %5512 = vmatprep.subr.mxu0 0.0
        %5513 = vmatpush1.msra.mxu0 0.0
        %5514 = vmatprep.subr.mxu0 0.0
        %5515 = vmatpush1.msra.mxu0 0.0
        %5516 = vmatprep.subr.mxu0 0.0
        %5517 = vmatpush1.msra.mxu0 0.0
        %5518 = vmatprep.subr.mxu0 0.0
        %5519 = vmatpush1.msra.mxu0 0.0
        %5520 = vmatprep.subr.mxu0 0.0
        %5521 = vmatpush1.msra.mxu0 0.0
        %5522 = vmatprep.subr.mxu0 0.0
        %5523 = vmatpush1.msra.mxu0 0.0
        %5524 = vmatprep.subr.mxu0 0.0
        %5525 = vmatpush1.msra.mxu0 0.0
        %5526 = vmatprep.mubr.f32.mxu0 0.0
        %5527 = vmatmul.mubr.f32.gmra.mrb[0].mxu0 %v5439
        %v5528 = vpop.f32.mrb[0].mxu0
        %v5529 = vadd.f32 0.0, %v5528
        %v5530 = vpop.f32.mrb[0].mxu0
        %5531 = vmatprep.mubr.f32.mxu0 0.0
        %5532 = vmatmul.mubr.f32.gmra.mrb[0].mxu0 %v5442
        %v5533 = vpop.f32.mrb[0].mxu0
        %v5534 = vadd.f32 0.0, %v5533
        %v5535 = vpop.f32.mrb[0].mxu0
        %5536 = vmatprep.mubr.f32.mxu0 0.0
        %5537 = vmatmul.mubr.f32.gmra.mrb[0].mxu0 %v5445
        %v5538 = vpop.f32.mrb[0].mxu0
        %v5539 = vadd.f32 0.0, %v5538
        %v5540 = vpop.f32.mrb[0].mxu0
        %5541 = vmatprep.mubr.f32.mxu0 0.0
        %5542 = vmatmul.mubr.f32.gmra.mrb[0].mxu0 %v5448
        %v5543 = vpop.f32.mrb[0].mxu0
        %v5544 = vadd.f32 0.0, %v5543
        %v5545 = vpop.f32.mrb[0].mxu0
        %5546 = vmatprep.mubr.f32.mxu0 0.0
        %5547 = vmatmul.mubr.f32.gmra.mrb[0].mxu0 %v5451
        %v5548 = vpop.f32.mrb[0].mxu0
        %v5549 = vadd.f32 0.0, %v5548
        %v5550 = vpop.f32.mrb[0].mxu0
        %5551 = vmatprep.mubr.f32.mxu0 0.0
        %5552 = vmatmul.mubr.f32.gmra.mrb[0].mxu0 %v5454
        %v5553 = vpop.f32.mrb[0].mxu0
        %v5554 = vadd.f32 0.0, %v5553
        %v5555 = vpop.f32.mrb[0].mxu0
        %5556 = vmatprep.mubr.f32.mxu0 0.0
        %5557 = vmatmul.mubr.f32.gmra.mrb[0].mxu0 %v5457
        %v5558 = vpop.f32.mrb[0].mxu0
        %v5559 = vadd.f32 0.0, %v5558
        %v5560 = vpop.f32.mrb[0].mxu0
        %5561 = vmatprep.mubr.f32.mxu0 0.0
        %5562 = vmatmul.mubr.f32.gmra.mrb[0].mxu0 %v5460
        %v5563 = vpop.f32.mrb[0].mxu0
        %v5564 = vadd.f32 0.0, %v5563
        %v5565 = vpop.f32.mrb[0].mxu0
        %5566 = vdwg.mxu0
        %v5567 = vrcp.pop %v5529
        %v5568 = vrcp.pop %v5534
        %v5569 = vrcp.pop %v5539
        %v5570 = vrcp.pop %v5544
        %v5571 = vrcp.pop %v5549
        %v5572 = vrcp.pop %v5554
        %v5573 = vrcp.pop %v5559
        %v5574 = vrcp.pop %v5564
        %5576 = vset.pattern.permute.xlu0 0
        %5577 = vperm.xlu0 %5576, %v5567
        %v5578 = vpop.permute.xlu0 %5577
        %5581 = vset.pattern.permute.xlu0 0
        %5582 = vperm.xlu0 %5581, %v5568
        %v5583 = vpop.permute.xlu0 %5582
        %5586 = vset.pattern.permute.xlu0 0
        %5587 = vperm.xlu0 %5586, %v5569
        %v5588 = vpop.permute.xlu0 %5587
        %5591 = vset.pattern.permute.xlu0 0
        %5592 = vperm.xlu0 %5591, %v5570
        %v5593 = vpop.permute.xlu0 %5592
        %5596 = vset.pattern.permute.xlu0 0
        %5597 = vperm.xlu0 %5596, %v5571
        %v5598 = vpop.permute.xlu0 %5597
        %5601 = vset.pattern.permute.xlu0 0
        %5602 = vperm.xlu0 %5601, %v5572
        %v5603 = vpop.permute.xlu0 %5602
        %5606 = vset.pattern.permute.xlu0 0
        %5607 = vperm.xlu0 %5606, %v5573
        %v5608 = vpop.permute.xlu0 %5607
        %5611 = vset.pattern.permute.xlu0 0
        %5612 = vperm.xlu0 %5611, %v5574
        %v5613 = vpop.permute.xlu0 %5612
        %v5615 = vmul.f32 %v5423, %v5578
        %v5616 = vmul.f32 %v5425, %v5583
        %v5617 = vmul.f32 %v5427, %v5588
        %v5618 = vmul.f32 %v5429, %v5593
        %v5619 = vmul.f32 %v5431, %v5598
        %v5620 = vmul.f32 %v5433, %v5603
        %v5621 = vmul.f32 %v5435, %v5608
        %v5622 = vmul.f32 %v5437, %v5613
        %5623 = vrot.lane.b32.xlu0 %v3698, 80
        %v5624 = vpop.permute.xlu0 %5623
        %5625 = vrot.lane.b32.xlu0 %v3703, 80
        %v5626 = vpop.permute.xlu0 %5625
        %5627 = vrot.lane.b32.xlu0 %v3708, 80
        %v5628 = vpop.permute.xlu0 %5627
        %5629 = vrot.lane.b32.xlu0 %v3713, 80
        %v5630 = vpop.permute.xlu0 %5629
        %5631 = vrot.lane.b32.xlu0 %v3718, 80
        %v5632 = vpop.permute.xlu0 %5631
        %5633 = vrot.lane.b32.xlu0 %v3723, 80
        %v5634 = vpop.permute.xlu0 %5633
        %5635 = vrot.lane.b32.xlu0 %v3728, 80
        %v5636 = vpop.permute.xlu0 %5635
        %5637 = vrot.lane.b32.xlu0 %v3733, 80
        %v5638 = vpop.permute.xlu0 %5637
        %v5648 = vsel %vm3737, %v5615, 0
        %v5651 = vsel %vm3737, %v5616, 0
        %v5654 = vsel %vm3737, %v5617, 0
        %v5657 = vsel %vm3737, %v5618, 0
        %v5660 = vsel %vm3737, %v5619, 0
        %v5663 = vsel %vm3737, %v5620, 0
        %v5666 = vsel %vm3737, %v5621, 0
        %v5669 = vsel %vm3737, %v5622, 0
        %5671 = vmatprep.subr.mxu0 0.0
        %5672 = vmatpush1.msra.mxu0 %v5624
        %5673 = vmatprep.subr.mxu0 0.0
        %5674 = vmatpush1.msra.mxu0 %v5626
        %5675 = vmatprep.subr.mxu0 0.0
        %5676 = vmatpush1.msra.mxu0 %v5628
        %5677 = vmatprep.subr.mxu0 0.0
        %5678 = vmatpush1.msra.mxu0 %v5630
        %5679 = vmatprep.subr.mxu0 0.0
        %5680 = vmatpush1.msra.mxu0 %v5632
        %5681 = vmatprep.subr.mxu0 0.0
        %5682 = vmatpush1.msra.mxu0 %v5634
        %5683 = vmatprep.subr.mxu0 0.0
        %5684 = vmatpush1.msra.mxu0 %v5636
        %5685 = vmatprep.subr.mxu0 0.0
        %5686 = vmatpush1.msra.mxu0 %v5638
        %5687 = vmatprep.subr.mxu0 0.0
        %5688 = vmatpush1.msra.mxu0 0.0
        %5689 = vmatprep.subr.mxu0 0.0
        %5690 = vmatpush1.msra.mxu0 0.0
        %5691 = vmatprep.subr.mxu0 0.0
        %5692 = vmatpush1.msra.mxu0 0.0
        %5693 = vmatprep.subr.mxu0 0.0
        %5694 = vmatpush1.msra.mxu0 0.0
        %5695 = vmatprep.subr.mxu0 0.0
        %5696 = vmatpush1.msra.mxu0 0.0
        %5697 = vmatprep.subr.mxu0 0.0
        %5698 = vmatpush1.msra.mxu0 0.0
        %5699 = vmatprep.subr.mxu0 0.0
        %5700 = vmatpush1.msra.mxu0 0.0
        %5701 = vmatprep.subr.mxu0 0.0
        %5702 = vmatpush1.msra.mxu0 0.0
        %5703 = vmatprep.subr.mxu0 0.0
        %5704 = vmatpush1.msra.mxu0 0.0
        %5705 = vmatprep.subr.mxu0 0.0
        %5706 = vmatpush1.msra.mxu0 0.0
        %5707 = vmatprep.subr.mxu0 0.0
        %5708 = vmatpush1.msra.mxu0 0.0
        %5709 = vmatprep.subr.mxu0 0.0
        %5710 = vmatpush1.msra.mxu0 0.0
        %5711 = vmatprep.subr.mxu0 0.0
        %5712 = vmatpush1.msra.mxu0 0.0
        %5713 = vmatprep.subr.mxu0 0.0
        %5714 = vmatpush1.msra.mxu0 0.0
        %5715 = vmatprep.subr.mxu0 0.0
        %5716 = vmatpush1.msra.mxu0 0.0
        %5717 = vmatprep.subr.mxu0 0.0
        %5718 = vmatpush1.msra.mxu0 0.0
        %5719 = vmatprep.subr.mxu0 0.0
        %5720 = vmatpush1.msra.mxu0 0.0
        %5721 = vmatprep.subr.mxu0 0.0
        %5722 = vmatpush1.msra.mxu0 0.0
        %5723 = vmatprep.subr.mxu0 0.0
        %5724 = vmatpush1.msra.mxu0 0.0
        %5725 = vmatprep.subr.mxu0 0.0
        %5726 = vmatpush1.msra.mxu0 0.0
        %5727 = vmatprep.subr.mxu0 0.0
        %5728 = vmatpush1.msra.mxu0 0.0
        %5729 = vmatprep.subr.mxu0 0.0
        %5730 = vmatpush1.msra.mxu0 0.0
        %5731 = vmatprep.subr.mxu0 0.0
        %5732 = vmatpush1.msra.mxu0 0.0
        %5733 = vmatprep.subr.mxu0 0.0
        %5734 = vmatpush1.msra.mxu0 0.0
        %5735 = vmatprep.mubr.f32.mxu0 0.0
        %5736 = vmatmul.mubr.f32.gmra.mrb[0].mxu0 %v5648
        %v5737 = vpop.f32.mrb[0].mxu0
        %v5738 = vadd.f32 0.0, %v5737
        %v5739 = vpop.f32.mrb[0].mxu0
        %5740 = vmatprep.mubr.f32.mxu0 0.0
        %5741 = vmatmul.mubr.f32.gmra.mrb[0].mxu0 %v5651
        %v5742 = vpop.f32.mrb[0].mxu0
        %v5743 = vadd.f32 0.0, %v5742
        %v5744 = vpop.f32.mrb[0].mxu0
        %5745 = vmatprep.mubr.f32.mxu0 0.0
        %5746 = vmatmul.mubr.f32.gmra.mrb[0].mxu0 %v5654
        %v5747 = vpop.f32.mrb[0].mxu0
        %v5748 = vadd.f32 0.0, %v5747
        %v5749 = vpop.f32.mrb[0].mxu0
        %5750 = vmatprep.mubr.f32.mxu0 0.0
        %5751 = vmatmul.mubr.f32.gmra.mrb[0].mxu0 %v5657
        %v5752 = vpop.f32.mrb[0].mxu0
        %v5753 = vadd.f32 0.0, %v5752
        %v5754 = vpop.f32.mrb[0].mxu0
        %5755 = vmatprep.mubr.f32.mxu0 0.0
        %5756 = vmatmul.mubr.f32.gmra.mrb[0].mxu0 %v5660
        %v5757 = vpop.f32.mrb[0].mxu0
        %v5758 = vadd.f32 0.0, %v5757
        %v5759 = vpop.f32.mrb[0].mxu0
        %5760 = vmatprep.mubr.f32.mxu0 0.0
        %5761 = vmatmul.mubr.f32.gmra.mrb[0].mxu0 %v5663
        %v5762 = vpop.f32.mrb[0].mxu0
        %v5763 = vadd.f32 0.0, %v5762
        %v5764 = vpop.f32.mrb[0].mxu0
        %5765 = vmatprep.mubr.f32.mxu0 0.0
        %5766 = vmatmul.mubr.f32.gmra.mrb[0].mxu0 %v5666
        %v5767 = vpop.f32.mrb[0].mxu0
        %v5768 = vadd.f32 0.0, %v5767
        %v5769 = vpop.f32.mrb[0].mxu0
        %5770 = vmatprep.mubr.f32.mxu0 0.0
        %5771 = vmatmul.mubr.f32.gmra.mrb[0].mxu0 %v5669
        %v5772 = vpop.f32.mrb[0].mxu0
        %v5773 = vadd.f32 0.0, %v5772
        %v5774 = vpop.f32.mrb[0].mxu0
        %5775 = vdwg.mxu0
        %5784 = vrot.lane.b32.xlu0 %v4814, 16
        %v5785 = vpop.permute.xlu0 %5784
        %5786 = vrot.lane.b32.xlu0 %v4819, 16
        %v5787 = vpop.permute.xlu0 %5786
        %5788 = vrot.lane.b32.xlu0 %v4824, 16
        %v5789 = vpop.permute.xlu0 %5788
        %5790 = vrot.lane.b32.xlu0 %v4829, 16
        %v5791 = vpop.permute.xlu0 %5790
        %5792 = vrot.lane.b32.xlu0 %v4834, 16
        %v5793 = vpop.permute.xlu0 %5792
        %5794 = vrot.lane.b32.xlu0 %v4839, 16
        %v5795 = vpop.permute.xlu0 %5794
        %5796 = vrot.lane.b32.xlu0 %v4844, 16
        %v5797 = vpop.permute.xlu0 %5796
        %5798 = vrot.lane.b32.xlu0 %v4849, 16
        %v5799 = vpop.permute.xlu0 %5798
        %5816 = vrot.lane.b32.xlu0 %v5276, 32
        %v5817 = vpop.permute.xlu0 %5816
        %5818 = vrot.lane.b32.xlu0 %v5281, 32
        %v5819 = vpop.permute.xlu0 %5818
        %5820 = vrot.lane.b32.xlu0 %v5286, 32
        %v5821 = vpop.permute.xlu0 %5820
        %5822 = vrot.lane.b32.xlu0 %v5291, 32
        %v5823 = vpop.permute.xlu0 %5822
        %5824 = vrot.lane.b32.xlu0 %v5296, 32
        %v5825 = vpop.permute.xlu0 %5824
        %5826 = vrot.lane.b32.xlu0 %v5301, 32
        %v5827 = vpop.permute.xlu0 %5826
        %5828 = vrot.lane.b32.xlu0 %v5306, 32
        %v5829 = vpop.permute.xlu0 %5828
        %5830 = vrot.lane.b32.xlu0 %v5311, 32
        %v5831 = vpop.permute.xlu0 %5830
        %5848 = vrot.lane.b32.xlu0 %v5738, 48
        %v5849 = vpop.permute.xlu0 %5848
        %5850 = vrot.lane.b32.xlu0 %v5743, 48
        %v5851 = vpop.permute.xlu0 %5850
        %5852 = vrot.lane.b32.xlu0 %v5748, 48
        %v5853 = vpop.permute.xlu0 %5852
        %5854 = vrot.lane.b32.xlu0 %v5753, 48
        %v5855 = vpop.permute.xlu0 %5854
        %5856 = vrot.lane.b32.xlu0 %v5758, 48
        %v5857 = vpop.permute.xlu0 %5856
        %5858 = vrot.lane.b32.xlu0 %v5763, 48
        %v5859 = vpop.permute.xlu0 %5858
        %5860 = vrot.lane.b32.xlu0 %v5768, 48
        %v5861 = vpop.permute.xlu0 %5860
        %5862 = vrot.lane.b32.xlu0 %v5773, 48
        %v5863 = vpop.permute.xlu0 %5862
        %vm5872 = vcmask 130048
        %v5873 = vsel %vm5872, %v4352, %v5785
        %v5874 = vsel %vm5872, %v4357, %v5787
        %v5875 = vsel %vm5872, %v4362, %v5789
        %v5876 = vsel %vm5872, %v4367, %v5791
        %v5877 = vsel %vm5872, %v4372, %v5793
        %v5878 = vsel %vm5872, %v4377, %v5795
        %v5879 = vsel %vm5872, %v4382, %v5797
        %v5880 = vsel %vm5872, %v4387, %v5799
        %v5881 = vsel %vm3459, %v5873, %v5817
        %v5882 = vsel %vm3459, %v5874, %v5819
        %v5883 = vsel %vm3459, %v5875, %v5821
        %v5884 = vsel %vm3459, %v5876, %v5823
        %v5885 = vsel %vm3459, %v5877, %v5825
        %v5886 = vsel %vm3459, %v5878, %v5827
        %v5887 = vsel %vm3459, %v5879, %v5829
        %v5888 = vsel %vm3459, %v5880, %v5831
        %v5889 = vsel %vm769, %v5881, %v5849
        %v5890 = vsel %vm769, %v5882, %v5851
        %v5891 = vsel %vm769, %v5883, %v5853
        %v5892 = vsel %vm769, %v5884, %v5855
        %v5893 = vsel %vm769, %v5885, %v5857
        %v5894 = vsel %vm769, %v5886, %v5859
        %v5895 = vsel %vm769, %v5887, %v5861
        %v5896 = vsel %vm769, %v5888, %v5863
        %vm5897 = vcmp.gt.f32.partialorder %v5889, 0.0
        %vm5898 = vcmp.gt.f32.partialorder %v5890, 0.0
        %vm5899 = vcmp.gt.f32.partialorder %v5891, 0.0
        %vm5900 = vcmp.gt.f32.partialorder %v5892, 0.0
        %vm5901 = vcmp.gt.f32.partialorder %v5893, 0.0
        %vm5902 = vcmp.gt.f32.partialorder %v5894, 0.0
        %vm5903 = vcmp.gt.f32.partialorder %v5895, 0.0
        %vm5904 = vcmp.gt.f32.partialorder %v5896, 0.0
        %v5905 = vmul.f32 %v5889, 1.442695
        %v5906 = vpow.pop %v5905
        %v5907 = vmul.f32 %v5890, 1.442695
        %v5908 = vpow.pop %v5907
        %v5909 = vmul.f32 %v5891, 1.442695
        %v5910 = vpow.pop %v5909
        %v5911 = vmul.f32 %v5892, 1.442695
        %v5912 = vpow.pop %v5911
        %v5913 = vmul.f32 %v5893, 1.442695
        %v5914 = vpow.pop %v5913
        %v5915 = vmul.f32 %v5894, 1.442695
        %v5916 = vpow.pop %v5915
        %v5917 = vmul.f32 %v5895, 1.442695
        %v5918 = vpow.pop %v5917
        %v5919 = vmul.f32 %v5896, 1.442695
        %v5920 = vpow.pop %v5919
        %v5921 = vsub.f32 %v5906, 1.0
        %v5922 = vsub.f32 %v5908, 1.0
        %v5923 = vsub.f32 %v5910, 1.0
        %v5924 = vsub.f32 %v5912, 1.0
        %v5925 = vsub.f32 %v5914, 1.0
        %v5926 = vsub.f32 %v5916, 1.0
        %v5927 = vsub.f32 %v5918, 1.0
        %v5928 = vsub.f32 %v5920, 1.0
        %v5929 = vsel %vm5897, %v5889, %v5921
        %v5930 = vsel %vm5898, %v5890, %v5922
        %v5931 = vsel %vm5899, %v5891, %v5923
        %v5932 = vsel %vm5900, %v5892, %v5924
        %v5933 = vsel %vm5901, %v5893, %v5925
        %v5934 = vsel %vm5902, %v5894, %v5926
        %v5935 = vsel %vm5903, %v5895, %v5927
        %v5936 = vsel %vm5904, %v5896, %v5928
        %v5937 = vld [vmem:[%s11] sm:$0xff]
        %v5938 = vld [vmem:[%s11 + $0x8] sm:$0xff]
        %v5939 = vld [vmem:[%s11 + $0x10] sm:$0xff]
        %v5940 = vld [vmem:[%s11 + $0x18] sm:$0xff]
        %v5941 = vld [vmem:[%s11 + $0x20] sm:$0xff]
        %v5942 = vld [vmem:[%s11 + $0x28] sm:$0xff]
        %v5943 = vld [vmem:[%s11 + $0x30] sm:$0xff]
        %v5944 = vld [vmem:[%s11 + $0x38] sm:$0xff]
        %v5946 = vsel %vm3737, %v5929, 0
        %v5949 = vsel %vm3737, %v5930, 0
        %v5952 = vsel %vm3737, %v5931, 0
        %v5955 = vsel %vm3737, %v5932, 0
        %v5958 = vsel %vm3737, %v5933, 0
        %v5961 = vsel %vm3737, %v5934, 0
        %v5964 = vsel %vm3737, %v5935, 0
        %v5967 = vsel %vm3737, %v5936, 0
        %5969 = vmatprep.subr.mxu0 0.0
        %5970 = vmatpush1.msra.mxu0 %v5937
        %5971 = vmatprep.subr.mxu0 0.0
        %5972 = vmatpush1.msra.mxu0 %v5938
        %5973 = vmatprep.subr.mxu0 0.0
        %5974 = vmatpush1.msra.mxu0 %v5939
        %5975 = vmatprep.subr.mxu0 0.0
        %5976 = vmatpush1.msra.mxu0 %v5940
        %5977 = vmatprep.subr.mxu0 0.0
        %5978 = vmatpush1.msra.mxu0 %v5941
        %5979 = vmatprep.subr.mxu0 0.0
        %5980 = vmatpush1.msra.mxu0 %v5942
        %5981 = vmatprep.subr.mxu0 0.0
        %5982 = vmatpush1.msra.mxu0 %v5943
        %5983 = vmatprep.subr.mxu0 0.0
        %5984 = vmatpush1.msra.mxu0 %v5944
        %5985 = vmatprep.subr.mxu0 0.0
        %5986 = vmatpush1.msra.mxu0 0.0
        %5987 = vmatprep.subr.mxu0 0.0
        %5988 = vmatpush1.msra.mxu0 0.0
        %5989 = vmatprep.subr.mxu0 0.0
        %5990 = vmatpush1.msra.mxu0 0.0
        %5991 = vmatprep.subr.mxu0 0.0
        %5992 = vmatpush1.msra.mxu0 0.0
        %5993 = vmatprep.subr.mxu0 0.0
        %5994 = vmatpush1.msra.mxu0 0.0
        %5995 = vmatprep.subr.mxu0 0.0
        %5996 = vmatpush1.msra.mxu0 0.0
        %5997 = vmatprep.subr.mxu0 0.0
        %5998 = vmatpush1.msra.mxu0 0.0
        %5999 = vmatprep.subr.mxu0 0.0
        %6000 = vmatpush1.msra.mxu0 0.0
        %6001 = vmatprep.subr.mxu0 0.0
        %6002 = vmatpush1.msra.mxu0 0.0
        %6003 = vmatprep.subr.mxu0 0.0
        %6004 = vmatpush1.msra.mxu0 0.0
        %6005 = vmatprep.subr.mxu0 0.0
        %6006 = vmatpush1.msra.mxu0 0.0
        %6007 = vmatprep.subr.mxu0 0.0
        %6008 = vmatpush1.msra.mxu0 0.0
        %6009 = vmatprep.subr.mxu0 0.0
        %6010 = vmatpush1.msra.mxu0 0.0
        %6011 = vmatprep.subr.mxu0 0.0
        %6012 = vmatpush1.msra.mxu0 0.0
        %6013 = vmatprep.subr.mxu0 0.0
        %6014 = vmatpush1.msra.mxu0 0.0
        %6015 = vmatprep.subr.mxu0 0.0
        %6016 = vmatpush1.msra.mxu0 0.0
        %6017 = vmatprep.subr.mxu0 0.0
        %6018 = vmatpush1.msra.mxu0 0.0
        %6019 = vmatprep.subr.mxu0 0.0
        %6020 = vmatpush1.msra.mxu0 0.0
        %6021 = vmatprep.subr.mxu0 0.0
        %6022 = vmatpush1.msra.mxu0 0.0
        %6023 = vmatprep.subr.mxu0 0.0
        %6024 = vmatpush1.msra.mxu0 0.0
        %6025 = vmatprep.subr.mxu0 0.0
        %6026 = vmatpush1.msra.mxu0 0.0
        %6027 = vmatprep.subr.mxu0 0.0
        %6028 = vmatpush1.msra.mxu0 0.0
        %6029 = vmatprep.subr.mxu0 0.0
        %6030 = vmatpush1.msra.mxu0 0.0
        %6031 = vmatprep.subr.mxu0 0.0
        %6032 = vmatpush1.msra.mxu0 0.0
        %6033 = vmatprep.mubr.f32.mxu0 0.0
        %6034 = vmatmul.mubr.f32.gmra.mrb[0].mxu0 %v5946
        %v6035 = vpop.f32.mrb[0].mxu0
        %v6036 = vadd.f32 0.0, %v6035
        %v6037 = vpop.f32.mrb[0].mxu0
        %6038 = vmatprep.mubr.f32.mxu0 0.0
        %6039 = vmatmul.mubr.f32.gmra.mrb[0].mxu0 %v5949
        %v6040 = vpop.f32.mrb[0].mxu0
        %v6041 = vadd.f32 0.0, %v6040
        %v6042 = vpop.f32.mrb[0].mxu0
        %6043 = vmatprep.mubr.f32.mxu0 0.0
        %6044 = vmatmul.mubr.f32.gmra.mrb[0].mxu0 %v5952
        %v6045 = vpop.f32.mrb[0].mxu0
        %v6046 = vadd.f32 0.0, %v6045
        %v6047 = vpop.f32.mrb[0].mxu0
        %6048 = vmatprep.mubr.f32.mxu0 0.0
        %6049 = vmatmul.mubr.f32.gmra.mrb[0].mxu0 %v5955
        %v6050 = vpop.f32.mrb[0].mxu0
        %v6051 = vadd.f32 0.0, %v6050
        %v6052 = vpop.f32.mrb[0].mxu0
        %6053 = vmatprep.mubr.f32.mxu0 0.0
        %6054 = vmatmul.mubr.f32.gmra.mrb[0].mxu0 %v5958
        %v6055 = vpop.f32.mrb[0].mxu0
        %v6056 = vadd.f32 0.0, %v6055
        %v6057 = vpop.f32.mrb[0].mxu0
        %6058 = vmatprep.mubr.f32.mxu0 0.0
        %6059 = vmatmul.mubr.f32.gmra.mrb[0].mxu0 %v5961
        %v6060 = vpop.f32.mrb[0].mxu0
        %v6061 = vadd.f32 0.0, %v6060
        %v6062 = vpop.f32.mrb[0].mxu0
        %6063 = vmatprep.mubr.f32.mxu0 0.0
        %6064 = vmatmul.mubr.f32.gmra.mrb[0].mxu0 %v5964
        %v6065 = vpop.f32.mrb[0].mxu0
        %v6066 = vadd.f32 0.0, %v6065
        %v6067 = vpop.f32.mrb[0].mxu0
        %6068 = vmatprep.mubr.f32.mxu0 0.0
        %6069 = vmatmul.mubr.f32.gmra.mrb[0].mxu0 %v5967
        %v6070 = vpop.f32.mrb[0].mxu0
        %v6071 = vadd.f32 0.0, %v6070
        %v6072 = vpop.f32.mrb[0].mxu0
        %6073 = vdwg.mxu0
        %v6074 = vld [vmem:[%s12] sm:$0xf]
        %v6076 = vsel %vm3737, %v6036, 0
        %v6079 = vsel %vm3737, %v6041, 0
        %v6082 = vsel %vm3737, %v6046, 0
        %v6085 = vsel %vm3737, %v6051, 0
        %v6088 = vsel %vm3737, %v6056, 0
        %v6091 = vsel %vm3737, %v6061, 0
        %v6094 = vsel %vm3737, %v6066, 0
        %v6097 = vsel %vm3737, %v6071, 0
        %v6100 = vsel %vm3737, %v6074, 0
        %6102 = vmatprep.subr.mxu0 0.0
        %6103 = vmatpush1.xpose.msra.mxu0 %v6100
        %6104 = vmatprep.subr.mxu0 0.0
        %6105 = vmatpush1.xpose.msra.mxu0 0.0
        %6106 = vmatprep.subr.mxu0 0.0
        %6107 = vmatpush1.xpose.msra.mxu0 0.0
        %6108 = vmatprep.subr.mxu0 0.0
        %6109 = vmatpush1.xpose.msra.mxu0 0.0
        %6110 = vmatprep.subr.mxu0 0.0
        %6111 = vmatpush1.xpose.msra.mxu0 0.0
        %6112 = vmatprep.subr.mxu0 0.0
        %6113 = vmatpush1.xpose.msra.mxu0 0.0
        %6114 = vmatprep.subr.mxu0 0.0
        %6115 = vmatpush1.xpose.msra.mxu0 0.0
        %6116 = vmatprep.subr.mxu0 0.0
        %6117 = vmatpush1.xpose.msra.mxu0 0.0
        %6118 = vmatprep.subr.mxu0 0.0
        %6119 = vmatpush1.xpose.msra.mxu0 0.0
        %6120 = vmatprep.subr.mxu0 0.0
        %6121 = vmatpush1.xpose.msra.mxu0 0.0
        %6122 = vmatprep.subr.mxu0 0.0
        %6123 = vmatpush1.xpose.msra.mxu0 0.0
        %6124 = vmatprep.subr.mxu0 0.0
        %6125 = vmatpush1.xpose.msra.mxu0 0.0
        %6126 = vmatprep.subr.mxu0 0.0
        %6127 = vmatpush1.xpose.msra.mxu0 0.0
        %6128 = vmatprep.subr.mxu0 0.0
        %6129 = vmatpush1.xpose.msra.mxu0 0.0
        %6130 = vmatprep.subr.mxu0 0.0
        %6131 = vmatpush1.xpose.msra.mxu0 0.0
        %6132 = vmatprep.subr.mxu0 0.0
        %6133 = vmatpush1.xpose.msra.mxu0 0.0
        %6134 = vmatprep.subr.mxu0 0.0
        %6135 = vmatpush1.xpose.msra.mxu0 0.0
        %6136 = vmatprep.subr.mxu0 0.0
        %6137 = vmatpush1.xpose.msra.mxu0 0.0
        %6138 = vmatprep.subr.mxu0 0.0
        %6139 = vmatpush1.xpose.msra.mxu0 0.0
        %6140 = vmatprep.subr.mxu0 0.0
        %6141 = vmatpush1.xpose.msra.mxu0 0.0
        %6142 = vmatprep.subr.mxu0 0.0
        %6143 = vmatpush1.xpose.msra.mxu0 0.0
        %6144 = vmatprep.subr.mxu0 0.0
        %6145 = vmatpush1.xpose.msra.mxu0 0.0
        %6146 = vmatprep.subr.mxu0 0.0
        %6147 = vmatpush1.xpose.msra.mxu0 0.0
        %6148 = vmatprep.subr.mxu0 0.0
        %6149 = vmatpush1.xpose.msra.mxu0 0.0
        %6150 = vmatprep.subr.mxu0 0.0
        %6151 = vmatpush1.xpose.msra.mxu0 0.0
        %6152 = vmatprep.subr.mxu0 0.0
        %6153 = vmatpush1.xpose.msra.mxu0 0.0
        %6154 = vmatprep.subr.mxu0 0.0
        %6155 = vmatpush1.xpose.msra.mxu0 0.0
        %6156 = vmatprep.subr.mxu0 0.0
        %6157 = vmatpush1.xpose.msra.mxu0 0.0
        %6158 = vmatprep.subr.mxu0 0.0
        %6159 = vmatpush1.xpose.msra.mxu0 0.0
        %6160 = vmatprep.subr.mxu0 0.0
        %6161 = vmatpush1.xpose.msra.mxu0 0.0
        %6162 = vmatprep.subr.mxu0 0.0
        %6163 = vmatpush1.xpose.msra.mxu0 0.0
        %6164 = vmatprep.subr.mxu0 0.0
        %6165 = vmatpush1.xpose.msra.mxu0 0.0
        %6166 = vmatprep.mubr.f32.mxu0 0.0
        %6167 = vmatmul.mubr.f32.gmra.mrb[0].mxu0 %v6076
        %v6168 = vpop.f32.mrb[0].mxu0
        %v6169 = vadd.f32 0.0, %v6168
        %v6170 = vpop.f32.mrb[0].mxu0
        %6171 = vmatprep.mubr.f32.mxu0 0.0
        %6172 = vmatmul.mubr.f32.gmra.mrb[0].mxu0 %v6079
        %v6173 = vpop.f32.mrb[0].mxu0
        %v6174 = vadd.f32 0.0, %v6173
        %v6175 = vpop.f32.mrb[0].mxu0
        %6176 = vmatprep.mubr.f32.mxu0 0.0
        %6177 = vmatmul.mubr.f32.gmra.mrb[0].mxu0 %v6082
        %v6178 = vpop.f32.mrb[0].mxu0
        %v6179 = vadd.f32 0.0, %v6178
        %v6180 = vpop.f32.mrb[0].mxu0
        %6181 = vmatprep.mubr.f32.mxu0 0.0
        %6182 = vmatmul.mubr.f32.gmra.mrb[0].mxu0 %v6085
        %v6183 = vpop.f32.mrb[0].mxu0
        %v6184 = vadd.f32 0.0, %v6183
        %v6185 = vpop.f32.mrb[0].mxu0
        %6186 = vmatprep.mubr.f32.mxu0 0.0
        %6187 = vmatmul.mubr.f32.gmra.mrb[0].mxu0 %v6088
        %v6188 = vpop.f32.mrb[0].mxu0
        %v6189 = vadd.f32 0.0, %v6188
        %v6190 = vpop.f32.mrb[0].mxu0
        %6191 = vmatprep.mubr.f32.mxu0 0.0
        %6192 = vmatmul.mubr.f32.gmra.mrb[0].mxu0 %v6091
        %v6193 = vpop.f32.mrb[0].mxu0
        %v6194 = vadd.f32 0.0, %v6193
        %v6195 = vpop.f32.mrb[0].mxu0
        %6196 = vmatprep.mubr.f32.mxu0 0.0
        %6197 = vmatmul.mubr.f32.gmra.mrb[0].mxu0 %v6094
        %v6198 = vpop.f32.mrb[0].mxu0
        %v6199 = vadd.f32 0.0, %v6198
        %v6200 = vpop.f32.mrb[0].mxu0
        %6201 = vmatprep.mubr.f32.mxu0 0.0
        %6202 = vmatmul.mubr.f32.gmra.mrb[0].mxu0 %v6097
        %v6203 = vpop.f32.mrb[0].mxu0
        %v6204 = vadd.f32 0.0, %v6203
        %v6205 = vpop.f32.mrb[0].mxu0
        %6206 = vdwg.mxu0
        %v6207 = vld [vmem:[%s13] sm:$0xf]
        %v6209 = vsel %vm3737, %v6207, 0
        %6211 = vmatprep.subr.mxu0 0.0
        %6212 = vmatpush1.xpose.msra.mxu0 %v6076
        %6213 = vmatprep.subr.mxu0 0.0
        %6214 = vmatpush1.xpose.msra.mxu0 %v6079
        %6215 = vmatprep.subr.mxu0 0.0
        %6216 = vmatpush1.xpose.msra.mxu0 %v6082
        %6217 = vmatprep.subr.mxu0 0.0
        %6218 = vmatpush1.xpose.msra.mxu0 %v6085
        %6219 = vmatprep.subr.mxu0 0.0
        %6220 = vmatpush1.xpose.msra.mxu0 %v6088
        %6221 = vmatprep.subr.mxu0 0.0
        %6222 = vmatpush1.xpose.msra.mxu0 %v6091
        %6223 = vmatprep.subr.mxu0 0.0
        %6224 = vmatpush1.xpose.msra.mxu0 %v6094
        %6225 = vmatprep.subr.mxu0 0.0
        %6226 = vmatpush1.xpose.msra.mxu0 %v6097
        %6227 = vmatprep.subr.mxu0 0.0
        %6228 = vmatpush1.xpose.msra.mxu0 0.0
        %6229 = vmatprep.subr.mxu0 0.0
        %6230 = vmatpush1.xpose.msra.mxu0 0.0
        %6231 = vmatprep.subr.mxu0 0.0
        %6232 = vmatpush1.xpose.msra.mxu0 0.0
        %6233 = vmatprep.subr.mxu0 0.0
        %6234 = vmatpush1.xpose.msra.mxu0 0.0
        %6235 = vmatprep.subr.mxu0 0.0
        %6236 = vmatpush1.xpose.msra.mxu0 0.0
        %6237 = vmatprep.subr.mxu0 0.0
        %6238 = vmatpush1.xpose.msra.mxu0 0.0
        %6239 = vmatprep.subr.mxu0 0.0
        %6240 = vmatpush1.xpose.msra.mxu0 0.0
        %6241 = vmatprep.subr.mxu0 0.0
        %6242 = vmatpush1.xpose.msra.mxu0 0.0
        %6243 = vmatprep.subr.mxu0 0.0
        %6244 = vmatpush1.xpose.msra.mxu0 0.0
        %6245 = vmatprep.subr.mxu0 0.0
        %6246 = vmatpush1.xpose.msra.mxu0 0.0
        %6247 = vmatprep.subr.mxu0 0.0
        %6248 = vmatpush1.xpose.msra.mxu0 0.0
        %6249 = vmatprep.subr.mxu0 0.0
        %6250 = vmatpush1.xpose.msra.mxu0 0.0
        %6251 = vmatprep.subr.mxu0 0.0
        %6252 = vmatpush1.xpose.msra.mxu0 0.0
        %6253 = vmatprep.subr.mxu0 0.0
        %6254 = vmatpush1.xpose.msra.mxu0 0.0
        %6255 = vmatprep.subr.mxu0 0.0
        %6256 = vmatpush1.xpose.msra.mxu0 0.0
        %6257 = vmatprep.subr.mxu0 0.0
        %6258 = vmatpush1.xpose.msra.mxu0 0.0
        %6259 = vmatprep.subr.mxu0 0.0
        %6260 = vmatpush1.xpose.msra.mxu0 0.0
        %6261 = vmatprep.subr.mxu0 0.0
        %6262 = vmatpush1.xpose.msra.mxu0 0.0
        %6263 = vmatprep.subr.mxu0 0.0
        %6264 = vmatpush1.xpose.msra.mxu0 0.0
        %6265 = vmatprep.subr.mxu0 0.0
        %6266 = vmatpush1.xpose.msra.mxu0 0.0
        %6267 = vmatprep.subr.mxu0 0.0
        %6268 = vmatpush1.xpose.msra.mxu0 0.0
        %6269 = vmatprep.subr.mxu0 0.0
        %6270 = vmatpush1.xpose.msra.mxu0 0.0
        %6271 = vmatprep.subr.mxu0 0.0
        %6272 = vmatpush1.xpose.msra.mxu0 0.0
        %6273 = vmatprep.subr.mxu0 0.0
        %6274 = vmatpush1.xpose.msra.mxu0 0.0
        %6275 = vmatprep.mubr.f32.mxu0 0.0
        %6276 = vmatmul.mubr.f32.gmra.mrb[0].mxu0 %v6209
        %v6277 = vpop.f32.mrb[0].mxu0
        %v6278 = vadd.f32 0.0, %v6277
        %v6279 = vpop.f32.mrb[0].mxu0
        %6280 = vdwg.mxu0
        %6282 = vset.pattern.permute.xlu0 0
        %6283 = vperm.xlu0 %6282, %v6169
        %v6284 = vpop.permute.xlu0 %6283
        %6287 = vset.pattern.permute.xlu0 0
        %6288 = vperm.xlu0 %6287, %v6174
        %v6289 = vpop.permute.xlu0 %6288
        %6292 = vset.pattern.permute.xlu0 0
        %6293 = vperm.xlu0 %6292, %v6179
        %v6294 = vpop.permute.xlu0 %6293
        %6297 = vset.pattern.permute.xlu0 0
        %6298 = vperm.xlu0 %6297, %v6184
        %v6299 = vpop.permute.xlu0 %6298
        %6302 = vset.pattern.permute.xlu0 0
        %6303 = vperm.xlu0 %6302, %v6189
        %v6304 = vpop.permute.xlu0 %6303
        %6307 = vset.pattern.permute.xlu0 0
        %6308 = vperm.xlu0 %6307, %v6194
        %v6309 = vpop.permute.xlu0 %6308
        %6312 = vset.pattern.permute.xlu0 0
        %6313 = vperm.xlu0 %6312, %v6199
        %v6314 = vpop.permute.xlu0 %6313
        %6317 = vset.pattern.permute.xlu0 0
        %6318 = vperm.xlu0 %6317, %v6204
        %v6319 = vpop.permute.xlu0 %6318
        %v6321 = vlaneseq
        %v6322 = vshrl.u32 %v6321, 7
        %v6323 = vsub.s32 0, %v6322
        %v6324 = vrot.slane %v6278, %v6323
        %v6325 = vadd.f32 %v6284, %v6324
        %v6326 = vadd.f32 %v6289, %v6324
        %v6327 = vadd.f32 %v6294, %v6324
        %v6328 = vadd.f32 %v6299, %v6324
        %v6329 = vadd.f32 %v6304, %v6324
        %v6330 = vadd.f32 %v6309, %v6324
        %v6331 = vadd.f32 %v6314, %v6324
        %v6332 = vadd.f32 %v6319, %v6324
        %vm6333 = vcmp.gt.f32.partialorder %v6325, 0.0
        %vm6334 = vcmp.gt.f32.partialorder %v6326, 0.0
        %vm6335 = vcmp.gt.f32.partialorder %v6327, 0.0
        %vm6336 = vcmp.gt.f32.partialorder %v6328, 0.0
        %vm6337 = vcmp.gt.f32.partialorder %v6329, 0.0
        %vm6338 = vcmp.gt.f32.partialorder %v6330, 0.0
        %vm6339 = vcmp.gt.f32.partialorder %v6331, 0.0
        %vm6340 = vcmp.gt.f32.partialorder %v6332, 0.0
        %v6341 = vmul.f32 %v6325, 0.2
        %v6342 = vmul.f32 %v6326, 0.2
        %v6343 = vmul.f32 %v6327, 0.2
        %v6344 = vmul.f32 %v6328, 0.2
        %v6345 = vmul.f32 %v6329, 0.2
        %v6346 = vmul.f32 %v6330, 0.2
        %v6347 = vmul.f32 %v6331, 0.2
        %v6348 = vmul.f32 %v6332, 0.2
        %v6349 = vsel %vm6333, %v6325, %v6341
        %v6350 = vsel %vm6334, %v6326, %v6342
        %v6351 = vsel %vm6335, %v6327, %v6343
        %v6352 = vsel %vm6336, %v6328, %v6344
        %v6353 = vsel %vm6337, %v6329, %v6345
        %v6354 = vsel %vm6338, %v6330, %v6346
        %v6355 = vsel %vm6339, %v6331, %v6347
        %v6356 = vsel %vm6340, %v6332, %v6348
        %v6357 = vadd.f32 %v6349, %v3595
        %v6358 = vadd.f32 %v6350, %v3596
        %v6359 = vadd.f32 %v6351, %v3597
        %v6360 = vadd.f32 %v6352, %v3598
        %v6361 = vadd.f32 %v6353, %v3599
        %v6362 = vadd.f32 %v6354, %v3600
        %v6363 = vadd.f32 %v6355, %v3601
        %v6364 = vadd.f32 %v6356, %v3602
        %v6365 = vsel %vm3737, %v6357, -inf
        %6366 = vmax.xlane.f32.xlu0 %v6365
        %v6367 = vpop.xlane.xlu0 %6366
        %v6368 = vsel %vm3737, %v6358, -inf
        %6369 = vmax.xlane.f32.xlu0 %v6368
        %v6370 = vpop.xlane.xlu0 %6369
        %v6371 = vsel %vm3737, %v6359, -inf
        %6372 = vmax.xlane.f32.xlu0 %v6371
        %v6373 = vpop.xlane.xlu0 %6372
        %v6374 = vsel %vm3737, %v6360, -inf
        %6375 = vmax.xlane.f32.xlu0 %v6374
        %v6376 = vpop.xlane.xlu0 %6375
        %v6377 = vsel %vm3737, %v6361, -inf
        %6378 = vmax.xlane.f32.xlu0 %v6377
        %v6379 = vpop.xlane.xlu0 %6378
        %v6380 = vsel %vm3737, %v6362, -inf
        %6381 = vmax.xlane.f32.xlu0 %v6380
        %v6382 = vpop.xlane.xlu0 %6381
        %v6383 = vsel %vm3737, %v6363, -inf
        %6384 = vmax.xlane.f32.xlu0 %v6383
        %v6385 = vpop.xlane.xlu0 %6384
        %v6386 = vsel %vm3737, %v6364, -inf
        %6387 = vmax.xlane.f32.xlu0 %v6386
        %v6388 = vpop.xlane.xlu0 %6387
        %v6389 = vsub.f32 %v6357, %v6367
        %v6390 = vsub.f32 %v6358, %v6370
        %v6391 = vsub.f32 %v6359, %v6373
        %v6392 = vsub.f32 %v6360, %v6376
        %v6393 = vsub.f32 %v6361, %v6379
        %v6394 = vsub.f32 %v6362, %v6382
        %v6395 = vsub.f32 %v6363, %v6385
        %v6396 = vsub.f32 %v6364, %v6388
        %v6397 = vmul.f32 %v6389, 1.442695
        %v6398 = vpow.pop %v6397
        %v6399 = vmul.f32 %v6390, 1.442695
        %v6400 = vpow.pop %v6399
        %v6401 = vmul.f32 %v6391, 1.442695
        %v6402 = vpow.pop %v6401
        %v6403 = vmul.f32 %v6392, 1.442695
        %v6404 = vpow.pop %v6403
        %v6405 = vmul.f32 %v6393, 1.442695
        %v6406 = vpow.pop %v6405
        %v6407 = vmul.f32 %v6394, 1.442695
        %v6408 = vpow.pop %v6407
        %v6409 = vmul.f32 %v6395, 1.442695
        %v6410 = vpow.pop %v6409
        %v6411 = vmul.f32 %v6396, 1.442695
        %v6412 = vpow.pop %v6411
        %v6414 = vsel %vm3737, %v6398, 0
        %v6417 = vsel %vm3737, %v6400, 0
        %v6420 = vsel %vm3737, %v6402, 0
        %v6423 = vsel %vm3737, %v6404, 0
        %v6426 = vsel %vm3737, %v6406, 0
        %v6429 = vsel %vm3737, %v6408, 0
        %v6432 = vsel %vm3737, %v6410, 0
        %v6435 = vsel %vm3737, %v6412, 0
        %6437 = vmatprep.subr.mxu0 0.0
        %6438 = vmatpush1.msra.mxu0 1.0
        %6439 = vmatprep.subr.mxu0 0.0
        %6440 = vmatpush1.msra.mxu0 1.0
        %6441 = vmatprep.subr.mxu0 0.0
        %6442 = vmatpush1.msra.mxu0 1.0
        %6443 = vmatprep.subr.mxu0 0.0
        %6444 = vmatpush1.msra.mxu0 1.0
        %6445 = vmatprep.subr.mxu0 0.0
        %6446 = vmatpush1.msra.mxu0 1.0
        %6447 = vmatprep.subr.mxu0 0.0
        %6448 = vmatpush1.msra.mxu0 1.0
        %6449 = vmatprep.subr.mxu0 0.0
        %6450 = vmatpush1.msra.mxu0 1.0
        %6451 = vmatprep.subr.mxu0 0.0
        %6452 = vmatpush1.msra.mxu0 1.0
        %6453 = vmatprep.subr.mxu0 0.0
        %6454 = vmatpush1.msra.mxu0 0.0
        %6455 = vmatprep.subr.mxu0 0.0
        %6456 = vmatpush1.msra.mxu0 0.0
        %6457 = vmatprep.subr.mxu0 0.0
        %6458 = vmatpush1.msra.mxu0 0.0
        %6459 = vmatprep.subr.mxu0 0.0
        %6460 = vmatpush1.msra.mxu0 0.0
        %6461 = vmatprep.subr.mxu0 0.0
        %6462 = vmatpush1.msra.mxu0 0.0
        %6463 = vmatprep.subr.mxu0 0.0
        %6464 = vmatpush1.msra.mxu0 0.0
        %6465 = vmatprep.subr.mxu0 0.0
        %6466 = vmatpush1.msra.mxu0 0.0
        %6467 = vmatprep.subr.mxu0 0.0
        %6468 = vmatpush1.msra.mxu0 0.0
        %6469 = vmatprep.subr.mxu0 0.0
        %6470 = vmatpush1.msra.mxu0 0.0
        %6471 = vmatprep.subr.mxu0 0.0
        %6472 = vmatpush1.msra.mxu0 0.0
        %6473 = vmatprep.subr.mxu0 0.0
        %6474 = vmatpush1.msra.mxu0 0.0
        %6475 = vmatprep.subr.mxu0 0.0
        %6476 = vmatpush1.msra.mxu0 0.0
        %6477 = vmatprep.subr.mxu0 0.0
        %6478 = vmatpush1.msra.mxu0 0.0
        %6479 = vmatprep.subr.mxu0 0.0
        %6480 = vmatpush1.msra.mxu0 0.0
        %6481 = vmatprep.subr.mxu0 0.0
        %6482 = vmatpush1.msra.mxu0 0.0
        %6483 = vmatprep.subr.mxu0 0.0
        %6484 = vmatpush1.msra.mxu0 0.0
        %6485 = vmatprep.subr.mxu0 0.0
        %6486 = vmatpush1.msra.mxu0 0.0
        %6487 = vmatprep.subr.mxu0 0.0
        %6488 = vmatpush1.msra.mxu0 0.0
        %6489 = vmatprep.subr.mxu0 0.0
        %6490 = vmatpush1.msra.mxu0 0.0
        %6491 = vmatprep.subr.mxu0 0.0
        %6492 = vmatpush1.msra.mxu0 0.0
        %6493 = vmatprep.subr.mxu0 0.0
        %6494 = vmatpush1.msra.mxu0 0.0
        %6495 = vmatprep.subr.mxu0 0.0
        %6496 = vmatpush1.msra.mxu0 0.0
        %6497 = vmatprep.subr.mxu0 0.0
        %6498 = vmatpush1.msra.mxu0 0.0
        %6499 = vmatprep.subr.mxu0 0.0
        %6500 = vmatpush1.msra.mxu0 0.0
        %6501 = vmatprep.mubr.f32.mxu0 0.0
        %6502 = vmatmul.mubr.f32.gmra.mrb[0].mxu0 %v6414
        %v6503 = vpop.f32.mrb[0].mxu0
        %v6504 = vadd.f32 0.0, %v6503
        %v6505 = vpop.f32.mrb[0].mxu0
        %6506 = vmatprep.mubr.f32.mxu0 0.0
        %6507 = vmatmul.mubr.f32.gmra.mrb[0].mxu0 %v6417
        %v6508 = vpop.f32.mrb[0].mxu0
        %v6509 = vadd.f32 0.0, %v6508
        %v6510 = vpop.f32.mrb[0].mxu0
        %6511 = vmatprep.mubr.f32.mxu0 0.0
        %6512 = vmatmul.mubr.f32.gmra.mrb[0].mxu0 %v6420
        %v6513 = vpop.f32.mrb[0].mxu0
        %v6514 = vadd.f32 0.0, %v6513
        %v6515 = vpop.f32.mrb[0].mxu0
        %6516 = vmatprep.mubr.f32.mxu0 0.0
        %6517 = vmatmul.mubr.f32.gmra.mrb[0].mxu0 %v6423
        %v6518 = vpop.f32.mrb[0].mxu0
        %v6519 = vadd.f32 0.0, %v6518
        %v6520 = vpop.f32.mrb[0].mxu0
        %6521 = vmatprep.mubr.f32.mxu0 0.0
        %6522 = vmatmul.mubr.f32.gmra.mrb[0].mxu0 %v6426
        %v6523 = vpop.f32.mrb[0].mxu0
        %v6524 = vadd.f32 0.0, %v6523
        %v6525 = vpop.f32.mrb[0].mxu0
        %6526 = vmatprep.mubr.f32.mxu0 0.0
        %6527 = vmatmul.mubr.f32.gmra.mrb[0].mxu0 %v6429
        %v6528 = vpop.f32.mrb[0].mxu0
        %v6529 = vadd.f32 0.0, %v6528
        %v6530 = vpop.f32.mrb[0].mxu0
        %6531 = vmatprep.mubr.f32.mxu0 0.0
        %6532 = vmatmul.mubr.f32.gmra.mrb[0].mxu0 %v6432
        %v6533 = vpop.f32.mrb[0].mxu0
        %v6534 = vadd.f32 0.0, %v6533
        %v6535 = vpop.f32.mrb[0].mxu0
        %6536 = vmatprep.mubr.f32.mxu0 0.0
        %6537 = vmatmul.mubr.f32.gmra.mrb[0].mxu0 %v6435
        %v6538 = vpop.f32.mrb[0].mxu0
        %v6539 = vadd.f32 0.0, %v6538
        %v6540 = vpop.f32.mrb[0].mxu0
        %6541 = vdwg.mxu0
        %v6542 = vrcp.pop %v6504
        %v6543 = vrcp.pop %v6509
        %v6544 = vrcp.pop %v6514
        %v6545 = vrcp.pop %v6519
        %v6546 = vrcp.pop %v6524
        %v6547 = vrcp.pop %v6529
        %v6548 = vrcp.pop %v6534
        %v6549 = vrcp.pop %v6539
        %6551 = vset.pattern.permute.xlu0 0
        %6552 = vperm.xlu0 %6551, %v6542
        %v6553 = vpop.permute.xlu0 %6552
        %6556 = vset.pattern.permute.xlu0 0
        %6557 = vperm.xlu0 %6556, %v6543
        %v6558 = vpop.permute.xlu0 %6557
        %6561 = vset.pattern.permute.xlu0 0
        %6562 = vperm.xlu0 %6561, %v6544
        %v6563 = vpop.permute.xlu0 %6562
        %6566 = vset.pattern.permute.xlu0 0
        %6567 = vperm.xlu0 %6566, %v6545
        %v6568 = vpop.permute.xlu0 %6567
        %6571 = vset.pattern.permute.xlu0 0
        %6572 = vperm.xlu0 %6571, %v6546
        %v6573 = vpop.permute.xlu0 %6572
        %6576 = vset.pattern.permute.xlu0 0
        %6577 = vperm.xlu0 %6576, %v6547
        %v6578 = vpop.permute.xlu0 %6577
        %6581 = vset.pattern.permute.xlu0 0
        %6582 = vperm.xlu0 %6581, %v6548
        %v6583 = vpop.permute.xlu0 %6582
        %6586 = vset.pattern.permute.xlu0 0
        %6587 = vperm.xlu0 %6586, %v6549
        %v6588 = vpop.permute.xlu0 %6587
        %v6590 = vmul.f32 %v6398, %v6553
        %v6591 = vmul.f32 %v6400, %v6558
        %v6592 = vmul.f32 %v6402, %v6563
        %v6593 = vmul.f32 %v6404, %v6568
        %v6594 = vmul.f32 %v6406, %v6573
        %v6595 = vmul.f32 %v6408, %v6578
        %v6596 = vmul.f32 %v6410, %v6583
        %v6597 = vmul.f32 %v6412, %v6588
        %v6599 = vsel %vm3737, %v6590, 0
        %v6602 = vsel %vm3737, %v6591, 0
        %v6605 = vsel %vm3737, %v6592, 0
        %v6608 = vsel %vm3737, %v6593, 0
        %v6611 = vsel %vm3737, %v6594, 0
        %v6614 = vsel %vm3737, %v6595, 0
        %v6617 = vsel %vm3737, %v6596, 0
        %v6620 = vsel %vm3737, %v6597, 0
        %6622 = vmatprep.subr.mxu0 0.0
        %6623 = vmatpush1.msra.mxu0 %v6036
        %6624 = vmatprep.subr.mxu0 0.0
        %6625 = vmatpush1.msra.mxu0 %v6041
        %6626 = vmatprep.subr.mxu0 0.0
        %6627 = vmatpush1.msra.mxu0 %v6046
        %6628 = vmatprep.subr.mxu0 0.0
        %6629 = vmatpush1.msra.mxu0 %v6051
        %6630 = vmatprep.subr.mxu0 0.0
        %6631 = vmatpush1.msra.mxu0 %v6056
        %6632 = vmatprep.subr.mxu0 0.0
        %6633 = vmatpush1.msra.mxu0 %v6061
        %6634 = vmatprep.subr.mxu0 0.0
        %6635 = vmatpush1.msra.mxu0 %v6066
        %6636 = vmatprep.subr.mxu0 0.0
        %6637 = vmatpush1.msra.mxu0 %v6071
        %6638 = vmatprep.subr.mxu0 0.0
        %6639 = vmatpush1.msra.mxu0 0.0
        %6640 = vmatprep.subr.mxu0 0.0
        %6641 = vmatpush1.msra.mxu0 0.0
        %6642 = vmatprep.subr.mxu0 0.0
        %6643 = vmatpush1.msra.mxu0 0.0
        %6644 = vmatprep.subr.mxu0 0.0
        %6645 = vmatpush1.msra.mxu0 0.0
        %6646 = vmatprep.subr.mxu0 0.0
        %6647 = vmatpush1.msra.mxu0 0.0
        %6648 = vmatprep.subr.mxu0 0.0
        %6649 = vmatpush1.msra.mxu0 0.0
        %6650 = vmatprep.subr.mxu0 0.0
        %6651 = vmatpush1.msra.mxu0 0.0
        %6652 = vmatprep.subr.mxu0 0.0
        %6653 = vmatpush1.msra.mxu0 0.0
        %6654 = vmatprep.subr.mxu0 0.0
        %6655 = vmatpush1.msra.mxu0 0.0
        %6656 = vmatprep.subr.mxu0 0.0
        %6657 = vmatpush1.msra.mxu0 0.0
        %6658 = vmatprep.subr.mxu0 0.0
        %6659 = vmatpush1.msra.mxu0 0.0
        %6660 = vmatprep.subr.mxu0 0.0
        %6661 = vmatpush1.msra.mxu0 0.0
        %6662 = vmatprep.subr.mxu0 0.0
        %6663 = vmatpush1.msra.mxu0 0.0
        %6664 = vmatprep.subr.mxu0 0.0
        %6665 = vmatpush1.msra.mxu0 0.0
        %6666 = vmatprep.subr.mxu0 0.0
        %6667 = vmatpush1.msra.mxu0 0.0
        %6668 = vmatprep.subr.mxu0 0.0
        %6669 = vmatpush1.msra.mxu0 0.0
        %6670 = vmatprep.subr.mxu0 0.0
        %6671 = vmatpush1.msra.mxu0 0.0
        %6672 = vmatprep.subr.mxu0 0.0
        %6673 = vmatpush1.msra.mxu0 0.0
        %6674 = vmatprep.subr.mxu0 0.0
        %6675 = vmatpush1.msra.mxu0 0.0
        %6676 = vmatprep.subr.mxu0 0.0
        %6677 = vmatpush1.msra.mxu0 0.0
        %6678 = vmatprep.subr.mxu0 0.0
        %6679 = vmatpush1.msra.mxu0 0.0
        %6680 = vmatprep.subr.mxu0 0.0
        %6681 = vmatpush1.msra.mxu0 0.0
        %6682 = vmatprep.subr.mxu0 0.0
        %6683 = vmatpush1.msra.mxu0 0.0
        %6684 = vmatprep.subr.mxu0 0.0
        %6685 = vmatpush1.msra.mxu0 0.0
        %6686 = vmatprep.mubr.f32.mxu0 0.0
        %6687 = vmatmul.mubr.f32.gmra.mrb[0].mxu0 %v6599
        %v6688 = vpop.f32.mrb[0].mxu0
        %v6689 = vadd.f32 0.0, %v6688
        %v6690 = vpop.f32.mrb[0].mxu0
        %6691 = vmatprep.mubr.f32.mxu0 0.0
        %6692 = vmatmul.mubr.f32.gmra.mrb[0].mxu0 %v6602
        %v6693 = vpop.f32.mrb[0].mxu0
        %v6694 = vadd.f32 0.0, %v6693
        %v6695 = vpop.f32.mrb[0].mxu0
        %6696 = vmatprep.mubr.f32.mxu0 0.0
        %6697 = vmatmul.mubr.f32.gmra.mrb[0].mxu0 %v6605
        %v6698 = vpop.f32.mrb[0].mxu0
        %v6699 = vadd.f32 0.0, %v6698
        %v6700 = vpop.f32.mrb[0].mxu0
        %6701 = vmatprep.mubr.f32.mxu0 0.0
        %6702 = vmatmul.mubr.f32.gmra.mrb[0].mxu0 %v6608
        %v6703 = vpop.f32.mrb[0].mxu0
        %v6704 = vadd.f32 0.0, %v6703
        %v6705 = vpop.f32.mrb[0].mxu0
        %6706 = vmatprep.mubr.f32.mxu0 0.0
        %6707 = vmatmul.mubr.f32.gmra.mrb[0].mxu0 %v6611
        %v6708 = vpop.f32.mrb[0].mxu0
        %v6709 = vadd.f32 0.0, %v6708
        %v6710 = vpop.f32.mrb[0].mxu0
        %6711 = vmatprep.mubr.f32.mxu0 0.0
        %6712 = vmatmul.mubr.f32.gmra.mrb[0].mxu0 %v6614
        %v6713 = vpop.f32.mrb[0].mxu0
        %v6714 = vadd.f32 0.0, %v6713
        %v6715 = vpop.f32.mrb[0].mxu0
        %6716 = vmatprep.mubr.f32.mxu0 0.0
        %6717 = vmatmul.mubr.f32.gmra.mrb[0].mxu0 %v6617
        %v6718 = vpop.f32.mrb[0].mxu0
        %v6719 = vadd.f32 0.0, %v6718
        %v6720 = vpop.f32.mrb[0].mxu0
        %6721 = vmatprep.mubr.f32.mxu0 0.0
        %6722 = vmatmul.mubr.f32.gmra.mrb[0].mxu0 %v6620
        %v6723 = vpop.f32.mrb[0].mxu0
        %v6724 = vadd.f32 0.0, %v6723
        %v6725 = vpop.f32.mrb[0].mxu0
        %6726 = vdwg.mxu0
        %6727 = vset.pattern.permute.xlu0 1
        %6728 = vperm.xlu0 %6727, %v6169
        %v6729 = vpop.permute.xlu0 %6728
        %6731 = vset.pattern.permute.xlu0 1
        %6732 = vperm.xlu0 %6731, %v6174
        %v6733 = vpop.permute.xlu0 %6732
        %6735 = vset.pattern.permute.xlu0 1
        %6736 = vperm.xlu0 %6735, %v6179
        %v6737 = vpop.permute.xlu0 %6736
        %6739 = vset.pattern.permute.xlu0 1
        %6740 = vperm.xlu0 %6739, %v6184
        %v6741 = vpop.permute.xlu0 %6740
        %6743 = vset.pattern.permute.xlu0 1
        %6744 = vperm.xlu0 %6743, %v6189
        %v6745 = vpop.permute.xlu0 %6744
        %6747 = vset.pattern.permute.xlu0 1
        %6748 = vperm.xlu0 %6747, %v6194
        %v6749 = vpop.permute.xlu0 %6748
        %6751 = vset.pattern.permute.xlu0 1
        %6752 = vperm.xlu0 %6751, %v6199
        %v6753 = vpop.permute.xlu0 %6752
        %6755 = vset.pattern.permute.xlu0 1
        %6756 = vperm.xlu0 %6755, %v6204
        %v6757 = vpop.permute.xlu0 %6756
        %v6759 = vlaneseq
        %v6760 = vshrl.u32 %v6759, 7
        %v6761 = vsub.s32 1, %v6760
        %v6762 = vrot.slane %v6278, %v6761
        %v6763 = vadd.f32 %v6729, %v6762
        %v6764 = vadd.f32 %v6733, %v6762
        %v6765 = vadd.f32 %v6737, %v6762
        %v6766 = vadd.f32 %v6741, %v6762
        %v6767 = vadd.f32 %v6745, %v6762
        %v6768 = vadd.f32 %v6749, %v6762
        %v6769 = vadd.f32 %v6753, %v6762
        %v6770 = vadd.f32 %v6757, %v6762
        %vm6771 = vcmp.gt.f32.partialorder %v6763, 0.0
        %vm6772 = vcmp.gt.f32.partialorder %v6764, 0.0
        %vm6773 = vcmp.gt.f32.partialorder %v6765, 0.0
        %vm6774 = vcmp.gt.f32.partialorder %v6766, 0.0
        %vm6775 = vcmp.gt.f32.partialorder %v6767, 0.0
        %vm6776 = vcmp.gt.f32.partialorder %v6768, 0.0
        %vm6777 = vcmp.gt.f32.partialorder %v6769, 0.0
        %vm6778 = vcmp.gt.f32.partialorder %v6770, 0.0
        %v6779 = vmul.f32 %v6763, 0.2
        %v6780 = vmul.f32 %v6764, 0.2
        %v6781 = vmul.f32 %v6765, 0.2
        %v6782 = vmul.f32 %v6766, 0.2
        %v6783 = vmul.f32 %v6767, 0.2
        %v6784 = vmul.f32 %v6768, 0.2
        %v6785 = vmul.f32 %v6769, 0.2
        %v6786 = vmul.f32 %v6770, 0.2
        %v6787 = vsel %vm6771, %v6763, %v6779
        %v6788 = vsel %vm6772, %v6764, %v6780
        %v6789 = vsel %vm6773, %v6765, %v6781
        %v6790 = vsel %vm6774, %v6766, %v6782
        %v6791 = vsel %vm6775, %v6767, %v6783
        %v6792 = vsel %vm6776, %v6768, %v6784
        %v6793 = vsel %vm6777, %v6769, %v6785
        %v6794 = vsel %vm6778, %v6770, %v6786
        %v6795 = vadd.f32 %v6787, %v3595
        %v6796 = vadd.f32 %v6788, %v3596
        %v6797 = vadd.f32 %v6789, %v3597
        %v6798 = vadd.f32 %v6790, %v3598
        %v6799 = vadd.f32 %v6791, %v3599
        %v6800 = vadd.f32 %v6792, %v3600
        %v6801 = vadd.f32 %v6793, %v3601
        %v6802 = vadd.f32 %v6794, %v3602
        %v6803 = vsel %vm3737, %v6795, -inf
        %6804 = vmax.xlane.f32.xlu0 %v6803
        %v6805 = vpop.xlane.xlu0 %6804
        %v6806 = vsel %vm3737, %v6796, -inf
        %6807 = vmax.xlane.f32.xlu0 %v6806
        %v6808 = vpop.xlane.xlu0 %6807
        %v6809 = vsel %vm3737, %v6797, -inf
        %6810 = vmax.xlane.f32.xlu0 %v6809
        %v6811 = vpop.xlane.xlu0 %6810
        %v6812 = vsel %vm3737, %v6798, -inf
        %6813 = vmax.xlane.f32.xlu0 %v6812
        %v6814 = vpop.xlane.xlu0 %6813
        %v6815 = vsel %vm3737, %v6799, -inf
        %6816 = vmax.xlane.f32.xlu0 %v6815
        %v6817 = vpop.xlane.xlu0 %6816
        %v6818 = vsel %vm3737, %v6800, -inf
        %6819 = vmax.xlane.f32.xlu0 %v6818
        %v6820 = vpop.xlane.xlu0 %6819
        %v6821 = vsel %vm3737, %v6801, -inf
        %6822 = vmax.xlane.f32.xlu0 %v6821
        %v6823 = vpop.xlane.xlu0 %6822
        %v6824 = vsel %vm3737, %v6802, -inf
        %6825 = vmax.xlane.f32.xlu0 %v6824
        %v6826 = vpop.xlane.xlu0 %6825
        %v6827 = vsub.f32 %v6795, %v6805
        %v6828 = vsub.f32 %v6796, %v6808
        %v6829 = vsub.f32 %v6797, %v6811
        %v6830 = vsub.f32 %v6798, %v6814
        %v6831 = vsub.f32 %v6799, %v6817
        %v6832 = vsub.f32 %v6800, %v6820
        %v6833 = vsub.f32 %v6801, %v6823
        %v6834 = vsub.f32 %v6802, %v6826
        %v6835 = vmul.f32 %v6827, 1.442695
        %v6836 = vpow.pop %v6835
        %v6837 = vmul.f32 %v6828, 1.442695
        %v6838 = vpow.pop %v6837
        %v6839 = vmul.f32 %v6829, 1.442695
        %v6840 = vpow.pop %v6839
        %v6841 = vmul.f32 %v6830, 1.442695
        %v6842 = vpow.pop %v6841
        %v6843 = vmul.f32 %v6831, 1.442695
        %v6844 = vpow.pop %v6843
        %v6845 = vmul.f32 %v6832, 1.442695
        %v6846 = vpow.pop %v6845
        %v6847 = vmul.f32 %v6833, 1.442695
        %v6848 = vpow.pop %v6847
        %v6849 = vmul.f32 %v6834, 1.442695
        %v6850 = vpow.pop %v6849
        %v6852 = vsel %vm3737, %v6836, 0
        %v6855 = vsel %vm3737, %v6838, 0
        %v6858 = vsel %vm3737, %v6840, 0
        %v6861 = vsel %vm3737, %v6842, 0
        %v6864 = vsel %vm3737, %v6844, 0
        %v6867 = vsel %vm3737, %v6846, 0
        %v6870 = vsel %vm3737, %v6848, 0
        %v6873 = vsel %vm3737, %v6850, 0
        %6875 = vmatprep.subr.mxu0 0.0
        %6876 = vmatpush1.msra.mxu0 1.0
        %6877 = vmatprep.subr.mxu0 0.0
        %6878 = vmatpush1.msra.mxu0 1.0
        %6879 = vmatprep.subr.mxu0 0.0
        %6880 = vmatpush1.msra.mxu0 1.0
        %6881 = vmatprep.subr.mxu0 0.0
        %6882 = vmatpush1.msra.mxu0 1.0
        %6883 = vmatprep.subr.mxu0 0.0
        %6884 = vmatpush1.msra.mxu0 1.0
        %6885 = vmatprep.subr.mxu0 0.0
        %6886 = vmatpush1.msra.mxu0 1.0
        %6887 = vmatprep.subr.mxu0 0.0
        %6888 = vmatpush1.msra.mxu0 1.0
        %6889 = vmatprep.subr.mxu0 0.0
        %6890 = vmatpush1.msra.mxu0 1.0
        %6891 = vmatprep.subr.mxu0 0.0
        %6892 = vmatpush1.msra.mxu0 0.0
        %6893 = vmatprep.subr.mxu0 0.0
        %6894 = vmatpush1.msra.mxu0 0.0
        %6895 = vmatprep.subr.mxu0 0.0
        %6896 = vmatpush1.msra.mxu0 0.0
        %6897 = vmatprep.subr.mxu0 0.0
        %6898 = vmatpush1.msra.mxu0 0.0
        %6899 = vmatprep.subr.mxu0 0.0
        %6900 = vmatpush1.msra.mxu0 0.0
        %6901 = vmatprep.subr.mxu0 0.0
        %6902 = vmatpush1.msra.mxu0 0.0
        %6903 = vmatprep.subr.mxu0 0.0
        %6904 = vmatpush1.msra.mxu0 0.0
        %6905 = vmatprep.subr.mxu0 0.0
        %6906 = vmatpush1.msra.mxu0 0.0
        %6907 = vmatprep.subr.mxu0 0.0
        %6908 = vmatpush1.msra.mxu0 0.0
        %6909 = vmatprep.subr.mxu0 0.0
        %6910 = vmatpush1.msra.mxu0 0.0
        %6911 = vmatprep.subr.mxu0 0.0
        %6912 = vmatpush1.msra.mxu0 0.0
        %6913 = vmatprep.subr.mxu0 0.0
        %6914 = vmatpush1.msra.mxu0 0.0
        %6915 = vmatprep.subr.mxu0 0.0
        %6916 = vmatpush1.msra.mxu0 0.0
        %6917 = vmatprep.subr.mxu0 0.0
        %6918 = vmatpush1.msra.mxu0 0.0
        %6919 = vmatprep.subr.mxu0 0.0
        %6920 = vmatpush1.msra.mxu0 0.0
        %6921 = vmatprep.subr.mxu0 0.0
        %6922 = vmatpush1.msra.mxu0 0.0
        %6923 = vmatprep.subr.mxu0 0.0
        %6924 = vmatpush1.msra.mxu0 0.0
        %6925 = vmatprep.subr.mxu0 0.0
        %6926 = vmatpush1.msra.mxu0 0.0
        %6927 = vmatprep.subr.mxu0 0.0
        %6928 = vmatpush1.msra.mxu0 0.0
        %6929 = vmatprep.subr.mxu0 0.0
        %6930 = vmatpush1.msra.mxu0 0.0
        %6931 = vmatprep.subr.mxu0 0.0
        %6932 = vmatpush1.msra.mxu0 0.0
        %6933 = vmatprep.subr.mxu0 0.0
        %6934 = vmatpush1.msra.mxu0 0.0
        %6935 = vmatprep.subr.mxu0 0.0
        %6936 = vmatpush1.msra.mxu0 0.0
        %6937 = vmatprep.subr.mxu0 0.0
        %6938 = vmatpush1.msra.mxu0 0.0
        %6939 = vmatprep.mubr.f32.mxu0 0.0
        %6940 = vmatmul.mubr.f32.gmra.mrb[0].mxu0 %v6852
        %v6941 = vpop.f32.mrb[0].mxu0
        %v6942 = vadd.f32 0.0, %v6941
        %v6943 = vpop.f32.mrb[0].mxu0
        %6944 = vmatprep.mubr.f32.mxu0 0.0
        %6945 = vmatmul.mubr.f32.gmra.mrb[0].mxu0 %v6855
        %v6946 = vpop.f32.mrb[0].mxu0
        %v6947 = vadd.f32 0.0, %v6946
        %v6948 = vpop.f32.mrb[0].mxu0
        %6949 = vmatprep.mubr.f32.mxu0 0.0
        %6950 = vmatmul.mubr.f32.gmra.mrb[0].mxu0 %v6858
        %v6951 = vpop.f32.mrb[0].mxu0
        %v6952 = vadd.f32 0.0, %v6951
        %v6953 = vpop.f32.mrb[0].mxu0
        %6954 = vmatprep.mubr.f32.mxu0 0.0
        %6955 = vmatmul.mubr.f32.gmra.mrb[0].mxu0 %v6861
        %v6956 = vpop.f32.mrb[0].mxu0
        %v6957 = vadd.f32 0.0, %v6956
        %v6958 = vpop.f32.mrb[0].mxu0
        %6959 = vmatprep.mubr.f32.mxu0 0.0
        %6960 = vmatmul.mubr.f32.gmra.mrb[0].mxu0 %v6864
        %v6961 = vpop.f32.mrb[0].mxu0
        %v6962 = vadd.f32 0.0, %v6961
        %v6963 = vpop.f32.mrb[0].mxu0
        %6964 = vmatprep.mubr.f32.mxu0 0.0
        %6965 = vmatmul.mubr.f32.gmra.mrb[0].mxu0 %v6867
        %v6966 = vpop.f32.mrb[0].mxu0
        %v6967 = vadd.f32 0.0, %v6966
        %v6968 = vpop.f32.mrb[0].mxu0
        %6969 = vmatprep.mubr.f32.mxu0 0.0
        %6970 = vmatmul.mubr.f32.gmra.mrb[0].mxu0 %v6870
        %v6971 = vpop.f32.mrb[0].mxu0
        %v6972 = vadd.f32 0.0, %v6971
        %v6973 = vpop.f32.mrb[0].mxu0
        %6974 = vmatprep.mubr.f32.mxu0 0.0
        %6975 = vmatmul.mubr.f32.gmra.mrb[0].mxu0 %v6873
        %v6976 = vpop.f32.mrb[0].mxu0
        %v6977 = vadd.f32 0.0, %v6976
        %v6978 = vpop.f32.mrb[0].mxu0
        %6979 = vdwg.mxu0
        %v6980 = vrcp.pop %v6942
        %v6981 = vrcp.pop %v6947
        %v6982 = vrcp.pop %v6952
        %v6983 = vrcp.pop %v6957
        %v6984 = vrcp.pop %v6962
        %v6985 = vrcp.pop %v6967
        %v6986 = vrcp.pop %v6972
        %v6987 = vrcp.pop %v6977
        %6989 = vset.pattern.permute.xlu0 0
        %6990 = vperm.xlu0 %6989, %v6980
        %v6991 = vpop.permute.xlu0 %6990
        %6994 = vset.pattern.permute.xlu0 0
        %6995 = vperm.xlu0 %6994, %v6981
        %v6996 = vpop.permute.xlu0 %6995
        %6999 = vset.pattern.permute.xlu0 0
        %7000 = vperm.xlu0 %6999, %v6982
        %v7001 = vpop.permute.xlu0 %7000
        %7004 = vset.pattern.permute.xlu0 0
        %7005 = vperm.xlu0 %7004, %v6983
        %v7006 = vpop.permute.xlu0 %7005
        %7009 = vset.pattern.permute.xlu0 0
        %7010 = vperm.xlu0 %7009, %v6984
        %v7011 = vpop.permute.xlu0 %7010
        %7014 = vset.pattern.permute.xlu0 0
        %7015 = vperm.xlu0 %7014, %v6985
        %v7016 = vpop.permute.xlu0 %7015
        %7019 = vset.pattern.permute.xlu0 0
        %7020 = vperm.xlu0 %7019, %v6986
        %v7021 = vpop.permute.xlu0 %7020
        %7024 = vset.pattern.permute.xlu0 0
        %7025 = vperm.xlu0 %7024, %v6987
        %v7026 = vpop.permute.xlu0 %7025
        %v7028 = vmul.f32 %v6836, %v6991
        %v7029 = vmul.f32 %v6838, %v6996
        %v7030 = vmul.f32 %v6840, %v7001
        %v7031 = vmul.f32 %v6842, %v7006
        %v7032 = vmul.f32 %v6844, %v7011
        %v7033 = vmul.f32 %v6846, %v7016
        %v7034 = vmul.f32 %v6848, %v7021
        %v7035 = vmul.f32 %v6850, %v7026
        %7036 = vrot.lane.b32.xlu0 %v6036, 112
        %v7037 = vpop.permute.xlu0 %7036
        %7038 = vrot.lane.b32.xlu0 %v6041, 112
        %v7039 = vpop.permute.xlu0 %7038
        %7040 = vrot.lane.b32.xlu0 %v6046, 112
        %v7041 = vpop.permute.xlu0 %7040
        %7042 = vrot.lane.b32.xlu0 %v6051, 112
        %v7043 = vpop.permute.xlu0 %7042
        %7044 = vrot.lane.b32.xlu0 %v6056, 112
        %v7045 = vpop.permute.xlu0 %7044
        %7046 = vrot.lane.b32.xlu0 %v6061, 112
        %v7047 = vpop.permute.xlu0 %7046
        %7048 = vrot.lane.b32.xlu0 %v6066, 112
        %v7049 = vpop.permute.xlu0 %7048
        %7050 = vrot.lane.b32.xlu0 %v6071, 112
        %v7051 = vpop.permute.xlu0 %7050
        %v7061 = vsel %vm3737, %v7028, 0
        %v7064 = vsel %vm3737, %v7029, 0
        %v7067 = vsel %vm3737, %v7030, 0
        %v7070 = vsel %vm3737, %v7031, 0
        %v7073 = vsel %vm3737, %v7032, 0
        %v7076 = vsel %vm3737, %v7033, 0
        %v7079 = vsel %vm3737, %v7034, 0
        %v7082 = vsel %vm3737, %v7035, 0
        %7084 = vmatprep.subr.mxu0 0.0
        %7085 = vmatpush1.msra.mxu0 %v7037
        %7086 = vmatprep.subr.mxu0 0.0
        %7087 = vmatpush1.msra.mxu0 %v7039
        %7088 = vmatprep.subr.mxu0 0.0
        %7089 = vmatpush1.msra.mxu0 %v7041
        %7090 = vmatprep.subr.mxu0 0.0
        %7091 = vmatpush1.msra.mxu0 %v7043
        %7092 = vmatprep.subr.mxu0 0.0
        %7093 = vmatpush1.msra.mxu0 %v7045
        %7094 = vmatprep.subr.mxu0 0.0
        %7095 = vmatpush1.msra.mxu0 %v7047
        %7096 = vmatprep.subr.mxu0 0.0
        %7097 = vmatpush1.msra.mxu0 %v7049
        %7098 = vmatprep.subr.mxu0 0.0
        %7099 = vmatpush1.msra.mxu0 %v7051
        %7100 = vmatprep.subr.mxu0 0.0
        %7101 = vmatpush1.msra.mxu0 0.0
        %7102 = vmatprep.subr.mxu0 0.0
        %7103 = vmatpush1.msra.mxu0 0.0
        %7104 = vmatprep.subr.mxu0 0.0
        %7105 = vmatpush1.msra.mxu0 0.0
        %7106 = vmatprep.subr.mxu0 0.0
        %7107 = vmatpush1.msra.mxu0 0.0
        %7108 = vmatprep.subr.mxu0 0.0
        %7109 = vmatpush1.msra.mxu0 0.0
        %7110 = vmatprep.subr.mxu0 0.0
        %7111 = vmatpush1.msra.mxu0 0.0
        %7112 = vmatprep.subr.mxu0 0.0
        %7113 = vmatpush1.msra.mxu0 0.0
        %7114 = vmatprep.subr.mxu0 0.0
        %7115 = vmatpush1.msra.mxu0 0.0
        %7116 = vmatprep.subr.mxu0 0.0
        %7117 = vmatpush1.msra.mxu0 0.0
        %7118 = vmatprep.subr.mxu0 0.0
        %7119 = vmatpush1.msra.mxu0 0.0
        %7120 = vmatprep.subr.mxu0 0.0
        %7121 = vmatpush1.msra.mxu0 0.0
        %7122 = vmatprep.subr.mxu0 0.0
        %7123 = vmatpush1.msra.mxu0 0.0
        %7124 = vmatprep.subr.mxu0 0.0
        %7125 = vmatpush1.msra.mxu0 0.0
        %7126 = vmatprep.subr.mxu0 0.0
        %7127 = vmatpush1.msra.mxu0 0.0
        %7128 = vmatprep.subr.mxu0 0.0
        %7129 = vmatpush1.msra.mxu0 0.0
        %7130 = vmatprep.subr.mxu0 0.0
        %7131 = vmatpush1.msra.mxu0 0.0
        %7132 = vmatprep.subr.mxu0 0.0
        %7133 = vmatpush1.msra.mxu0 0.0
        %7134 = vmatprep.subr.mxu0 0.0
        %7135 = vmatpush1.msra.mxu0 0.0
        %7136 = vmatprep.subr.mxu0 0.0
        %7137 = vmatpush1.msra.mxu0 0.0
        %7138 = vmatprep.subr.mxu0 0.0
        %7139 = vmatpush1.msra.mxu0 0.0
        %7140 = vmatprep.subr.mxu0 0.0
        %7141 = vmatpush1.msra.mxu0 0.0
        %7142 = vmatprep.subr.mxu0 0.0
        %7143 = vmatpush1.msra.mxu0 0.0
        %7144 = vmatprep.subr.mxu0 0.0
        %7145 = vmatpush1.msra.mxu0 0.0
        %7146 = vmatprep.subr.mxu0 0.0
        %7147 = vmatpush1.msra.mxu0 0.0
        %7148 = vmatprep.mubr.f32.mxu0 0.0
        %7149 = vmatmul.mubr.f32.gmra.mrb[0].mxu0 %v7061
        %v7150 = vpop.f32.mrb[0].mxu0
        %v7151 = vadd.f32 0.0, %v7150
        %v7152 = vpop.f32.mrb[0].mxu0
        %7153 = vmatprep.mubr.f32.mxu0 0.0
        %7154 = vmatmul.mubr.f32.gmra.mrb[0].mxu0 %v7064
        %v7155 = vpop.f32.mrb[0].mxu0
        %v7156 = vadd.f32 0.0, %v7155
        %v7157 = vpop.f32.mrb[0].mxu0
        %7158 = vmatprep.mubr.f32.mxu0 0.0
        %7159 = vmatmul.mubr.f32.gmra.mrb[0].mxu0 %v7067
        %v7160 = vpop.f32.mrb[0].mxu0
        %v7161 = vadd.f32 0.0, %v7160
        %v7162 = vpop.f32.mrb[0].mxu0
        %7163 = vmatprep.mubr.f32.mxu0 0.0
        %7164 = vmatmul.mubr.f32.gmra.mrb[0].mxu0 %v7070
        %v7165 = vpop.f32.mrb[0].mxu0
        %v7166 = vadd.f32 0.0, %v7165
        %v7167 = vpop.f32.mrb[0].mxu0
        %7168 = vmatprep.mubr.f32.mxu0 0.0
        %7169 = vmatmul.mubr.f32.gmra.mrb[0].mxu0 %v7073
        %v7170 = vpop.f32.mrb[0].mxu0
        %v7171 = vadd.f32 0.0, %v7170
        %v7172 = vpop.f32.mrb[0].mxu0
        %7173 = vmatprep.mubr.f32.mxu0 0.0
        %7174 = vmatmul.mubr.f32.gmra.mrb[0].mxu0 %v7076
        %v7175 = vpop.f32.mrb[0].mxu0
        %v7176 = vadd.f32 0.0, %v7175
        %v7177 = vpop.f32.mrb[0].mxu0
        %7178 = vmatprep.mubr.f32.mxu0 0.0
        %7179 = vmatmul.mubr.f32.gmra.mrb[0].mxu0 %v7079
        %v7180 = vpop.f32.mrb[0].mxu0
        %v7181 = vadd.f32 0.0, %v7180
        %v7182 = vpop.f32.mrb[0].mxu0
        %7183 = vmatprep.mubr.f32.mxu0 0.0
        %7184 = vmatmul.mubr.f32.gmra.mrb[0].mxu0 %v7082
        %v7185 = vpop.f32.mrb[0].mxu0
        %v7186 = vadd.f32 0.0, %v7185
        %v7187 = vpop.f32.mrb[0].mxu0
        %7188 = vdwg.mxu0
        %7189 = vset.pattern.permute.xlu0 2
        %7190 = vperm.xlu0 %7189, %v6169
        %v7191 = vpop.permute.xlu0 %7190
        %7193 = vset.pattern.permute.xlu0 2
        %7194 = vperm.xlu0 %7193, %v6174
        %v7195 = vpop.permute.xlu0 %7194
        %7197 = vset.pattern.permute.xlu0 2
        %7198 = vperm.xlu0 %7197, %v6179
        %v7199 = vpop.permute.xlu0 %7198
        %7201 = vset.pattern.permute.xlu0 2
        %7202 = vperm.xlu0 %7201, %v6184
        %v7203 = vpop.permute.xlu0 %7202
        %7205 = vset.pattern.permute.xlu0 2
        %7206 = vperm.xlu0 %7205, %v6189
        %v7207 = vpop.permute.xlu0 %7206
        %7209 = vset.pattern.permute.xlu0 2
        %7210 = vperm.xlu0 %7209, %v6194
        %v7211 = vpop.permute.xlu0 %7210
        %7213 = vset.pattern.permute.xlu0 2
        %7214 = vperm.xlu0 %7213, %v6199
        %v7215 = vpop.permute.xlu0 %7214
        %7217 = vset.pattern.permute.xlu0 2
        %7218 = vperm.xlu0 %7217, %v6204
        %v7219 = vpop.permute.xlu0 %7218
        %v7221 = vlaneseq
        %v7222 = vshrl.u32 %v7221, 7
        %v7223 = vsub.s32 2, %v7222
        %v7224 = vrot.slane %v6278, %v7223
        %v7225 = vadd.f32 %v7191, %v7224
        %v7226 = vadd.f32 %v7195, %v7224
        %v7227 = vadd.f32 %v7199, %v7224
        %v7228 = vadd.f32 %v7203, %v7224
        %v7229 = vadd.f32 %v7207, %v7224
        %v7230 = vadd.f32 %v7211, %v7224
        %v7231 = vadd.f32 %v7215, %v7224
        %v7232 = vadd.f32 %v7219, %v7224
        %vm7233 = vcmp.gt.f32.partialorder %v7225, 0.0
        %vm7234 = vcmp.gt.f32.partialorder %v7226, 0.0
        %vm7235 = vcmp.gt.f32.partialorder %v7227, 0.0
        %vm7236 = vcmp.gt.f32.partialorder %v7228, 0.0
        %vm7237 = vcmp.gt.f32.partialorder %v7229, 0.0
        %vm7238 = vcmp.gt.f32.partialorder %v7230, 0.0
        %vm7239 = vcmp.gt.f32.partialorder %v7231, 0.0
        %vm7240 = vcmp.gt.f32.partialorder %v7232, 0.0
        %v7241 = vmul.f32 %v7225, 0.2
        %v7242 = vmul.f32 %v7226, 0.2
        %v7243 = vmul.f32 %v7227, 0.2
        %v7244 = vmul.f32 %v7228, 0.2
        %v7245 = vmul.f32 %v7229, 0.2
        %v7246 = vmul.f32 %v7230, 0.2
        %v7247 = vmul.f32 %v7231, 0.2
        %v7248 = vmul.f32 %v7232, 0.2
        %v7249 = vsel %vm7233, %v7225, %v7241
        %v7250 = vsel %vm7234, %v7226, %v7242
        %v7251 = vsel %vm7235, %v7227, %v7243
        %v7252 = vsel %vm7236, %v7228, %v7244
        %v7253 = vsel %vm7237, %v7229, %v7245
        %v7254 = vsel %vm7238, %v7230, %v7246
        %v7255 = vsel %vm7239, %v7231, %v7247
        %v7256 = vsel %vm7240, %v7232, %v7248
        %v7257 = vadd.f32 %v7249, %v3595
        %v7258 = vadd.f32 %v7250, %v3596
        %v7259 = vadd.f32 %v7251, %v3597
        %v7260 = vadd.f32 %v7252, %v3598
        %v7261 = vadd.f32 %v7253, %v3599
        %v7262 = vadd.f32 %v7254, %v3600
        %v7263 = vadd.f32 %v7255, %v3601
        %v7264 = vadd.f32 %v7256, %v3602
        %v7265 = vsel %vm3737, %v7257, -inf
        %7266 = vmax.xlane.f32.xlu0 %v7265
        %v7267 = vpop.xlane.xlu0 %7266
        %v7268 = vsel %vm3737, %v7258, -inf
        %7269 = vmax.xlane.f32.xlu0 %v7268
        %v7270 = vpop.xlane.xlu0 %7269
        %v7271 = vsel %vm3737, %v7259, -inf
        %7272 = vmax.xlane.f32.xlu0 %v7271
        %v7273 = vpop.xlane.xlu0 %7272
        %v7274 = vsel %vm3737, %v7260, -inf
        %7275 = vmax.xlane.f32.xlu0 %v7274
        %v7276 = vpop.xlane.xlu0 %7275
        %v7277 = vsel %vm3737, %v7261, -inf
        %7278 = vmax.xlane.f32.xlu0 %v7277
        %v7279 = vpop.xlane.xlu0 %7278
        %v7280 = vsel %vm3737, %v7262, -inf
        %7281 = vmax.xlane.f32.xlu0 %v7280
        %v7282 = vpop.xlane.xlu0 %7281
        %v7283 = vsel %vm3737, %v7263, -inf
        %7284 = vmax.xlane.f32.xlu0 %v7283
        %v7285 = vpop.xlane.xlu0 %7284
        %v7286 = vsel %vm3737, %v7264, -inf
        %7287 = vmax.xlane.f32.xlu0 %v7286
        %v7288 = vpop.xlane.xlu0 %7287
        %v7289 = vsub.f32 %v7257, %v7267
        %v7290 = vsub.f32 %v7258, %v7270
        %v7291 = vsub.f32 %v7259, %v7273
        %v7292 = vsub.f32 %v7260, %v7276
        %v7293 = vsub.f32 %v7261, %v7279
        %v7294 = vsub.f32 %v7262, %v7282
        %v7295 = vsub.f32 %v7263, %v7285
        %v7296 = vsub.f32 %v7264, %v7288
        %v7297 = vmul.f32 %v7289, 1.442695
        %v7298 = vpow.pop %v7297
        %v7299 = vmul.f32 %v7290, 1.442695
        %v7300 = vpow.pop %v7299
        %v7301 = vmul.f32 %v7291, 1.442695
        %v7302 = vpow.pop %v7301
        %v7303 = vmul.f32 %v7292, 1.442695
        %v7304 = vpow.pop %v7303
        %v7305 = vmul.f32 %v7293, 1.442695
        %v7306 = vpow.pop %v7305
        %v7307 = vmul.f32 %v7294, 1.442695
        %v7308 = vpow.pop %v7307
        %v7309 = vmul.f32 %v7295, 1.442695
        %v7310 = vpow.pop %v7309
        %v7311 = vmul.f32 %v7296, 1.442695
        %v7312 = vpow.pop %v7311
        %v7314 = vsel %vm3737, %v7298, 0
        %v7317 = vsel %vm3737, %v7300, 0
        %v7320 = vsel %vm3737, %v7302, 0
        %v7323 = vsel %vm3737, %v7304, 0
        %v7326 = vsel %vm3737, %v7306, 0
        %v7329 = vsel %vm3737, %v7308, 0
        %v7332 = vsel %vm3737, %v7310, 0
        %v7335 = vsel %vm3737, %v7312, 0
        %7337 = vmatprep.subr.mxu0 0.0
        %7338 = vmatpush1.msra.mxu0 1.0
        %7339 = vmatprep.subr.mxu0 0.0
        %7340 = vmatpush1.msra.mxu0 1.0
        %7341 = vmatprep.subr.mxu0 0.0
        %7342 = vmatpush1.msra.mxu0 1.0
        %7343 = vmatprep.subr.mxu0 0.0
        %7344 = vmatpush1.msra.mxu0 1.0
        %7345 = vmatprep.subr.mxu0 0.0
        %7346 = vmatpush1.msra.mxu0 1.0
        %7347 = vmatprep.subr.mxu0 0.0
        %7348 = vmatpush1.msra.mxu0 1.0
        %7349 = vmatprep.subr.mxu0 0.0
        %7350 = vmatpush1.msra.mxu0 1.0
        %7351 = vmatprep.subr.mxu0 0.0
        %7352 = vmatpush1.msra.mxu0 1.0
        %7353 = vmatprep.subr.mxu0 0.0
        %7354 = vmatpush1.msra.mxu0 0.0
        %7355 = vmatprep.subr.mxu0 0.0
        %7356 = vmatpush1.msra.mxu0 0.0
        %7357 = vmatprep.subr.mxu0 0.0
        %7358 = vmatpush1.msra.mxu0 0.0
        %7359 = vmatprep.subr.mxu0 0.0
        %7360 = vmatpush1.msra.mxu0 0.0
        %7361 = vmatprep.subr.mxu0 0.0
        %7362 = vmatpush1.msra.mxu0 0.0
        %7363 = vmatprep.subr.mxu0 0.0
        %7364 = vmatpush1.msra.mxu0 0.0
        %7365 = vmatprep.subr.mxu0 0.0
        %7366 = vmatpush1.msra.mxu0 0.0
        %7367 = vmatprep.subr.mxu0 0.0
        %7368 = vmatpush1.msra.mxu0 0.0
        %7369 = vmatprep.subr.mxu0 0.0
        %7370 = vmatpush1.msra.mxu0 0.0
        %7371 = vmatprep.subr.mxu0 0.0
        %7372 = vmatpush1.msra.mxu0 0.0
        %7373 = vmatprep.subr.mxu0 0.0
        %7374 = vmatpush1.msra.mxu0 0.0
        %7375 = vmatprep.subr.mxu0 0.0
        %7376 = vmatpush1.msra.mxu0 0.0
        %7377 = vmatprep.subr.mxu0 0.0
        %7378 = vmatpush1.msra.mxu0 0.0
        %7379 = vmatprep.subr.mxu0 0.0
        %7380 = vmatpush1.msra.mxu0 0.0
        %7381 = vmatprep.subr.mxu0 0.0
        %7382 = vmatpush1.msra.mxu0 0.0
        %7383 = vmatprep.subr.mxu0 0.0
        %7384 = vmatpush1.msra.mxu0 0.0
        %7385 = vmatprep.subr.mxu0 0.0
        %7386 = vmatpush1.msra.mxu0 0.0
        %7387 = vmatprep.subr.mxu0 0.0
        %7388 = vmatpush1.msra.mxu0 0.0
        %7389 = vmatprep.subr.mxu0 0.0
        %7390 = vmatpush1.msra.mxu0 0.0
        %7391 = vmatprep.subr.mxu0 0.0
        %7392 = vmatpush1.msra.mxu0 0.0
        %7393 = vmatprep.subr.mxu0 0.0
        %7394 = vmatpush1.msra.mxu0 0.0
        %7395 = vmatprep.subr.mxu0 0.0
        %7396 = vmatpush1.msra.mxu0 0.0
        %7397 = vmatprep.subr.mxu0 0.0
        %7398 = vmatpush1.msra.mxu0 0.0
        %7399 = vmatprep.subr.mxu0 0.0
        %7400 = vmatpush1.msra.mxu0 0.0
        %7401 = vmatprep.mubr.f32.mxu0 0.0
        %7402 = vmatmul.mubr.f32.gmra.mrb[0].mxu0 %v7314
        %v7403 = vpop.f32.mrb[0].mxu0
        %v7404 = vadd.f32 0.0, %v7403
        %v7405 = vpop.f32.mrb[0].mxu0
        %7406 = vmatprep.mubr.f32.mxu0 0.0
        %7407 = vmatmul.mubr.f32.gmra.mrb[0].mxu0 %v7317
        %v7408 = vpop.f32.mrb[0].mxu0
        %v7409 = vadd.f32 0.0, %v7408
        %v7410 = vpop.f32.mrb[0].mxu0
        %7411 = vmatprep.mubr.f32.mxu0 0.0
        %7412 = vmatmul.mubr.f32.gmra.mrb[0].mxu0 %v7320
        %v7413 = vpop.f32.mrb[0].mxu0
        %v7414 = vadd.f32 0.0, %v7413
        %v7415 = vpop.f32.mrb[0].mxu0
        %7416 = vmatprep.mubr.f32.mxu0 0.0
        %7417 = vmatmul.mubr.f32.gmra.mrb[0].mxu0 %v7323
        %v7418 = vpop.f32.mrb[0].mxu0
        %v7419 = vadd.f32 0.0, %v7418
        %v7420 = vpop.f32.mrb[0].mxu0
        %7421 = vmatprep.mubr.f32.mxu0 0.0
        %7422 = vmatmul.mubr.f32.gmra.mrb[0].mxu0 %v7326
        %v7423 = vpop.f32.mrb[0].mxu0
        %v7424 = vadd.f32 0.0, %v7423
        %v7425 = vpop.f32.mrb[0].mxu0
        %7426 = vmatprep.mubr.f32.mxu0 0.0
        %7427 = vmatmul.mubr.f32.gmra.mrb[0].mxu0 %v7329
        %v7428 = vpop.f32.mrb[0].mxu0
        %v7429 = vadd.f32 0.0, %v7428
        %v7430 = vpop.f32.mrb[0].mxu0
        %7431 = vmatprep.mubr.f32.mxu0 0.0
        %7432 = vmatmul.mubr.f32.gmra.mrb[0].mxu0 %v7332
        %v7433 = vpop.f32.mrb[0].mxu0
        %v7434 = vadd.f32 0.0, %v7433
        %v7435 = vpop.f32.mrb[0].mxu0
        %7436 = vmatprep.mubr.f32.mxu0 0.0
        %7437 = vmatmul.mubr.f32.gmra.mrb[0].mxu0 %v7335
        %v7438 = vpop.f32.mrb[0].mxu0
        %v7439 = vadd.f32 0.0, %v7438
        %v7440 = vpop.f32.mrb[0].mxu0
        %7441 = vdwg.mxu0
        %v7442 = vrcp.pop %v7404
        %v7443 = vrcp.pop %v7409
        %v7444 = vrcp.pop %v7414
        %v7445 = vrcp.pop %v7419
        %v7446 = vrcp.pop %v7424
        %v7447 = vrcp.pop %v7429
        %v7448 = vrcp.pop %v7434
        %v7449 = vrcp.pop %v7439
        %7451 = vset.pattern.permute.xlu0 0
        %7452 = vperm.xlu0 %7451, %v7442
        %v7453 = vpop.permute.xlu0 %7452
        %7456 = vset.pattern.permute.xlu0 0
        %7457 = vperm.xlu0 %7456, %v7443
        %v7458 = vpop.permute.xlu0 %7457
        %7461 = vset.pattern.permute.xlu0 0
        %7462 = vperm.xlu0 %7461, %v7444
        %v7463 = vpop.permute.xlu0 %7462
        %7466 = vset.pattern.permute.xlu0 0
        %7467 = vperm.xlu0 %7466, %v7445
        %v7468 = vpop.permute.xlu0 %7467
        %7471 = vset.pattern.permute.xlu0 0
        %7472 = vperm.xlu0 %7471, %v7446
        %v7473 = vpop.permute.xlu0 %7472
        %7476 = vset.pattern.permute.xlu0 0
        %7477 = vperm.xlu0 %7476, %v7447
        %v7478 = vpop.permute.xlu0 %7477
        %7481 = vset.pattern.permute.xlu0 0
        %7482 = vperm.xlu0 %7481, %v7448
        %v7483 = vpop.permute.xlu0 %7482
        %7486 = vset.pattern.permute.xlu0 0
        %7487 = vperm.xlu0 %7486, %v7449
        %v7488 = vpop.permute.xlu0 %7487
        %v7490 = vmul.f32 %v7298, %v7453
        %v7491 = vmul.f32 %v7300, %v7458
        %v7492 = vmul.f32 %v7302, %v7463
        %v7493 = vmul.f32 %v7304, %v7468
        %v7494 = vmul.f32 %v7306, %v7473
        %v7495 = vmul.f32 %v7308, %v7478
        %v7496 = vmul.f32 %v7310, %v7483
        %v7497 = vmul.f32 %v7312, %v7488
        %7498 = vrot.lane.b32.xlu0 %v6036, 96
        %v7499 = vpop.permute.xlu0 %7498
        %7500 = vrot.lane.b32.xlu0 %v6041, 96
        %v7501 = vpop.permute.xlu0 %7500
        %7502 = vrot.lane.b32.xlu0 %v6046, 96
        %v7503 = vpop.permute.xlu0 %7502
        %7504 = vrot.lane.b32.xlu0 %v6051, 96
        %v7505 = vpop.permute.xlu0 %7504
        %7506 = vrot.lane.b32.xlu0 %v6056, 96
        %v7507 = vpop.permute.xlu0 %7506
        %7508 = vrot.lane.b32.xlu0 %v6061, 96
        %v7509 = vpop.permute.xlu0 %7508
        %7510 = vrot.lane.b32.xlu0 %v6066, 96
        %v7511 = vpop.permute.xlu0 %7510
        %7512 = vrot.lane.b32.xlu0 %v6071, 96
        %v7513 = vpop.permute.xlu0 %7512
        %v7523 = vsel %vm3737, %v7490, 0
        %v7526 = vsel %vm3737, %v7491, 0
        %v7529 = vsel %vm3737, %v7492, 0
        %v7532 = vsel %vm3737, %v7493, 0
        %v7535 = vsel %vm3737, %v7494, 0
        %v7538 = vsel %vm3737, %v7495, 0
        %v7541 = vsel %vm3737, %v7496, 0
        %v7544 = vsel %vm3737, %v7497, 0
        %7546 = vmatprep.subr.mxu0 0.0
        %7547 = vmatpush1.msra.mxu0 %v7499
        %7548 = vmatprep.subr.mxu0 0.0
        %7549 = vmatpush1.msra.mxu0 %v7501
        %7550 = vmatprep.subr.mxu0 0.0
        %7551 = vmatpush1.msra.mxu0 %v7503
        %7552 = vmatprep.subr.mxu0 0.0
        %7553 = vmatpush1.msra.mxu0 %v7505
        %7554 = vmatprep.subr.mxu0 0.0
        %7555 = vmatpush1.msra.mxu0 %v7507
        %7556 = vmatprep.subr.mxu0 0.0
        %7557 = vmatpush1.msra.mxu0 %v7509
        %7558 = vmatprep.subr.mxu0 0.0
        %7559 = vmatpush1.msra.mxu0 %v7511
        %7560 = vmatprep.subr.mxu0 0.0
        %7561 = vmatpush1.msra.mxu0 %v7513
        %7562 = vmatprep.subr.mxu0 0.0
        %7563 = vmatpush1.msra.mxu0 0.0
        %7564 = vmatprep.subr.mxu0 0.0
        %7565 = vmatpush1.msra.mxu0 0.0
        %7566 = vmatprep.subr.mxu0 0.0
        %7567 = vmatpush1.msra.mxu0 0.0
        %7568 = vmatprep.subr.mxu0 0.0
        %7569 = vmatpush1.msra.mxu0 0.0
        %7570 = vmatprep.subr.mxu0 0.0
        %7571 = vmatpush1.msra.mxu0 0.0
        %7572 = vmatprep.subr.mxu0 0.0
        %7573 = vmatpush1.msra.mxu0 0.0
        %7574 = vmatprep.subr.mxu0 0.0
        %7575 = vmatpush1.msra.mxu0 0.0
        %7576 = vmatprep.subr.mxu0 0.0
        %7577 = vmatpush1.msra.mxu0 0.0
        %7578 = vmatprep.subr.mxu0 0.0
        %7579 = vmatpush1.msra.mxu0 0.0
        %7580 = vmatprep.subr.mxu0 0.0
        %7581 = vmatpush1.msra.mxu0 0.0
        %7582 = vmatprep.subr.mxu0 0.0
        %7583 = vmatpush1.msra.mxu0 0.0
        %7584 = vmatprep.subr.mxu0 0.0
        %7585 = vmatpush1.msra.mxu0 0.0
        %7586 = vmatprep.subr.mxu0 0.0
        %7587 = vmatpush1.msra.mxu0 0.0
        %7588 = vmatprep.subr.mxu0 0.0
        %7589 = vmatpush1.msra.mxu0 0.0
        %7590 = vmatprep.subr.mxu0 0.0
        %7591 = vmatpush1.msra.mxu0 0.0
        %7592 = vmatprep.subr.mxu0 0.0
        %7593 = vmatpush1.msra.mxu0 0.0
        %7594 = vmatprep.subr.mxu0 0.0
        %7595 = vmatpush1.msra.mxu0 0.0
        %7596 = vmatprep.subr.mxu0 0.0
        %7597 = vmatpush1.msra.mxu0 0.0
        %7598 = vmatprep.subr.mxu0 0.0
        %7599 = vmatpush1.msra.mxu0 0.0
        %7600 = vmatprep.subr.mxu0 0.0
        %7601 = vmatpush1.msra.mxu0 0.0
        %7602 = vmatprep.subr.mxu0 0.0
        %7603 = vmatpush1.msra.mxu0 0.0
        %7604 = vmatprep.subr.mxu0 0.0
        %7605 = vmatpush1.msra.mxu0 0.0
        %7606 = vmatprep.subr.mxu0 0.0
        %7607 = vmatpush1.msra.mxu0 0.0
        %7608 = vmatprep.subr.mxu0 0.0
        %7609 = vmatpush1.msra.mxu0 0.0
        %7610 = vmatprep.mubr.f32.mxu0 0.0
        %7611 = vmatmul.mubr.f32.gmra.mrb[0].mxu0 %v7523
        %v7612 = vpop.f32.mrb[0].mxu0
        %v7613 = vadd.f32 0.0, %v7612
        %v7614 = vpop.f32.mrb[0].mxu0
        %7615 = vmatprep.mubr.f32.mxu0 0.0
        %7616 = vmatmul.mubr.f32.gmra.mrb[0].mxu0 %v7526
        %v7617 = vpop.f32.mrb[0].mxu0
        %v7618 = vadd.f32 0.0, %v7617
        %v7619 = vpop.f32.mrb[0].mxu0
        %7620 = vmatprep.mubr.f32.mxu0 0.0
        %7621 = vmatmul.mubr.f32.gmra.mrb[0].mxu0 %v7529
        %v7622 = vpop.f32.mrb[0].mxu0
        %v7623 = vadd.f32 0.0, %v7622
        %v7624 = vpop.f32.mrb[0].mxu0
        %7625 = vmatprep.mubr.f32.mxu0 0.0
        %7626 = vmatmul.mubr.f32.gmra.mrb[0].mxu0 %v7532
        %v7627 = vpop.f32.mrb[0].mxu0
        %v7628 = vadd.f32 0.0, %v7627
        %v7629 = vpop.f32.mrb[0].mxu0
        %7630 = vmatprep.mubr.f32.mxu0 0.0
        %7631 = vmatmul.mubr.f32.gmra.mrb[0].mxu0 %v7535
        %v7632 = vpop.f32.mrb[0].mxu0
        %v7633 = vadd.f32 0.0, %v7632
        %v7634 = vpop.f32.mrb[0].mxu0
        %7635 = vmatprep.mubr.f32.mxu0 0.0
        %7636 = vmatmul.mubr.f32.gmra.mrb[0].mxu0 %v7538
        %v7637 = vpop.f32.mrb[0].mxu0
        %v7638 = vadd.f32 0.0, %v7637
        %v7639 = vpop.f32.mrb[0].mxu0
        %7640 = vmatprep.mubr.f32.mxu0 0.0
        %7641 = vmatmul.mubr.f32.gmra.mrb[0].mxu0 %v7541
        %v7642 = vpop.f32.mrb[0].mxu0
        %v7643 = vadd.f32 0.0, %v7642
        %v7644 = vpop.f32.mrb[0].mxu0
        %7645 = vmatprep.mubr.f32.mxu0 0.0
        %7646 = vmatmul.mubr.f32.gmra.mrb[0].mxu0 %v7544
        %v7647 = vpop.f32.mrb[0].mxu0
        %v7648 = vadd.f32 0.0, %v7647
        %v7649 = vpop.f32.mrb[0].mxu0
        %7650 = vdwg.mxu0
        %7651 = vset.pattern.permute.xlu0 3
        %7652 = vperm.xlu0 %7651, %v6169
        %v7653 = vpop.permute.xlu0 %7652
        %7655 = vset.pattern.permute.xlu0 3
        %7656 = vperm.xlu0 %7655, %v6174
        %v7657 = vpop.permute.xlu0 %7656
        %7659 = vset.pattern.permute.xlu0 3
        %7660 = vperm.xlu0 %7659, %v6179
        %v7661 = vpop.permute.xlu0 %7660
        %7663 = vset.pattern.permute.xlu0 3
        %7664 = vperm.xlu0 %7663, %v6184
        %v7665 = vpop.permute.xlu0 %7664
        %7667 = vset.pattern.permute.xlu0 3
        %7668 = vperm.xlu0 %7667, %v6189
        %v7669 = vpop.permute.xlu0 %7668
        %7671 = vset.pattern.permute.xlu0 3
        %7672 = vperm.xlu0 %7671, %v6194
        %v7673 = vpop.permute.xlu0 %7672
        %7675 = vset.pattern.permute.xlu0 3
        %7676 = vperm.xlu0 %7675, %v6199
        %v7677 = vpop.permute.xlu0 %7676
        %7679 = vset.pattern.permute.xlu0 3
        %7680 = vperm.xlu0 %7679, %v6204
        %v7681 = vpop.permute.xlu0 %7680
        %v7683 = vlaneseq
        %v7684 = vshrl.u32 %v7683, 7
        %v7685 = vsub.s32 3, %v7684
        %v7686 = vrot.slane %v6278, %v7685
        %v7687 = vadd.f32 %v7653, %v7686
        %v7688 = vadd.f32 %v7657, %v7686
        %v7689 = vadd.f32 %v7661, %v7686
        %v7690 = vadd.f32 %v7665, %v7686
        %v7691 = vadd.f32 %v7669, %v7686
        %v7692 = vadd.f32 %v7673, %v7686
        %v7693 = vadd.f32 %v7677, %v7686
        %v7694 = vadd.f32 %v7681, %v7686
        %vm7695 = vcmp.gt.f32.partialorder %v7687, 0.0
        %vm7696 = vcmp.gt.f32.partialorder %v7688, 0.0
        %vm7697 = vcmp.gt.f32.partialorder %v7689, 0.0
        %vm7698 = vcmp.gt.f32.partialorder %v7690, 0.0
        %vm7699 = vcmp.gt.f32.partialorder %v7691, 0.0
        %vm7700 = vcmp.gt.f32.partialorder %v7692, 0.0
        %vm7701 = vcmp.gt.f32.partialorder %v7693, 0.0
        %vm7702 = vcmp.gt.f32.partialorder %v7694, 0.0
        %v7703 = vmul.f32 %v7687, 0.2
        %v7704 = vmul.f32 %v7688, 0.2
        %v7705 = vmul.f32 %v7689, 0.2
        %v7706 = vmul.f32 %v7690, 0.2
        %v7707 = vmul.f32 %v7691, 0.2
        %v7708 = vmul.f32 %v7692, 0.2
        %v7709 = vmul.f32 %v7693, 0.2
        %v7710 = vmul.f32 %v7694, 0.2
        %v7711 = vsel %vm7695, %v7687, %v7703
        %v7712 = vsel %vm7696, %v7688, %v7704
        %v7713 = vsel %vm7697, %v7689, %v7705
        %v7714 = vsel %vm7698, %v7690, %v7706
        %v7715 = vsel %vm7699, %v7691, %v7707
        %v7716 = vsel %vm7700, %v7692, %v7708
        %v7717 = vsel %vm7701, %v7693, %v7709
        %v7718 = vsel %vm7702, %v7694, %v7710
        %v7719 = vadd.f32 %v7711, %v3595
        %v7720 = vadd.f32 %v7712, %v3596
        %v7721 = vadd.f32 %v7713, %v3597
        %v7722 = vadd.f32 %v7714, %v3598
        %v7723 = vadd.f32 %v7715, %v3599
        %v7724 = vadd.f32 %v7716, %v3600
        %v7725 = vadd.f32 %v7717, %v3601
        %v7726 = vadd.f32 %v7718, %v3602
        %v7727 = vsel %vm3737, %v7719, -inf
        %7728 = vmax.xlane.f32.xlu0 %v7727
        %v7729 = vpop.xlane.xlu0 %7728
        %v7730 = vsel %vm3737, %v7720, -inf
        %7731 = vmax.xlane.f32.xlu0 %v7730
        %v7732 = vpop.xlane.xlu0 %7731
        %v7733 = vsel %vm3737, %v7721, -inf
        %7734 = vmax.xlane.f32.xlu0 %v7733
        %v7735 = vpop.xlane.xlu0 %7734
        %v7736 = vsel %vm3737, %v7722, -inf
        %7737 = vmax.xlane.f32.xlu0 %v7736
        %v7738 = vpop.xlane.xlu0 %7737
        %v7739 = vsel %vm3737, %v7723, -inf
        %7740 = vmax.xlane.f32.xlu0 %v7739
        %v7741 = vpop.xlane.xlu0 %7740
        %v7742 = vsel %vm3737, %v7724, -inf
        %7743 = vmax.xlane.f32.xlu0 %v7742
        %v7744 = vpop.xlane.xlu0 %7743
        %v7745 = vsel %vm3737, %v7725, -inf
        %7746 = vmax.xlane.f32.xlu0 %v7745
        %v7747 = vpop.xlane.xlu0 %7746
        %v7748 = vsel %vm3737, %v7726, -inf
        %7749 = vmax.xlane.f32.xlu0 %v7748
        %v7750 = vpop.xlane.xlu0 %7749
        %v7751 = vsub.f32 %v7719, %v7729
        %v7752 = vsub.f32 %v7720, %v7732
        %v7753 = vsub.f32 %v7721, %v7735
        %v7754 = vsub.f32 %v7722, %v7738
        %v7755 = vsub.f32 %v7723, %v7741
        %v7756 = vsub.f32 %v7724, %v7744
        %v7757 = vsub.f32 %v7725, %v7747
        %v7758 = vsub.f32 %v7726, %v7750
        %v7759 = vmul.f32 %v7751, 1.442695
        %v7760 = vpow.pop %v7759
        %v7761 = vmul.f32 %v7752, 1.442695
        %v7762 = vpow.pop %v7761
        %v7763 = vmul.f32 %v7753, 1.442695
        %v7764 = vpow.pop %v7763
        %v7765 = vmul.f32 %v7754, 1.442695
        %v7766 = vpow.pop %v7765
        %v7767 = vmul.f32 %v7755, 1.442695
        %v7768 = vpow.pop %v7767
        %v7769 = vmul.f32 %v7756, 1.442695
        %v7770 = vpow.pop %v7769
        %v7771 = vmul.f32 %v7757, 1.442695
        %v7772 = vpow.pop %v7771
        %v7773 = vmul.f32 %v7758, 1.442695
        %v7774 = vpow.pop %v7773
        %v7776 = vsel %vm3737, %v7760, 0
        %v7779 = vsel %vm3737, %v7762, 0
        %v7782 = vsel %vm3737, %v7764, 0
        %v7785 = vsel %vm3737, %v7766, 0
        %v7788 = vsel %vm3737, %v7768, 0
        %v7791 = vsel %vm3737, %v7770, 0
        %v7794 = vsel %vm3737, %v7772, 0
        %v7797 = vsel %vm3737, %v7774, 0
        %7799 = vmatprep.subr.mxu0 0.0
        %7800 = vmatpush1.msra.mxu0 1.0
        %7801 = vmatprep.subr.mxu0 0.0
        %7802 = vmatpush1.msra.mxu0 1.0
        %7803 = vmatprep.subr.mxu0 0.0
        %7804 = vmatpush1.msra.mxu0 1.0
        %7805 = vmatprep.subr.mxu0 0.0
        %7806 = vmatpush1.msra.mxu0 1.0
        %7807 = vmatprep.subr.mxu0 0.0
        %7808 = vmatpush1.msra.mxu0 1.0
        %7809 = vmatprep.subr.mxu0 0.0
        %7810 = vmatpush1.msra.mxu0 1.0
        %7811 = vmatprep.subr.mxu0 0.0
        %7812 = vmatpush1.msra.mxu0 1.0
        %7813 = vmatprep.subr.mxu0 0.0
        %7814 = vmatpush1.msra.mxu0 1.0
        %7815 = vmatprep.subr.mxu0 0.0
        %7816 = vmatpush1.msra.mxu0 0.0
        %7817 = vmatprep.subr.mxu0 0.0
        %7818 = vmatpush1.msra.mxu0 0.0
        %7819 = vmatprep.subr.mxu0 0.0
        %7820 = vmatpush1.msra.mxu0 0.0
        %7821 = vmatprep.subr.mxu0 0.0
        %7822 = vmatpush1.msra.mxu0 0.0
        %7823 = vmatprep.subr.mxu0 0.0
        %7824 = vmatpush1.msra.mxu0 0.0
        %7825 = vmatprep.subr.mxu0 0.0
        %7826 = vmatpush1.msra.mxu0 0.0
        %7827 = vmatprep.subr.mxu0 0.0
        %7828 = vmatpush1.msra.mxu0 0.0
        %7829 = vmatprep.subr.mxu0 0.0
        %7830 = vmatpush1.msra.mxu0 0.0
        %7831 = vmatprep.subr.mxu0 0.0
        %7832 = vmatpush1.msra.mxu0 0.0
        %7833 = vmatprep.subr.mxu0 0.0
        %7834 = vmatpush1.msra.mxu0 0.0
        %7835 = vmatprep.subr.mxu0 0.0
        %7836 = vmatpush1.msra.mxu0 0.0
        %7837 = vmatprep.subr.mxu0 0.0
        %7838 = vmatpush1.msra.mxu0 0.0
        %7839 = vmatprep.subr.mxu0 0.0
        %7840 = vmatpush1.msra.mxu0 0.0
        %7841 = vmatprep.subr.mxu0 0.0
        %7842 = vmatpush1.msra.mxu0 0.0
        %7843 = vmatprep.subr.mxu0 0.0
        %7844 = vmatpush1.msra.mxu0 0.0
        %7845 = vmatprep.subr.mxu0 0.0
        %7846 = vmatpush1.msra.mxu0 0.0
        %7847 = vmatprep.subr.mxu0 0.0
        %7848 = vmatpush1.msra.mxu0 0.0
        %7849 = vmatprep.subr.mxu0 0.0
        %7850 = vmatpush1.msra.mxu0 0.0
        %7851 = vmatprep.subr.mxu0 0.0
        %7852 = vmatpush1.msra.mxu0 0.0
        %7853 = vmatprep.subr.mxu0 0.0
        %7854 = vmatpush1.msra.mxu0 0.0
        %7855 = vmatprep.subr.mxu0 0.0
        %7856 = vmatpush1.msra.mxu0 0.0
        %7857 = vmatprep.subr.mxu0 0.0
        %7858 = vmatpush1.msra.mxu0 0.0
        %7859 = vmatprep.subr.mxu0 0.0
        %7860 = vmatpush1.msra.mxu0 0.0
        %7861 = vmatprep.subr.mxu0 0.0
        %7862 = vmatpush1.msra.mxu0 0.0
        %7863 = vmatprep.mubr.f32.mxu0 0.0
        %7864 = vmatmul.mubr.f32.gmra.mrb[0].mxu0 %v7776
        %v7865 = vpop.f32.mrb[0].mxu0
        %v7866 = vadd.f32 0.0, %v7865
        %v7867 = vpop.f32.mrb[0].mxu0
        %7868 = vmatprep.mubr.f32.mxu0 0.0
        %7869 = vmatmul.mubr.f32.gmra.mrb[0].mxu0 %v7779
        %v7870 = vpop.f32.mrb[0].mxu0
        %v7871 = vadd.f32 0.0, %v7870
        %v7872 = vpop.f32.mrb[0].mxu0
        %7873 = vmatprep.mubr.f32.mxu0 0.0
        %7874 = vmatmul.mubr.f32.gmra.mrb[0].mxu0 %v7782
        %v7875 = vpop.f32.mrb[0].mxu0
        %v7876 = vadd.f32 0.0, %v7875
        %v7877 = vpop.f32.mrb[0].mxu0
        %7878 = vmatprep.mubr.f32.mxu0 0.0
        %7879 = vmatmul.mubr.f32.gmra.mrb[0].mxu0 %v7785
        %v7880 = vpop.f32.mrb[0].mxu0
        %v7881 = vadd.f32 0.0, %v7880
        %v7882 = vpop.f32.mrb[0].mxu0
        %7883 = vmatprep.mubr.f32.mxu0 0.0
        %7884 = vmatmul.mubr.f32.gmra.mrb[0].mxu0 %v7788
        %v7885 = vpop.f32.mrb[0].mxu0
        %v7886 = vadd.f32 0.0, %v7885
        %v7887 = vpop.f32.mrb[0].mxu0
        %7888 = vmatprep.mubr.f32.mxu0 0.0
        %7889 = vmatmul.mubr.f32.gmra.mrb[0].mxu0 %v7791
        %v7890 = vpop.f32.mrb[0].mxu0
        %v7891 = vadd.f32 0.0, %v7890
        %v7892 = vpop.f32.mrb[0].mxu0
        %7893 = vmatprep.mubr.f32.mxu0 0.0
        %7894 = vmatmul.mubr.f32.gmra.mrb[0].mxu0 %v7794
        %v7895 = vpop.f32.mrb[0].mxu0
        %v7896 = vadd.f32 0.0, %v7895
        %v7897 = vpop.f32.mrb[0].mxu0
        %7898 = vmatprep.mubr.f32.mxu0 0.0
        %7899 = vmatmul.mubr.f32.gmra.mrb[0].mxu0 %v7797
        %v7900 = vpop.f32.mrb[0].mxu0
        %v7901 = vadd.f32 0.0, %v7900
        %v7902 = vpop.f32.mrb[0].mxu0
        %7903 = vdwg.mxu0
        %v7904 = vrcp.pop %v7866
        %v7905 = vrcp.pop %v7871
        %v7906 = vrcp.pop %v7876
        %v7907 = vrcp.pop %v7881
        %v7908 = vrcp.pop %v7886
        %v7909 = vrcp.pop %v7891
        %v7910 = vrcp.pop %v7896
        %v7911 = vrcp.pop %v7901
        %7913 = vset.pattern.permute.xlu0 0
        %7914 = vperm.xlu0 %7913, %v7904
        %v7915 = vpop.permute.xlu0 %7914
        %7918 = vset.pattern.permute.xlu0 0
        %7919 = vperm.xlu0 %7918, %v7905
        %v7920 = vpop.permute.xlu0 %7919
        %7923 = vset.pattern.permute.xlu0 0
        %7924 = vperm.xlu0 %7923, %v7906
        %v7925 = vpop.permute.xlu0 %7924
        %7928 = vset.pattern.permute.xlu0 0
        %7929 = vperm.xlu0 %7928, %v7907
        %v7930 = vpop.permute.xlu0 %7929
        %7933 = vset.pattern.permute.xlu0 0
        %7934 = vperm.xlu0 %7933, %v7908
        %v7935 = vpop.permute.xlu0 %7934
        %7938 = vset.pattern.permute.xlu0 0
        %7939 = vperm.xlu0 %7938, %v7909
        %v7940 = vpop.permute.xlu0 %7939
        %7943 = vset.pattern.permute.xlu0 0
        %7944 = vperm.xlu0 %7943, %v7910
        %v7945 = vpop.permute.xlu0 %7944
        %7948 = vset.pattern.permute.xlu0 0
        %7949 = vperm.xlu0 %7948, %v7911
        %v7950 = vpop.permute.xlu0 %7949
        %v7952 = vmul.f32 %v7760, %v7915
        %v7953 = vmul.f32 %v7762, %v7920
        %v7954 = vmul.f32 %v7764, %v7925
        %v7955 = vmul.f32 %v7766, %v7930
        %v7956 = vmul.f32 %v7768, %v7935
        %v7957 = vmul.f32 %v7770, %v7940
        %v7958 = vmul.f32 %v7772, %v7945
        %v7959 = vmul.f32 %v7774, %v7950
        %7960 = vrot.lane.b32.xlu0 %v6036, 80
        %v7961 = vpop.permute.xlu0 %7960
        %7962 = vrot.lane.b32.xlu0 %v6041, 80
        %v7963 = vpop.permute.xlu0 %7962
        %7964 = vrot.lane.b32.xlu0 %v6046, 80
        %v7965 = vpop.permute.xlu0 %7964
        %7966 = vrot.lane.b32.xlu0 %v6051, 80
        %v7967 = vpop.permute.xlu0 %7966
        %7968 = vrot.lane.b32.xlu0 %v6056, 80
        %v7969 = vpop.permute.xlu0 %7968
        %7970 = vrot.lane.b32.xlu0 %v6061, 80
        %v7971 = vpop.permute.xlu0 %7970
        %7972 = vrot.lane.b32.xlu0 %v6066, 80
        %v7973 = vpop.permute.xlu0 %7972
        %7974 = vrot.lane.b32.xlu0 %v6071, 80
        %v7975 = vpop.permute.xlu0 %7974
        %v7985 = vsel %vm3737, %v7952, 0
        %v7988 = vsel %vm3737, %v7953, 0
        %v7991 = vsel %vm3737, %v7954, 0
        %v7994 = vsel %vm3737, %v7955, 0
        %v7997 = vsel %vm3737, %v7956, 0
        %v8000 = vsel %vm3737, %v7957, 0
        %v8003 = vsel %vm3737, %v7958, 0
        %v8006 = vsel %vm3737, %v7959, 0
        %8008 = vmatprep.subr.mxu0 0.0
        %8009 = vmatpush1.msra.mxu0 %v7961
        %8010 = vmatprep.subr.mxu0 0.0
        %8011 = vmatpush1.msra.mxu0 %v7963
        %8012 = vmatprep.subr.mxu0 0.0
        %8013 = vmatpush1.msra.mxu0 %v7965
        %8014 = vmatprep.subr.mxu0 0.0
        %8015 = vmatpush1.msra.mxu0 %v7967
        %8016 = vmatprep.subr.mxu0 0.0
        %8017 = vmatpush1.msra.mxu0 %v7969
        %8018 = vmatprep.subr.mxu0 0.0
        %8019 = vmatpush1.msra.mxu0 %v7971
        %8020 = vmatprep.subr.mxu0 0.0
        %8021 = vmatpush1.msra.mxu0 %v7973
        %8022 = vmatprep.subr.mxu0 0.0
        %8023 = vmatpush1.msra.mxu0 %v7975
        %8024 = vmatprep.subr.mxu0 0.0
        %8025 = vmatpush1.msra.mxu0 0.0
        %8026 = vmatprep.subr.mxu0 0.0
        %8027 = vmatpush1.msra.mxu0 0.0
        %8028 = vmatprep.subr.mxu0 0.0
        %8029 = vmatpush1.msra.mxu0 0.0
        %8030 = vmatprep.subr.mxu0 0.0
        %8031 = vmatpush1.msra.mxu0 0.0
        %8032 = vmatprep.subr.mxu0 0.0
        %8033 = vmatpush1.msra.mxu0 0.0
        %8034 = vmatprep.subr.mxu0 0.0
        %8035 = vmatpush1.msra.mxu0 0.0
        %8036 = vmatprep.subr.mxu0 0.0
        %8037 = vmatpush1.msra.mxu0 0.0
        %8038 = vmatprep.subr.mxu0 0.0
        %8039 = vmatpush1.msra.mxu0 0.0
        %8040 = vmatprep.subr.mxu0 0.0
        %8041 = vmatpush1.msra.mxu0 0.0
        %8042 = vmatprep.subr.mxu0 0.0
        %8043 = vmatpush1.msra.mxu0 0.0
        %8044 = vmatprep.subr.mxu0 0.0
        %8045 = vmatpush1.msra.mxu0 0.0
        %8046 = vmatprep.subr.mxu0 0.0
        %8047 = vmatpush1.msra.mxu0 0.0
        %8048 = vmatprep.subr.mxu0 0.0
        %8049 = vmatpush1.msra.mxu0 0.0
        %8050 = vmatprep.subr.mxu0 0.0
        %8051 = vmatpush1.msra.mxu0 0.0
        %8052 = vmatprep.subr.mxu0 0.0
        %8053 = vmatpush1.msra.mxu0 0.0
        %8054 = vmatprep.subr.mxu0 0.0
        %8055 = vmatpush1.msra.mxu0 0.0
        %8056 = vmatprep.subr.mxu0 0.0
        %8057 = vmatpush1.msra.mxu0 0.0
        %8058 = vmatprep.subr.mxu0 0.0
        %8059 = vmatpush1.msra.mxu0 0.0
        %8060 = vmatprep.subr.mxu0 0.0
        %8061 = vmatpush1.msra.mxu0 0.0
        %8062 = vmatprep.subr.mxu0 0.0
        %8063 = vmatpush1.msra.mxu0 0.0
        %8064 = vmatprep.subr.mxu0 0.0
        %8065 = vmatpush1.msra.mxu0 0.0
        %8066 = vmatprep.subr.mxu0 0.0
        %8067 = vmatpush1.msra.mxu0 0.0
        %8068 = vmatprep.subr.mxu0 0.0
        %8069 = vmatpush1.msra.mxu0 0.0
        %8070 = vmatprep.subr.mxu0 0.0
        %8071 = vmatpush1.msra.mxu0 0.0
        %8072 = vmatprep.mubr.f32.mxu0 0.0
        %8073 = vmatmul.mubr.f32.gmra.mrb[0].mxu0 %v7985
        %v8074 = vpop.f32.mrb[0].mxu0
        %v8075 = vadd.f32 0.0, %v8074
        %v8076 = vpop.f32.mrb[0].mxu0
        %8077 = vmatprep.mubr.f32.mxu0 0.0
        %8078 = vmatmul.mubr.f32.gmra.mrb[0].mxu0 %v7988
        %v8079 = vpop.f32.mrb[0].mxu0
        %v8080 = vadd.f32 0.0, %v8079
        %v8081 = vpop.f32.mrb[0].mxu0
        %8082 = vmatprep.mubr.f32.mxu0 0.0
        %8083 = vmatmul.mubr.f32.gmra.mrb[0].mxu0 %v7991
        %v8084 = vpop.f32.mrb[0].mxu0
        %v8085 = vadd.f32 0.0, %v8084
        %v8086 = vpop.f32.mrb[0].mxu0
        %8087 = vmatprep.mubr.f32.mxu0 0.0
        %8088 = vmatmul.mubr.f32.gmra.mrb[0].mxu0 %v7994
        %v8089 = vpop.f32.mrb[0].mxu0
        %v8090 = vadd.f32 0.0, %v8089
        %v8091 = vpop.f32.mrb[0].mxu0
        %8092 = vmatprep.mubr.f32.mxu0 0.0
        %8093 = vmatmul.mubr.f32.gmra.mrb[0].mxu0 %v7997
        %v8094 = vpop.f32.mrb[0].mxu0
        %v8095 = vadd.f32 0.0, %v8094
        %v8096 = vpop.f32.mrb[0].mxu0
        %8097 = vmatprep.mubr.f32.mxu0 0.0
        %8098 = vmatmul.mubr.f32.gmra.mrb[0].mxu0 %v8000
        %v8099 = vpop.f32.mrb[0].mxu0
        %v8100 = vadd.f32 0.0, %v8099
        %v8101 = vpop.f32.mrb[0].mxu0
        %8102 = vmatprep.mubr.f32.mxu0 0.0
        %8103 = vmatmul.mubr.f32.gmra.mrb[0].mxu0 %v8003
        %v8104 = vpop.f32.mrb[0].mxu0
        %v8105 = vadd.f32 0.0, %v8104
        %v8106 = vpop.f32.mrb[0].mxu0
        %8107 = vmatprep.mubr.f32.mxu0 0.0
        %8108 = vmatmul.mubr.f32.gmra.mrb[0].mxu0 %v8006
        %v8109 = vpop.f32.mrb[0].mxu0
        %v8110 = vadd.f32 0.0, %v8109
        %v8111 = vpop.f32.mrb[0].mxu0
        %8112 = vdwg.mxu0
        %8121 = vrot.lane.b32.xlu0 %v7151, 16
        %v8122 = vpop.permute.xlu0 %8121
        %8123 = vrot.lane.b32.xlu0 %v7156, 16
        %v8124 = vpop.permute.xlu0 %8123
        %8125 = vrot.lane.b32.xlu0 %v7161, 16
        %v8126 = vpop.permute.xlu0 %8125
        %8127 = vrot.lane.b32.xlu0 %v7166, 16
        %v8128 = vpop.permute.xlu0 %8127
        %8129 = vrot.lane.b32.xlu0 %v7171, 16
        %v8130 = vpop.permute.xlu0 %8129
        %8131 = vrot.lane.b32.xlu0 %v7176, 16
        %v8132 = vpop.permute.xlu0 %8131
        %8133 = vrot.lane.b32.xlu0 %v7181, 16
        %v8134 = vpop.permute.xlu0 %8133
        %8135 = vrot.lane.b32.xlu0 %v7186, 16
        %v8136 = vpop.permute.xlu0 %8135
        %8153 = vrot.lane.b32.xlu0 %v7613, 32
        %v8154 = vpop.permute.xlu0 %8153
        %8155 = vrot.lane.b32.xlu0 %v7618, 32
        %v8156 = vpop.permute.xlu0 %8155
        %8157 = vrot.lane.b32.xlu0 %v7623, 32
        %v8158 = vpop.permute.xlu0 %8157
        %8159 = vrot.lane.b32.xlu0 %v7628, 32
        %v8160 = vpop.permute.xlu0 %8159
        %8161 = vrot.lane.b32.xlu0 %v7633, 32
        %v8162 = vpop.permute.xlu0 %8161
        %8163 = vrot.lane.b32.xlu0 %v7638, 32
        %v8164 = vpop.permute.xlu0 %8163
        %8165 = vrot.lane.b32.xlu0 %v7643, 32
        %v8166 = vpop.permute.xlu0 %8165
        %8167 = vrot.lane.b32.xlu0 %v7648, 32
        %v8168 = vpop.permute.xlu0 %8167
        %8185 = vrot.lane.b32.xlu0 %v8075, 48
        %v8186 = vpop.permute.xlu0 %8185
        %8187 = vrot.lane.b32.xlu0 %v8080, 48
        %v8188 = vpop.permute.xlu0 %8187
        %8189 = vrot.lane.b32.xlu0 %v8085, 48
        %v8190 = vpop.permute.xlu0 %8189
        %8191 = vrot.lane.b32.xlu0 %v8090, 48
        %v8192 = vpop.permute.xlu0 %8191
        %8193 = vrot.lane.b32.xlu0 %v8095, 48
        %v8194 = vpop.permute.xlu0 %8193
        %8195 = vrot.lane.b32.xlu0 %v8100, 48
        %v8196 = vpop.permute.xlu0 %8195
        %8197 = vrot.lane.b32.xlu0 %v8105, 48
        %v8198 = vpop.permute.xlu0 %8197
        %8199 = vrot.lane.b32.xlu0 %v8110, 48
        %v8200 = vpop.permute.xlu0 %8199
        %v8209 = vsel %vm5872, %v6689, %v8122
        %v8210 = vsel %vm5872, %v6694, %v8124
        %v8211 = vsel %vm5872, %v6699, %v8126
        %v8212 = vsel %vm5872, %v6704, %v8128
        %v8213 = vsel %vm5872, %v6709, %v8130
        %v8214 = vsel %vm5872, %v6714, %v8132
        %v8215 = vsel %vm5872, %v6719, %v8134
        %v8216 = vsel %vm5872, %v6724, %v8136
        %v8217 = vsel %vm3459, %v8209, %v8154
        %v8218 = vsel %vm3459, %v8210, %v8156
        %v8219 = vsel %vm3459, %v8211, %v8158
        %v8220 = vsel %vm3459, %v8212, %v8160
        %v8221 = vsel %vm3459, %v8213, %v8162
        %v8222 = vsel %vm3459, %v8214, %v8164
        %v8223 = vsel %vm3459, %v8215, %v8166
        %v8224 = vsel %vm3459, %v8216, %v8168
        %v8225 = vsel %vm769, %v8217, %v8186
        %v8226 = vsel %vm769, %v8218, %v8188
        %v8227 = vsel %vm769, %v8219, %v8190
        %v8228 = vsel %vm769, %v8220, %v8192
        %v8229 = vsel %vm769, %v8221, %v8194
        %v8230 = vsel %vm769, %v8222, %v8196
        %v8231 = vsel %vm769, %v8223, %v8198
        %v8232 = vsel %vm769, %v8224, %v8200
        %vm8233 = vcmp.gt.f32.partialorder %v8225, 0.0
        %vm8234 = vcmp.gt.f32.partialorder %v8226, 0.0
        %vm8235 = vcmp.gt.f32.partialorder %v8227, 0.0
        %vm8236 = vcmp.gt.f32.partialorder %v8228, 0.0
        %vm8237 = vcmp.gt.f32.partialorder %v8229, 0.0
        %vm8238 = vcmp.gt.f32.partialorder %v8230, 0.0
        %vm8239 = vcmp.gt.f32.partialorder %v8231, 0.0
        %vm8240 = vcmp.gt.f32.partialorder %v8232, 0.0
        %v8241 = vmul.f32 %v8225, 1.442695
        %v8242 = vpow.pop %v8241
        %v8243 = vmul.f32 %v8226, 1.442695
        %v8244 = vpow.pop %v8243
        %v8245 = vmul.f32 %v8227, 1.442695
        %v8246 = vpow.pop %v8245
        %v8247 = vmul.f32 %v8228, 1.442695
        %v8248 = vpow.pop %v8247
        %v8249 = vmul.f32 %v8229, 1.442695
        %v8250 = vpow.pop %v8249
        %v8251 = vmul.f32 %v8230, 1.442695
        %v8252 = vpow.pop %v8251
        %v8253 = vmul.f32 %v8231, 1.442695
        %v8254 = vpow.pop %v8253
        %v8255 = vmul.f32 %v8232, 1.442695
        %v8256 = vpow.pop %v8255
        %v8257 = vsub.f32 %v8242, 1.0
        %v8258 = vsub.f32 %v8244, 1.0
        %v8259 = vsub.f32 %v8246, 1.0
        %v8260 = vsub.f32 %v8248, 1.0
        %v8261 = vsub.f32 %v8250, 1.0
        %v8262 = vsub.f32 %v8252, 1.0
        %v8263 = vsub.f32 %v8254, 1.0
        %v8264 = vsub.f32 %v8256, 1.0
        %v8265 = vsel %vm8233, %v8225, %v8257
        %v8266 = vsel %vm8234, %v8226, %v8258
        %v8267 = vsel %vm8235, %v8227, %v8259
        %v8268 = vsel %vm8236, %v8228, %v8260
        %v8269 = vsel %vm8237, %v8229, %v8261
        %v8270 = vsel %vm8238, %v8230, %v8262
        %v8271 = vsel %vm8239, %v8231, %v8263
        %v8272 = vsel %vm8240, %v8232, %v8264
        %v8273 = vld [vmem:[%s14] sm:$0xff]
        %v8274 = vld [vmem:[%s14 + $0x8] sm:$0xff]
        %v8275 = vld [vmem:[%s14 + $0x10] sm:$0xff]
        %v8276 = vld [vmem:[%s14 + $0x18] sm:$0xff]
        %v8277 = vld [vmem:[%s14 + $0x20] sm:$0xff]
        %v8278 = vld [vmem:[%s14 + $0x28] sm:$0xff]
        %v8279 = vld [vmem:[%s14 + $0x30] sm:$0xff]
        %v8280 = vld [vmem:[%s14 + $0x38] sm:$0xff]
        %v8282 = vsel %vm3737, %v8265, 0
        %v8285 = vsel %vm3737, %v8266, 0
        %v8288 = vsel %vm3737, %v8267, 0
        %v8291 = vsel %vm3737, %v8268, 0
        %v8294 = vsel %vm3737, %v8269, 0
        %v8297 = vsel %vm3737, %v8270, 0
        %v8300 = vsel %vm3737, %v8271, 0
        %v8303 = vsel %vm3737, %v8272, 0
        %8305 = vmatprep.subr.mxu0 0.0
        %8306 = vmatpush1.msra.mxu0 %v8273
        %8307 = vmatprep.subr.mxu0 0.0
        %8308 = vmatpush1.msra.mxu0 %v8274
        %8309 = vmatprep.subr.mxu0 0.0
        %8310 = vmatpush1.msra.mxu0 %v8275
        %8311 = vmatprep.subr.mxu0 0.0
        %8312 = vmatpush1.msra.mxu0 %v8276
        %8313 = vmatprep.subr.mxu0 0.0
        %8314 = vmatpush1.msra.mxu0 %v8277
        %8315 = vmatprep.subr.mxu0 0.0
        %8316 = vmatpush1.msra.mxu0 %v8278
        %8317 = vmatprep.subr.mxu0 0.0
        %8318 = vmatpush1.msra.mxu0 %v8279
        %8319 = vmatprep.subr.mxu0 0.0
        %8320 = vmatpush1.msra.mxu0 %v8280
        %8321 = vmatprep.subr.mxu0 0.0
        %8322 = vmatpush1.msra.mxu0 0.0
        %8323 = vmatprep.subr.mxu0 0.0
        %8324 = vmatpush1.msra.mxu0 0.0
        %8325 = vmatprep.subr.mxu0 0.0
        %8326 = vmatpush1.msra.mxu0 0.0
        %8327 = vmatprep.subr.mxu0 0.0
        %8328 = vmatpush1.msra.mxu0 0.0
        %8329 = vmatprep.subr.mxu0 0.0
        %8330 = vmatpush1.msra.mxu0 0.0
        %8331 = vmatprep.subr.mxu0 0.0
        %8332 = vmatpush1.msra.mxu0 0.0
        %8333 = vmatprep.subr.mxu0 0.0
        %8334 = vmatpush1.msra.mxu0 0.0
        %8335 = vmatprep.subr.mxu0 0.0
        %8336 = vmatpush1.msra.mxu0 0.0
        %8337 = vmatprep.subr.mxu0 0.0
        %8338 = vmatpush1.msra.mxu0 0.0
        %8339 = vmatprep.subr.mxu0 0.0
        %8340 = vmatpush1.msra.mxu0 0.0
        %8341 = vmatprep.subr.mxu0 0.0
        %8342 = vmatpush1.msra.mxu0 0.0
        %8343 = vmatprep.subr.mxu0 0.0
        %8344 = vmatpush1.msra.mxu0 0.0
        %8345 = vmatprep.subr.mxu0 0.0
        %8346 = vmatpush1.msra.mxu0 0.0
        %8347 = vmatprep.subr.mxu0 0.0
        %8348 = vmatpush1.msra.mxu0 0.0
        %8349 = vmatprep.subr.mxu0 0.0
        %8350 = vmatpush1.msra.mxu0 0.0
        %8351 = vmatprep.subr.mxu0 0.0
        %8352 = vmatpush1.msra.mxu0 0.0
        %8353 = vmatprep.subr.mxu0 0.0
        %8354 = vmatpush1.msra.mxu0 0.0
        %8355 = vmatprep.subr.mxu0 0.0
        %8356 = vmatpush1.msra.mxu0 0.0
        %8357 = vmatprep.subr.mxu0 0.0
        %8358 = vmatpush1.msra.mxu0 0.0
        %8359 = vmatprep.subr.mxu0 0.0
        %8360 = vmatpush1.msra.mxu0 0.0
        %8361 = vmatprep.subr.mxu0 0.0
        %8362 = vmatpush1.msra.mxu0 0.0
        %8363 = vmatprep.subr.mxu0 0.0
        %8364 = vmatpush1.msra.mxu0 0.0
        %8365 = vmatprep.subr.mxu0 0.0
        %8366 = vmatpush1.msra.mxu0 0.0
        %8367 = vmatprep.subr.mxu0 0.0
        %8368 = vmatpush1.msra.mxu0 0.0
        %8369 = vmatprep.mubr.f32.mxu0 0.0
        %8370 = vmatmul.mubr.f32.gmra.mrb[0].mxu0 %v8282
        %v8371 = vpop.f32.mrb[0].mxu0
        %v8372 = vadd.f32 0.0, %v8371
        %v8373 = vpop.f32.mrb[0].mxu0
        %8374 = vmatprep.mubr.f32.mxu0 0.0
        %8375 = vmatmul.mubr.f32.gmra.mrb[0].mxu0 %v8285
        %v8376 = vpop.f32.mrb[0].mxu0
        %v8377 = vadd.f32 0.0, %v8376
        %v8378 = vpop.f32.mrb[0].mxu0
        %8379 = vmatprep.mubr.f32.mxu0 0.0
        %8380 = vmatmul.mubr.f32.gmra.mrb[0].mxu0 %v8288
        %v8381 = vpop.f32.mrb[0].mxu0
        %v8382 = vadd.f32 0.0, %v8381
        %v8383 = vpop.f32.mrb[0].mxu0
        %8384 = vmatprep.mubr.f32.mxu0 0.0
        %8385 = vmatmul.mubr.f32.gmra.mrb[0].mxu0 %v8291
        %v8386 = vpop.f32.mrb[0].mxu0
        %v8387 = vadd.f32 0.0, %v8386
        %v8388 = vpop.f32.mrb[0].mxu0
        %8389 = vmatprep.mubr.f32.mxu0 0.0
        %8390 = vmatmul.mubr.f32.gmra.mrb[0].mxu0 %v8294
        %v8391 = vpop.f32.mrb[0].mxu0
        %v8392 = vadd.f32 0.0, %v8391
        %v8393 = vpop.f32.mrb[0].mxu0
        %8394 = vmatprep.mubr.f32.mxu0 0.0
        %8395 = vmatmul.mubr.f32.gmra.mrb[0].mxu0 %v8297
        %v8396 = vpop.f32.mrb[0].mxu0
        %v8397 = vadd.f32 0.0, %v8396
        %v8398 = vpop.f32.mrb[0].mxu0
        %8399 = vmatprep.mubr.f32.mxu0 0.0
        %8400 = vmatmul.mubr.f32.gmra.mrb[0].mxu0 %v8300
        %v8401 = vpop.f32.mrb[0].mxu0
        %v8402 = vadd.f32 0.0, %v8401
        %v8403 = vpop.f32.mrb[0].mxu0
        %8404 = vmatprep.mubr.f32.mxu0 0.0
        %8405 = vmatmul.mubr.f32.gmra.mrb[0].mxu0 %v8303
        %v8406 = vpop.f32.mrb[0].mxu0
        %v8407 = vadd.f32 0.0, %v8406
        %v8408 = vpop.f32.mrb[0].mxu0
        %8409 = vdwg.mxu0
        %v8410 = vld [vmem:[%s15] sm:$0x1]
        %v8412 = vlaneseq
        %v8413 = vshrl.u32 %v8412, 7
        %v8414 = vsub.s32 0, %v8413
        %v8415 = vrot.slane %v8410, %v8414
        %v8417 = vmul.f32 %v8372, %v8415
        %v8418 = vmul.f32 %v8377, %v8415
        %v8419 = vmul.f32 %v8382, %v8415
        %v8420 = vmul.f32 %v8387, %v8415
        %v8421 = vmul.f32 %v8392, %v8415
        %v8422 = vmul.f32 %v8397, %v8415
        %v8423 = vmul.f32 %v8402, %v8415
        %v8424 = vmul.f32 %v8407, %v8415
        %v8425 = vsel %vm5872, %v8417, 0.0
        %8426 = vadd.xlane.f32.xlu0 %v8425
        %v8427 = vpop.xlane.xlu0 %8426
        %v8428 = vsel %vm5872, %v8418, 0.0
        %8429 = vadd.xlane.f32.xlu0 %v8428
        %v8430 = vpop.xlane.xlu0 %8429
        %v8431 = vsel %vm5872, %v8419, 0.0
        %8432 = vadd.xlane.f32.xlu0 %v8431
        %v8433 = vpop.xlane.xlu0 %8432
        %v8434 = vsel %vm5872, %v8420, 0.0
        %8435 = vadd.xlane.f32.xlu0 %v8434
        %v8436 = vpop.xlane.xlu0 %8435
        %v8437 = vsel %vm5872, %v8421, 0.0
        %8438 = vadd.xlane.f32.xlu0 %v8437
        %v8439 = vpop.xlane.xlu0 %8438
        %v8440 = vsel %vm5872, %v8422, 0.0
        %8441 = vadd.xlane.f32.xlu0 %v8440
        %v8442 = vpop.xlane.xlu0 %8441
        %v8443 = vsel %vm5872, %v8423, 0.0
        %8444 = vadd.xlane.f32.xlu0 %v8443
        %v8445 = vpop.xlane.xlu0 %8444
        %v8446 = vsel %vm5872, %v8424, 0.0
        %8447 = vadd.xlane.f32.xlu0 %v8446
        %v8448 = vpop.xlane.xlu0 %8447
        %v8449 = vld [vmem:[%s16] sm:$0x1]
        %v8451 = vsel %vm5872, %v8449, 0
        %v8454 = vsel %vm5872, %v8372, 0
        %v8457 = vsel %vm5872, %v8377, 0
        %v8460 = vsel %vm5872, %v8382, 0
        %v8463 = vsel %vm5872, %v8387, 0
        %v8466 = vsel %vm5872, %v8392, 0
        %v8469 = vsel %vm5872, %v8397, 0
        %v8472 = vsel %vm5872, %v8402, 0
        %v8475 = vsel %vm5872, %v8407, 0
        %8477 = vmatprep.subr.mxu0 0.0
        %8478 = vmatpush1.xpose.msra.mxu0 %v8454
        %8479 = vmatprep.subr.mxu0 0.0
        %8480 = vmatpush1.xpose.msra.mxu0 %v8457
        %8481 = vmatprep.subr.mxu0 0.0
        %8482 = vmatpush1.xpose.msra.mxu0 %v8460
        %8483 = vmatprep.subr.mxu0 0.0
        %8484 = vmatpush1.xpose.msra.mxu0 %v8463
        %8485 = vmatprep.subr.mxu0 0.0
        %8486 = vmatpush1.xpose.msra.mxu0 %v8466
        %8487 = vmatprep.subr.mxu0 0.0
        %8488 = vmatpush1.xpose.msra.mxu0 %v8469
        %8489 = vmatprep.subr.mxu0 0.0
        %8490 = vmatpush1.xpose.msra.mxu0 %v8472
        %8491 = vmatprep.subr.mxu0 0.0
        %8492 = vmatpush1.xpose.msra.mxu0 %v8475
        %8493 = vmatprep.subr.mxu0 0.0
        %8494 = vmatpush1.xpose.msra.mxu0 0.0
        %8495 = vmatprep.subr.mxu0 0.0
        %8496 = vmatpush1.xpose.msra.mxu0 0.0
        %8497 = vmatprep.subr.mxu0 0.0
        %8498 = vmatpush1.xpose.msra.mxu0 0.0
        %8499 = vmatprep.subr.mxu0 0.0
        %8500 = vmatpush1.xpose.msra.mxu0 0.0
        %8501 = vmatprep.subr.mxu0 0.0
        %8502 = vmatpush1.xpose.msra.mxu0 0.0
        %8503 = vmatprep.subr.mxu0 0.0
        %8504 = vmatpush1.xpose.msra.mxu0 0.0
        %8505 = vmatprep.subr.mxu0 0.0
        %8506 = vmatpush1.xpose.msra.mxu0 0.0
        %8507 = vmatprep.subr.mxu0 0.0
        %8508 = vmatpush1.xpose.msra.mxu0 0.0
        %8509 = vmatprep.subr.mxu0 0.0
        %8510 = vmatpush1.xpose.msra.mxu0 0.0
        %8511 = vmatprep.subr.mxu0 0.0
        %8512 = vmatpush1.xpose.msra.mxu0 0.0
        %8513 = vmatprep.subr.mxu0 0.0
        %8514 = vmatpush1.xpose.msra.mxu0 0.0
        %8515 = vmatprep.subr.mxu0 0.0
        %8516 = vmatpush1.xpose.msra.mxu0 0.0
        %8517 = vmatprep.subr.mxu0 0.0
        %8518 = vmatpush1.xpose.msra.mxu0 0.0
        %8519 = vmatprep.subr.mxu0 0.0
        %8520 = vmatpush1.xpose.msra.mxu0 0.0
        %8521 = vmatprep.subr.mxu0 0.0
        %8522 = vmatpush1.xpose.msra.mxu0 0.0
        %8523 = vmatprep.subr.mxu0 0.0
        %8524 = vmatpush1.xpose.msra.mxu0 0.0
        %8525 = vmatprep.subr.mxu0 0.0
        %8526 = vmatpush1.xpose.msra.mxu0 0.0
        %8527 = vmatprep.subr.mxu0 0.0
        %8528 = vmatpush1.xpose.msra.mxu0 0.0
        %8529 = vmatprep.subr.mxu0 0.0
        %8530 = vmatpush1.xpose.msra.mxu0 0.0
        %8531 = vmatprep.subr.mxu0 0.0
        %8532 = vmatpush1.xpose.msra.mxu0 0.0
        %8533 = vmatprep.subr.mxu0 0.0
        %8534 = vmatpush1.xpose.msra.mxu0 0.0
        %8535 = vmatprep.subr.mxu0 0.0
        %8536 = vmatpush1.xpose.msra.mxu0 0.0
        %8537 = vmatprep.subr.mxu0 0.0
        %8538 = vmatpush1.xpose.msra.mxu0 0.0
        %8539 = vmatprep.subr.mxu0 0.0
        %8540 = vmatpush1.xpose.msra.mxu0 0.0
        %8541 = vmatprep.mubr.f32.mxu0 0.0
        %8542 = vmatmul.mubr.f32.gmra.mrb[0].mxu0 %v8451
        %v8543 = vpop.f32.mrb[0].mxu0
        %v8544 = vadd.f32 0.0, %v8543
        %v8545 = vpop.f32.mrb[0].mxu0
        %8546 = vdwg.mxu0
        %v8547 = vlaneseq
        %v8548 = vshrl.u32 %v8547, 7
        %v8549 = vsub.s32 0, %v8548
        %v8550 = vrot.slane %v8544, %v8549
        %v8551 = vadd.f32 %v8427, %v8550
        %v8552 = vadd.f32 %v8430, %v8550
        %v8553 = vadd.f32 %v8433, %v8550
        %v8554 = vadd.f32 %v8436, %v8550
        %v8555 = vadd.f32 %v8439, %v8550
        %v8556 = vadd.f32 %v8442, %v8550
        %v8557 = vadd.f32 %v8445, %v8550
        %v8558 = vadd.f32 %v8448, %v8550
        %vm8559 = vcmp.gt.f32.partialorder %v8551, 0.0
        %vm8560 = vcmp.gt.f32.partialorder %v8552, 0.0
        %vm8561 = vcmp.gt.f32.partialorder %v8553, 0.0
        %vm8562 = vcmp.gt.f32.partialorder %v8554, 0.0
        %vm8563 = vcmp.gt.f32.partialorder %v8555, 0.0
        %vm8564 = vcmp.gt.f32.partialorder %v8556, 0.0
        %vm8565 = vcmp.gt.f32.partialorder %v8557, 0.0
        %vm8566 = vcmp.gt.f32.partialorder %v8558, 0.0
        %v8567 = vmul.f32 %v8551, 0.2
        %v8568 = vmul.f32 %v8552, 0.2
        %v8569 = vmul.f32 %v8553, 0.2
        %v8570 = vmul.f32 %v8554, 0.2
        %v8571 = vmul.f32 %v8555, 0.2
        %v8572 = vmul.f32 %v8556, 0.2
        %v8573 = vmul.f32 %v8557, 0.2
        %v8574 = vmul.f32 %v8558, 0.2
        %v8575 = vsel %vm8559, %v8551, %v8567
        %v8576 = vsel %vm8560, %v8552, %v8568
        %v8577 = vsel %vm8561, %v8553, %v8569
        %v8578 = vsel %vm8562, %v8554, %v8570
        %v8579 = vsel %vm8563, %v8555, %v8571
        %v8580 = vsel %vm8564, %v8556, %v8572
        %v8581 = vsel %vm8565, %v8557, %v8573
        %v8582 = vsel %vm8566, %v8558, %v8574
        %v8583 = vadd.f32 %v8575, %v3595
        %v8584 = vadd.f32 %v8576, %v3596
        %v8585 = vadd.f32 %v8577, %v3597
        %v8586 = vadd.f32 %v8578, %v3598
        %v8587 = vadd.f32 %v8579, %v3599
        %v8588 = vadd.f32 %v8580, %v3600
        %v8589 = vadd.f32 %v8581, %v3601
        %v8590 = vadd.f32 %v8582, %v3602
        %v8591 = vsel %vm3737, %v8583, -inf
        %8592 = vmax.xlane.f32.xlu0 %v8591
        %v8593 = vpop.xlane.xlu0 %8592
        %v8594 = vsel %vm3737, %v8584, -inf
        %8595 = vmax.xlane.f32.xlu0 %v8594
        %v8596 = vpop.xlane.xlu0 %8595
        %v8597 = vsel %vm3737, %v8585, -inf
        %8598 = vmax.xlane.f32.xlu0 %v8597
        %v8599 = vpop.xlane.xlu0 %8598
        %v8600 = vsel %vm3737, %v8586, -inf
        %8601 = vmax.xlane.f32.xlu0 %v8600
        %v8602 = vpop.xlane.xlu0 %8601
        %v8603 = vsel %vm3737, %v8587, -inf
        %8604 = vmax.xlane.f32.xlu0 %v8603
        %v8605 = vpop.xlane.xlu0 %8604
        %v8606 = vsel %vm3737, %v8588, -inf
        %8607 = vmax.xlane.f32.xlu0 %v8606
        %v8608 = vpop.xlane.xlu0 %8607
        %v8609 = vsel %vm3737, %v8589, -inf
        %8610 = vmax.xlane.f32.xlu0 %v8609
        %v8611 = vpop.xlane.xlu0 %8610
        %v8612 = vsel %vm3737, %v8590, -inf
        %8613 = vmax.xlane.f32.xlu0 %v8612
        %v8614 = vpop.xlane.xlu0 %8613
        %v8615 = vsub.f32 %v8583, %v8593
        %v8616 = vsub.f32 %v8584, %v8596
        %v8617 = vsub.f32 %v8585, %v8599
        %v8618 = vsub.f32 %v8586, %v8602
        %v8619 = vsub.f32 %v8587, %v8605
        %v8620 = vsub.f32 %v8588, %v8608
        %v8621 = vsub.f32 %v8589, %v8611
        %v8622 = vsub.f32 %v8590, %v8614
        %v8623 = vmul.f32 %v8615, 1.442695
        %v8624 = vpow.pop %v8623
        %v8625 = vmul.f32 %v8616, 1.442695
        %v8626 = vpow.pop %v8625
        %v8627 = vmul.f32 %v8617, 1.442695
        %v8628 = vpow.pop %v8627
        %v8629 = vmul.f32 %v8618, 1.442695
        %v8630 = vpow.pop %v8629
        %v8631 = vmul.f32 %v8619, 1.442695
        %v8632 = vpow.pop %v8631
        %v8633 = vmul.f32 %v8620, 1.442695
        %v8634 = vpow.pop %v8633
        %v8635 = vmul.f32 %v8621, 1.442695
        %v8636 = vpow.pop %v8635
        %v8637 = vmul.f32 %v8622, 1.442695
        %v8638 = vpow.pop %v8637
        %v8640 = vsel %vm3737, %v8624, 0
        %v8643 = vsel %vm3737, %v8626, 0
        %v8646 = vsel %vm3737, %v8628, 0
        %v8649 = vsel %vm3737, %v8630, 0
        %v8652 = vsel %vm3737, %v8632, 0
        %v8655 = vsel %vm3737, %v8634, 0
        %v8658 = vsel %vm3737, %v8636, 0
        %v8661 = vsel %vm3737, %v8638, 0
        %8663 = vmatprep.subr.mxu0 0.0
        %8664 = vmatpush1.msra.mxu0 1.0
        %8665 = vmatprep.subr.mxu0 0.0
        %8666 = vmatpush1.msra.mxu0 1.0
        %8667 = vmatprep.subr.mxu0 0.0
        %8668 = vmatpush1.msra.mxu0 1.0
        %8669 = vmatprep.subr.mxu0 0.0
        %8670 = vmatpush1.msra.mxu0 1.0
        %8671 = vmatprep.subr.mxu0 0.0
        %8672 = vmatpush1.msra.mxu0 1.0
        %8673 = vmatprep.subr.mxu0 0.0
        %8674 = vmatpush1.msra.mxu0 1.0
        %8675 = vmatprep.subr.mxu0 0.0
        %8676 = vmatpush1.msra.mxu0 1.0
        %8677 = vmatprep.subr.mxu0 0.0
        %8678 = vmatpush1.msra.mxu0 1.0
        %8679 = vmatprep.subr.mxu0 0.0
        %8680 = vmatpush1.msra.mxu0 0.0
        %8681 = vmatprep.subr.mxu0 0.0
        %8682 = vmatpush1.msra.mxu0 0.0
        %8683 = vmatprep.subr.mxu0 0.0
        %8684 = vmatpush1.msra.mxu0 0.0
        %8685 = vmatprep.subr.mxu0 0.0
        %8686 = vmatpush1.msra.mxu0 0.0
        %8687 = vmatprep.subr.mxu0 0.0
        %8688 = vmatpush1.msra.mxu0 0.0
        %8689 = vmatprep.subr.mxu0 0.0
        %8690 = vmatpush1.msra.mxu0 0.0
        %8691 = vmatprep.subr.mxu0 0.0
        %8692 = vmatpush1.msra.mxu0 0.0
        %8693 = vmatprep.subr.mxu0 0.0
        %8694 = vmatpush1.msra.mxu0 0.0
        %8695 = vmatprep.subr.mxu0 0.0
        %8696 = vmatpush1.msra.mxu0 0.0
        %8697 = vmatprep.subr.mxu0 0.0
        %8698 = vmatpush1.msra.mxu0 0.0
        %8699 = vmatprep.subr.mxu0 0.0
        %8700 = vmatpush1.msra.mxu0 0.0
        %8701 = vmatprep.subr.mxu0 0.0
        %8702 = vmatpush1.msra.mxu0 0.0
        %8703 = vmatprep.subr.mxu0 0.0
        %8704 = vmatpush1.msra.mxu0 0.0
        %8705 = vmatprep.subr.mxu0 0.0
        %8706 = vmatpush1.msra.mxu0 0.0
        %8707 = vmatprep.subr.mxu0 0.0
        %8708 = vmatpush1.msra.mxu0 0.0
        %8709 = vmatprep.subr.mxu0 0.0
        %8710 = vmatpush1.msra.mxu0 0.0
        %8711 = vmatprep.subr.mxu0 0.0
        %8712 = vmatpush1.msra.mxu0 0.0
        %8713 = vmatprep.subr.mxu0 0.0
        %8714 = vmatpush1.msra.mxu0 0.0
        %8715 = vmatprep.subr.mxu0 0.0
        %8716 = vmatpush1.msra.mxu0 0.0
        %8717 = vmatprep.subr.mxu0 0.0
        %8718 = vmatpush1.msra.mxu0 0.0
        %8719 = vmatprep.subr.mxu0 0.0
        %8720 = vmatpush1.msra.mxu0 0.0
        %8721 = vmatprep.subr.mxu0 0.0
        %8722 = vmatpush1.msra.mxu0 0.0
        %8723 = vmatprep.subr.mxu0 0.0
        %8724 = vmatpush1.msra.mxu0 0.0
        %8725 = vmatprep.subr.mxu0 0.0
        %8726 = vmatpush1.msra.mxu0 0.0
        %8727 = vmatprep.mubr.f32.mxu0 0.0
        %8728 = vmatmul.mubr.f32.gmra.mrb[0].mxu0 %v8640
        %v8729 = vpop.f32.mrb[0].mxu0
        %v8730 = vadd.f32 0.0, %v8729
        %v8731 = vpop.f32.mrb[0].mxu0
        %8732 = vmatprep.mubr.f32.mxu0 0.0
        %8733 = vmatmul.mubr.f32.gmra.mrb[0].mxu0 %v8643
        %v8734 = vpop.f32.mrb[0].mxu0
        %v8735 = vadd.f32 0.0, %v8734
        %v8736 = vpop.f32.mrb[0].mxu0
        %8737 = vmatprep.mubr.f32.mxu0 0.0
        %8738 = vmatmul.mubr.f32.gmra.mrb[0].mxu0 %v8646
        %v8739 = vpop.f32.mrb[0].mxu0
        %v8740 = vadd.f32 0.0, %v8739
        %v8741 = vpop.f32.mrb[0].mxu0
        %8742 = vmatprep.mubr.f32.mxu0 0.0
        %8743 = vmatmul.mubr.f32.gmra.mrb[0].mxu0 %v8649
        %v8744 = vpop.f32.mrb[0].mxu0
        %v8745 = vadd.f32 0.0, %v8744
        %v8746 = vpop.f32.mrb[0].mxu0
        %8747 = vmatprep.mubr.f32.mxu0 0.0
        %8748 = vmatmul.mubr.f32.gmra.mrb[0].mxu0 %v8652
        %v8749 = vpop.f32.mrb[0].mxu0
        %v8750 = vadd.f32 0.0, %v8749
        %v8751 = vpop.f32.mrb[0].mxu0
        %8752 = vmatprep.mubr.f32.mxu0 0.0
        %8753 = vmatmul.mubr.f32.gmra.mrb[0].mxu0 %v8655
        %v8754 = vpop.f32.mrb[0].mxu0
        %v8755 = vadd.f32 0.0, %v8754
        %v8756 = vpop.f32.mrb[0].mxu0
        %8757 = vmatprep.mubr.f32.mxu0 0.0
        %8758 = vmatmul.mubr.f32.gmra.mrb[0].mxu0 %v8658
        %v8759 = vpop.f32.mrb[0].mxu0
        %v8760 = vadd.f32 0.0, %v8759
        %v8761 = vpop.f32.mrb[0].mxu0
        %8762 = vmatprep.mubr.f32.mxu0 0.0
        %8763 = vmatmul.mubr.f32.gmra.mrb[0].mxu0 %v8661
        %v8764 = vpop.f32.mrb[0].mxu0
        %v8765 = vadd.f32 0.0, %v8764
        %v8766 = vpop.f32.mrb[0].mxu0
        %8767 = vdwg.mxu0
        %v8768 = vrcp.pop %v8730
        %v8769 = vrcp.pop %v8735
        %v8770 = vrcp.pop %v8740
        %v8771 = vrcp.pop %v8745
        %v8772 = vrcp.pop %v8750
        %v8773 = vrcp.pop %v8755
        %v8774 = vrcp.pop %v8760
        %v8775 = vrcp.pop %v8765
        %8777 = vset.pattern.permute.xlu0 0
        %8778 = vperm.xlu0 %8777, %v8768
        %v8779 = vpop.permute.xlu0 %8778
        %8782 = vset.pattern.permute.xlu0 0
        %8783 = vperm.xlu0 %8782, %v8769
        %v8784 = vpop.permute.xlu0 %8783
        %8787 = vset.pattern.permute.xlu0 0
        %8788 = vperm.xlu0 %8787, %v8770
        %v8789 = vpop.permute.xlu0 %8788
        %8792 = vset.pattern.permute.xlu0 0
        %8793 = vperm.xlu0 %8792, %v8771
        %v8794 = vpop.permute.xlu0 %8793
        %8797 = vset.pattern.permute.xlu0 0
        %8798 = vperm.xlu0 %8797, %v8772
        %v8799 = vpop.permute.xlu0 %8798
        %8802 = vset.pattern.permute.xlu0 0
        %8803 = vperm.xlu0 %8802, %v8773
        %v8804 = vpop.permute.xlu0 %8803
        %8807 = vset.pattern.permute.xlu0 0
        %8808 = vperm.xlu0 %8807, %v8774
        %v8809 = vpop.permute.xlu0 %8808
        %8812 = vset.pattern.permute.xlu0 0
        %8813 = vperm.xlu0 %8812, %v8775
        %v8814 = vpop.permute.xlu0 %8813
        %v8816 = vmul.f32 %v8624, %v8779
        %v8817 = vmul.f32 %v8626, %v8784
        %v8818 = vmul.f32 %v8628, %v8789
        %v8819 = vmul.f32 %v8630, %v8794
        %v8820 = vmul.f32 %v8632, %v8799
        %v8821 = vmul.f32 %v8634, %v8804
        %v8822 = vmul.f32 %v8636, %v8809
        %v8823 = vmul.f32 %v8638, %v8814
        %v8825 = vsel %vm3737, %v8816, 0
        %v8828 = vsel %vm3737, %v8817, 0
        %v8831 = vsel %vm3737, %v8818, 0
        %v8834 = vsel %vm3737, %v8819, 0
        %v8837 = vsel %vm3737, %v8820, 0
        %v8840 = vsel %vm3737, %v8821, 0
        %v8843 = vsel %vm3737, %v8822, 0
        %v8846 = vsel %vm3737, %v8823, 0
        %8848 = vmatprep.subr.mxu0 0.0
        %8849 = vmatpush1.msra.mxu0 %v8372
        %8850 = vmatprep.subr.mxu0 0.0
        %8851 = vmatpush1.msra.mxu0 %v8377
        %8852 = vmatprep.subr.mxu0 0.0
        %8853 = vmatpush1.msra.mxu0 %v8382
        %8854 = vmatprep.subr.mxu0 0.0
        %8855 = vmatpush1.msra.mxu0 %v8387
        %8856 = vmatprep.subr.mxu0 0.0
        %8857 = vmatpush1.msra.mxu0 %v8392
        %8858 = vmatprep.subr.mxu0 0.0
        %8859 = vmatpush1.msra.mxu0 %v8397
        %8860 = vmatprep.subr.mxu0 0.0
        %8861 = vmatpush1.msra.mxu0 %v8402
        %8862 = vmatprep.subr.mxu0 0.0
        %8863 = vmatpush1.msra.mxu0 %v8407
        %8864 = vmatprep.subr.mxu0 0.0
        %8865 = vmatpush1.msra.mxu0 0.0
        %8866 = vmatprep.subr.mxu0 0.0
        %8867 = vmatpush1.msra.mxu0 0.0
        %8868 = vmatprep.subr.mxu0 0.0
        %8869 = vmatpush1.msra.mxu0 0.0
        %8870 = vmatprep.subr.mxu0 0.0
        %8871 = vmatpush1.msra.mxu0 0.0
        %8872 = vmatprep.subr.mxu0 0.0
        %8873 = vmatpush1.msra.mxu0 0.0
        %8874 = vmatprep.subr.mxu0 0.0
        %8875 = vmatpush1.msra.mxu0 0.0
        %8876 = vmatprep.subr.mxu0 0.0
        %8877 = vmatpush1.msra.mxu0 0.0
        %8878 = vmatprep.subr.mxu0 0.0
        %8879 = vmatpush1.msra.mxu0 0.0
        %8880 = vmatprep.subr.mxu0 0.0
        %8881 = vmatpush1.msra.mxu0 0.0
        %8882 = vmatprep.subr.mxu0 0.0
        %8883 = vmatpush1.msra.mxu0 0.0
        %8884 = vmatprep.subr.mxu0 0.0
        %8885 = vmatpush1.msra.mxu0 0.0
        %8886 = vmatprep.subr.mxu0 0.0
        %8887 = vmatpush1.msra.mxu0 0.0
        %8888 = vmatprep.subr.mxu0 0.0
        %8889 = vmatpush1.msra.mxu0 0.0
        %8890 = vmatprep.subr.mxu0 0.0
        %8891 = vmatpush1.msra.mxu0 0.0
        %8892 = vmatprep.subr.mxu0 0.0
        %8893 = vmatpush1.msra.mxu0 0.0
        %8894 = vmatprep.subr.mxu0 0.0
        %8895 = vmatpush1.msra.mxu0 0.0
        %8896 = vmatprep.subr.mxu0 0.0
        %8897 = vmatpush1.msra.mxu0 0.0
        %8898 = vmatprep.subr.mxu0 0.0
        %8899 = vmatpush1.msra.mxu0 0.0
        %8900 = vmatprep.subr.mxu0 0.0
        %8901 = vmatpush1.msra.mxu0 0.0
        %8902 = vmatprep.subr.mxu0 0.0
        %8903 = vmatpush1.msra.mxu0 0.0
        %8904 = vmatprep.subr.mxu0 0.0
        %8905 = vmatpush1.msra.mxu0 0.0
        %8906 = vmatprep.subr.mxu0 0.0
        %8907 = vmatpush1.msra.mxu0 0.0
        %8908 = vmatprep.subr.mxu0 0.0
        %8909 = vmatpush1.msra.mxu0 0.0
        %8910 = vmatprep.subr.mxu0 0.0
        %8911 = vmatpush1.msra.mxu0 0.0
        %8912 = vmatprep.mubr.f32.mxu0 0.0
        %8913 = vmatmul.mubr.f32.gmra.mrb[0].mxu0 %v8825
        %v8914 = vpop.f32.mrb[0].mxu0
        %v8915 = vadd.f32 0.0, %v8914
        %v8916 = vpop.f32.mrb[0].mxu0
        %8917 = vmatprep.mubr.f32.mxu0 0.0
        %8918 = vmatmul.mubr.f32.gmra.mrb[0].mxu0 %v8828
        %v8919 = vpop.f32.mrb[0].mxu0
        %v8920 = vadd.f32 0.0, %v8919
        %v8921 = vpop.f32.mrb[0].mxu0
        %8922 = vmatprep.mubr.f32.mxu0 0.0
        %8923 = vmatmul.mubr.f32.gmra.mrb[0].mxu0 %v8831
        %v8924 = vpop.f32.mrb[0].mxu0
        %v8925 = vadd.f32 0.0, %v8924
        %v8926 = vpop.f32.mrb[0].mxu0
        %8927 = vmatprep.mubr.f32.mxu0 0.0
        %8928 = vmatmul.mubr.f32.gmra.mrb[0].mxu0 %v8834
        %v8929 = vpop.f32.mrb[0].mxu0
        %v8930 = vadd.f32 0.0, %v8929
        %v8931 = vpop.f32.mrb[0].mxu0
        %8932 = vmatprep.mubr.f32.mxu0 0.0
        %8933 = vmatmul.mubr.f32.gmra.mrb[0].mxu0 %v8837
        %v8934 = vpop.f32.mrb[0].mxu0
        %v8935 = vadd.f32 0.0, %v8934
        %v8936 = vpop.f32.mrb[0].mxu0
        %8937 = vmatprep.mubr.f32.mxu0 0.0
        %8938 = vmatmul.mubr.f32.gmra.mrb[0].mxu0 %v8840
        %v8939 = vpop.f32.mrb[0].mxu0
        %v8940 = vadd.f32 0.0, %v8939
        %v8941 = vpop.f32.mrb[0].mxu0
        %8942 = vmatprep.mubr.f32.mxu0 0.0
        %8943 = vmatmul.mubr.f32.gmra.mrb[0].mxu0 %v8843
        %v8944 = vpop.f32.mrb[0].mxu0
        %v8945 = vadd.f32 0.0, %v8944
        %v8946 = vpop.f32.mrb[0].mxu0
        %8947 = vmatprep.mubr.f32.mxu0 0.0
        %8948 = vmatmul.mubr.f32.gmra.mrb[0].mxu0 %v8846
        %v8949 = vpop.f32.mrb[0].mxu0
        %v8950 = vadd.f32 0.0, %v8949
        %v8951 = vpop.f32.mrb[0].mxu0
        %8952 = vdwg.mxu0
        %v8954 = vsel %vm3737, 0.015625, 0
        %8956 = vmatprep.subr.mxu0 0.0
        %8957 = vmatpush1.msra.mxu0 %v8915
        %8958 = vmatprep.subr.mxu0 0.0
        %8959 = vmatpush1.msra.mxu0 %v8920
        %8960 = vmatprep.subr.mxu0 0.0
        %8961 = vmatpush1.msra.mxu0 %v8925
        %8962 = vmatprep.subr.mxu0 0.0
        %8963 = vmatpush1.msra.mxu0 %v8930
        %8964 = vmatprep.subr.mxu0 0.0
        %8965 = vmatpush1.msra.mxu0 %v8935
        %8966 = vmatprep.subr.mxu0 0.0
        %8967 = vmatpush1.msra.mxu0 %v8940
        %8968 = vmatprep.subr.mxu0 0.0
        %8969 = vmatpush1.msra.mxu0 %v8945
        %8970 = vmatprep.subr.mxu0 0.0
        %8971 = vmatpush1.msra.mxu0 %v8950
        %8972 = vmatprep.subr.mxu0 0.0
        %8973 = vmatpush1.msra.mxu0 0.0
        %8974 = vmatprep.subr.mxu0 0.0
        %8975 = vmatpush1.msra.mxu0 0.0
        %8976 = vmatprep.subr.mxu0 0.0
        %8977 = vmatpush1.msra.mxu0 0.0
        %8978 = vmatprep.subr.mxu0 0.0
        %8979 = vmatpush1.msra.mxu0 0.0
        %8980 = vmatprep.subr.mxu0 0.0
        %8981 = vmatpush1.msra.mxu0 0.0
        %8982 = vmatprep.subr.mxu0 0.0
        %8983 = vmatpush1.msra.mxu0 0.0
        %8984 = vmatprep.subr.mxu0 0.0
        %8985 = vmatpush1.msra.mxu0 0.0
        %8986 = vmatprep.subr.mxu0 0.0
        %8987 = vmatpush1.msra.mxu0 0.0
        %8988 = vmatprep.subr.mxu0 0.0
        %8989 = vmatpush1.msra.mxu0 0.0
        %8990 = vmatprep.subr.mxu0 0.0
        %8991 = vmatpush1.msra.mxu0 0.0
        %8992 = vmatprep.subr.mxu0 0.0
        %8993 = vmatpush1.msra.mxu0 0.0
        %8994 = vmatprep.subr.mxu0 0.0
        %8995 = vmatpush1.msra.mxu0 0.0
        %8996 = vmatprep.subr.mxu0 0.0
        %8997 = vmatpush1.msra.mxu0 0.0
        %8998 = vmatprep.subr.mxu0 0.0
        %8999 = vmatpush1.msra.mxu0 0.0
        %9000 = vmatprep.subr.mxu0 0.0
        %9001 = vmatpush1.msra.mxu0 0.0
        %9002 = vmatprep.subr.mxu0 0.0
        %9003 = vmatpush1.msra.mxu0 0.0
        %9004 = vmatprep.subr.mxu0 0.0
        %9005 = vmatpush1.msra.mxu0 0.0
        %9006 = vmatprep.subr.mxu0 0.0
        %9007 = vmatpush1.msra.mxu0 0.0
        %9008 = vmatprep.subr.mxu0 0.0
        %9009 = vmatpush1.msra.mxu0 0.0
        %9010 = vmatprep.subr.mxu0 0.0
        %9011 = vmatpush1.msra.mxu0 0.0
        %9012 = vmatprep.subr.mxu0 0.0
        %9013 = vmatpush1.msra.mxu0 0.0
        %9014 = vmatprep.subr.mxu0 0.0
        %9015 = vmatpush1.msra.mxu0 0.0
        %9016 = vmatprep.subr.mxu0 0.0
        %9017 = vmatpush1.msra.mxu0 0.0
        %9018 = vmatprep.subr.mxu0 0.0
        %9019 = vmatpush1.msra.mxu0 0.0
        %9020 = vmatprep.mubr.f32.mxu0 0.0
        %9021 = vmatmul.mubr.f32.gmra.mrb[0].mxu0 %v8954
        %v9022 = vpop.f32.mrb[0].mxu0
        %v9023 = vadd.f32 0.0, %v9022
        %v9024 = vpop.f32.mrb[0].mxu0
        %9025 = vdwg.mxu0
        %v9026 = vld [vmem:[%s17] sm:$0xff]
        %v9027 = vld [vmem:[%s17 + $0x8] sm:$0xff]
        %v9028 = vld [vmem:[%s18] sm:$0x1]
        %v9030 = vsel %vm5872, %v9023, 0
        %9032 = vmatprep.subr.mxu0 0.0
        %9033 = vmatpush1.msra.mxu0 %v9026
        %9034 = vmatprep.subr.mxu0 0.0
        %9035 = vmatpush1.msra.mxu0 %v9027
        %9036 = vmatprep.subr.mxu0 0.0
        %9037 = vmatpush1.msra.mxu0 0.0
        %9038 = vmatprep.subr.mxu0 0.0
        %9039 = vmatpush1.msra.mxu0 0.0
        %9040 = vmatprep.subr.mxu0 0.0
        %9041 = vmatpush1.msra.mxu0 0.0
        %9042 = vmatprep.subr.mxu0 0.0
        %9043 = vmatpush1.msra.mxu0 0.0
        %9044 = vmatprep.subr.mxu0 0.0
        %9045 = vmatpush1.msra.mxu0 0.0
        %9046 = vmatprep.subr.mxu0 0.0
        %9047 = vmatpush1.msra.mxu0 0.0
        %9048 = vmatprep.subr.mxu0 0.0
        %9049 = vmatpush1.msra.mxu0 0.0
        %9050 = vmatprep.subr.mxu0 0.0
        %9051 = vmatpush1.msra.mxu0 0.0
        %9052 = vmatprep.subr.mxu0 0.0
        %9053 = vmatpush1.msra.mxu0 0.0
        %9054 = vmatprep.subr.mxu0 0.0
        %9055 = vmatpush1.msra.mxu0 0.0
        %9056 = vmatprep.subr.mxu0 0.0
        %9057 = vmatpush1.msra.mxu0 0.0
        %9058 = vmatprep.subr.mxu0 0.0
        %9059 = vmatpush1.msra.mxu0 0.0
        %9060 = vmatprep.subr.mxu0 0.0
        %9061 = vmatpush1.msra.mxu0 0.0
        %9062 = vmatprep.subr.mxu0 0.0
        %9063 = vmatpush1.msra.mxu0 0.0
        %9064 = vmatprep.subr.mxu0 0.0
        %9065 = vmatpush1.msra.mxu0 0.0
        %9066 = vmatprep.subr.mxu0 0.0
        %9067 = vmatpush1.msra.mxu0 0.0
        %9068 = vmatprep.subr.mxu0 0.0
        %9069 = vmatpush1.msra.mxu0 0.0
        %9070 = vmatprep.subr.mxu0 0.0
        %9071 = vmatpush1.msra.mxu0 0.0
        %9072 = vmatprep.subr.mxu0 0.0
        %9073 = vmatpush1.msra.mxu0 0.0
        %9074 = vmatprep.subr.mxu0 0.0
        %9075 = vmatpush1.msra.mxu0 0.0
        %9076 = vmatprep.subr.mxu0 0.0
        %9077 = vmatpush1.msra.mxu0 0.0
        %9078 = vmatprep.subr.mxu0 0.0
        %9079 = vmatpush1.msra.mxu0 0.0
        %9080 = vmatprep.subr.mxu0 0.0
        %9081 = vmatpush1.msra.mxu0 0.0
        %9082 = vmatprep.subr.mxu0 0.0
        %9083 = vmatpush1.msra.mxu0 0.0
        %9084 = vmatprep.subr.mxu0 0.0
        %9085 = vmatpush1.msra.mxu0 0.0
        %9086 = vmatprep.subr.mxu0 0.0
        %9087 = vmatpush1.msra.mxu0 0.0
        %9088 = vmatprep.subr.mxu0 0.0
        %9089 = vmatpush1.msra.mxu0 0.0
        %9090 = vmatprep.subr.mxu0 0.0
        %9091 = vmatpush1.msra.mxu0 0.0
        %9092 = vmatprep.subr.mxu0 0.0
        %9093 = vmatpush1.msra.mxu0 0.0
        %9094 = vmatprep.subr.mxu0 0.0
        %9095 = vmatpush1.msra.mxu0 0.0
        %9096 = vmatprep.mubr.f32.mxu0 0.0
        %9097 = vmatmul.mubr.f32.gmra.mrb[0].mxu0 %v9030
        %v9098 = vpop.f32.mrb[0].mxu0
        %v9099 = vadd.f32 %v9028, %v9098
        %v9100 = vpop.f32.mrb[0].mxu0
        %9101 = vdwg.mxu0
        %vm9102 = vcmask 73728
        %v9103 = vsel %vm9102, %v9099, -inf
        %9104 = vmax.xlane.f32.xlu0 %v9103
        %v9105 = vpop.xlane.xlu0 %9104
        %v9106 = vsub.f32 %v9099, %v9105
        %v9107 = vmul.f32 %v9106, 1.442695
        %v9108 = vpow.pop %v9107
        %v9109 = vsel %vm9102, %v9108, 0.0
        %9110 = vadd.xlane.f32.xlu0 %v9109
        %v9111 = vpop.xlane.xlu0 %9110
        %v9112 = vlog2.pop %v9111
        %v9113 = vmul.f32 %v9112, 0.6931472
        %v9114 = vsub.f32 %v9106, %v9113
        %9115 = vst.msk [vmem:[%s594] sm:$0x1] %vm9102, %v9114
        %s9116 = sand.u32 %s445, 1
        %s9117 = scalar_lea.sflag [#allocation3], %s9116
        %s9118 = sand.u32 %s445, 1
        %s9119 = scalar_lea.vmem [#allocation2], %s9118
        // Predicated region
        $region97: #{tpu_custom_call.1} parent=95 // pred_check
          %p9120 = pneg %p455
        $region98: #{tpu_custom_call.1} parent=95 // pred_check_branch
          %9122 = sbr.rel (%p9120) target = $region100
        $region99: #{tpu_custom_call.1} parent=95 // pred_region
          %s9124 = ssub.s32 16, 16
          %9125 = vsyncadd %s9117, %s9124
          %s9126 = smul.addr %s33, 16
          %s9127 = scalar_lea.hbm %s19, %s9126
          %s9129 = sshll.u32 %s9119, 4
          %s9130 = int_to_ptr.vmem [resolvable:$true] %s9129
          %9132 = dma.vmem_to_hbm [thread:$0]  %s9130, 16, %s9127, %s9117
        $region100: #{tpu_custom_call.1} parent=95 // pred_fallthru
          _
      $region96: #{tpu_custom_call.1} parent=5 // pred_fallthru
        _
      %p9133 = scmp.le.s32.totalorder 2, %s28
      // Predicated region
      $region101: #{tpu_custom_call.1} parent=5 // pred_check
        %p9134 = pneg %p9133
      $region102: #{tpu_custom_call.1} parent=5 // pred_check_branch
        %9136 = sbr.rel (%p9134) target = $region104
      $region103: #{tpu_custom_call.1} parent=5 // pred_region
        %s9137 = ssub.s32 %s28, 2
        // Predicated region
        $region105: #{tpu_custom_call.1} parent=103 // pred_check
          %p9138 = pneg %p461
        $region106: #{tpu_custom_call.1} parent=103 // pred_check_branch
          %9140 = sbr.rel (%p9138) target = $region108
        $region107: #{tpu_custom_call.1} parent=103 // pred_region
          %s9141 = sand.u32 %s446, 1
          %s9142 = scalar_lea.sflag [#allocation3], %s9141
          %s9143 = sand.u32 %s446, 1
          %s9144 = scalar_lea.vmem [#allocation2], %s9143
          %9145 = dma.done %s9142, 16
        $region108: #{tpu_custom_call.1} parent=103 // pred_fallthru
          _
      $region104: #{tpu_custom_call.1} parent=5 // pred_fallthru
        _
    $region6: #{tpu_custom_call.1} parent=1 // loop_footer
      %s32 = sadd.s32 1, %s28
    $region7: #{tpu_custom_call.1} parent=1 // loop_footer_branch
      %27 = sbr.rel target = $region3
    $region8: #{tpu_custom_call.1} parent=1 // loop_exit
      _
    %9146 = vsyncpa [#allocation3], 1
    %s9147 = scalar_lea.sflag [#allocation3], 1
    %9148 = vsyncpa %s9147, 1

</llo_original>
